<compile_context>
chip_gen: v5e
topology: v5e:2x2
jax: 0.10.0
libtpu: 0.0.40
codegen_flags: <defaults>
</compile_context>

<pallas_src>
import functools

import numpy as np
import jax
import jax.numpy as jnp
from jax import lax
from jax.experimental import pallas as pl
from jax.experimental.pallas import tpu as pltpu


# ---------------------------------------------------------------------------
# The fused kernel: one batch tile per grid step.
# ---------------------------------------------------------------------------
def _lenet_fused_kernel(x_ref, wc1_ref, cb1_ref, wc2_ref, cb2_ref,
                        w1_ref, b1_ref, w2_ref, b2_ref, w3_ref, b3_ref,
                        o_ref, y1e_ref, y1o_ref, *, bt):
    """Fused conv1/pool1/conv2/pool2/fc1/fc2/fc3 for one tile of `bt` images.

    x_ref   : (8, 7*bt, 96)   row-phase slabs; x_ref[c][q*bt + b] = image b, row 4q+c
    wc1_ref : (10, 96, 224)   conv1 banded weights, index dx*5 + i
    cb1_ref : (1, 224)        conv1 bias tiled over pooled columns
    wc2_ref : (10, 224, 160)  conv2 banded weights
    cb2_ref : (1, 160)        conv2 bias tiled
    w1_ref  : (5, 160, 120)   fc1 weights chunked per pooled row p2 (pre-permuted)
    b1/b2/b3: (1, 120/84/10)  fc biases; w2 (120,84), w3 (84,10) pre-transposed
    o_ref   : (bt, 10)        logits
    y1e_ref / y1o_ref : (7*bt, 224) VMEM scratch holding conv1-pooled rows of even /
        odd parity, q-major: row q*bt + b = pooled row (2q + parity) of image b.
    """
    f32 = jnp.float32

    # ---- stage 1: conv1 (5x5 VALID) + bias + ReLU + 2x2 maxpool --------------
    for par in range(2):                        # parity of the pooled output row
        best = None
        for dy in range(2):                     # row phase inside the pool window
            acc_e = None
            acc_o = None
            for i in range(5):                  # conv kernel row taps
                c = 2 * par + dy + i            # input row phase (0..7)
                xs = x_ref[c]                   # (7*bt, 96)
                pe = jnp.dot(xs, wc1_ref[i], preferred_element_type=f32)
                po = jnp.dot(xs, wc1_ref[5 + i], preferred_element_type=f32)
                acc_e = pe if acc_e is None else acc_e + pe
                acc_o = po if acc_o is None else acc_o + po
            m = jnp.maximum(acc_e, acc_o)       # max over pooling column phase (dx)
            best = m if best is None else jnp.maximum(best, m)
        # bias + ReLU commute with the 2x2 max (per-channel bias, monotone ReLU)
        y1 = jnp.maximum(best + cb1_ref[...], 0.0)          # (7*bt, 224)
        if par == 0:
            y1e_ref[...] = y1
        else:
            y1o_ref[...] = y1

    # ---- stage 2: conv2 (5x5 VALID) + bias + ReLU + 2x2 maxpool --------------
    best2 = None
    for dy in range(2):
        acc_e = None
        acc_o = None
        for i in range(5):
            s = dy + i                           # conv1-pooled row offset (0..5)
            src = y1e_ref if s % 2 == 0 else y1o_ref
            off = s // 2                         # 0..2, sublane-aligned (bt % 8 == 0)
            xs = src[off * bt:(off + 5) * bt, :]               # (5*bt, 224)
            pe = jnp.dot(xs, wc2_ref[i], preferred_element_type=f32)
            po = jnp.dot(xs, wc2_ref[5 + i], preferred_element_type=f32)
            acc_e = pe if acc_e is None else acc_e + pe
            acc_o = po if acc_o is None else acc_o + po
        m = jnp.maximum(acc_e, acc_o)
        best2 = m if best2 is None else jnp.maximum(best2, m)
    y2 = jnp.maximum(best2 + cb2_ref[...], 0.0)                # (5*bt, 160), rows (p2, b)

    # ---- stage 3: fc1 + ReLU -> fc2 + ReLU -> fc3 ----------------------------
    # fc1 is computed as a sum over the 5 pooled rows (p2-major layout of y2 makes
    # every partial a contiguous, aligned (bt, 160) x (160, 120) matmul).
    h = None
    for p2 in range(5):
        part = jnp.dot(y2[p2 * bt:(p2 + 1) * bt, :], w1_ref[p2],
                       preferred_element_type=f32)
        h = part if h is None else h + part
    h = jnp.maximum(h + b1_ref[...], 0.0)                      # (bt, 120)
    h = jnp.maximum(jnp.dot(h, w2_ref[...], preferred_element_type=f32)
                    + b2_ref[...], 0.0)                        # (bt, 84)
    out = jnp.dot(h, w3_ref[...], preferred_element_type=f32) + b3_ref[...]
    o_ref[...] = out.astype(o_ref.dtype)


# ---------------------------------------------------------------------------
# Forward pass wrapper (one pallas_call total)
# ---------------------------------------------------------------------------
def _round_up(x, m):
    return ((x + m - 1) // m) * m


def lenet_forward(x_nchw, prep, *, batch_tile=32):
    x = jnp.transpose(x_nchw, (0, 2, 3, 1)).astype(jnp.float32)   # NCHW -> NHWC
    N = x.shape[0]
    # Tile: multiple of 8 (sublane alignment of the q-major slabs), capped at
    # batch_tile, and preferring >=2 grid steps so both v7x TensorCores get work.
    bt = max(8, min(batch_tile, _round_up(max(1, (N + 1) // 2), 8)))
    Np = _round_up(N, bt)
    nt = Np // bt

    xr = x.reshape(N, 32, 32 * 3)                                 # [n, h, w*Cin]
    if Np != N:
        xr = jnp.pad(xr, ((0, Np - N), (0, 0), (0, 0)))           # zero-pad batch

    # 8 row-phase slabs in (tile, q, image) order:
    #   slab[c] row n*(7*bt) + q*bt + b  ==  image (n*bt + b), input row (4q + c).
    # This makes every stage-1 matmul operand a whole, contiguous 2-D block.
    slabs = []
    for c in range(8):
        xc = xr[:, c:c + 25:4, :]                                 # (Np, 7, 96)
        xc = xc.reshape(nt, bt, 7, 96).transpose(0, 2, 1, 3)      # (nt, 7, bt, 96)
        slabs.append(xc.reshape(nt * 7 * bt, 96))
    x_slabs = jnp.stack(slabs, axis=0)                            # (8, Np*7, 96)

    kern = functools.partial(_lenet_fused_kernel, bt=bt)
    out = pl.pallas_call(
        kern,
        out_shape=jax.ShapeDtypeStruct((Np, 10), jnp.float32),
        grid=(nt,),
        in_specs=[
            pl.BlockSpec((8, 7 * bt, 96), lambda n: (0, n, 0)),   # input slabs
            pl.BlockSpec((10, 96, 224), lambda n: (0, 0, 0)),     # conv1 band
            pl.BlockSpec((1, 224), lambda n: (0, 0)),             # conv1 bias
            pl.BlockSpec((10, 224, 160), lambda n: (0, 0, 0)),    # conv2 band
            pl.BlockSpec((1, 160), lambda n: (0, 0)),             # conv2 bias
            pl.BlockSpec((5, 160, 120), lambda n: (0, 0, 0)),     # fc1 chunks
            pl.BlockSpec((1, 120), lambda n: (0, 0)),
            pl.BlockSpec((120, 84), lambda n: (0, 0)),
            pl.BlockSpec((1, 84), lambda n: (0, 0)),
            pl.BlockSpec((84, 10), lambda n: (0, 0)),
            pl.BlockSpec((1, 10), lambda n: (0, 0)),
        ],
        out_specs=pl.BlockSpec((bt, 10), lambda n: (n, 0)),
        scratch_shapes=[
            pltpu.VMEM((7 * bt, 224), jnp.float32),               # y1 even pooled rows
            pltpu.VMEM((7 * bt, 224), jnp.float32),               # y1 odd pooled rows
        ],
        compiler_params=pltpu.CompilerParams(dimension_semantics=("parallel",)),
    )(x_slabs, prep["wcat1"], prep["cbias1"], prep["wcat2"], prep["cbias2"],
      prep["w1p"], prep["b1"], prep["w2"], prep["b2"], prep["w3"], prep["b3"])
    return out[:N]


# ---------------------------------------------------------------------------
# One-time host-side weight repackaging (outside jit)
# ---------------------------------------------------------------------------
def prepare_params(params):
    def conv_pack(w_oihw, b, Wd):
        wt = np.asarray(w_oihw, dtype=np.float32)       # [Cout, Cin, kh, kw]
        bv = np.asarray(b, dtype=np.float32)
        Cout, Cin, kh, kw = wt.shape
        ow = Wd - kw + 1
        pw = ow // 2
        pwC = pw * Cout
        # wcat[dx*kh + i, xa*Cin+ci, px*Cout+co] = W[co,ci,i,j]  with xa = 2*px+dx+j
        wcat = np.zeros((2 * kh, Wd * Cin, pwC), dtype=np.float32)
        for i in range(kh):
            for j in range(kw):
                wij = wt[:, :, i, j].T                  # [Cin, Cout]
                for dx in range(2):
                    for px in range(pw):
                        xa = 2 * px + dx + j            # absolute input column
                        wcat[dx * kh + i,
                             xa * Cin:(xa + 1) * Cin,
                             px * Cout:(px + 1) * Cout] = wij
        btile = np.tile(bv, pw).reshape(1, pwC)
        return jnp.asarray(wcat), jnp.asarray(btile)

    wcat1, cbias1 = conv_pack(params["conv1_w"], params["conv1_b"], 32)
    wcat2, cbias2 = conv_pack(params["conv2_w"], params["conv2_b"], 14)

    # PyTorch flatten order is NCHW: feature = co*25 + p2*5 + px.  Our y2 layout
    # per pooled row p2 is [px*32 + co] -> chunk fc1 weights per p2, pre-transposed.
    fc1_w = np.asarray(params["fc1_w"], dtype=np.float32)               # [120, 800]
    w1p = fc1_w.reshape(120, 32, 5, 5).transpose(2, 3, 1, 0).reshape(5, 160, 120)
    w2 = np.asarray(params["fc2_w"], dtype=np.float32).T                # [120, 84]
    w3 = np.asarray(params["fc3_w"], dtype=np.float32).T                # [84, 10]
    return {
        "wcat1": wcat1, "cbias1": cbias1,
        "wcat2": wcat2, "cbias2": cbias2,
        "w1p": jnp.asarray(w1p), "b1": jnp.asarray(params["fc1_b"]).reshape(1, -1),
        "w2": jnp.asarray(w2), "b2": jnp.asarray(params["fc2_b"]).reshape(1, -1),
        "w3": jnp.asarray(w3), "b3": jnp.asarray(params["fc3_b"]).reshape(1, -1),
    }


# ---------------------------------------------------------------------------
# Pure-JAX reference (mirrors the PyTorch module) for the correctness check
# ---------------------------------------------------------------------------
def lenet_reference(x_nchw, params):
    hp = lax.Precision.HIGHEST
    y = lax.conv_general_dilated(x_nchw.astype(jnp.float32), params["conv1_w"],
                                 (1, 1), "VALID",
                                 dimension_numbers=("NCHW", "OIHW", "NCHW"),
                                 precision=hp)
    y = jax.nn.relu(y + params["conv1_b"][None, :, None, None])
    y = lax.reduce_window(y, -jnp.inf, lax.max, (1, 1, 2, 2), (1, 1, 2, 2), "VALID")
    y = lax.conv_general_dilated(y, params["conv2_w"], (1, 1), "VALID",
                                 dimension_numbers=("NCHW", "OIHW", "NCHW"),
                                 precision=hp)
    y = jax.nn.relu(y + params["conv2_b"][None, :, None, None])
    y = lax.reduce_window(y, -jnp.inf, lax.max, (1, 1, 2, 2), (1, 1, 2, 2), "VALID")
    y = y.reshape(y.shape[0], -1)
    y = jax.nn.relu(jnp.dot(y, params["fc1_w"].T, precision=hp) + params["fc1_b"])
    y = jax.nn.relu(jnp.dot(y, params["fc2_w"].T, precision=hp) + params["fc2_b"])
    return jnp.dot(y, params["fc3_w"].T, precision=hp) + params["fc3_b"]


# ---------------------------------------------------------------------------
# Deterministic parameter initialization (shapes from LeNet.__init__)
# ---------------------------------------------------------------------------
def init_params(key):
    ks = jax.random.split(key, 10)
    scale = 0.05
    return {
        "conv1_w": scale * jax.random.normal(ks[0], (16, 3, 5, 5), jnp.float32),
        "conv1_b": scale * jax.random.normal(ks[1], (16,), jnp.float32),
        "conv2_w": scale * jax.random.normal(ks[2], (32, 16, 5, 5), jnp.float32),
        "conv2_b": scale * jax.random.normal(ks[3], (32,), jnp.float32),
        "fc1_w": scale * jax.random.normal(ks[4], (120, 32 * 5 * 5), jnp.float32),
        "fc1_b": scale * jax.random.normal(ks[5], (120,), jnp.float32),
        "fc2_w": scale * jax.random.normal(ks[6], (84, 120), jnp.float32),
        "fc2_b": scale * jax.random.normal(ks[7], (84,), jnp.float32),
        "fc3_w": scale * jax.random.normal(ks[8], (10, 84), jnp.float32),
        "fc3_b": scale * jax.random.normal(ks[9], (10,), jnp.float32),
    }


if __name__ == "__main__":
    key = jax.random.PRNGKey(0)
    k_params, k_x = jax.random.split(key)
    params = init_params(k_params)
    prep = prepare_params(params)

    # LeNet's fc1 expects 32*5*5 features, which pins the input to 3x32x32.
    x = jax.random.normal(k_x, (2, 3, 32, 32), jnp.float32)       # NCHW like PyTorch

    fwd = jax.jit(lenet_forward)
    out = jax.block_until_ready(fwd(x, prep))

    ref = jax.block_until_ready(jax.jit(lenet_reference)(x, params))

    assert out.shape == (2, 10), out.shape
    assert out.dtype == jnp.float32
    assert bool(jnp.all(jnp.isfinite(out)))
    err = float(jnp.max(jnp.abs(out - ref)))
    assert err < 1e-3, f"mismatch vs reference, max abs err = {err}"
    print("KERNEL_OK")
</pallas_src>

<mosaic_0001>
module attributes {stable_mosaic.version = 11 : i64} {
  func.func @_lenet_fused_kernel(%arg0: i32, %arg1: memref<8x56x96xf32, #tpu.memory_space<vmem>>, %arg2: memref<10x96x224xf32, #tpu.memory_space<vmem>>, %arg3: memref<1x224xf32, #tpu.memory_space<vmem>>, %arg4: memref<10x224x160xf32, #tpu.memory_space<vmem>>, %arg5: memref<1x160xf32, #tpu.memory_space<vmem>>, %arg6: memref<5x160x120xf32, #tpu.memory_space<vmem>>, %arg7: memref<1x120xf32, #tpu.memory_space<vmem>>, %arg8: memref<120x84xf32, #tpu.memory_space<vmem>>, %arg9: memref<1x84xf32, #tpu.memory_space<vmem>>, %arg10: memref<84x10xf32, #tpu.memory_space<vmem>>, %arg11: memref<1x10xf32, #tpu.memory_space<vmem>>, %arg12: memref<8x10xf32, #tpu.memory_space<vmem>>, %arg13: memref<56x224xf32, #tpu.memory_space<vmem>>, %arg14: memref<56x224xf32, #tpu.memory_space<vmem>>) attributes {dimension_semantics = [#tpu.dimension_semantics<parallel>], iteration_bounds = array<i64: 1>, scalar_prefetch = 0 : i64, scratch_operands = 2 : i64, tpu.core_type = #tpu.core_type<tc>, window_params = [{transform_indices = @transform_0, window_bounds = array<i64: 8, 56, 96>}, {pipeline_mode = #tpu.pipeline_mode<synchronous>, transform_indices = @transform_1, window_bounds = array<i64: 10, 96, 224>}, {pipeline_mode = #tpu.pipeline_mode<synchronous>, transform_indices = @transform_2, window_bounds = array<i64: 1, 224>}, {pipeline_mode = #tpu.pipeline_mode<synchronous>, transform_indices = @transform_3, window_bounds = array<i64: 10, 224, 160>}, {pipeline_mode = #tpu.pipeline_mode<synchronous>, transform_indices = @transform_4, window_bounds = array<i64: 1, 160>}, {pipeline_mode = #tpu.pipeline_mode<synchronous>, transform_indices = @transform_5, window_bounds = array<i64: 5, 160, 120>}, {pipeline_mode = #tpu.pipeline_mode<synchronous>, transform_indices = @transform_6, window_bounds = array<i64: 1, 120>}, {pipeline_mode = #tpu.pipeline_mode<synchronous>, transform_indices = @transform_7, window_bounds = array<i64: 120, 84>}, {pipeline_mode = #tpu.pipeline_mode<synchronous>, transform_indices = @transform_8, window_bounds = array<i64: 1, 84>}, {pipeline_mode = #tpu.pipeline_mode<synchronous>, transform_indices = @transform_9, window_bounds = array<i64: 84, 10>}, {pipeline_mode = #tpu.pipeline_mode<synchronous>, transform_indices = @transform_10, window_bounds = array<i64: 1, 10>}, {transform_indices = @transform_11, window_bounds = array<i64: 8, 10>}]} {
    %c0 = arith.constant 0 : index
    %c0_0 = arith.constant 0 : index
    %c0_1 = arith.constant 0 : index
    %0 = vector.load %arg1[%c0, %c0_0, %c0_1] : memref<8x56x96xf32, #tpu.memory_space<vmem>>, vector<1x56x96xf32>
    %1 = vector.shape_cast %0 : vector<1x56x96xf32> to vector<56x96xf32>
    %c0_2 = arith.constant 0 : index
    %c0_3 = arith.constant 0 : index
    %c0_4 = arith.constant 0 : index
    %2 = vector.load %arg2[%c0_2, %c0_3, %c0_4] : memref<10x96x224xf32, #tpu.memory_space<vmem>>, vector<1x96x224xf32>
    %3 = vector.shape_cast %2 : vector<1x96x224xf32> to vector<96x224xf32>
    %cst = arith.constant dense<0.000000e+00> : vector<56x224xf32>
    %4 = tpu.matmul %1, %3, %cst {dimension_numbers = #tpu.dot_dimension_numbers<[1], [0], [0], [1], [0, 0, 1, 1], [], []>} : vector<56x96xf32>, vector<96x224xf32>, vector<56x224xf32> -> vector<56x224xf32>
    %c5 = arith.constant 5 : index
    %c0_5 = arith.constant 0 : index
    %c0_6 = arith.constant 0 : index
    %5 = vector.load %arg2[%c5, %c0_5, %c0_6] : memref<10x96x224xf32, #tpu.memory_space<vmem>>, vector<1x96x224xf32>
    %6 = vector.shape_cast %5 : vector<1x96x224xf32> to vector<96x224xf32>
    %cst_7 = arith.constant dense<0.000000e+00> : vector<56x224xf32>
    %7 = tpu.matmul %1, %6, %cst_7 {dimension_numbers = #tpu.dot_dimension_numbers<[1], [0], [0], [1], [0, 0, 1, 1], [], []>} : vector<56x96xf32>, vector<96x224xf32>, vector<56x224xf32> -> vector<56x224xf32>
    %c1 = arith.constant 1 : index
    %c0_8 = arith.constant 0 : index
    %c0_9 = arith.constant 0 : index
    %8 = vector.load %arg1[%c1, %c0_8, %c0_9] : memref<8x56x96xf32, #tpu.memory_space<vmem>>, vector<1x56x96xf32>
    %9 = vector.shape_cast %8 : vector<1x56x96xf32> to vector<56x96xf32>
    %c1_10 = arith.constant 1 : index
    %c0_11 = arith.constant 0 : index
    %c0_12 = arith.constant 0 : index
    %10 = vector.load %arg2[%c1_10, %c0_11, %c0_12] : memref<10x96x224xf32, #tpu.memory_space<vmem>>, vector<1x96x224xf32>
    %11 = vector.shape_cast %10 : vector<1x96x224xf32> to vector<96x224xf32>
    %cst_13 = arith.constant dense<0.000000e+00> : vector<56x224xf32>
    %12 = tpu.matmul %9, %11, %cst_13 {dimension_numbers = #tpu.dot_dimension_numbers<[1], [0], [0], [1], [0, 0, 1, 1], [], []>} : vector<56x96xf32>, vector<96x224xf32>, vector<56x224xf32> -> vector<56x224xf32>
    %c6 = arith.constant 6 : index
    %c0_14 = arith.constant 0 : index
    %c0_15 = arith.constant 0 : index
    %13 = vector.load %arg2[%c6, %c0_14, %c0_15] : memref<10x96x224xf32, #tpu.memory_space<vmem>>, vector<1x96x224xf32>
    %14 = vector.shape_cast %13 : vector<1x96x224xf32> to vector<96x224xf32>
    %cst_16 = arith.constant dense<0.000000e+00> : vector<56x224xf32>
    %15 = tpu.matmul %9, %14, %cst_16 {dimension_numbers = #tpu.dot_dimension_numbers<[1], [0], [0], [1], [0, 0, 1, 1], [], []>} : vector<56x96xf32>, vector<96x224xf32>, vector<56x224xf32> -> vector<56x224xf32>
    %16 = arith.addf %4, %12 : vector<56x224xf32>
    %17 = arith.addf %7, %15 : vector<56x224xf32>
    %c2 = arith.constant 2 : index
    %c0_17 = arith.constant 0 : index
    %c0_18 = arith.constant 0 : index
    %18 = vector.load %arg1[%c2, %c0_17, %c0_18] : memref<8x56x96xf32, #tpu.memory_space<vmem>>, vector<1x56x96xf32>
    %19 = vector.shape_cast %18 : vector<1x56x96xf32> to vector<56x96xf32>
    %c2_19 = arith.constant 2 : index
    %c0_20 = arith.constant 0 : index
    %c0_21 = arith.constant 0 : index
    %20 = vector.load %arg2[%c2_19, %c0_20, %c0_21] : memref<10x96x224xf32, #tpu.memory_space<vmem>>, vector<1x96x224xf32>
    %21 = vector.shape_cast %20 : vector<1x96x224xf32> to vector<96x224xf32>
    %cst_22 = arith.constant dense<0.000000e+00> : vector<56x224xf32>
    %22 = tpu.matmul %19, %21, %cst_22 {dimension_numbers = #tpu.dot_dimension_numbers<[1], [0], [0], [1], [0, 0, 1, 1], [], []>} : vector<56x96xf32>, vector<96x224xf32>, vector<56x224xf32> -> vector<56x224xf32>
    %c7 = arith.constant 7 : index
    %c0_23 = arith.constant 0 : index
    %c0_24 = arith.constant 0 : index
    %23 = vector.load %arg2[%c7, %c0_23, %c0_24] : memref<10x96x224xf32, #tpu.memory_space<vmem>>, vector<1x96x224xf32>
    %24 = vector.shape_cast %23 : vector<1x96x224xf32> to vector<96x224xf32>
    %cst_25 = arith.constant dense<0.000000e+00> : vector<56x224xf32>
    %25 = tpu.matmul %19, %24, %cst_25 {dimension_numbers = #tpu.dot_dimension_numbers<[1], [0], [0], [1], [0, 0, 1, 1], [], []>} : vector<56x96xf32>, vector<96x224xf32>, vector<56x224xf32> -> vector<56x224xf32>
    %26 = arith.addf %16, %22 : vector<56x224xf32>
    %27 = arith.addf %17, %25 : vector<56x224xf32>
    %c3 = arith.constant 3 : index
    %c0_26 = arith.constant 0 : index
    %c0_27 = arith.constant 0 : index
    %28 = vector.load %arg1[%c3, %c0_26, %c0_27] : memref<8x56x96xf32, #tpu.memory_space<vmem>>, vector<1x56x96xf32>
    %29 = vector.shape_cast %28 : vector<1x56x96xf32> to vector<56x96xf32>
    %c3_28 = arith.constant 3 : index
    %c0_29 = arith.constant 0 : index
    %c0_30 = arith.constant 0 : index
    %30 = vector.load %arg2[%c3_28, %c0_29, %c0_30] : memref<10x96x224xf32, #tpu.memory_space<vmem>>, vector<1x96x224xf32>
    %31 = vector.shape_cast %30 : vector<1x96x224xf32> to vector<96x224xf32>
    %cst_31 = arith.constant dense<0.000000e+00> : vector<56x224xf32>
    %32 = tpu.matmul %29, %31, %cst_31 {dimension_numbers = #tpu.dot_dimension_numbers<[1], [0], [0], [1], [0, 0, 1, 1], [], []>} : vector<56x96xf32>, vector<96x224xf32>, vector<56x224xf32> -> vector<56x224xf32>
    %c8 = arith.constant 8 : index
    %c0_32 = arith.constant 0 : index
    %c0_33 = arith.constant 0 : index
    %33 = vector.load %arg2[%c8, %c0_32, %c0_33] : memref<10x96x224xf32, #tpu.memory_space<vmem>>, vector<1x96x224xf32>
    %34 = vector.shape_cast %33 : vector<1x96x224xf32> to vector<96x224xf32>
    %cst_34 = arith.constant dense<0.000000e+00> : vector<56x224xf32>
    %35 = tpu.matmul %29, %34, %cst_34 {dimension_numbers = #tpu.dot_dimension_numbers<[1], [0], [0], [1], [0, 0, 1, 1], [], []>} : vector<56x96xf32>, vector<96x224xf32>, vector<56x224xf32> -> vector<56x224xf32>
    %36 = arith.addf %26, %32 : vector<56x224xf32>
    %37 = arith.addf %27, %35 : vector<56x224xf32>
    %c4 = arith.constant 4 : index
    %c0_35 = arith.constant 0 : index
    %c0_36 = arith.constant 0 : index
    %38 = vector.load %arg1[%c4, %c0_35, %c0_36] : memref<8x56x96xf32, #tpu.memory_space<vmem>>, vector<1x56x96xf32>
    %39 = vector.shape_cast %38 : vector<1x56x96xf32> to vector<56x96xf32>
    %c4_37 = arith.constant 4 : index
    %c0_38 = arith.constant 0 : index
    %c0_39 = arith.constant 0 : index
    %40 = vector.load %arg2[%c4_37, %c0_38, %c0_39] : memref<10x96x224xf32, #tpu.memory_space<vmem>>, vector<1x96x224xf32>
    %41 = vector.shape_cast %40 : vector<1x96x224xf32> to vector<96x224xf32>
    %cst_40 = arith.constant dense<0.000000e+00> : vector<56x224xf32>
    %42 = tpu.matmul %39, %41, %cst_40 {dimension_numbers = #tpu.dot_dimension_numbers<[1], [0], [0], [1], [0, 0, 1, 1], [], []>} : vector<56x96xf32>, vector<96x224xf32>, vector<56x224xf32> -> vector<56x224xf32>
    %c9 = arith.constant 9 : index
    %c0_41 = arith.constant 0 : index
    %c0_42 = arith.constant 0 : index
    %43 = vector.load %arg2[%c9, %c0_41, %c0_42] : memref<10x96x224xf32, #tpu.memory_space<vmem>>, vector<1x96x224xf32>
    %44 = vector.shape_cast %43 : vector<1x96x224xf32> to vector<96x224xf32>
    %cst_43 = arith.constant dense<0.000000e+00> : vector<56x224xf32>
    %45 = tpu.matmul %39, %44, %cst_43 {dimension_numbers = #tpu.dot_dimension_numbers<[1], [0], [0], [1], [0, 0, 1, 1], [], []>} : vector<56x96xf32>, vector<96x224xf32>, vector<56x224xf32> -> vector<56x224xf32>
    %46 = arith.addf %36, %42 : vector<56x224xf32>
    %47 = arith.addf %37, %45 : vector<56x224xf32>
    %48 = arith.maximumf %46, %47 : vector<56x224xf32>
    %c1_44 = arith.constant 1 : index
    %c0_45 = arith.constant 0 : index
    %c0_46 = arith.constant 0 : index
    %49 = vector.load %arg1[%c1_44, %c0_45, %c0_46] : memref<8x56x96xf32, #tpu.memory_space<vmem>>, vector<1x56x96xf32>
    %50 = vector.shape_cast %49 : vector<1x56x96xf32> to vector<56x96xf32>
    %c0_47 = arith.constant 0 : index
    %c0_48 = arith.constant 0 : index
    %c0_49 = arith.constant 0 : index
    %51 = vector.load %arg2[%c0_47, %c0_48, %c0_49] : memref<10x96x224xf32, #tpu.memory_space<vmem>>, vector<1x96x224xf32>
    %52 = vector.shape_cast %51 : vector<1x96x224xf32> to vector<96x224xf32>
    %cst_50 = arith.constant dense<0.000000e+00> : vector<56x224xf32>
    %53 = tpu.matmul %50, %52, %cst_50 {dimension_numbers = #tpu.dot_dimension_numbers<[1], [0], [0], [1], [0, 0, 1, 1], [], []>} : vector<56x96xf32>, vector<96x224xf32>, vector<56x224xf32> -> vector<56x224xf32>
    %c5_51 = arith.constant 5 : index
    %c0_52 = arith.constant 0 : index
    %c0_53 = arith.constant 0 : index
    %54 = vector.load %arg2[%c5_51, %c0_52, %c0_53] : memref<10x96x224xf32, #tpu.memory_space<vmem>>, vector<1x96x224xf32>
    %55 = vector.shape_cast %54 : vector<1x96x224xf32> to vector<96x224xf32>
    %cst_54 = arith.constant dense<0.000000e+00> : vector<56x224xf32>
    %56 = tpu.matmul %50, %55, %cst_54 {dimension_numbers = #tpu.dot_dimension_numbers<[1], [0], [0], [1], [0, 0, 1, 1], [], []>} : vector<56x96xf32>, vector<96x224xf32>, vector<56x224xf32> -> vector<56x224xf32>
    %c2_55 = arith.constant 2 : index
    %c0_56 = arith.constant 0 : index
    %c0_57 = arith.constant 0 : index
    %57 = vector.load %arg1[%c2_55, %c0_56, %c0_57] : memref<8x56x96xf32, #tpu.memory_space<vmem>>, vector<1x56x96xf32>
    %58 = vector.shape_cast %57 : vector<1x56x96xf32> to vector<56x96xf32>
    %c1_58 = arith.constant 1 : index
    %c0_59 = arith.constant 0 : index
    %c0_60 = arith.constant 0 : index
    %59 = vector.load %arg2[%c1_58, %c0_59, %c0_60] : memref<10x96x224xf32, #tpu.memory_space<vmem>>, vector<1x96x224xf32>
    %60 = vector.shape_cast %59 : vector<1x96x224xf32> to vector<96x224xf32>
    %cst_61 = arith.constant dense<0.000000e+00> : vector<56x224xf32>
    %61 = tpu.matmul %58, %60, %cst_61 {dimension_numbers = #tpu.dot_dimension_numbers<[1], [0], [0], [1], [0, 0, 1, 1], [], []>} : vector<56x96xf32>, vector<96x224xf32>, vector<56x224xf32> -> vector<56x224xf32>
    %c6_62 = arith.constant 6 : index
    %c0_63 = arith.constant 0 : index
    %c0_64 = arith.constant 0 : index
    %62 = vector.load %arg2[%c6_62, %c0_63, %c0_64] : memref<10x96x224xf32, #tpu.memory_space<vmem>>, vector<1x96x224xf32>
    %63 = vector.shape_cast %62 : vector<1x96x224xf32> to vector<96x224xf32>
    %cst_65 = arith.constant dense<0.000000e+00> : vector<56x224xf32>
    %64 = tpu.matmul %58, %63, %cst_65 {dimension_numbers = #tpu.dot_dimension_numbers<[1], [0], [0], [1], [0, 0, 1, 1], [], []>} : vector<56x96xf32>, vector<96x224xf32>, vector<56x224xf32> -> vector<56x224xf32>
    %65 = arith.addf %53, %61 : vector<56x224xf32>
    %66 = arith.addf %56, %64 : vector<56x224xf32>
    %c3_66 = arith.constant 3 : index
    %c0_67 = arith.constant 0 : index
    %c0_68 = arith.constant 0 : index
    %67 = vector.load %arg1[%c3_66, %c0_67, %c0_68] : memref<8x56x96xf32, #tpu.memory_space<vmem>>, vector<1x56x96xf32>
    %68 = vector.shape_cast %67 : vector<1x56x96xf32> to vector<56x96xf32>
    %c2_69 = arith.constant 2 : index
    %c0_70 = arith.constant 0 : index
    %c0_71 = arith.constant 0 : index
    %69 = vector.load %arg2[%c2_69, %c0_70, %c0_71] : memref<10x96x224xf32, #tpu.memory_space<vmem>>, vector<1x96x224xf32>
    %70 = vector.shape_cast %69 : vector<1x96x224xf32> to vector<96x224xf32>
    %cst_72 = arith.constant dense<0.000000e+00> : vector<56x224xf32>
    %71 = tpu.matmul %68, %70, %cst_72 {dimension_numbers = #tpu.dot_dimension_numbers<[1], [0], [0], [1], [0, 0, 1, 1], [], []>} : vector<56x96xf32>, vector<96x224xf32>, vector<56x224xf32> -> vector<56x224xf32>
    %c7_73 = arith.constant 7 : index
    %c0_74 = arith.constant 0 : index
    %c0_75 = arith.constant 0 : index
    %72 = vector.load %arg2[%c7_73, %c0_74, %c0_75] : memref<10x96x224xf32, #tpu.memory_space<vmem>>, vector<1x96x224xf32>
    %73 = vector.shape_cast %72 : vector<1x96x224xf32> to vector<96x224xf32>
    %cst_76 = arith.constant dense<0.000000e+00> : vector<56x224xf32>
    %74 = tpu.matmul %68, %73, %cst_76 {dimension_numbers = #tpu.dot_dimension_numbers<[1], [0], [0], [1], [0, 0, 1, 1], [], []>} : vector<56x96xf32>, vector<96x224xf32>, vector<56x224xf32> -> vector<56x224xf32>
    %75 = arith.addf %65, %71 : vector<56x224xf32>
    %76 = arith.addf %66, %74 : vector<56x224xf32>
    %c4_77 = arith.constant 4 : index
    %c0_78 = arith.constant 0 : index
    %c0_79 = arith.constant 0 : index
    %77 = vector.load %arg1[%c4_77, %c0_78, %c0_79] : memref<8x56x96xf32, #tpu.memory_space<vmem>>, vector<1x56x96xf32>
    %78 = vector.shape_cast %77 : vector<1x56x96xf32> to vector<56x96xf32>
    %c3_80 = arith.constant 3 : index
    %c0_81 = arith.constant 0 : index
    %c0_82 = arith.constant 0 : index
    %79 = vector.load %arg2[%c3_80, %c0_81, %c0_82] : memref<10x96x224xf32, #tpu.memory_space<vmem>>, vector<1x96x224xf32>
    %80 = vector.shape_cast %79 : vector<1x96x224xf32> to vector<96x224xf32>
    %cst_83 = arith.constant dense<0.000000e+00> : vector<56x224xf32>
    %81 = tpu.matmul %78, %80, %cst_83 {dimension_numbers = #tpu.dot_dimension_numbers<[1], [0], [0], [1], [0, 0, 1, 1], [], []>} : vector<56x96xf32>, vector<96x224xf32>, vector<56x224xf32> -> vector<56x224xf32>
    %c8_84 = arith.constant 8 : index
    %c0_85 = arith.constant 0 : index
    %c0_86 = arith.constant 0 : index
    %82 = vector.load %arg2[%c8_84, %c0_85, %c0_86] : memref<10x96x224xf32, #tpu.memory_space<vmem>>, vector<1x96x224xf32>
    %83 = vector.shape_cast %82 : vector<1x96x224xf32> to vector<96x224xf32>
    %cst_87 = arith.constant dense<0.000000e+00> : vector<56x224xf32>
    %84 = tpu.matmul %78, %83, %cst_87 {dimension_numbers = #tpu.dot_dimension_numbers<[1], [0], [0], [1], [0, 0, 1, 1], [], []>} : vector<56x96xf32>, vector<96x224xf32>, vector<56x224xf32> -> vector<56x224xf32>
    %85 = arith.addf %75, %81 : vector<56x224xf32>
    %86 = arith.addf %76, %84 : vector<56x224xf32>
    %c5_88 = arith.constant 5 : index
    %c0_89 = arith.constant 0 : index
    %c0_90 = arith.constant 0 : index
    %87 = vector.load %arg1[%c5_88, %c0_89, %c0_90] : memref<8x56x96xf32, #tpu.memory_space<vmem>>, vector<1x56x96xf32>
    %88 = vector.shape_cast %87 : vector<1x56x96xf32> to vector<56x96xf32>
    %c4_91 = arith.constant 4 : index
    %c0_92 = arith.constant 0 : index
    %c0_93 = arith.constant 0 : index
    %89 = vector.load %arg2[%c4_91, %c0_92, %c0_93] : memref<10x96x224xf32, #tpu.memory_space<vmem>>, vector<1x96x224xf32>
    %90 = vector.shape_cast %89 : vector<1x96x224xf32> to vector<96x224xf32>
    %cst_94 = arith.constant dense<0.000000e+00> : vector<56x224xf32>
    %91 = tpu.matmul %88, %90, %cst_94 {dimension_numbers = #tpu.dot_dimension_numbers<[1], [0], [0], [1], [0, 0, 1, 1], [], []>} : vector<56x96xf32>, vector<96x224xf32>, vector<56x224xf32> -> vector<56x224xf32>
    %c9_95 = arith.constant 9 : index
    %c0_96 = arith.constant 0 : index
    %c0_97 = arith.constant 0 : index
    %92 = vector.load %arg2[%c9_95, %c0_96, %c0_97] : memref<10x96x224xf32, #tpu.memory_space<vmem>>, vector<1x96x224xf32>
    %93 = vector.shape_cast %92 : vector<1x96x224xf32> to vector<96x224xf32>
    %cst_98 = arith.constant dense<0.000000e+00> : vector<56x224xf32>
    %94 = tpu.matmul %88, %93, %cst_98 {dimension_numbers = #tpu.dot_dimension_numbers<[1], [0], [0], [1], [0, 0, 1, 1], [], []>} : vector<56x96xf32>, vector<96x224xf32>, vector<56x224xf32> -> vector<56x224xf32>
    %95 = arith.addf %85, %91 : vector<56x224xf32>
    %96 = arith.addf %86, %94 : vector<56x224xf32>
    %97 = arith.maximumf %95, %96 : vector<56x224xf32>
    %98 = arith.maximumf %48, %97 : vector<56x224xf32>
    %c0_99 = arith.constant 0 : index
    %c0_100 = arith.constant 0 : index
    %99 = vector.load %arg3[%c0_99, %c0_100] : memref<1x224xf32, #tpu.memory_space<vmem>>, vector<1x224xf32>
    %100 = vector.broadcast %99 : vector<1x224xf32> to vector<56x224xf32>
    %101 = arith.addf %98, %100 : vector<56x224xf32>
    %cst_101 = arith.constant 0.000000e+00 : f32
    %102 = vector.broadcast %cst_101 : f32 to vector<56x224xf32>
    %103 = arith.maximumf %101, %102 : vector<56x224xf32>
    %c0_102 = arith.constant 0 : index
    %c0_103 = arith.constant 0 : index
    %104 = vector.load %arg13[%c0_102, %c0_103] : memref<56x224xf32, #tpu.memory_space<vmem>>, vector<56x224xf32>
    tpu.vector_store %arg13[%c0_102, %c0_103], %103 {strides = array<i32>} : memref<56x224xf32, #tpu.memory_space<vmem>>, vector<56x224xf32>,
    %c2_104 = arith.constant 2 : index
    %c0_105 = arith.constant 0 : index
    %c0_106 = arith.constant 0 : index
    %105 = vector.load %arg1[%c2_104, %c0_105, %c0_106] : memref<8x56x96xf32, #tpu.memory_space<vmem>>, vector<1x56x96xf32>
    %106 = vector.shape_cast %105 : vector<1x56x96xf32> to vector<56x96xf32>
    %c0_107 = arith.constant 0 : index
    %c0_108 = arith.constant 0 : index
    %c0_109 = arith.constant 0 : index
    %107 = vector.load %arg2[%c0_107, %c0_108, %c0_109] : memref<10x96x224xf32, #tpu.memory_space<vmem>>, vector<1x96x224xf32>
    %108 = vector.shape_cast %107 : vector<1x96x224xf32> to vector<96x224xf32>
    %cst_110 = arith.constant dense<0.000000e+00> : vector<56x224xf32>
    %109 = tpu.matmul %106, %108, %cst_110 {dimension_numbers = #tpu.dot_dimension_numbers<[1], [0], [0], [1], [0, 0, 1, 1], [], []>} : vector<56x96xf32>, vector<96x224xf32>, vector<56x224xf32> -> vector<56x224xf32>
    %c5_111 = arith.constant 5 : index
    %c0_112 = arith.constant 0 : index
    %c0_113 = arith.constant 0 : index
    %110 = vector.load %arg2[%c5_111, %c0_112, %c0_113] : memref<10x96x224xf32, #tpu.memory_space<vmem>>, vector<1x96x224xf32>
    %111 = vector.shape_cast %110 : vector<1x96x224xf32> to vector<96x224xf32>
    %cst_114 = arith.constant dense<0.000000e+00> : vector<56x224xf32>
    %112 = tpu.matmul %106, %111, %cst_114 {dimension_numbers = #tpu.dot_dimension_numbers<[1], [0], [0], [1], [0, 0, 1, 1], [], []>} : vector<56x96xf32>, vector<96x224xf32>, vector<56x224xf32> -> vector<56x224xf32>
    %c3_115 = arith.constant 3 : index
    %c0_116 = arith.constant 0 : index
    %c0_117 = arith.constant 0 : index
    %113 = vector.load %arg1[%c3_115, %c0_116, %c0_117] : memref<8x56x96xf32, #tpu.memory_space<vmem>>, vector<1x56x96xf32>
    %114 = vector.shape_cast %113 : vector<1x56x96xf32> to vector<56x96xf32>
    %c1_118 = arith.constant 1 : index
    %c0_119 = arith.constant 0 : index
    %c0_120 = arith.constant 0 : index
    %115 = vector.load %arg2[%c1_118, %c0_119, %c0_120] : memref<10x96x224xf32, #tpu.memory_space<vmem>>, vector<1x96x224xf32>
    %116 = vector.shape_cast %115 : vector<1x96x224xf32> to vector<96x224xf32>
    %cst_121 = arith.constant dense<0.000000e+00> : vector<56x224xf32>
    %117 = tpu.matmul %114, %116, %cst_121 {dimension_numbers = #tpu.dot_dimension_numbers<[1], [0], [0], [1], [0, 0, 1, 1], [], []>} : vector<56x96xf32>, vector<96x224xf32>, vector<56x224xf32> -> vector<56x224xf32>
    %c6_122 = arith.constant 6 : index
    %c0_123 = arith.constant 0 : index
    %c0_124 = arith.constant 0 : index
    %118 = vector.load %arg2[%c6_122, %c0_123, %c0_124] : memref<10x96x224xf32, #tpu.memory_space<vmem>>, vector<1x96x224xf32>
    %119 = vector.shape_cast %118 : vector<1x96x224xf32> to vector<96x224xf32>
    %cst_125 = arith.constant dense<0.000000e+00> : vector<56x224xf32>
    %120 = tpu.matmul %114, %119, %cst_125 {dimension_numbers = #tpu.dot_dimension_numbers<[1], [0], [0], [1], [0, 0, 1, 1], [], []>} : vector<56x96xf32>, vector<96x224xf32>, vector<56x224xf32> -> vector<56x224xf32>
    %121 = arith.addf %109, %117 : vector<56x224xf32>
    %122 = arith.addf %112, %120 : vector<56x224xf32>
    %c4_126 = arith.constant 4 : index
    %c0_127 = arith.constant 0 : index
    %c0_128 = arith.constant 0 : index
    %123 = vector.load %arg1[%c4_126, %c0_127, %c0_128] : memref<8x56x96xf32, #tpu.memory_space<vmem>>, vector<1x56x96xf32>
    %124 = vector.shape_cast %123 : vector<1x56x96xf32> to vector<56x96xf32>
    %c2_129 = arith.constant 2 : index
    %c0_130 = arith.constant 0 : index
    %c0_131 = arith.constant 0 : index
    %125 = vector.load %arg2[%c2_129, %c0_130, %c0_131] : memref<10x96x224xf32, #tpu.memory_space<vmem>>, vector<1x96x224xf32>
    %126 = vector.shape_cast %125 : vector<1x96x224xf32> to vector<96x224xf32>
    %cst_132 = arith.constant dense<0.000000e+00> : vector<56x224xf32>
    %127 = tpu.matmul %124, %126, %cst_132 {dimension_numbers = #tpu.dot_dimension_numbers<[1], [0], [0], [1], [0, 0, 1, 1], [], []>} : vector<56x96xf32>, vector<96x224xf32>, vector<56x224xf32> -> vector<56x224xf32>
    %c7_133 = arith.constant 7 : index
    %c0_134 = arith.constant 0 : index
    %c0_135 = arith.constant 0 : index
    %128 = vector.load %arg2[%c7_133, %c0_134, %c0_135] : memref<10x96x224xf32, #tpu.memory_space<vmem>>, vector<1x96x224xf32>
    %129 = vector.shape_cast %128 : vector<1x96x224xf32> to vector<96x224xf32>
    %cst_136 = arith.constant dense<0.000000e+00> : vector<56x224xf32>
    %130 = tpu.matmul %124, %129, %cst_136 {dimension_numbers = #tpu.dot_dimension_numbers<[1], [0], [0], [1], [0, 0, 1, 1], [], []>} : vector<56x96xf32>, vector<96x224xf32>, vector<56x224xf32> -> vector<56x224xf32>
    %131 = arith.addf %121, %127 : vector<56x224xf32>
    %132 = arith.addf %122, %130 : vector<56x224xf32>
    %c5_137 = arith.constant 5 : index
    %c0_138 = arith.constant 0 : index
    %c0_139 = arith.constant 0 : index
    %133 = vector.load %arg1[%c5_137, %c0_138, %c0_139] : memref<8x56x96xf32, #tpu.memory_space<vmem>>, vector<1x56x96xf32>
    %134 = vector.shape_cast %133 : vector<1x56x96xf32> to vector<56x96xf32>
    %c3_140 = arith.constant 3 : index
    %c0_141 = arith.constant 0 : index
    %c0_142 = arith.constant 0 : index
    %135 = vector.load %arg2[%c3_140, %c0_141, %c0_142] : memref<10x96x224xf32, #tpu.memory_space<vmem>>, vector<1x96x224xf32>
    %136 = vector.shape_cast %135 : vector<1x96x224xf32> to vector<96x224xf32>
    %cst_143 = arith.constant dense<0.000000e+00> : vector<56x224xf32>
    %137 = tpu.matmul %134, %136, %cst_143 {dimension_numbers = #tpu.dot_dimension_numbers<[1], [0], [0], [1], [0, 0, 1, 1], [], []>} : vector<56x96xf32>, vector<96x224xf32>, vector<56x224xf32> -> vector<56x224xf32>
    %c8_144 = arith.constant 8 : index
    %c0_145 = arith.constant 0 : index
    %c0_146 = arith.constant 0 : index
    %138 = vector.load %arg2[%c8_144, %c0_145, %c0_146] : memref<10x96x224xf32, #tpu.memory_space<vmem>>, vector<1x96x224xf32>
    %139 = vector.shape_cast %138 : vector<1x96x224xf32> to vector<96x224xf32>
    %cst_147 = arith.constant dense<0.000000e+00> : vector<56x224xf32>
    %140 = tpu.matmul %134, %139, %cst_147 {dimension_numbers = #tpu.dot_dimension_numbers<[1], [0], [0], [1], [0, 0, 1, 1], [], []>} : vector<56x96xf32>, vector<96x224xf32>, vector<56x224xf32> -> vector<56x224xf32>
    %141 = arith.addf %131, %137 : vector<56x224xf32>
    %142 = arith.addf %132, %140 : vector<56x224xf32>
    %c6_148 = arith.constant 6 : index
    %c0_149 = arith.constant 0 : index
    %c0_150 = arith.constant 0 : index
    %143 = vector.load %arg1[%c6_148, %c0_149, %c0_150] : memref<8x56x96xf32, #tpu.memory_space<vmem>>, vector<1x56x96xf32>
    %144 = vector.shape_cast %143 : vector<1x56x96xf32> to vector<56x96xf32>
    %c4_151 = arith.constant 4 : index
    %c0_152 = arith.constant 0 : index
    %c0_153 = arith.constant 0 : index
    %145 = vector.load %arg2[%c4_151, %c0_152, %c0_153] : memref<10x96x224xf32, #tpu.memory_space<vmem>>, vector<1x96x224xf32>
    %146 = vector.shape_cast %145 : vector<1x96x224xf32> to vector<96x224xf32>
    %cst_154 = arith.constant dense<0.000000e+00> : vector<56x224xf32>
    %147 = tpu.matmul %144, %146, %cst_154 {dimension_numbers = #tpu.dot_dimension_numbers<[1], [0], [0], [1], [0, 0, 1, 1], [], []>} : vector<56x96xf32>, vector<96x224xf32>, vector<56x224xf32> -> vector<56x224xf32>
    %c9_155 = arith.constant 9 : index
    %c0_156 = arith.constant 0 : index
    %c0_157 = arith.constant 0 : index
    %148 = vector.load %arg2[%c9_155, %c0_156, %c0_157] : memref<10x96x224xf32, #tpu.memory_space<vmem>>, vector<1x96x224xf32>
    %149 = vector.shape_cast %148 : vector<1x96x224xf32> to vector<96x224xf32>
    %cst_158 = arith.constant dense<0.000000e+00> : vector<56x224xf32>
    %150 = tpu.matmul %144, %149, %cst_158 {dimension_numbers = #tpu.dot_dimension_numbers<[1], [0], [0], [1], [0, 0, 1, 1], [], []>} : vector<56x96xf32>, vector<96x224xf32>, vector<56x224xf32> -> vector<56x224xf32>
    %151 = arith.addf %141, %147 : vector<56x224xf32>
    %152 = arith.addf %142, %150 : vector<56x224xf32>
    %153 = arith.maximumf %151, %152 : vector<56x224xf32>
    %c3_159 = arith.constant 3 : index
    %c0_160 = arith.constant 0 : index
    %c0_161 = arith.constant 0 : index
    %154 = vector.load %arg1[%c3_159, %c0_160, %c0_161] : memref<8x56x96xf32, #tpu.memory_space<vmem>>, vector<1x56x96xf32>
    %155 = vector.shape_cast %154 : vector<1x56x96xf32> to vector<56x96xf32>
    %c0_162 = arith.constant 0 : index
    %c0_163 = arith.constant 0 : index
    %c0_164 = arith.constant 0 : index
    %156 = vector.load %arg2[%c0_162, %c0_163, %c0_164] : memref<10x96x224xf32, #tpu.memory_space<vmem>>, vector<1x96x224xf32>
    %157 = vector.shape_cast %156 : vector<1x96x224xf32> to vector<96x224xf32>
    %cst_165 = arith.constant dense<0.000000e+00> : vector<56x224xf32>
    %158 = tpu.matmul %155, %157, %cst_165 {dimension_numbers = #tpu.dot_dimension_numbers<[1], [0], [0], [1], [0, 0, 1, 1], [], []>} : vector<56x96xf32>, vector<96x224xf32>, vector<56x224xf32> -> vector<56x224xf32>
    %c5_166 = arith.constant 5 : index
    %c0_167 = arith.constant 0 : index
    %c0_168 = arith.constant 0 : index
    %159 = vector.load %arg2[%c5_166, %c0_167, %c0_168] : memref<10x96x224xf32, #tpu.memory_space<vmem>>, vector<1x96x224xf32>
    %160 = vector.shape_cast %159 : vector<1x96x224xf32> to vector<96x224xf32>
    %cst_169 = arith.constant dense<0.000000e+00> : vector<56x224xf32>
    %161 = tpu.matmul %155, %160, %cst_169 {dimension_numbers = #tpu.dot_dimension_numbers<[1], [0], [0], [1], [0, 0, 1, 1], [], []>} : vector<56x96xf32>, vector<96x224xf32>, vector<56x224xf32> -> vector<56x224xf32>
    %c4_170 = arith.constant 4 : index
    %c0_171 = arith.constant 0 : index
    %c0_172 = arith.constant 0 : index
    %162 = vector.load %arg1[%c4_170, %c0_171, %c0_172] : memref<8x56x96xf32, #tpu.memory_space<vmem>>, vector<1x56x96xf32>
    %163 = vector.shape_cast %162 : vector<1x56x96xf32> to vector<56x96xf32>
    %c1_173 = arith.constant 1 : index
    %c0_174 = arith.constant 0 : index
    %c0_175 = arith.constant 0 : index
    %164 = vector.load %arg2[%c1_173, %c0_174, %c0_175] : memref<10x96x224xf32, #tpu.memory_space<vmem>>, vector<1x96x224xf32>
    %165 = vector.shape_cast %164 : vector<1x96x224xf32> to vector<96x224xf32>
    %cst_176 = arith.constant dense<0.000000e+00> : vector<56x224xf32>
    %166 = tpu.matmul %163, %165, %cst_176 {dimension_numbers = #tpu.dot_dimension_numbers<[1], [0], [0], [1], [0, 0, 1, 1], [], []>} : vector<56x96xf32>, vector<96x224xf32>, vector<56x224xf32> -> vector<56x224xf32>
    %c6_177 = arith.constant 6 : index
    %c0_178 = arith.constant 0 : index
    %c0_179 = arith.constant 0 : index
    %167 = vector.load %arg2[%c6_177, %c0_178, %c0_179] : memref<10x96x224xf32, #tpu.memory_space<vmem>>, vector<1x96x224xf32>
    %168 = vector.shape_cast %167 : vector<1x96x224xf32> to vector<96x224xf32>
    %cst_180 = arith.constant dense<0.000000e+00> : vector<56x224xf32>
    %169 = tpu.matmul %163, %168, %cst_180 {dimension_numbers = #tpu.dot_dimension_numbers<[1], [0], [0], [1], [0, 0, 1, 1], [], []>} : vector<56x96xf32>, vector<96x224xf32>, vector<56x224xf32> -> vector<56x224xf32>
    %170 = arith.addf %158, %166 : vector<56x224xf32>
    %171 = arith.addf %161, %169 : vector<56x224xf32>
    %c5_181 = arith.constant 5 : index
    %c0_182 = arith.constant 0 : index
    %c0_183 = arith.constant 0 : index
    %172 = vector.load %arg1[%c5_181, %c0_182, %c0_183] : memref<8x56x96xf32, #tpu.memory_space<vmem>>, vector<1x56x96xf32>
    %173 = vector.shape_cast %172 : vector<1x56x96xf32> to vector<56x96xf32>
    %c2_184 = arith.constant 2 : index
    %c0_185 = arith.constant 0 : index
    %c0_186 = arith.constant 0 : index
    %174 = vector.load %arg2[%c2_184, %c0_185, %c0_186] : memref<10x96x224xf32, #tpu.memory_space<vmem>>, vector<1x96x224xf32>
    %175 = vector.shape_cast %174 : vector<1x96x224xf32> to vector<96x224xf32>
    %cst_187 = arith.constant dense<0.000000e+00> : vector<56x224xf32>
    %176 = tpu.matmul %173, %175, %cst_187 {dimension_numbers = #tpu.dot_dimension_numbers<[1], [0], [0], [1], [0, 0, 1, 1], [], []>} : vector<56x96xf32>, vector<96x224xf32>, vector<56x224xf32> -> vector<56x224xf32>
    %c7_188 = arith.constant 7 : index
    %c0_189 = arith.constant 0 : index
    %c0_190 = arith.constant 0 : index
    %177 = vector.load %arg2[%c7_188, %c0_189, %c0_190] : memref<10x96x224xf32, #tpu.memory_space<vmem>>, vector<1x96x224xf32>
    %178 = vector.shape_cast %177 : vector<1x96x224xf32> to vector<96x224xf32>
    %cst_191 = arith.constant dense<0.000000e+00> : vector<56x224xf32>
    %179 = tpu.matmul %173, %178, %cst_191 {dimension_numbers = #tpu.dot_dimension_numbers<[1], [0], [0], [1], [0, 0, 1, 1], [], []>} : vector<56x96xf32>, vector<96x224xf32>, vector<56x224xf32> -> vector<56x224xf32>
    %180 = arith.addf %170, %176 : vector<56x224xf32>
    %181 = arith.addf %171, %179 : vector<56x224xf32>
    %c6_192 = arith.constant 6 : index
    %c0_193 = arith.constant 0 : index
    %c0_194 = arith.constant 0 : index
    %182 = vector.load %arg1[%c6_192, %c0_193, %c0_194] : memref<8x56x96xf32, #tpu.memory_space<vmem>>, vector<1x56x96xf32>
    %183 = vector.shape_cast %182 : vector<1x56x96xf32> to vector<56x96xf32>
    %c3_195 = arith.constant 3 : index
    %c0_196 = arith.constant 0 : index
    %c0_197 = arith.constant 0 : index
    %184 = vector.load %arg2[%c3_195, %c0_196, %c0_197] : memref<10x96x224xf32, #tpu.memory_space<vmem>>, vector<1x96x224xf32>
    %185 = vector.shape_cast %184 : vector<1x96x224xf32> to vector<96x224xf32>
    %cst_198 = arith.constant dense<0.000000e+00> : vector<56x224xf32>
    %186 = tpu.matmul %183, %185, %cst_198 {dimension_numbers = #tpu.dot_dimension_numbers<[1], [0], [0], [1], [0, 0, 1, 1], [], []>} : vector<56x96xf32>, vector<96x224xf32>, vector<56x224xf32> -> vector<56x224xf32>
    %c8_199 = arith.constant 8 : index
    %c0_200 = arith.constant 0 : index
    %c0_201 = arith.constant 0 : index
    %187 = vector.load %arg2[%c8_199, %c0_200, %c0_201] : memref<10x96x224xf32, #tpu.memory_space<vmem>>, vector<1x96x224xf32>
    %188 = vector.shape_cast %187 : vector<1x96x224xf32> to vector<96x224xf32>
    %cst_202 = arith.constant dense<0.000000e+00> : vector<56x224xf32>
    %189 = tpu.matmul %183, %188, %cst_202 {dimension_numbers = #tpu.dot_dimension_numbers<[1], [0], [0], [1], [0, 0, 1, 1], [], []>} : vector<56x96xf32>, vector<96x224xf32>, vector<56x224xf32> -> vector<56x224xf32>
    %190 = arith.addf %180, %186 : vector<56x224xf32>
    %191 = arith.addf %181, %189 : vector<56x224xf32>
    %c7_203 = arith.constant 7 : index
    %c0_204 = arith.constant 0 : index
    %c0_205 = arith.constant 0 : index
    %192 = vector.load %arg1[%c7_203, %c0_204, %c0_205] : memref<8x56x96xf32, #tpu.memory_space<vmem>>, vector<1x56x96xf32>
    %193 = vector.shape_cast %192 : vector<1x56x96xf32> to vector<56x96xf32>
    %c4_206 = arith.constant 4 : index
    %c0_207 = arith.constant 0 : index
    %c0_208 = arith.constant 0 : index
    %194 = vector.load %arg2[%c4_206, %c0_207, %c0_208] : memref<10x96x224xf32, #tpu.memory_space<vmem>>, vector<1x96x224xf32>
    %195 = vector.shape_cast %194 : vector<1x96x224xf32> to vector<96x224xf32>
    %cst_209 = arith.constant dense<0.000000e+00> : vector<56x224xf32>
    %196 = tpu.matmul %193, %195, %cst_209 {dimension_numbers = #tpu.dot_dimension_numbers<[1], [0], [0], [1], [0, 0, 1, 1], [], []>} : vector<56x96xf32>, vector<96x224xf32>, vector<56x224xf32> -> vector<56x224xf32>
    %c9_210 = arith.constant 9 : index
    %c0_211 = arith.constant 0 : index
    %c0_212 = arith.constant 0 : index
    %197 = vector.load %arg2[%c9_210, %c0_211, %c0_212] : memref<10x96x224xf32, #tpu.memory_space<vmem>>, vector<1x96x224xf32>
    %198 = vector.shape_cast %197 : vector<1x96x224xf32> to vector<96x224xf32>
    %cst_213 = arith.constant dense<0.000000e+00> : vector<56x224xf32>
    %199 = tpu.matmul %193, %198, %cst_213 {dimension_numbers = #tpu.dot_dimension_numbers<[1], [0], [0], [1], [0, 0, 1, 1], [], []>} : vector<56x96xf32>, vector<96x224xf32>, vector<56x224xf32> -> vector<56x224xf32>
    %200 = arith.addf %190, %196 : vector<56x224xf32>
    %201 = arith.addf %191, %199 : vector<56x224xf32>
    %202 = arith.maximumf %200, %201 : vector<56x224xf32>
    %203 = arith.maximumf %153, %202 : vector<56x224xf32>
    %c0_214 = arith.constant 0 : index
    %c0_215 = arith.constant 0 : index
    %204 = vector.load %arg3[%c0_214, %c0_215] : memref<1x224xf32, #tpu.memory_space<vmem>>, vector<1x224xf32>
    %205 = vector.broadcast %204 : vector<1x224xf32> to vector<56x224xf32>
    %206 = arith.addf %203, %205 : vector<56x224xf32>
    %cst_216 = arith.constant 0.000000e+00 : f32
    %207 = vector.broadcast %cst_216 : f32 to vector<56x224xf32>
    %208 = arith.maximumf %206, %207 : vector<56x224xf32>
    %c0_217 = arith.constant 0 : index
    %c0_218 = arith.constant 0 : index
    %209 = vector.load %arg14[%c0_217, %c0_218] : memref<56x224xf32, #tpu.memory_space<vmem>>, vector<56x224xf32>
    tpu.vector_store %arg14[%c0_217, %c0_218], %208 {strides = array<i32>} : memref<56x224xf32, #tpu.memory_space<vmem>>, vector<56x224xf32>,
    %c0_219 = arith.constant 0 : index
    %c0_220 = arith.constant 0 : index
    %210 = vector.load %arg13[%c0_219, %c0_220] : memref<56x224xf32, #tpu.memory_space<vmem>>, vector<40x224xf32>
    %c0_221 = arith.constant 0 : index
    %c0_222 = arith.constant 0 : index
    %c0_223 = arith.constant 0 : index
    %211 = vector.load %arg4[%c0_221, %c0_222, %c0_223] : memref<10x224x160xf32, #tpu.memory_space<vmem>>, vector<1x224x160xf32>
    %212 = vector.shape_cast %211 : vector<1x224x160xf32> to vector<224x160xf32>
    %cst_224 = arith.constant dense<0.000000e+00> : vector<40x160xf32>
    %213 = tpu.matmul %210, %212, %cst_224 {dimension_numbers = #tpu.dot_dimension_numbers<[1], [0], [0], [1], [0, 0, 1, 1], [], []>} : vector<40x224xf32>, vector<224x160xf32>, vector<40x160xf32> -> vector<40x160xf32>
    %c5_225 = arith.constant 5 : index
    %c0_226 = arith.constant 0 : index
    %c0_227 = arith.constant 0 : index
    %214 = vector.load %arg4[%c5_225, %c0_226, %c0_227] : memref<10x224x160xf32, #tpu.memory_space<vmem>>, vector<1x224x160xf32>
    %215 = vector.shape_cast %214 : vector<1x224x160xf32> to vector<224x160xf32>
    %cst_228 = arith.constant dense<0.000000e+00> : vector<40x160xf32>
    %216 = tpu.matmul %210, %215, %cst_228 {dimension_numbers = #tpu.dot_dimension_numbers<[1], [0], [0], [1], [0, 0, 1, 1], [], []>} : vector<40x224xf32>, vector<224x160xf32>, vector<40x160xf32> -> vector<40x160xf32>
    %c0_229 = arith.constant 0 : index
    %c0_230 = arith.constant 0 : index
    %217 = vector.load %arg14[%c0_229, %c0_230] : memref<56x224xf32, #tpu.memory_space<vmem>>, vector<40x224xf32>
    %c1_231 = arith.constant 1 : index
    %c0_232 = arith.constant 0 : index
    %c0_233 = arith.constant 0 : index
    %218 = vector.load %arg4[%c1_231, %c0_232, %c0_233] : memref<10x224x160xf32, #tpu.memory_space<vmem>>, vector<1x224x160xf32>
    %219 = vector.shape_cast %218 : vector<1x224x160xf32> to vector<224x160xf32>
    %cst_234 = arith.constant dense<0.000000e+00> : vector<40x160xf32>
    %220 = tpu.matmul %217, %219, %cst_234 {dimension_numbers = #tpu.dot_dimension_numbers<[1], [0], [0], [1], [0, 0, 1, 1], [], []>} : vector<40x224xf32>, vector<224x160xf32>, vector<40x160xf32> -> vector<40x160xf32>
    %c6_235 = arith.constant 6 : index
    %c0_236 = arith.constant 0 : index
    %c0_237 = arith.constant 0 : index
    %221 = vector.load %arg4[%c6_235, %c0_236, %c0_237] : memref<10x224x160xf32, #tpu.memory_space<vmem>>, vector<1x224x160xf32>
    %222 = vector.shape_cast %221 : vector<1x224x160xf32> to vector<224x160xf32>
    %cst_238 = arith.constant dense<0.000000e+00> : vector<40x160xf32>
    %223 = tpu.matmul %217, %222, %cst_238 {dimension_numbers = #tpu.dot_dimension_numbers<[1], [0], [0], [1], [0, 0, 1, 1], [], []>} : vector<40x224xf32>, vector<224x160xf32>, vector<40x160xf32> -> vector<40x160xf32>
    %224 = arith.addf %213, %220 : vector<40x160xf32>
    %225 = arith.addf %216, %223 : vector<40x160xf32>
    %c8_239 = arith.constant 8 : index
    %c0_240 = arith.constant 0 : index
    %226 = vector.load %arg13[%c8_239, %c0_240] : memref<56x224xf32, #tpu.memory_space<vmem>>, vector<40x224xf32>
    %c2_241 = arith.constant 2 : index
    %c0_242 = arith.constant 0 : index
    %c0_243 = arith.constant 0 : index
    %227 = vector.load %arg4[%c2_241, %c0_242, %c0_243] : memref<10x224x160xf32, #tpu.memory_space<vmem>>, vector<1x224x160xf32>
    %228 = vector.shape_cast %227 : vector<1x224x160xf32> to vector<224x160xf32>
    %cst_244 = arith.constant dense<0.000000e+00> : vector<40x160xf32>
    %229 = tpu.matmul %226, %228, %cst_244 {dimension_numbers = #tpu.dot_dimension_numbers<[1], [0], [0], [1], [0, 0, 1, 1], [], []>} : vector<40x224xf32>, vector<224x160xf32>, vector<40x160xf32> -> vector<40x160xf32>
    %c7_245 = arith.constant 7 : index
    %c0_246 = arith.constant 0 : index
    %c0_247 = arith.constant 0 : index
    %230 = vector.load %arg4[%c7_245, %c0_246, %c0_247] : memref<10x224x160xf32, #tpu.memory_space<vmem>>, vector<1x224x160xf32>
    %231 = vector.shape_cast %230 : vector<1x224x160xf32> to vector<224x160xf32>
    %cst_248 = arith.constant dense<0.000000e+00> : vector<40x160xf32>
    %232 = tpu.matmul %226, %231, %cst_248 {dimension_numbers = #tpu.dot_dimension_numbers<[1], [0], [0], [1], [0, 0, 1, 1], [], []>} : vector<40x224xf32>, vector<224x160xf32>, vector<40x160xf32> -> vector<40x160xf32>
    %233 = arith.addf %224, %229 : vector<40x160xf32>
    %234 = arith.addf %225, %232 : vector<40x160xf32>
    %c8_249 = arith.constant 8 : index
    %c0_250 = arith.constant 0 : index
    %235 = vector.load %arg14[%c8_249, %c0_250] : memref<56x224xf32, #tpu.memory_space<vmem>>, vector<40x224xf32>
    %c3_251 = arith.constant 3 : index
    %c0_252 = arith.constant 0 : index
    %c0_253 = arith.constant 0 : index
    %236 = vector.load %arg4[%c3_251, %c0_252, %c0_253] : memref<10x224x160xf32, #tpu.memory_space<vmem>>, vector<1x224x160xf32>
    %237 = vector.shape_cast %236 : vector<1x224x160xf32> to vector<224x160xf32>
    %cst_254 = arith.constant dense<0.000000e+00> : vector<40x160xf32>
    %238 = tpu.matmul %235, %237, %cst_254 {dimension_numbers = #tpu.dot_dimension_numbers<[1], [0], [0], [1], [0, 0, 1, 1], [], []>} : vector<40x224xf32>, vector<224x160xf32>, vector<40x160xf32> -> vector<40x160xf32>
    %c8_255 = arith.constant 8 : index
    %c0_256 = arith.constant 0 : index
    %c0_257 = arith.constant 0 : index
    %239 = vector.load %arg4[%c8_255, %c0_256, %c0_257] : memref<10x224x160xf32, #tpu.memory_space<vmem>>, vector<1x224x160xf32>
    %240 = vector.shape_cast %239 : vector<1x224x160xf32> to vector<224x160xf32>
    %cst_258 = arith.constant dense<0.000000e+00> : vector<40x160xf32>
    %241 = tpu.matmul %235, %240, %cst_258 {dimension_numbers = #tpu.dot_dimension_numbers<[1], [0], [0], [1], [0, 0, 1, 1], [], []>} : vector<40x224xf32>, vector<224x160xf32>, vector<40x160xf32> -> vector<40x160xf32>
    %242 = arith.addf %233, %238 : vector<40x160xf32>
    %243 = arith.addf %234, %241 : vector<40x160xf32>
    %c16 = arith.constant 16 : index
    %c0_259 = arith.constant 0 : index
    %244 = vector.load %arg13[%c16, %c0_259] : memref<56x224xf32, #tpu.memory_space<vmem>>, vector<40x224xf32>
    %c4_260 = arith.constant 4 : index
    %c0_261 = arith.constant 0 : index
    %c0_262 = arith.constant 0 : index
    %245 = vector.load %arg4[%c4_260, %c0_261, %c0_262] : memref<10x224x160xf32, #tpu.memory_space<vmem>>, vector<1x224x160xf32>
    %246 = vector.shape_cast %245 : vector<1x224x160xf32> to vector<224x160xf32>
    %cst_263 = arith.constant dense<0.000000e+00> : vector<40x160xf32>
    %247 = tpu.matmul %244, %246, %cst_263 {dimension_numbers = #tpu.dot_dimension_numbers<[1], [0], [0], [1], [0, 0, 1, 1], [], []>} : vector<40x224xf32>, vector<224x160xf32>, vector<40x160xf32> -> vector<40x160xf32>
    %c9_264 = arith.constant 9 : index
    %c0_265 = arith.constant 0 : index
    %c0_266 = arith.constant 0 : index
    %248 = vector.load %arg4[%c9_264, %c0_265, %c0_266] : memref<10x224x160xf32, #tpu.memory_space<vmem>>, vector<1x224x160xf32>
    %249 = vector.shape_cast %248 : vector<1x224x160xf32> to vector<224x160xf32>
    %cst_267 = arith.constant dense<0.000000e+00> : vector<40x160xf32>
    %250 = tpu.matmul %244, %249, %cst_267 {dimension_numbers = #tpu.dot_dimension_numbers<[1], [0], [0], [1], [0, 0, 1, 1], [], []>} : vector<40x224xf32>, vector<224x160xf32>, vector<40x160xf32> -> vector<40x160xf32>
    %251 = arith.addf %242, %247 : vector<40x160xf32>
    %252 = arith.addf %243, %250 : vector<40x160xf32>
    %253 = arith.maximumf %251, %252 : vector<40x160xf32>
    %c0_268 = arith.constant 0 : index
    %c0_269 = arith.constant 0 : index
    %254 = vector.load %arg14[%c0_268, %c0_269] : memref<56x224xf32, #tpu.memory_space<vmem>>, vector<40x224xf32>
    %c0_270 = arith.constant 0 : index
    %c0_271 = arith.constant 0 : index
    %c0_272 = arith.constant 0 : index
    %255 = vector.load %arg4[%c0_270, %c0_271, %c0_272] : memref<10x224x160xf32, #tpu.memory_space<vmem>>, vector<1x224x160xf32>
    %256 = vector.shape_cast %255 : vector<1x224x160xf32> to vector<224x160xf32>
    %cst_273 = arith.constant dense<0.000000e+00> : vector<40x160xf32>
    %257 = tpu.matmul %254, %256, %cst_273 {dimension_numbers = #tpu.dot_dimension_numbers<[1], [0], [0], [1], [0, 0, 1, 1], [], []>} : vector<40x224xf32>, vector<224x160xf32>, vector<40x160xf32> -> vector<40x160xf32>
    %c5_274 = arith.constant 5 : index
    %c0_275 = arith.constant 0 : index
    %c0_276 = arith.constant 0 : index
    %258 = vector.load %arg4[%c5_274, %c0_275, %c0_276] : memref<10x224x160xf32, #tpu.memory_space<vmem>>, vector<1x224x160xf32>
    %259 = vector.shape_cast %258 : vector<1x224x160xf32> to vector<224x160xf32>
    %cst_277 = arith.constant dense<0.000000e+00> : vector<40x160xf32>
    %260 = tpu.matmul %254, %259, %cst_277 {dimension_numbers = #tpu.dot_dimension_numbers<[1], [0], [0], [1], [0, 0, 1, 1], [], []>} : vector<40x224xf32>, vector<224x160xf32>, vector<40x160xf32> -> vector<40x160xf32>
    %c8_278 = arith.constant 8 : index
    %c0_279 = arith.constant 0 : index
    %261 = vector.load %arg13[%c8_278, %c0_279] : memref<56x224xf32, #tpu.memory_space<vmem>>, vector<40x224xf32>
    %c1_280 = arith.constant 1 : index
    %c0_281 = arith.constant 0 : index
    %c0_282 = arith.constant 0 : index
    %262 = vector.load %arg4[%c1_280, %c0_281, %c0_282] : memref<10x224x160xf32, #tpu.memory_space<vmem>>, vector<1x224x160xf32>
    %263 = vector.shape_cast %262 : vector<1x224x160xf32> to vector<224x160xf32>
    %cst_283 = arith.constant dense<0.000000e+00> : vector<40x160xf32>
    %264 = tpu.matmul %261, %263, %cst_283 {dimension_numbers = #tpu.dot_dimension_numbers<[1], [0], [0], [1], [0, 0, 1, 1], [], []>} : vector<40x224xf32>, vector<224x160xf32>, vector<40x160xf32> -> vector<40x160xf32>
    %c6_284 = arith.constant 6 : index
    %c0_285 = arith.constant 0 : index
    %c0_286 = arith.constant 0 : index
    %265 = vector.load %arg4[%c6_284, %c0_285, %c0_286] : memref<10x224x160xf32, #tpu.memory_space<vmem>>, vector<1x224x160xf32>
    %266 = vector.shape_cast %265 : vector<1x224x160xf32> to vector<224x160xf32>
    %cst_287 = arith.constant dense<0.000000e+00> : vector<40x160xf32>
    %267 = tpu.matmul %261, %266, %cst_287 {dimension_numbers = #tpu.dot_dimension_numbers<[1], [0], [0], [1], [0, 0, 1, 1], [], []>} : vector<40x224xf32>, vector<224x160xf32>, vector<40x160xf32> -> vector<40x160xf32>
    %268 = arith.addf %257, %264 : vector<40x160xf32>
    %269 = arith.addf %260, %267 : vector<40x160xf32>
    %c8_288 = arith.constant 8 : index
    %c0_289 = arith.constant 0 : index
    %270 = vector.load %arg14[%c8_288, %c0_289] : memref<56x224xf32, #tpu.memory_space<vmem>>, vector<40x224xf32>
    %c2_290 = arith.constant 2 : index
    %c0_291 = arith.constant 0 : index
    %c0_292 = arith.constant 0 : index
    %271 = vector.load %arg4[%c2_290, %c0_291, %c0_292] : memref<10x224x160xf32, #tpu.memory_space<vmem>>, vector<1x224x160xf32>
    %272 = vector.shape_cast %271 : vector<1x224x160xf32> to vector<224x160xf32>
    %cst_293 = arith.constant dense<0.000000e+00> : vector<40x160xf32>
    %273 = tpu.matmul %270, %272, %cst_293 {dimension_numbers = #tpu.dot_dimension_numbers<[1], [0], [0], [1], [0, 0, 1, 1], [], []>} : vector<40x224xf32>, vector<224x160xf32>, vector<40x160xf32> -> vector<40x160xf32>
    %c7_294 = arith.constant 7 : index
    %c0_295 = arith.constant 0 : index
    %c0_296 = arith.constant 0 : index
    %274 = vector.load %arg4[%c7_294, %c0_295, %c0_296] : memref<10x224x160xf32, #tpu.memory_space<vmem>>, vector<1x224x160xf32>
    %275 = vector.shape_cast %274 : vector<1x224x160xf32> to vector<224x160xf32>
    %cst_297 = arith.constant dense<0.000000e+00> : vector<40x160xf32>
    %276 = tpu.matmul %270, %275, %cst_297 {dimension_numbers = #tpu.dot_dimension_numbers<[1], [0], [0], [1], [0, 0, 1, 1], [], []>} : vector<40x224xf32>, vector<224x160xf32>, vector<40x160xf32> -> vector<40x160xf32>
    %277 = arith.addf %268, %273 : vector<40x160xf32>
    %278 = arith.addf %269, %276 : vector<40x160xf32>
    %c16_298 = arith.constant 16 : index
    %c0_299 = arith.constant 0 : index
    %279 = vector.load %arg13[%c16_298, %c0_299] : memref<56x224xf32, #tpu.memory_space<vmem>>, vector<40x224xf32>
    %c3_300 = arith.constant 3 : index
    %c0_301 = arith.constant 0 : index
    %c0_302 = arith.constant 0 : index
    %280 = vector.load %arg4[%c3_300, %c0_301, %c0_302] : memref<10x224x160xf32, #tpu.memory_space<vmem>>, vector<1x224x160xf32>
    %281 = vector.shape_cast %280 : vector<1x224x160xf32> to vector<224x160xf32>
    %cst_303 = arith.constant dense<0.000000e+00> : vector<40x160xf32>
    %282 = tpu.matmul %279, %281, %cst_303 {dimension_numbers = #tpu.dot_dimension_numbers<[1], [0], [0], [1], [0, 0, 1, 1], [], []>} : vector<40x224xf32>, vector<224x160xf32>, vector<40x160xf32> -> vector<40x160xf32>
    %c8_304 = arith.constant 8 : index
    %c0_305 = arith.constant 0 : index
    %c0_306 = arith.constant 0 : index
    %283 = vector.load %arg4[%c8_304, %c0_305, %c0_306] : memref<10x224x160xf32, #tpu.memory_space<vmem>>, vector<1x224x160xf32>
    %284 = vector.shape_cast %283 : vector<1x224x160xf32> to vector<224x160xf32>
    %cst_307 = arith.constant dense<0.000000e+00> : vector<40x160xf32>
    %285 = tpu.matmul %279, %284, %cst_307 {dimension_numbers = #tpu.dot_dimension_numbers<[1], [0], [0], [1], [0, 0, 1, 1], [], []>} : vector<40x224xf32>, vector<224x160xf32>, vector<40x160xf32> -> vector<40x160xf32>
    %286 = arith.addf %277, %282 : vector<40x160xf32>
    %287 = arith.addf %278, %285 : vector<40x160xf32>
    %c16_308 = arith.constant 16 : index
    %c0_309 = arith.constant 0 : index
    %288 = vector.load %arg14[%c16_308, %c0_309] : memref<56x224xf32, #tpu.memory_space<vmem>>, vector<40x224xf32>
    %c4_310 = arith.constant 4 : index
    %c0_311 = arith.constant 0 : index
    %c0_312 = arith.constant 0 : index
    %289 = vector.load %arg4[%c4_310, %c0_311, %c0_312] : memref<10x224x160xf32, #tpu.memory_space<vmem>>, vector<1x224x160xf32>
    %290 = vector.shape_cast %289 : vector<1x224x160xf32> to vector<224x160xf32>
    %cst_313 = arith.constant dense<0.000000e+00> : vector<40x160xf32>
    %291 = tpu.matmul %288, %290, %cst_313 {dimension_numbers = #tpu.dot_dimension_numbers<[1], [0], [0], [1], [0, 0, 1, 1], [], []>} : vector<40x224xf32>, vector<224x160xf32>, vector<40x160xf32> -> vector<40x160xf32>
    %c9_314 = arith.constant 9 : index
    %c0_315 = arith.constant 0 : index
    %c0_316 = arith.constant 0 : index
    %292 = vector.load %arg4[%c9_314, %c0_315, %c0_316] : memref<10x224x160xf32, #tpu.memory_space<vmem>>, vector<1x224x160xf32>
    %293 = vector.shape_cast %292 : vector<1x224x160xf32> to vector<224x160xf32>
    %cst_317 = arith.constant dense<0.000000e+00> : vector<40x160xf32>
    %294 = tpu.matmul %288, %293, %cst_317 {dimension_numbers = #tpu.dot_dimension_numbers<[1], [0], [0], [1], [0, 0, 1, 1], [], []>} : vector<40x224xf32>, vector<224x160xf32>, vector<40x160xf32> -> vector<40x160xf32>
    %295 = arith.addf %286, %291 : vector<40x160xf32>
    %296 = arith.addf %287, %294 : vector<40x160xf32>
    %297 = arith.maximumf %295, %296 : vector<40x160xf32>
    %298 = arith.maximumf %253, %297 : vector<40x160xf32>
    %c0_318 = arith.constant 0 : index
    %c0_319 = arith.constant 0 : index
    %299 = vector.load %arg5[%c0_318, %c0_319] : memref<1x160xf32, #tpu.memory_space<vmem>>, vector<1x160xf32>
    %300 = vector.broadcast %299 : vector<1x160xf32> to vector<40x160xf32>
    %301 = arith.addf %298, %300 : vector<40x160xf32>
    %cst_320 = arith.constant 0.000000e+00 : f32
    %302 = vector.broadcast %cst_320 : f32 to vector<40x160xf32>
    %303 = arith.maximumf %301, %302 : vector<40x160xf32>
    %304 = vector.extract_strided_slice %303 {offsets = [0, 0], sizes = [8, 160], strides = [1, 1]} : vector<40x160xf32> to vector<8x160xf32>
    %c0_321 = arith.constant 0 : index
    %c0_322 = arith.constant 0 : index
    %c0_323 = arith.constant 0 : index
    %305 = vector.load %arg6[%c0_321, %c0_322, %c0_323] : memref<5x160x120xf32, #tpu.memory_space<vmem>>, vector<1x160x120xf32>
    %306 = vector.shape_cast %305 : vector<1x160x120xf32> to vector<160x120xf32>
    %cst_324 = arith.constant dense<0.000000e+00> : vector<8x120xf32>
    %307 = tpu.matmul %304, %306, %cst_324 {dimension_numbers = #tpu.dot_dimension_numbers<[1], [0], [0], [1], [0, 0, 1, 1], [], []>} : vector<8x160xf32>, vector<160x120xf32>, vector<8x120xf32> -> vector<8x120xf32>
    %308 = vector.extract_strided_slice %303 {offsets = [8, 0], sizes = [8, 160], strides = [1, 1]} : vector<40x160xf32> to vector<8x160xf32>
    %c1_325 = arith.constant 1 : index
    %c0_326 = arith.constant 0 : index
    %c0_327 = arith.constant 0 : index
    %309 = vector.load %arg6[%c1_325, %c0_326, %c0_327] : memref<5x160x120xf32, #tpu.memory_space<vmem>>, vector<1x160x120xf32>
    %310 = vector.shape_cast %309 : vector<1x160x120xf32> to vector<160x120xf32>
    %cst_328 = arith.constant dense<0.000000e+00> : vector<8x120xf32>
    %311 = tpu.matmul %308, %310, %cst_328 {dimension_numbers = #tpu.dot_dimension_numbers<[1], [0], [0], [1], [0, 0, 1, 1], [], []>} : vector<8x160xf32>, vector<160x120xf32>, vector<8x120xf32> -> vector<8x120xf32>
    %312 = arith.addf %307, %311 : vector<8x120xf32>
    %313 = vector.extract_strided_slice %303 {offsets = [16, 0], sizes = [8, 160], strides = [1, 1]} : vector<40x160xf32> to vector<8x160xf32>
    %c2_329 = arith.constant 2 : index
    %c0_330 = arith.constant 0 : index
    %c0_331 = arith.constant 0 : index
    %314 = vector.load %arg6[%c2_329, %c0_330, %c0_331] : memref<5x160x120xf32, #tpu.memory_space<vmem>>, vector<1x160x120xf32>
    %315 = vector.shape_cast %314 : vector<1x160x120xf32> to vector<160x120xf32>
    %cst_332 = arith.constant dense<0.000000e+00> : vector<8x120xf32>
    %316 = tpu.matmul %313, %315, %cst_332 {dimension_numbers = #tpu.dot_dimension_numbers<[1], [0], [0], [1], [0, 0, 1, 1], [], []>} : vector<8x160xf32>, vector<160x120xf32>, vector<8x120xf32> -> vector<8x120xf32>
    %317 = arith.addf %312, %316 : vector<8x120xf32>
    %318 = vector.extract_strided_slice %303 {offsets = [24, 0], sizes = [8, 160], strides = [1, 1]} : vector<40x160xf32> to vector<8x160xf32>
    %c3_333 = arith.constant 3 : index
    %c0_334 = arith.constant 0 : index
    %c0_335 = arith.constant 0 : index
    %319 = vector.load %arg6[%c3_333, %c0_334, %c0_335] : memref<5x160x120xf32, #tpu.memory_space<vmem>>, vector<1x160x120xf32>
    %320 = vector.shape_cast %319 : vector<1x160x120xf32> to vector<160x120xf32>
    %cst_336 = arith.constant dense<0.000000e+00> : vector<8x120xf32>
    %321 = tpu.matmul %318, %320, %cst_336 {dimension_numbers = #tpu.dot_dimension_numbers<[1], [0], [0], [1], [0, 0, 1, 1], [], []>} : vector<8x160xf32>, vector<160x120xf32>, vector<8x120xf32> -> vector<8x120xf32>
    %322 = arith.addf %317, %321 : vector<8x120xf32>
    %323 = vector.extract_strided_slice %303 {offsets = [32, 0], sizes = [8, 160], strides = [1, 1]} : vector<40x160xf32> to vector<8x160xf32>
    %c4_337 = arith.constant 4 : index
    %c0_338 = arith.constant 0 : index
    %c0_339 = arith.constant 0 : index
    %324 = vector.load %arg6[%c4_337, %c0_338, %c0_339] : memref<5x160x120xf32, #tpu.memory_space<vmem>>, vector<1x160x120xf32>
    %325 = vector.shape_cast %324 : vector<1x160x120xf32> to vector<160x120xf32>
    %cst_340 = arith.constant dense<0.000000e+00> : vector<8x120xf32>
    %326 = tpu.matmul %323, %325, %cst_340 {dimension_numbers = #tpu.dot_dimension_numbers<[1], [0], [0], [1], [0, 0, 1, 1], [], []>} : vector<8x160xf32>, vector<160x120xf32>, vector<8x120xf32> -> vector<8x120xf32>
    %327 = arith.addf %322, %326 : vector<8x120xf32>
    %c0_341 = arith.constant 0 : index
    %c0_342 = arith.constant 0 : index
    %328 = vector.load %arg7[%c0_341, %c0_342] : memref<1x120xf32, #tpu.memory_space<vmem>>, vector<1x120xf32>
    %329 = vector.broadcast %328 : vector<1x120xf32> to vector<8x120xf32>
    %330 = arith.addf %327, %329 : vector<8x120xf32>
    %cst_343 = arith.constant 0.000000e+00 : f32
    %331 = vector.broadcast %cst_343 : f32 to vector<8x120xf32>
    %332 = arith.maximumf %330, %331 : vector<8x120xf32>
    %c0_344 = arith.constant 0 : index
    %c0_345 = arith.constant 0 : index
    %333 = vector.load %arg8[%c0_344, %c0_345] : memref<120x84xf32, #tpu.memory_space<vmem>>, vector<120x84xf32>
    %cst_346 = arith.constant dense<0.000000e+00> : vector<8x84xf32>
    %334 = tpu.matmul %332, %333, %cst_346 {dimension_numbers = #tpu.dot_dimension_numbers<[1], [0], [0], [1], [0, 0, 1, 1], [], []>} : vector<8x120xf32>, vector<120x84xf32>, vector<8x84xf32> -> vector<8x84xf32>
    %c0_347 = arith.constant 0 : index
    %c0_348 = arith.constant 0 : index
    %335 = vector.load %arg9[%c0_347, %c0_348] : memref<1x84xf32, #tpu.memory_space<vmem>>, vector<1x84xf32>
    %336 = vector.broadcast %335 : vector<1x84xf32> to vector<8x84xf32>
    %337 = arith.addf %334, %336 : vector<8x84xf32>
    %cst_349 = arith.constant 0.000000e+00 : f32
    %338 = vector.broadcast %cst_349 : f32 to vector<8x84xf32>
    %339 = arith.maximumf %337, %338 : vector<8x84xf32>
    %c0_350 = arith.constant 0 : index
    %c0_351 = arith.constant 0 : index
    %340 = vector.load %arg10[%c0_350, %c0_351] : memref<84x10xf32, #tpu.memory_space<vmem>>, vector<84x10xf32>
    %cst_352 = arith.constant dense<0.000000e+00> : vector<8x10xf32>
    %341 = tpu.matmul %339, %340, %cst_352 {dimension_numbers = #tpu.dot_dimension_numbers<[1], [0], [0], [1], [0, 0, 1, 1], [], []>} : vector<8x84xf32>, vector<84x10xf32>, vector<8x10xf32> -> vector<8x10xf32>
    %c0_353 = arith.constant 0 : index
    %c0_354 = arith.constant 0 : index
    %342 = vector.load %arg11[%c0_353, %c0_354] : memref<1x10xf32, #tpu.memory_space<vmem>>, vector<1x10xf32>
    %343 = vector.broadcast %342 : vector<1x10xf32> to vector<8x10xf32>
    %344 = arith.addf %341, %343 : vector<8x10xf32>
    %c0_355 = arith.constant 0 : index
    %c0_356 = arith.constant 0 : index
    %345 = vector.load %arg12[%c0_355, %c0_356] : memref<8x10xf32, #tpu.memory_space<vmem>>, vector<8x10xf32>
    tpu.vector_store %arg12[%c0_355, %c0_356], %344 {strides = array<i32>} : memref<8x10xf32, #tpu.memory_space<vmem>>, vector<8x10xf32>,
    return
  }
  func.func @transform_0(%arg0: i32) -> (i32, i32, i32) {
    %c0_i32 = arith.constant 0 : i32
    %c0_i32_0 = arith.constant 0 : i32
    %c0_i32_1 = arith.constant 0 : i32
    return %c0_i32, %arg0, %c0_i32_0 : i32, i32, i32
  }
  func.func @transform_1(%arg0: i32) -> (i32, i32, i32) {
    %c0_i32 = arith.constant 0 : i32
    %c0_i32_0 = arith.constant 0 : i32
    %c0_i32_1 = arith.constant 0 : i32
    %c0_i32_2 = arith.constant 0 : i32
    return %c0_i32, %c0_i32_0, %c0_i32_1 : i32, i32, i32
  }
  func.func @transform_2(%arg0: i32) -> (i32, i32) {
    %c0_i32 = arith.constant 0 : i32
    %c0_i32_0 = arith.constant 0 : i32
    %c0_i32_1 = arith.constant 0 : i32
    return %c0_i32, %c0_i32_0 : i32, i32
  }
  func.func @transform_3(%arg0: i32) -> (i32, i32, i32) {
    %c0_i32 = arith.constant 0 : i32
    %c0_i32_0 = arith.constant 0 : i32
    %c0_i32_1 = arith.constant 0 : i32
    %c0_i32_2 = arith.constant 0 : i32
    return %c0_i32, %c0_i32_0, %c0_i32_1 : i32, i32, i32
  }
  func.func @transform_4(%arg0: i32) -> (i32, i32) {
    %c0_i32 = arith.constant 0 : i32
    %c0_i32_0 = arith.constant 0 : i32
    %c0_i32_1 = arith.constant 0 : i32
    return %c0_i32, %c0_i32_0 : i32, i32
  }
  func.func @transform_5(%arg0: i32) -> (i32, i32, i32) {
    %c0_i32 = arith.constant 0 : i32
    %c0_i32_0 = arith.constant 0 : i32
    %c0_i32_1 = arith.constant 0 : i32
    %c0_i32_2 = arith.constant 0 : i32
    return %c0_i32, %c0_i32_0, %c0_i32_1 : i32, i32, i32
  }
  func.func @transform_6(%arg0: i32) -> (i32, i32) {
    %c0_i32 = arith.constant 0 : i32
    %c0_i32_0 = arith.constant 0 : i32
    %c0_i32_1 = arith.constant 0 : i32
    return %c0_i32, %c0_i32_0 : i32, i32
  }
  func.func @transform_7(%arg0: i32) -> (i32, i32) {
    %c0_i32 = arith.constant 0 : i32
    %c0_i32_0 = arith.constant 0 : i32
    %c0_i32_1 = arith.constant 0 : i32
    return %c0_i32, %c0_i32_0 : i32, i32
  }
  func.func @transform_8(%arg0: i32) -> (i32, i32) {
    %c0_i32 = arith.constant 0 : i32
    %c0_i32_0 = arith.constant 0 : i32
    %c0_i32_1 = arith.constant 0 : i32
    return %c0_i32, %c0_i32_0 : i32, i32
  }
  func.func @transform_9(%arg0: i32) -> (i32, i32) {
    %c0_i32 = arith.constant 0 : i32
    %c0_i32_0 = arith.constant 0 : i32
    %c0_i32_1 = arith.constant 0 : i32
    return %c0_i32, %c0_i32_0 : i32, i32
  }
  func.func @transform_10(%arg0: i32) -> (i32, i32) {
    %c0_i32 = arith.constant 0 : i32
    %c0_i32_0 = arith.constant 0 : i32
    %c0_i32_1 = arith.constant 0 : i32
    return %c0_i32, %c0_i32_0 : i32, i32
  }
  func.func @transform_11(%arg0: i32) -> (i32, i32) {
    %c0_i32 = arith.constant 0 : i32
    %c0_i32_0 = arith.constant 0 : i32
    return %arg0, %c0_i32 : i32, i32
  }
}

</mosaic_0001>

<llo_original>
// kernel: lenet_forward.1
$region0: #{lenet_forward.1}
  #allocation0 [shape = 'u32[]', space=smem, size = 0x4, offset = 0x4, fixed_abs, tag = 'smem constant byte address 0x4 - core index']
  #allocation1 [shape = 'u32[72,128]{1,0:T(1,128)}', space=vmem, size = 0x9000, scoped, tag = 'internal scratch']
  #allocation2 [shape = 'f32[56,224]{1,0:T(8,128)}', space=vmem, size = 0xe000, scoped, tag = 'scratch operand']
  #allocation3 [shape = 'f32[56,224]{1,0:T(8,128)}', space=vmem, size = 0xe000, scoped, tag = 'scratch operand']
  %s0 = inlined_call_operand.vmem [shape: f32[8,56,96], index: 0, kind: input, shape index: {}]
  %s1 = inlined_call_operand.vmem [shape: f32[10,96,224], index: 1, kind: input, shape index: {}]
  %s2 = inlined_call_operand.vmem [shape: f32[1,224], index: 2, kind: input, shape index: {}]
  %s3 = inlined_call_operand.vmem [shape: f32[10,224,160], index: 3, kind: input, shape index: {}]
  %s4 = inlined_call_operand.vmem [shape: f32[1,160], index: 4, kind: input, shape index: {}]
  %s5 = inlined_call_operand.vmem [shape: f32[5,160,120], index: 5, kind: input, shape index: {}]
  %s6 = inlined_call_operand.vmem [shape: f32[1,120], index: 6, kind: input, shape index: {}]
  %s7 = inlined_call_operand.vmem [shape: f32[120,84], index: 7, kind: input, shape index: {}]
  %s8 = inlined_call_operand.vmem [shape: f32[1,84], index: 8, kind: input, shape index: {}]
  %s9 = inlined_call_operand.vmem [shape: f32[84,10], index: 9, kind: input, shape index: {}]
  %s10 = inlined_call_operand.vmem [shape: f32[1,10], index: 10, kind: input, shape index: {}]
  %s11 = inlined_call_operand.vmem [shape: f32[8,10], index: 11, kind: output, shape index: {}]
  %s12 = sld [smem:[#allocation0]]
  $region54: #{lenet_forward.1} parent=0
    _
  %s14 = ssub.s32 1, %s12
  %s15 = scalar_select 0, %s14, %s12
  // Predicated region
  $region2: #{lenet_forward.1} parent=0 // pred_check
    _
  $region3: #{lenet_forward.1} parent=0 // pred_check_branch
    %17 = sbr.rel (0) target = $region5
  $region4: #{lenet_forward.1} parent=0 // pred_region
    _
  $region5: #{lenet_forward.1} parent=0 // pred_fallthru
    _
  // Predicated region
  $region6: #{lenet_forward.1} parent=0 // pred_check
    _
  $region7: #{lenet_forward.1} parent=0 // pred_check_branch
    %19 = sbr.rel (0) target = $region9
  $region8: #{lenet_forward.1} parent=0 // pred_region
    _
  $region9: #{lenet_forward.1} parent=0 // pred_fallthru
    _
  // Predicated region
  $region10: #{lenet_forward.1} parent=0 // pred_check
    _
  $region11: #{lenet_forward.1} parent=0 // pred_check_branch
    %21 = sbr.rel (0) target = $region13
  $region12: #{lenet_forward.1} parent=0 // pred_region
    _
  $region13: #{lenet_forward.1} parent=0 // pred_fallthru
    _
  // Predicated region
  $region14: #{lenet_forward.1} parent=0 // pred_check
    _
  $region15: #{lenet_forward.1} parent=0 // pred_check_branch
    %23 = sbr.rel (0) target = $region17
  $region16: #{lenet_forward.1} parent=0 // pred_region
    _
  $region17: #{lenet_forward.1} parent=0 // pred_fallthru
    _
  // Predicated region
  $region18: #{lenet_forward.1} parent=0 // pred_check
    _
  $region19: #{lenet_forward.1} parent=0 // pred_check_branch
    %25 = sbr.rel (0) target = $region21
  $region20: #{lenet_forward.1} parent=0 // pred_region
    _
  $region21: #{lenet_forward.1} parent=0 // pred_fallthru
    _
  // Predicated region
  $region22: #{lenet_forward.1} parent=0 // pred_check
    _
  $region23: #{lenet_forward.1} parent=0 // pred_check_branch
    %27 = sbr.rel (0) target = $region25
  $region24: #{lenet_forward.1} parent=0 // pred_region
    _
  $region25: #{lenet_forward.1} parent=0 // pred_fallthru
    _
  // Predicated region
  $region26: #{lenet_forward.1} parent=0 // pred_check
    _
  $region27: #{lenet_forward.1} parent=0 // pred_check_branch
    %29 = sbr.rel (0) target = $region29
  $region28: #{lenet_forward.1} parent=0 // pred_region
    _
  $region29: #{lenet_forward.1} parent=0 // pred_fallthru
    _
  // Predicated region
  $region30: #{lenet_forward.1} parent=0 // pred_check
    _
  $region31: #{lenet_forward.1} parent=0 // pred_check_branch
    %31 = sbr.rel (0) target = $region33
  $region32: #{lenet_forward.1} parent=0 // pred_region
    _
  $region33: #{lenet_forward.1} parent=0 // pred_fallthru
    _
  // Predicated region
  $region34: #{lenet_forward.1} parent=0 // pred_check
    _
  $region35: #{lenet_forward.1} parent=0 // pred_check_branch
    %33 = sbr.rel (0) target = $region37
  $region36: #{lenet_forward.1} parent=0 // pred_region
    _
  $region37: #{lenet_forward.1} parent=0 // pred_fallthru
    _
  // Predicated region
  $region38: #{lenet_forward.1} parent=0 // pred_check
    _
  $region39: #{lenet_forward.1} parent=0 // pred_check_branch
    %35 = sbr.rel (0) target = $region41
  $region40: #{lenet_forward.1} parent=0 // pred_region
    _
  $region41: #{lenet_forward.1} parent=0 // pred_fallthru
    _
  // Predicated region
  $region42: #{lenet_forward.1} parent=0 // pred_check
    _
  $region43: #{lenet_forward.1} parent=0 // pred_check_branch
    %37 = sbr.rel (0) target = $region45
  $region44: #{lenet_forward.1} parent=0 // pred_region
    _
  $region45: #{lenet_forward.1} parent=0 // pred_fallthru
    _
  %v38 = vld [vmem:[%s0] sm:$0xff]
  %v39 = vld [vmem:[%s0 + $0x8] sm:$0xff]
  %v40 = vld [vmem:[%s0 + $0x10] sm:$0xff]
  %v41 = vld [vmem:[%s0 + $0x18] sm:$0xff]
  %v42 = vld [vmem:[%s0 + $0x20] sm:$0xff]
  %v43 = vld [vmem:[%s0 + $0x28] sm:$0xff]
  %v44 = vld [vmem:[%s0 + $0x30] sm:$0xff]
  %v45 = vld [vmem:[%s1] sm:$0xff]
  %v46 = vld [vmem:[%s1 + $0x8] sm:$0xff]
  %v47 = vld [vmem:[%s1 + $0x10] sm:$0xff]
  %v48 = vld [vmem:[%s1 + $0x18] sm:$0xff]
  %v49 = vld [vmem:[%s1 + $0x20] sm:$0xff]
  %v50 = vld [vmem:[%s1 + $0x28] sm:$0xff]
  %v51 = vld [vmem:[%s1 + $0x30] sm:$0xff]
  %v52 = vld [vmem:[%s1 + $0x38] sm:$0xff]
  %v53 = vld [vmem:[%s1 + $0x40] sm:$0xff]
  %v54 = vld [vmem:[%s1 + $0x48] sm:$0xff]
  %v55 = vld [vmem:[%s1 + $0x50] sm:$0xff]
  %v56 = vld [vmem:[%s1 + $0x58] sm:$0xff]
  %v57 = vld [vmem:[%s1 + $0x60] sm:$0xff]
  %v58 = vld [vmem:[%s1 + $0x68] sm:$0xff]
  %v59 = vld [vmem:[%s1 + $0x70] sm:$0xff]
  %v60 = vld [vmem:[%s1 + $0x78] sm:$0xff]
  %v61 = vld [vmem:[%s1 + $0x80] sm:$0xff]
  %v62 = vld [vmem:[%s1 + $0x88] sm:$0xff]
  %v63 = vld [vmem:[%s1 + $0x90] sm:$0xff]
  %v64 = vld [vmem:[%s1 + $0x98] sm:$0xff]
  %v65 = vld [vmem:[%s1 + $0xa0] sm:$0xff]
  %v66 = vld [vmem:[%s1 + $0xa8] sm:$0xff]
  %v67 = vld [vmem:[%s1 + $0xb0] sm:$0xff]
  %v68 = vld [vmem:[%s1 + $0xb8] sm:$0xff]
  %s69 = scalar_lea.vmem %s1, 960
  %v70 = vld [vmem:[%s69] sm:$0xff]
  %v71 = vld [vmem:[%s69 + $0x8] sm:$0xff]
  %v72 = vld [vmem:[%s69 + $0x10] sm:$0xff]
  %v73 = vld [vmem:[%s69 + $0x18] sm:$0xff]
  %v74 = vld [vmem:[%s69 + $0x20] sm:$0xff]
  %v75 = vld [vmem:[%s69 + $0x28] sm:$0xff]
  %v76 = vld [vmem:[%s69 + $0x30] sm:$0xff]
  %v77 = vld [vmem:[%s69 + $0x38] sm:$0xff]
  %v78 = vld [vmem:[%s69 + $0x40] sm:$0xff]
  %v79 = vld [vmem:[%s69 + $0x48] sm:$0xff]
  %v80 = vld [vmem:[%s69 + $0x50] sm:$0xff]
  %v81 = vld [vmem:[%s69 + $0x58] sm:$0xff]
  %v82 = vld [vmem:[%s69 + $0x60] sm:$0xff]
  %v83 = vld [vmem:[%s69 + $0x68] sm:$0xff]
  %v84 = vld [vmem:[%s69 + $0x70] sm:$0xff]
  %v85 = vld [vmem:[%s69 + $0x78] sm:$0xff]
  %v86 = vld [vmem:[%s69 + $0x80] sm:$0xff]
  %v87 = vld [vmem:[%s69 + $0x88] sm:$0xff]
  %v88 = vld [vmem:[%s69 + $0x90] sm:$0xff]
  %v89 = vld [vmem:[%s69 + $0x98] sm:$0xff]
  %v90 = vld [vmem:[%s69 + $0xa0] sm:$0xff]
  %v91 = vld [vmem:[%s69 + $0xa8] sm:$0xff]
  %v92 = vld [vmem:[%s69 + $0xb0] sm:$0xff]
  %v93 = vld [vmem:[%s69 + $0xb8] sm:$0xff]
  %s94 = scalar_lea.vmem %s0, 56
  %v95 = vld [vmem:[%s94] sm:$0xff]
  %v96 = vld [vmem:[%s94 + $0x8] sm:$0xff]
  %v97 = vld [vmem:[%s94 + $0x10] sm:$0xff]
  %v98 = vld [vmem:[%s94 + $0x18] sm:$0xff]
  %v99 = vld [vmem:[%s94 + $0x20] sm:$0xff]
  %v100 = vld [vmem:[%s94 + $0x28] sm:$0xff]
  %v101 = vld [vmem:[%s94 + $0x30] sm:$0xff]
  %s102 = scalar_lea.vmem %s1, 192
  %v103 = vld [vmem:[%s102] sm:$0xff]
  %v104 = vld [vmem:[%s102 + $0x8] sm:$0xff]
  %v105 = vld [vmem:[%s102 + $0x10] sm:$0xff]
  %v106 = vld [vmem:[%s102 + $0x18] sm:$0xff]
  %v107 = vld [vmem:[%s102 + $0x20] sm:$0xff]
  %v108 = vld [vmem:[%s102 + $0x28] sm:$0xff]
  %v109 = vld [vmem:[%s102 + $0x30] sm:$0xff]
  %v110 = vld [vmem:[%s102 + $0x38] sm:$0xff]
  %v111 = vld [vmem:[%s102 + $0x40] sm:$0xff]
  %v112 = vld [vmem:[%s102 + $0x48] sm:$0xff]
  %v113 = vld [vmem:[%s102 + $0x50] sm:$0xff]
  %v114 = vld [vmem:[%s102 + $0x58] sm:$0xff]
  %v115 = vld [vmem:[%s102 + $0x60] sm:$0xff]
  %v116 = vld [vmem:[%s102 + $0x68] sm:$0xff]
  %v117 = vld [vmem:[%s102 + $0x70] sm:$0xff]
  %v118 = vld [vmem:[%s102 + $0x78] sm:$0xff]
  %v119 = vld [vmem:[%s102 + $0x80] sm:$0xff]
  %v120 = vld [vmem:[%s102 + $0x88] sm:$0xff]
  %v121 = vld [vmem:[%s102 + $0x90] sm:$0xff]
  %v122 = vld [vmem:[%s102 + $0x98] sm:$0xff]
  %v123 = vld [vmem:[%s102 + $0xa0] sm:$0xff]
  %v124 = vld [vmem:[%s102 + $0xa8] sm:$0xff]
  %v125 = vld [vmem:[%s102 + $0xb0] sm:$0xff]
  %v126 = vld [vmem:[%s102 + $0xb8] sm:$0xff]
  %vm127 = vcmask 785408
  %v129 = vsel %vm127, %v95, 0
  %v132 = vsel %vm127, %v96, 0
  %v135 = vsel %vm127, %v97, 0
  %v138 = vsel %vm127, %v98, 0
  %v141 = vsel %vm127, %v99, 0
  %v144 = vsel %vm127, %v100, 0
  %v147 = vsel %vm127, %v101, 0
  %149 = vmatpush.msra.mxu0 0.0
  %150 = vmatpush.msra.mxu0 0.0
  %151 = vmatpush.msra.mxu0 0.0
  %152 = vmatpush.msra.mxu0 0.0
  %153 = vmatpush.msra.mxu0 %v125
  %154 = vmatpush.msra.mxu0 %v123
  %155 = vmatpush.msra.mxu0 %v121
  %156 = vmatpush.msra.mxu0 %v119
  %157 = vmatpush.msra.mxu0 %v117
  %158 = vmatpush.msra.mxu0 %v115
  %159 = vmatpush.msra.mxu0 %v113
  %160 = vmatpush.msra.mxu0 %v111
  %161 = vmatpush.msra.mxu0 %v109
  %162 = vmatpush.msra.mxu0 %v107
  %163 = vmatpush.msra.mxu0 %v105
  %164 = vmatpush.msra.mxu0 %v103
  %165 = vmatmul.f32.gmra.mxu0 %v129
  %v166 = vpop.f32.mrf.mxu0
  %v167 = vadd.f32 0.0, %v166
  %168 = vmatmul.f32.gmra.mxu0 %v132
  %v169 = vpop.f32.mrf.mxu0
  %v170 = vadd.f32 0.0, %v169
  %171 = vmatmul.f32.gmra.mxu0 %v135
  %v172 = vpop.f32.mrf.mxu0
  %v173 = vadd.f32 0.0, %v172
  %174 = vmatmul.f32.gmra.mxu0 %v138
  %v175 = vpop.f32.mrf.mxu0
  %v176 = vadd.f32 0.0, %v175
  %177 = vmatmul.f32.gmra.mxu0 %v141
  %v178 = vpop.f32.mrf.mxu0
  %v179 = vadd.f32 0.0, %v178
  %180 = vmatmul.f32.gmra.mxu0 %v144
  %v181 = vpop.f32.mrf.mxu0
  %v182 = vadd.f32 0.0, %v181
  %183 = vmatmul.f32.gmra.mxu0 %v147
  %v184 = vpop.f32.mrf.mxu0
  %v185 = vadd.f32 0.0, %v184
  %186 = vdwg.mxu0
  %187 = vmatpush.msra.mxu0 0.0
  %188 = vmatpush.msra.mxu0 0.0
  %189 = vmatpush.msra.mxu0 0.0
  %190 = vmatpush.msra.mxu0 0.0
  %191 = vmatpush.msra.mxu0 %v126
  %192 = vmatpush.msra.mxu0 %v124
  %193 = vmatpush.msra.mxu0 %v122
  %194 = vmatpush.msra.mxu0 %v120
  %195 = vmatpush.msra.mxu0 %v118
  %196 = vmatpush.msra.mxu0 %v116
  %197 = vmatpush.msra.mxu0 %v114
  %198 = vmatpush.msra.mxu0 %v112
  %199 = vmatpush.msra.mxu0 %v110
  %200 = vmatpush.msra.mxu0 %v108
  %201 = vmatpush.msra.mxu0 %v106
  %202 = vmatpush.msra.mxu0 %v104
  %203 = vmatmul.f32.gmra.mxu0 %v129
  %v204 = vpop.f32.mrf.mxu0
  %v205 = vadd.f32 0.0, %v204
  %206 = vmatmul.f32.gmra.mxu0 %v132
  %v207 = vpop.f32.mrf.mxu0
  %v208 = vadd.f32 0.0, %v207
  %209 = vmatmul.f32.gmra.mxu0 %v135
  %v210 = vpop.f32.mrf.mxu0
  %v211 = vadd.f32 0.0, %v210
  %212 = vmatmul.f32.gmra.mxu0 %v138
  %v213 = vpop.f32.mrf.mxu0
  %v214 = vadd.f32 0.0, %v213
  %215 = vmatmul.f32.gmra.mxu0 %v141
  %v216 = vpop.f32.mrf.mxu0
  %v217 = vadd.f32 0.0, %v216
  %218 = vmatmul.f32.gmra.mxu0 %v144
  %v219 = vpop.f32.mrf.mxu0
  %v220 = vadd.f32 0.0, %v219
  %221 = vmatmul.f32.gmra.mxu0 %v147
  %v222 = vpop.f32.mrf.mxu0
  %v223 = vadd.f32 0.0, %v222
  %224 = vdwg.mxu0
  %s225 = scalar_lea.vmem %s1, 1152
  %v226 = vld [vmem:[%s225] sm:$0xff]
  %v227 = vld [vmem:[%s225 + $0x8] sm:$0xff]
  %v228 = vld [vmem:[%s225 + $0x10] sm:$0xff]
  %v229 = vld [vmem:[%s225 + $0x18] sm:$0xff]
  %v230 = vld [vmem:[%s225 + $0x20] sm:$0xff]
  %v231 = vld [vmem:[%s225 + $0x28] sm:$0xff]
  %v232 = vld [vmem:[%s225 + $0x30] sm:$0xff]
  %v233 = vld [vmem:[%s225 + $0x38] sm:$0xff]
  %v234 = vld [vmem:[%s225 + $0x40] sm:$0xff]
  %v235 = vld [vmem:[%s225 + $0x48] sm:$0xff]
  %v236 = vld [vmem:[%s225 + $0x50] sm:$0xff]
  %v237 = vld [vmem:[%s225 + $0x58] sm:$0xff]
  %v238 = vld [vmem:[%s225 + $0x60] sm:$0xff]
  %v239 = vld [vmem:[%s225 + $0x68] sm:$0xff]
  %v240 = vld [vmem:[%s225 + $0x70] sm:$0xff]
  %v241 = vld [vmem:[%s225 + $0x78] sm:$0xff]
  %v242 = vld [vmem:[%s225 + $0x80] sm:$0xff]
  %v243 = vld [vmem:[%s225 + $0x88] sm:$0xff]
  %v244 = vld [vmem:[%s225 + $0x90] sm:$0xff]
  %v245 = vld [vmem:[%s225 + $0x98] sm:$0xff]
  %v246 = vld [vmem:[%s225 + $0xa0] sm:$0xff]
  %v247 = vld [vmem:[%s225 + $0xa8] sm:$0xff]
  %v248 = vld [vmem:[%s225 + $0xb0] sm:$0xff]
  %v249 = vld [vmem:[%s225 + $0xb8] sm:$0xff]
  %250 = vmatpush.msra.mxu0 0.0
  %251 = vmatpush.msra.mxu0 0.0
  %252 = vmatpush.msra.mxu0 0.0
  %253 = vmatpush.msra.mxu0 0.0
  %254 = vmatpush.msra.mxu0 %v248
  %255 = vmatpush.msra.mxu0 %v246
  %256 = vmatpush.msra.mxu0 %v244
  %257 = vmatpush.msra.mxu0 %v242
  %258 = vmatpush.msra.mxu0 %v240
  %259 = vmatpush.msra.mxu0 %v238
  %260 = vmatpush.msra.mxu0 %v236
  %261 = vmatpush.msra.mxu0 %v234
  %262 = vmatpush.msra.mxu0 %v232
  %263 = vmatpush.msra.mxu0 %v230
  %264 = vmatpush.msra.mxu0 %v228
  %265 = vmatpush.msra.mxu0 %v226
  %266 = vmatmul.f32.gmra.mxu0 %v129
  %v267 = vpop.f32.mrf.mxu0
  %v268 = vadd.f32 0.0, %v267
  %269 = vmatmul.f32.gmra.mxu0 %v132
  %v270 = vpop.f32.mrf.mxu0
  %v271 = vadd.f32 0.0, %v270
  %272 = vmatmul.f32.gmra.mxu0 %v135
  %v273 = vpop.f32.mrf.mxu0
  %v274 = vadd.f32 0.0, %v273
  %275 = vmatmul.f32.gmra.mxu0 %v138
  %v276 = vpop.f32.mrf.mxu0
  %v277 = vadd.f32 0.0, %v276
  %278 = vmatmul.f32.gmra.mxu0 %v141
  %v279 = vpop.f32.mrf.mxu0
  %v280 = vadd.f32 0.0, %v279
  %281 = vmatmul.f32.gmra.mxu0 %v144
  %v282 = vpop.f32.mrf.mxu0
  %v283 = vadd.f32 0.0, %v282
  %284 = vmatmul.f32.gmra.mxu0 %v147
  %v285 = vpop.f32.mrf.mxu0
  %v286 = vadd.f32 0.0, %v285
  %287 = vdwg.mxu0
  %288 = vmatpush.msra.mxu0 0.0
  %289 = vmatpush.msra.mxu0 0.0
  %290 = vmatpush.msra.mxu0 0.0
  %291 = vmatpush.msra.mxu0 0.0
  %292 = vmatpush.msra.mxu0 %v249
  %293 = vmatpush.msra.mxu0 %v247
  %294 = vmatpush.msra.mxu0 %v245
  %295 = vmatpush.msra.mxu0 %v243
  %296 = vmatpush.msra.mxu0 %v241
  %297 = vmatpush.msra.mxu0 %v239
  %298 = vmatpush.msra.mxu0 %v237
  %299 = vmatpush.msra.mxu0 %v235
  %300 = vmatpush.msra.mxu0 %v233
  %301 = vmatpush.msra.mxu0 %v231
  %302 = vmatpush.msra.mxu0 %v229
  %303 = vmatpush.msra.mxu0 %v227
  %304 = vmatmul.f32.gmra.mxu0 %v129
  %v305 = vpop.f32.mrf.mxu0
  %v306 = vadd.f32 0.0, %v305
  %307 = vmatmul.f32.gmra.mxu0 %v132
  %v308 = vpop.f32.mrf.mxu0
  %v309 = vadd.f32 0.0, %v308
  %310 = vmatmul.f32.gmra.mxu0 %v135
  %v311 = vpop.f32.mrf.mxu0
  %v312 = vadd.f32 0.0, %v311
  %313 = vmatmul.f32.gmra.mxu0 %v138
  %v314 = vpop.f32.mrf.mxu0
  %v315 = vadd.f32 0.0, %v314
  %316 = vmatmul.f32.gmra.mxu0 %v141
  %v317 = vpop.f32.mrf.mxu0
  %v318 = vadd.f32 0.0, %v317
  %319 = vmatmul.f32.gmra.mxu0 %v144
  %v320 = vpop.f32.mrf.mxu0
  %v321 = vadd.f32 0.0, %v320
  %322 = vmatmul.f32.gmra.mxu0 %v147
  %v323 = vpop.f32.mrf.mxu0
  %v324 = vadd.f32 0.0, %v323
  %325 = vdwg.mxu0
  %v327 = vsel %vm127, %v38, 0
  %v330 = vsel %vm127, %v39, 0
  %v333 = vsel %vm127, %v40, 0
  %v336 = vsel %vm127, %v41, 0
  %v339 = vsel %vm127, %v42, 0
  %v342 = vsel %vm127, %v43, 0
  %v345 = vsel %vm127, %v44, 0
  %347 = vmatpush.msra.mxu0 0.0
  %348 = vmatpush.msra.mxu0 0.0
  %349 = vmatpush.msra.mxu0 0.0
  %350 = vmatpush.msra.mxu0 0.0
  %351 = vmatpush.msra.mxu0 %v67
  %352 = vmatpush.msra.mxu0 %v65
  %353 = vmatpush.msra.mxu0 %v63
  %354 = vmatpush.msra.mxu0 %v61
  %355 = vmatpush.msra.mxu0 %v59
  %356 = vmatpush.msra.mxu0 %v57
  %357 = vmatpush.msra.mxu0 %v55
  %358 = vmatpush.msra.mxu0 %v53
  %359 = vmatpush.msra.mxu0 %v51
  %360 = vmatpush.msra.mxu0 %v49
  %361 = vmatpush.msra.mxu0 %v47
  %362 = vmatpush.msra.mxu0 %v45
  %363 = vmatmul.f32.gmra.mxu0 %v327
  %v364 = vpop.f32.mrf.mxu0
  %v365 = vadd.f32 %v167, %v364
  %366 = vmatmul.f32.gmra.mxu0 %v330
  %v367 = vpop.f32.mrf.mxu0
  %v368 = vadd.f32 %v170, %v367
  %369 = vmatmul.f32.gmra.mxu0 %v333
  %v370 = vpop.f32.mrf.mxu0
  %v371 = vadd.f32 %v173, %v370
  %372 = vmatmul.f32.gmra.mxu0 %v336
  %v373 = vpop.f32.mrf.mxu0
  %v374 = vadd.f32 %v176, %v373
  %375 = vmatmul.f32.gmra.mxu0 %v339
  %v376 = vpop.f32.mrf.mxu0
  %v377 = vadd.f32 %v179, %v376
  %378 = vmatmul.f32.gmra.mxu0 %v342
  %v379 = vpop.f32.mrf.mxu0
  %v380 = vadd.f32 %v182, %v379
  %381 = vmatmul.f32.gmra.mxu0 %v345
  %v382 = vpop.f32.mrf.mxu0
  %v383 = vadd.f32 %v185, %v382
  %384 = vdwg.mxu0
  %385 = vmatpush.msra.mxu0 0.0
  %386 = vmatpush.msra.mxu0 0.0
  %387 = vmatpush.msra.mxu0 0.0
  %388 = vmatpush.msra.mxu0 0.0
  %389 = vmatpush.msra.mxu0 %v68
  %390 = vmatpush.msra.mxu0 %v66
  %391 = vmatpush.msra.mxu0 %v64
  %392 = vmatpush.msra.mxu0 %v62
  %393 = vmatpush.msra.mxu0 %v60
  %394 = vmatpush.msra.mxu0 %v58
  %395 = vmatpush.msra.mxu0 %v56
  %396 = vmatpush.msra.mxu0 %v54
  %397 = vmatpush.msra.mxu0 %v52
  %398 = vmatpush.msra.mxu0 %v50
  %399 = vmatpush.msra.mxu0 %v48
  %400 = vmatpush.msra.mxu0 %v46
  %401 = vmatmul.f32.gmra.mxu0 %v327
  %v402 = vpop.f32.mrf.mxu0
  %v403 = vadd.f32 %v205, %v402
  %404 = vmatmul.f32.gmra.mxu0 %v330
  %v405 = vpop.f32.mrf.mxu0
  %v406 = vadd.f32 %v208, %v405
  %407 = vmatmul.f32.gmra.mxu0 %v333
  %v408 = vpop.f32.mrf.mxu0
  %v409 = vadd.f32 %v211, %v408
  %410 = vmatmul.f32.gmra.mxu0 %v336
  %v411 = vpop.f32.mrf.mxu0
  %v412 = vadd.f32 %v214, %v411
  %413 = vmatmul.f32.gmra.mxu0 %v339
  %v414 = vpop.f32.mrf.mxu0
  %v415 = vadd.f32 %v217, %v414
  %416 = vmatmul.f32.gmra.mxu0 %v342
  %v417 = vpop.f32.mrf.mxu0
  %v418 = vadd.f32 %v220, %v417
  %419 = vmatmul.f32.gmra.mxu0 %v345
  %v420 = vpop.f32.mrf.mxu0
  %v421 = vadd.f32 %v223, %v420
  %422 = vdwg.mxu0
  %423 = vmatpush.msra.mxu0 0.0
  %424 = vmatpush.msra.mxu0 0.0
  %425 = vmatpush.msra.mxu0 0.0
  %426 = vmatpush.msra.mxu0 0.0
  %427 = vmatpush.msra.mxu0 %v92
  %428 = vmatpush.msra.mxu0 %v90
  %429 = vmatpush.msra.mxu0 %v88
  %430 = vmatpush.msra.mxu0 %v86
  %431 = vmatpush.msra.mxu0 %v84
  %432 = vmatpush.msra.mxu0 %v82
  %433 = vmatpush.msra.mxu0 %v80
  %434 = vmatpush.msra.mxu0 %v78
  %435 = vmatpush.msra.mxu0 %v76
  %436 = vmatpush.msra.mxu0 %v74
  %437 = vmatpush.msra.mxu0 %v72
  %438 = vmatpush.msra.mxu0 %v70
  %439 = vmatmul.f32.gmra.mxu0 %v327
  %v440 = vpop.f32.mrf.mxu0
  %v441 = vadd.f32 %v268, %v440
  %442 = vmatmul.f32.gmra.mxu0 %v330
  %v443 = vpop.f32.mrf.mxu0
  %v444 = vadd.f32 %v271, %v443
  %445 = vmatmul.f32.gmra.mxu0 %v333
  %v446 = vpop.f32.mrf.mxu0
  %v447 = vadd.f32 %v274, %v446
  %448 = vmatmul.f32.gmra.mxu0 %v336
  %v449 = vpop.f32.mrf.mxu0
  %v450 = vadd.f32 %v277, %v449
  %451 = vmatmul.f32.gmra.mxu0 %v339
  %v452 = vpop.f32.mrf.mxu0
  %v453 = vadd.f32 %v280, %v452
  %454 = vmatmul.f32.gmra.mxu0 %v342
  %v455 = vpop.f32.mrf.mxu0
  %v456 = vadd.f32 %v283, %v455
  %457 = vmatmul.f32.gmra.mxu0 %v345
  %v458 = vpop.f32.mrf.mxu0
  %v459 = vadd.f32 %v286, %v458
  %460 = vdwg.mxu0
  %461 = vmatpush.msra.mxu0 0.0
  %462 = vmatpush.msra.mxu0 0.0
  %463 = vmatpush.msra.mxu0 0.0
  %464 = vmatpush.msra.mxu0 0.0
  %465 = vmatpush.msra.mxu0 %v93
  %466 = vmatpush.msra.mxu0 %v91
  %467 = vmatpush.msra.mxu0 %v89
  %468 = vmatpush.msra.mxu0 %v87
  %469 = vmatpush.msra.mxu0 %v85
  %470 = vmatpush.msra.mxu0 %v83
  %471 = vmatpush.msra.mxu0 %v81
  %472 = vmatpush.msra.mxu0 %v79
  %473 = vmatpush.msra.mxu0 %v77
  %474 = vmatpush.msra.mxu0 %v75
  %475 = vmatpush.msra.mxu0 %v73
  %476 = vmatpush.msra.mxu0 %v71
  %477 = vmatmul.f32.gmra.mxu0 %v327
  %v478 = vpop.f32.mrf.mxu0
  %v479 = vadd.f32 %v306, %v478
  %480 = vmatmul.f32.gmra.mxu0 %v330
  %v481 = vpop.f32.mrf.mxu0
  %v482 = vadd.f32 %v309, %v481
  %483 = vmatmul.f32.gmra.mxu0 %v333
  %v484 = vpop.f32.mrf.mxu0
  %v485 = vadd.f32 %v312, %v484
  %486 = vmatmul.f32.gmra.mxu0 %v336
  %v487 = vpop.f32.mrf.mxu0
  %v488 = vadd.f32 %v315, %v487
  %489 = vmatmul.f32.gmra.mxu0 %v339
  %v490 = vpop.f32.mrf.mxu0
  %v491 = vadd.f32 %v318, %v490
  %492 = vmatmul.f32.gmra.mxu0 %v342
  %v493 = vpop.f32.mrf.mxu0
  %v494 = vadd.f32 %v321, %v493
  %495 = vmatmul.f32.gmra.mxu0 %v345
  %v496 = vpop.f32.mrf.mxu0
  %v497 = vadd.f32 %v324, %v496
  %498 = vdwg.mxu0
  %s499 = scalar_lea.vmem %s0, 112
  %v500 = vld [vmem:[%s499] sm:$0xff]
  %v501 = vld [vmem:[%s499 + $0x8] sm:$0xff]
  %v502 = vld [vmem:[%s499 + $0x10] sm:$0xff]
  %v503 = vld [vmem:[%s499 + $0x18] sm:$0xff]
  %v504 = vld [vmem:[%s499 + $0x20] sm:$0xff]
  %v505 = vld [vmem:[%s499 + $0x28] sm:$0xff]
  %v506 = vld [vmem:[%s499 + $0x30] sm:$0xff]
  %s507 = scalar_lea.vmem %s1, 384
  %v508 = vld [vmem:[%s507] sm:$0xff]
  %v509 = vld [vmem:[%s507 + $0x8] sm:$0xff]
  %v510 = vld [vmem:[%s507 + $0x10] sm:$0xff]
  %v511 = vld [vmem:[%s507 + $0x18] sm:$0xff]
  %v512 = vld [vmem:[%s507 + $0x20] sm:$0xff]
  %v513 = vld [vmem:[%s507 + $0x28] sm:$0xff]
  %v514 = vld [vmem:[%s507 + $0x30] sm:$0xff]
  %v515 = vld [vmem:[%s507 + $0x38] sm:$0xff]
  %v516 = vld [vmem:[%s507 + $0x40] sm:$0xff]
  %v517 = vld [vmem:[%s507 + $0x48] sm:$0xff]
  %v518 = vld [vmem:[%s507 + $0x50] sm:$0xff]
  %v519 = vld [vmem:[%s507 + $0x58] sm:$0xff]
  %v520 = vld [vmem:[%s507 + $0x60] sm:$0xff]
  %v521 = vld [vmem:[%s507 + $0x68] sm:$0xff]
  %v522 = vld [vmem:[%s507 + $0x70] sm:$0xff]
  %v523 = vld [vmem:[%s507 + $0x78] sm:$0xff]
  %v524 = vld [vmem:[%s507 + $0x80] sm:$0xff]
  %v525 = vld [vmem:[%s507 + $0x88] sm:$0xff]
  %v526 = vld [vmem:[%s507 + $0x90] sm:$0xff]
  %v527 = vld [vmem:[%s507 + $0x98] sm:$0xff]
  %v528 = vld [vmem:[%s507 + $0xa0] sm:$0xff]
  %v529 = vld [vmem:[%s507 + $0xa8] sm:$0xff]
  %v530 = vld [vmem:[%s507 + $0xb0] sm:$0xff]
  %v531 = vld [vmem:[%s507 + $0xb8] sm:$0xff]
  %v533 = vsel %vm127, %v500, 0
  %v536 = vsel %vm127, %v501, 0
  %v539 = vsel %vm127, %v502, 0
  %v542 = vsel %vm127, %v503, 0
  %v545 = vsel %vm127, %v504, 0
  %v548 = vsel %vm127, %v505, 0
  %v551 = vsel %vm127, %v506, 0
  %553 = vmatpush.msra.mxu0 0.0
  %554 = vmatpush.msra.mxu0 0.0
  %555 = vmatpush.msra.mxu0 0.0
  %556 = vmatpush.msra.mxu0 0.0
  %557 = vmatpush.msra.mxu0 %v530
  %558 = vmatpush.msra.mxu0 %v528
  %559 = vmatpush.msra.mxu0 %v526
  %560 = vmatpush.msra.mxu0 %v524
  %561 = vmatpush.msra.mxu0 %v522
  %562 = vmatpush.msra.mxu0 %v520
  %563 = vmatpush.msra.mxu0 %v518
  %564 = vmatpush.msra.mxu0 %v516
  %565 = vmatpush.msra.mxu0 %v514
  %566 = vmatpush.msra.mxu0 %v512
  %567 = vmatpush.msra.mxu0 %v510
  %568 = vmatpush.msra.mxu0 %v508
  %569 = vmatmul.f32.gmra.mxu0 %v533
  %v570 = vpop.f32.mrf.mxu0
  %v571 = vadd.f32 0.0, %v570
  %572 = vmatmul.f32.gmra.mxu0 %v536
  %v573 = vpop.f32.mrf.mxu0
  %v574 = vadd.f32 0.0, %v573
  %575 = vmatmul.f32.gmra.mxu0 %v539
  %v576 = vpop.f32.mrf.mxu0
  %v577 = vadd.f32 0.0, %v576
  %578 = vmatmul.f32.gmra.mxu0 %v542
  %v579 = vpop.f32.mrf.mxu0
  %v580 = vadd.f32 0.0, %v579
  %581 = vmatmul.f32.gmra.mxu0 %v545
  %v582 = vpop.f32.mrf.mxu0
  %v583 = vadd.f32 0.0, %v582
  %584 = vmatmul.f32.gmra.mxu0 %v548
  %v585 = vpop.f32.mrf.mxu0
  %v586 = vadd.f32 0.0, %v585
  %587 = vmatmul.f32.gmra.mxu0 %v551
  %v588 = vpop.f32.mrf.mxu0
  %v589 = vadd.f32 0.0, %v588
  %590 = vdwg.mxu0
  %591 = vmatpush.msra.mxu0 0.0
  %592 = vmatpush.msra.mxu0 0.0
  %593 = vmatpush.msra.mxu0 0.0
  %594 = vmatpush.msra.mxu0 0.0
  %595 = vmatpush.msra.mxu0 %v531
  %596 = vmatpush.msra.mxu0 %v529
  %597 = vmatpush.msra.mxu0 %v527
  %598 = vmatpush.msra.mxu0 %v525
  %599 = vmatpush.msra.mxu0 %v523
  %600 = vmatpush.msra.mxu0 %v521
  %601 = vmatpush.msra.mxu0 %v519
  %602 = vmatpush.msra.mxu0 %v517
  %603 = vmatpush.msra.mxu0 %v515
  %604 = vmatpush.msra.mxu0 %v513
  %605 = vmatpush.msra.mxu0 %v511
  %606 = vmatpush.msra.mxu0 %v509
  %607 = vmatmul.f32.gmra.mxu0 %v533
  %v608 = vpop.f32.mrf.mxu0
  %v609 = vadd.f32 0.0, %v608
  %610 = vmatmul.f32.gmra.mxu0 %v536
  %v611 = vpop.f32.mrf.mxu0
  %v612 = vadd.f32 0.0, %v611
  %613 = vmatmul.f32.gmra.mxu0 %v539
  %v614 = vpop.f32.mrf.mxu0
  %v615 = vadd.f32 0.0, %v614
  %616 = vmatmul.f32.gmra.mxu0 %v542
  %v617 = vpop.f32.mrf.mxu0
  %v618 = vadd.f32 0.0, %v617
  %619 = vmatmul.f32.gmra.mxu0 %v545
  %v620 = vpop.f32.mrf.mxu0
  %v621 = vadd.f32 0.0, %v620
  %622 = vmatmul.f32.gmra.mxu0 %v548
  %v623 = vpop.f32.mrf.mxu0
  %v624 = vadd.f32 0.0, %v623
  %625 = vmatmul.f32.gmra.mxu0 %v551
  %v626 = vpop.f32.mrf.mxu0
  %v627 = vadd.f32 0.0, %v626
  %628 = vdwg.mxu0
  %s629 = scalar_lea.vmem %s1, 1344
  %v630 = vld [vmem:[%s629] sm:$0xff]
  %v631 = vld [vmem:[%s629 + $0x8] sm:$0xff]
  %v632 = vld [vmem:[%s629 + $0x10] sm:$0xff]
  %v633 = vld [vmem:[%s629 + $0x18] sm:$0xff]
  %v634 = vld [vmem:[%s629 + $0x20] sm:$0xff]
  %v635 = vld [vmem:[%s629 + $0x28] sm:$0xff]
  %v636 = vld [vmem:[%s629 + $0x30] sm:$0xff]
  %v637 = vld [vmem:[%s629 + $0x38] sm:$0xff]
  %v638 = vld [vmem:[%s629 + $0x40] sm:$0xff]
  %v639 = vld [vmem:[%s629 + $0x48] sm:$0xff]
  %v640 = vld [vmem:[%s629 + $0x50] sm:$0xff]
  %v641 = vld [vmem:[%s629 + $0x58] sm:$0xff]
  %v642 = vld [vmem:[%s629 + $0x60] sm:$0xff]
  %v643 = vld [vmem:[%s629 + $0x68] sm:$0xff]
  %v644 = vld [vmem:[%s629 + $0x70] sm:$0xff]
  %v645 = vld [vmem:[%s629 + $0x78] sm:$0xff]
  %v646 = vld [vmem:[%s629 + $0x80] sm:$0xff]
  %v647 = vld [vmem:[%s629 + $0x88] sm:$0xff]
  %v648 = vld [vmem:[%s629 + $0x90] sm:$0xff]
  %v649 = vld [vmem:[%s629 + $0x98] sm:$0xff]
  %v650 = vld [vmem:[%s629 + $0xa0] sm:$0xff]
  %v651 = vld [vmem:[%s629 + $0xa8] sm:$0xff]
  %v652 = vld [vmem:[%s629 + $0xb0] sm:$0xff]
  %v653 = vld [vmem:[%s629 + $0xb8] sm:$0xff]
  %654 = vmatpush.msra.mxu0 0.0
  %655 = vmatpush.msra.mxu0 0.0
  %656 = vmatpush.msra.mxu0 0.0
  %657 = vmatpush.msra.mxu0 0.0
  %658 = vmatpush.msra.mxu0 %v652
  %659 = vmatpush.msra.mxu0 %v650
  %660 = vmatpush.msra.mxu0 %v648
  %661 = vmatpush.msra.mxu0 %v646
  %662 = vmatpush.msra.mxu0 %v644
  %663 = vmatpush.msra.mxu0 %v642
  %664 = vmatpush.msra.mxu0 %v640
  %665 = vmatpush.msra.mxu0 %v638
  %666 = vmatpush.msra.mxu0 %v636
  %667 = vmatpush.msra.mxu0 %v634
  %668 = vmatpush.msra.mxu0 %v632
  %669 = vmatpush.msra.mxu0 %v630
  %670 = vmatmul.f32.gmra.mxu0 %v533
  %v671 = vpop.f32.mrf.mxu0
  %v672 = vadd.f32 0.0, %v671
  %673 = vmatmul.f32.gmra.mxu0 %v536
  %v674 = vpop.f32.mrf.mxu0
  %v675 = vadd.f32 0.0, %v674
  %676 = vmatmul.f32.gmra.mxu0 %v539
  %v677 = vpop.f32.mrf.mxu0
  %v678 = vadd.f32 0.0, %v677
  %679 = vmatmul.f32.gmra.mxu0 %v542
  %v680 = vpop.f32.mrf.mxu0
  %v681 = vadd.f32 0.0, %v680
  %682 = vmatmul.f32.gmra.mxu0 %v545
  %v683 = vpop.f32.mrf.mxu0
  %v684 = vadd.f32 0.0, %v683
  %685 = vmatmul.f32.gmra.mxu0 %v548
  %v686 = vpop.f32.mrf.mxu0
  %v687 = vadd.f32 0.0, %v686
  %688 = vmatmul.f32.gmra.mxu0 %v551
  %v689 = vpop.f32.mrf.mxu0
  %v690 = vadd.f32 0.0, %v689
  %691 = vdwg.mxu0
  %692 = vmatpush.msra.mxu0 0.0
  %693 = vmatpush.msra.mxu0 0.0
  %694 = vmatpush.msra.mxu0 0.0
  %695 = vmatpush.msra.mxu0 0.0
  %696 = vmatpush.msra.mxu0 %v653
  %697 = vmatpush.msra.mxu0 %v651
  %698 = vmatpush.msra.mxu0 %v649
  %699 = vmatpush.msra.mxu0 %v647
  %700 = vmatpush.msra.mxu0 %v645
  %701 = vmatpush.msra.mxu0 %v643
  %702 = vmatpush.msra.mxu0 %v641
  %703 = vmatpush.msra.mxu0 %v639
  %704 = vmatpush.msra.mxu0 %v637
  %705 = vmatpush.msra.mxu0 %v635
  %706 = vmatpush.msra.mxu0 %v633
  %707 = vmatpush.msra.mxu0 %v631
  %708 = vmatmul.f32.gmra.mxu0 %v533
  %v709 = vpop.f32.mrf.mxu0
  %v710 = vadd.f32 0.0, %v709
  %711 = vmatmul.f32.gmra.mxu0 %v536
  %v712 = vpop.f32.mrf.mxu0
  %v713 = vadd.f32 0.0, %v712
  %714 = vmatmul.f32.gmra.mxu0 %v539
  %v715 = vpop.f32.mrf.mxu0
  %v716 = vadd.f32 0.0, %v715
  %717 = vmatmul.f32.gmra.mxu0 %v542
  %v718 = vpop.f32.mrf.mxu0
  %v719 = vadd.f32 0.0, %v718
  %720 = vmatmul.f32.gmra.mxu0 %v545
  %v721 = vpop.f32.mrf.mxu0
  %v722 = vadd.f32 0.0, %v721
  %723 = vmatmul.f32.gmra.mxu0 %v548
  %v724 = vpop.f32.mrf.mxu0
  %v725 = vadd.f32 0.0, %v724
  %726 = vmatmul.f32.gmra.mxu0 %v551
  %v727 = vpop.f32.mrf.mxu0
  %v728 = vadd.f32 0.0, %v727
  %729 = vdwg.mxu0
  %v730 = vadd.f32 %v365, %v571
  %v731 = vadd.f32 %v403, %v609
  %v732 = vadd.f32 %v368, %v574
  %v733 = vadd.f32 %v406, %v612
  %v734 = vadd.f32 %v371, %v577
  %v735 = vadd.f32 %v409, %v615
  %v736 = vadd.f32 %v374, %v580
  %v737 = vadd.f32 %v412, %v618
  %v738 = vadd.f32 %v377, %v583
  %v739 = vadd.f32 %v415, %v621
  %v740 = vadd.f32 %v380, %v586
  %v741 = vadd.f32 %v418, %v624
  %v742 = vadd.f32 %v383, %v589
  %v743 = vadd.f32 %v421, %v627
  %v744 = vadd.f32 %v441, %v672
  %v745 = vadd.f32 %v479, %v710
  %v746 = vadd.f32 %v444, %v675
  %v747 = vadd.f32 %v482, %v713
  %v748 = vadd.f32 %v447, %v678
  %v749 = vadd.f32 %v485, %v716
  %v750 = vadd.f32 %v450, %v681
  %v751 = vadd.f32 %v488, %v719
  %v752 = vadd.f32 %v453, %v684
  %v753 = vadd.f32 %v491, %v722
  %v754 = vadd.f32 %v456, %v687
  %v755 = vadd.f32 %v494, %v725
  %v756 = vadd.f32 %v459, %v690
  %v757 = vadd.f32 %v497, %v728
  %s758 = scalar_lea.vmem %s0, 168
  %v759 = vld [vmem:[%s758] sm:$0xff]
  %v760 = vld [vmem:[%s758 + $0x8] sm:$0xff]
  %v761 = vld [vmem:[%s758 + $0x10] sm:$0xff]
  %v762 = vld [vmem:[%s758 + $0x18] sm:$0xff]
  %v763 = vld [vmem:[%s758 + $0x20] sm:$0xff]
  %v764 = vld [vmem:[%s758 + $0x28] sm:$0xff]
  %v765 = vld [vmem:[%s758 + $0x30] sm:$0xff]
  %s766 = scalar_lea.vmem %s1, 576
  %v767 = vld [vmem:[%s766] sm:$0xff]
  %v768 = vld [vmem:[%s766 + $0x8] sm:$0xff]
  %v769 = vld [vmem:[%s766 + $0x10] sm:$0xff]
  %v770 = vld [vmem:[%s766 + $0x18] sm:$0xff]
  %v771 = vld [vmem:[%s766 + $0x20] sm:$0xff]
  %v772 = vld [vmem:[%s766 + $0x28] sm:$0xff]
  %v773 = vld [vmem:[%s766 + $0x30] sm:$0xff]
  %v774 = vld [vmem:[%s766 + $0x38] sm:$0xff]
  %v775 = vld [vmem:[%s766 + $0x40] sm:$0xff]
  %v776 = vld [vmem:[%s766 + $0x48] sm:$0xff]
  %v777 = vld [vmem:[%s766 + $0x50] sm:$0xff]
  %v778 = vld [vmem:[%s766 + $0x58] sm:$0xff]
  %v779 = vld [vmem:[%s766 + $0x60] sm:$0xff]
  %v780 = vld [vmem:[%s766 + $0x68] sm:$0xff]
  %v781 = vld [vmem:[%s766 + $0x70] sm:$0xff]
  %v782 = vld [vmem:[%s766 + $0x78] sm:$0xff]
  %v783 = vld [vmem:[%s766 + $0x80] sm:$0xff]
  %v784 = vld [vmem:[%s766 + $0x88] sm:$0xff]
  %v785 = vld [vmem:[%s766 + $0x90] sm:$0xff]
  %v786 = vld [vmem:[%s766 + $0x98] sm:$0xff]
  %v787 = vld [vmem:[%s766 + $0xa0] sm:$0xff]
  %v788 = vld [vmem:[%s766 + $0xa8] sm:$0xff]
  %v789 = vld [vmem:[%s766 + $0xb0] sm:$0xff]
  %v790 = vld [vmem:[%s766 + $0xb8] sm:$0xff]
  %v792 = vsel %vm127, %v759, 0
  %v795 = vsel %vm127, %v760, 0
  %v798 = vsel %vm127, %v761, 0
  %v801 = vsel %vm127, %v762, 0
  %v804 = vsel %vm127, %v763, 0
  %v807 = vsel %vm127, %v764, 0
  %v810 = vsel %vm127, %v765, 0
  %812 = vmatpush.msra.mxu0 0.0
  %813 = vmatpush.msra.mxu0 0.0
  %814 = vmatpush.msra.mxu0 0.0
  %815 = vmatpush.msra.mxu0 0.0
  %816 = vmatpush.msra.mxu0 %v789
  %817 = vmatpush.msra.mxu0 %v787
  %818 = vmatpush.msra.mxu0 %v785
  %819 = vmatpush.msra.mxu0 %v783
  %820 = vmatpush.msra.mxu0 %v781
  %821 = vmatpush.msra.mxu0 %v779
  %822 = vmatpush.msra.mxu0 %v777
  %823 = vmatpush.msra.mxu0 %v775
  %824 = vmatpush.msra.mxu0 %v773
  %825 = vmatpush.msra.mxu0 %v771
  %826 = vmatpush.msra.mxu0 %v769
  %827 = vmatpush.msra.mxu0 %v767
  %828 = vmatmul.f32.gmra.mxu0 %v792
  %v829 = vpop.f32.mrf.mxu0
  %v830 = vadd.f32 0.0, %v829
  %831 = vmatmul.f32.gmra.mxu0 %v795
  %v832 = vpop.f32.mrf.mxu0
  %v833 = vadd.f32 0.0, %v832
  %834 = vmatmul.f32.gmra.mxu0 %v798
  %v835 = vpop.f32.mrf.mxu0
  %v836 = vadd.f32 0.0, %v835
  %837 = vmatmul.f32.gmra.mxu0 %v801
  %v838 = vpop.f32.mrf.mxu0
  %v839 = vadd.f32 0.0, %v838
  %840 = vmatmul.f32.gmra.mxu0 %v804
  %v841 = vpop.f32.mrf.mxu0
  %v842 = vadd.f32 0.0, %v841
  %843 = vmatmul.f32.gmra.mxu0 %v807
  %v844 = vpop.f32.mrf.mxu0
  %v845 = vadd.f32 0.0, %v844
  %846 = vmatmul.f32.gmra.mxu0 %v810
  %v847 = vpop.f32.mrf.mxu0
  %v848 = vadd.f32 0.0, %v847
  %849 = vdwg.mxu0
  %850 = vmatpush.msra.mxu0 0.0
  %851 = vmatpush.msra.mxu0 0.0
  %852 = vmatpush.msra.mxu0 0.0
  %853 = vmatpush.msra.mxu0 0.0
  %854 = vmatpush.msra.mxu0 %v790
  %855 = vmatpush.msra.mxu0 %v788
  %856 = vmatpush.msra.mxu0 %v786
  %857 = vmatpush.msra.mxu0 %v784
  %858 = vmatpush.msra.mxu0 %v782
  %859 = vmatpush.msra.mxu0 %v780
  %860 = vmatpush.msra.mxu0 %v778
  %861 = vmatpush.msra.mxu0 %v776
  %862 = vmatpush.msra.mxu0 %v774
  %863 = vmatpush.msra.mxu0 %v772
  %864 = vmatpush.msra.mxu0 %v770
  %865 = vmatpush.msra.mxu0 %v768
  %866 = vmatmul.f32.gmra.mxu0 %v792
  %v867 = vpop.f32.mrf.mxu0
  %v868 = vadd.f32 0.0, %v867
  %869 = vmatmul.f32.gmra.mxu0 %v795
  %v870 = vpop.f32.mrf.mxu0
  %v871 = vadd.f32 0.0, %v870
  %872 = vmatmul.f32.gmra.mxu0 %v798
  %v873 = vpop.f32.mrf.mxu0
  %v874 = vadd.f32 0.0, %v873
  %875 = vmatmul.f32.gmra.mxu0 %v801
  %v876 = vpop.f32.mrf.mxu0
  %v877 = vadd.f32 0.0, %v876
  %878 = vmatmul.f32.gmra.mxu0 %v804
  %v879 = vpop.f32.mrf.mxu0
  %v880 = vadd.f32 0.0, %v879
  %881 = vmatmul.f32.gmra.mxu0 %v807
  %v882 = vpop.f32.mrf.mxu0
  %v883 = vadd.f32 0.0, %v882
  %884 = vmatmul.f32.gmra.mxu0 %v810
  %v885 = vpop.f32.mrf.mxu0
  %v886 = vadd.f32 0.0, %v885
  %887 = vdwg.mxu0
  %s888 = scalar_lea.vmem %s1, 1536
  %v889 = vld [vmem:[%s888] sm:$0xff]
  %v890 = vld [vmem:[%s888 + $0x8] sm:$0xff]
  %v891 = vld [vmem:[%s888 + $0x10] sm:$0xff]
  %v892 = vld [vmem:[%s888 + $0x18] sm:$0xff]
  %v893 = vld [vmem:[%s888 + $0x20] sm:$0xff]
  %v894 = vld [vmem:[%s888 + $0x28] sm:$0xff]
  %v895 = vld [vmem:[%s888 + $0x30] sm:$0xff]
  %v896 = vld [vmem:[%s888 + $0x38] sm:$0xff]
  %v897 = vld [vmem:[%s888 + $0x40] sm:$0xff]
  %v898 = vld [vmem:[%s888 + $0x48] sm:$0xff]
  %v899 = vld [vmem:[%s888 + $0x50] sm:$0xff]
  %v900 = vld [vmem:[%s888 + $0x58] sm:$0xff]
  %v901 = vld [vmem:[%s888 + $0x60] sm:$0xff]
  %v902 = vld [vmem:[%s888 + $0x68] sm:$0xff]
  %v903 = vld [vmem:[%s888 + $0x70] sm:$0xff]
  %v904 = vld [vmem:[%s888 + $0x78] sm:$0xff]
  %v905 = vld [vmem:[%s888 + $0x80] sm:$0xff]
  %v906 = vld [vmem:[%s888 + $0x88] sm:$0xff]
  %v907 = vld [vmem:[%s888 + $0x90] sm:$0xff]
  %v908 = vld [vmem:[%s888 + $0x98] sm:$0xff]
  %v909 = vld [vmem:[%s888 + $0xa0] sm:$0xff]
  %v910 = vld [vmem:[%s888 + $0xa8] sm:$0xff]
  %v911 = vld [vmem:[%s888 + $0xb0] sm:$0xff]
  %v912 = vld [vmem:[%s888 + $0xb8] sm:$0xff]
  %913 = vmatpush.msra.mxu0 0.0
  %914 = vmatpush.msra.mxu0 0.0
  %915 = vmatpush.msra.mxu0 0.0
  %916 = vmatpush.msra.mxu0 0.0
  %917 = vmatpush.msra.mxu0 %v911
  %918 = vmatpush.msra.mxu0 %v909
  %919 = vmatpush.msra.mxu0 %v907
  %920 = vmatpush.msra.mxu0 %v905
  %921 = vmatpush.msra.mxu0 %v903
  %922 = vmatpush.msra.mxu0 %v901
  %923 = vmatpush.msra.mxu0 %v899
  %924 = vmatpush.msra.mxu0 %v897
  %925 = vmatpush.msra.mxu0 %v895
  %926 = vmatpush.msra.mxu0 %v893
  %927 = vmatpush.msra.mxu0 %v891
  %928 = vmatpush.msra.mxu0 %v889
  %929 = vmatmul.f32.gmra.mxu0 %v792
  %v930 = vpop.f32.mrf.mxu0
  %v931 = vadd.f32 0.0, %v930
  %932 = vmatmul.f32.gmra.mxu0 %v795
  %v933 = vpop.f32.mrf.mxu0
  %v934 = vadd.f32 0.0, %v933
  %935 = vmatmul.f32.gmra.mxu0 %v798
  %v936 = vpop.f32.mrf.mxu0
  %v937 = vadd.f32 0.0, %v936
  %938 = vmatmul.f32.gmra.mxu0 %v801
  %v939 = vpop.f32.mrf.mxu0
  %v940 = vadd.f32 0.0, %v939
  %941 = vmatmul.f32.gmra.mxu0 %v804
  %v942 = vpop.f32.mrf.mxu0
  %v943 = vadd.f32 0.0, %v942
  %944 = vmatmul.f32.gmra.mxu0 %v807
  %v945 = vpop.f32.mrf.mxu0
  %v946 = vadd.f32 0.0, %v945
  %947 = vmatmul.f32.gmra.mxu0 %v810
  %v948 = vpop.f32.mrf.mxu0
  %v949 = vadd.f32 0.0, %v948
  %950 = vdwg.mxu0
  %951 = vmatpush.msra.mxu0 0.0
  %952 = vmatpush.msra.mxu0 0.0
  %953 = vmatpush.msra.mxu0 0.0
  %954 = vmatpush.msra.mxu0 0.0
  %955 = vmatpush.msra.mxu0 %v912
  %956 = vmatpush.msra.mxu0 %v910
  %957 = vmatpush.msra.mxu0 %v908
  %958 = vmatpush.msra.mxu0 %v906
  %959 = vmatpush.msra.mxu0 %v904
  %960 = vmatpush.msra.mxu0 %v902
  %961 = vmatpush.msra.mxu0 %v900
  %962 = vmatpush.msra.mxu0 %v898
  %963 = vmatpush.msra.mxu0 %v896
  %964 = vmatpush.msra.mxu0 %v894
  %965 = vmatpush.msra.mxu0 %v892
  %966 = vmatpush.msra.mxu0 %v890
  %967 = vmatmul.f32.gmra.mxu0 %v792
  %v968 = vpop.f32.mrf.mxu0
  %v969 = vadd.f32 0.0, %v968
  %970 = vmatmul.f32.gmra.mxu0 %v795
  %v971 = vpop.f32.mrf.mxu0
  %v972 = vadd.f32 0.0, %v971
  %973 = vmatmul.f32.gmra.mxu0 %v798
  %v974 = vpop.f32.mrf.mxu0
  %v975 = vadd.f32 0.0, %v974
  %976 = vmatmul.f32.gmra.mxu0 %v801
  %v977 = vpop.f32.mrf.mxu0
  %v978 = vadd.f32 0.0, %v977
  %979 = vmatmul.f32.gmra.mxu0 %v804
  %v980 = vpop.f32.mrf.mxu0
  %v981 = vadd.f32 0.0, %v980
  %982 = vmatmul.f32.gmra.mxu0 %v807
  %v983 = vpop.f32.mrf.mxu0
  %v984 = vadd.f32 0.0, %v983
  %985 = vmatmul.f32.gmra.mxu0 %v810
  %v986 = vpop.f32.mrf.mxu0
  %v987 = vadd.f32 0.0, %v986
  %988 = vdwg.mxu0
  %v989 = vadd.f32 %v730, %v830
  %v990 = vadd.f32 %v731, %v868
  %v991 = vadd.f32 %v732, %v833
  %v992 = vadd.f32 %v733, %v871
  %v993 = vadd.f32 %v734, %v836
  %v994 = vadd.f32 %v735, %v874
  %v995 = vadd.f32 %v736, %v839
  %v996 = vadd.f32 %v737, %v877
  %v997 = vadd.f32 %v738, %v842
  %v998 = vadd.f32 %v739, %v880
  %v999 = vadd.f32 %v740, %v845
  %v1000 = vadd.f32 %v741, %v883
  %v1001 = vadd.f32 %v742, %v848
  %v1002 = vadd.f32 %v743, %v886
  %v1003 = vadd.f32 %v744, %v931
  %v1004 = vadd.f32 %v745, %v969
  %v1005 = vadd.f32 %v746, %v934
  %v1006 = vadd.f32 %v747, %v972
  %v1007 = vadd.f32 %v748, %v937
  %v1008 = vadd.f32 %v749, %v975
  %v1009 = vadd.f32 %v750, %v940
  %v1010 = vadd.f32 %v751, %v978
  %v1011 = vadd.f32 %v752, %v943
  %v1012 = vadd.f32 %v753, %v981
  %v1013 = vadd.f32 %v754, %v946
  %v1014 = vadd.f32 %v755, %v984
  %v1015 = vadd.f32 %v756, %v949
  %v1016 = vadd.f32 %v757, %v987
  %s1017 = scalar_lea.vmem %s0, 224
  %v1018 = vld [vmem:[%s1017] sm:$0xff]
  %v1019 = vld [vmem:[%s1017 + $0x8] sm:$0xff]
  %v1020 = vld [vmem:[%s1017 + $0x10] sm:$0xff]
  %v1021 = vld [vmem:[%s1017 + $0x18] sm:$0xff]
  %v1022 = vld [vmem:[%s1017 + $0x20] sm:$0xff]
  %v1023 = vld [vmem:[%s1017 + $0x28] sm:$0xff]
  %v1024 = vld [vmem:[%s1017 + $0x30] sm:$0xff]
  %s1025 = scalar_lea.vmem %s1, 768
  %v1026 = vld [vmem:[%s1025] sm:$0xff]
  %v1027 = vld [vmem:[%s1025 + $0x8] sm:$0xff]
  %v1028 = vld [vmem:[%s1025 + $0x10] sm:$0xff]
  %v1029 = vld [vmem:[%s1025 + $0x18] sm:$0xff]
  %v1030 = vld [vmem:[%s1025 + $0x20] sm:$0xff]
  %v1031 = vld [vmem:[%s1025 + $0x28] sm:$0xff]
  %v1032 = vld [vmem:[%s1025 + $0x30] sm:$0xff]
  %v1033 = vld [vmem:[%s1025 + $0x38] sm:$0xff]
  %v1034 = vld [vmem:[%s1025 + $0x40] sm:$0xff]
  %v1035 = vld [vmem:[%s1025 + $0x48] sm:$0xff]
  %v1036 = vld [vmem:[%s1025 + $0x50] sm:$0xff]
  %v1037 = vld [vmem:[%s1025 + $0x58] sm:$0xff]
  %v1038 = vld [vmem:[%s1025 + $0x60] sm:$0xff]
  %v1039 = vld [vmem:[%s1025 + $0x68] sm:$0xff]
  %v1040 = vld [vmem:[%s1025 + $0x70] sm:$0xff]
  %v1041 = vld [vmem:[%s1025 + $0x78] sm:$0xff]
  %v1042 = vld [vmem:[%s1025 + $0x80] sm:$0xff]
  %v1043 = vld [vmem:[%s1025 + $0x88] sm:$0xff]
  %v1044 = vld [vmem:[%s1025 + $0x90] sm:$0xff]
  %v1045 = vld [vmem:[%s1025 + $0x98] sm:$0xff]
  %v1046 = vld [vmem:[%s1025 + $0xa0] sm:$0xff]
  %v1047 = vld [vmem:[%s1025 + $0xa8] sm:$0xff]
  %v1048 = vld [vmem:[%s1025 + $0xb0] sm:$0xff]
  %v1049 = vld [vmem:[%s1025 + $0xb8] sm:$0xff]
  %v1051 = vsel %vm127, %v1018, 0
  %v1054 = vsel %vm127, %v1019, 0
  %v1057 = vsel %vm127, %v1020, 0
  %v1060 = vsel %vm127, %v1021, 0
  %v1063 = vsel %vm127, %v1022, 0
  %v1066 = vsel %vm127, %v1023, 0
  %v1069 = vsel %vm127, %v1024, 0
  %1071 = vmatpush.msra.mxu0 0.0
  %1072 = vmatpush.msra.mxu0 0.0
  %1073 = vmatpush.msra.mxu0 0.0
  %1074 = vmatpush.msra.mxu0 0.0
  %1075 = vmatpush.msra.mxu0 %v1048
  %1076 = vmatpush.msra.mxu0 %v1046
  %1077 = vmatpush.msra.mxu0 %v1044
  %1078 = vmatpush.msra.mxu0 %v1042
  %1079 = vmatpush.msra.mxu0 %v1040
  %1080 = vmatpush.msra.mxu0 %v1038
  %1081 = vmatpush.msra.mxu0 %v1036
  %1082 = vmatpush.msra.mxu0 %v1034
  %1083 = vmatpush.msra.mxu0 %v1032
  %1084 = vmatpush.msra.mxu0 %v1030
  %1085 = vmatpush.msra.mxu0 %v1028
  %1086 = vmatpush.msra.mxu0 %v1026
  %1087 = vmatmul.f32.gmra.mxu0 %v1051
  %v1088 = vpop.f32.mrf.mxu0
  %v1089 = vadd.f32 0.0, %v1088
  %1090 = vmatmul.f32.gmra.mxu0 %v1054
  %v1091 = vpop.f32.mrf.mxu0
  %v1092 = vadd.f32 0.0, %v1091
  %1093 = vmatmul.f32.gmra.mxu0 %v1057
  %v1094 = vpop.f32.mrf.mxu0
  %v1095 = vadd.f32 0.0, %v1094
  %1096 = vmatmul.f32.gmra.mxu0 %v1060
  %v1097 = vpop.f32.mrf.mxu0
  %v1098 = vadd.f32 0.0, %v1097
  %1099 = vmatmul.f32.gmra.mxu0 %v1063
  %v1100 = vpop.f32.mrf.mxu0
  %v1101 = vadd.f32 0.0, %v1100
  %1102 = vmatmul.f32.gmra.mxu0 %v1066
  %v1103 = vpop.f32.mrf.mxu0
  %v1104 = vadd.f32 0.0, %v1103
  %1105 = vmatmul.f32.gmra.mxu0 %v1069
  %v1106 = vpop.f32.mrf.mxu0
  %v1107 = vadd.f32 0.0, %v1106
  %1108 = vdwg.mxu0
  %1109 = vmatpush.msra.mxu0 0.0
  %1110 = vmatpush.msra.mxu0 0.0
  %1111 = vmatpush.msra.mxu0 0.0
  %1112 = vmatpush.msra.mxu0 0.0
  %1113 = vmatpush.msra.mxu0 %v1049
  %1114 = vmatpush.msra.mxu0 %v1047
  %1115 = vmatpush.msra.mxu0 %v1045
  %1116 = vmatpush.msra.mxu0 %v1043
  %1117 = vmatpush.msra.mxu0 %v1041
  %1118 = vmatpush.msra.mxu0 %v1039
  %1119 = vmatpush.msra.mxu0 %v1037
  %1120 = vmatpush.msra.mxu0 %v1035
  %1121 = vmatpush.msra.mxu0 %v1033
  %1122 = vmatpush.msra.mxu0 %v1031
  %1123 = vmatpush.msra.mxu0 %v1029
  %1124 = vmatpush.msra.mxu0 %v1027
  %1125 = vmatmul.f32.gmra.mxu0 %v1051
  %v1126 = vpop.f32.mrf.mxu0
  %v1127 = vadd.f32 0.0, %v1126
  %1128 = vmatmul.f32.gmra.mxu0 %v1054
  %v1129 = vpop.f32.mrf.mxu0
  %v1130 = vadd.f32 0.0, %v1129
  %1131 = vmatmul.f32.gmra.mxu0 %v1057
  %v1132 = vpop.f32.mrf.mxu0
  %v1133 = vadd.f32 0.0, %v1132
  %1134 = vmatmul.f32.gmra.mxu0 %v1060
  %v1135 = vpop.f32.mrf.mxu0
  %v1136 = vadd.f32 0.0, %v1135
  %1137 = vmatmul.f32.gmra.mxu0 %v1063
  %v1138 = vpop.f32.mrf.mxu0
  %v1139 = vadd.f32 0.0, %v1138
  %1140 = vmatmul.f32.gmra.mxu0 %v1066
  %v1141 = vpop.f32.mrf.mxu0
  %v1142 = vadd.f32 0.0, %v1141
  %1143 = vmatmul.f32.gmra.mxu0 %v1069
  %v1144 = vpop.f32.mrf.mxu0
  %v1145 = vadd.f32 0.0, %v1144
  %1146 = vdwg.mxu0
  %s1147 = scalar_lea.vmem %s1, 1728
  %v1148 = vld [vmem:[%s1147] sm:$0xff]
  %v1149 = vld [vmem:[%s1147 + $0x8] sm:$0xff]
  %v1150 = vld [vmem:[%s1147 + $0x10] sm:$0xff]
  %v1151 = vld [vmem:[%s1147 + $0x18] sm:$0xff]
  %v1152 = vld [vmem:[%s1147 + $0x20] sm:$0xff]
  %v1153 = vld [vmem:[%s1147 + $0x28] sm:$0xff]
  %v1154 = vld [vmem:[%s1147 + $0x30] sm:$0xff]
  %v1155 = vld [vmem:[%s1147 + $0x38] sm:$0xff]
  %v1156 = vld [vmem:[%s1147 + $0x40] sm:$0xff]
  %v1157 = vld [vmem:[%s1147 + $0x48] sm:$0xff]
  %v1158 = vld [vmem:[%s1147 + $0x50] sm:$0xff]
  %v1159 = vld [vmem:[%s1147 + $0x58] sm:$0xff]
  %v1160 = vld [vmem:[%s1147 + $0x60] sm:$0xff]
  %v1161 = vld [vmem:[%s1147 + $0x68] sm:$0xff]
  %v1162 = vld [vmem:[%s1147 + $0x70] sm:$0xff]
  %v1163 = vld [vmem:[%s1147 + $0x78] sm:$0xff]
  %v1164 = vld [vmem:[%s1147 + $0x80] sm:$0xff]
  %v1165 = vld [vmem:[%s1147 + $0x88] sm:$0xff]
  %v1166 = vld [vmem:[%s1147 + $0x90] sm:$0xff]
  %v1167 = vld [vmem:[%s1147 + $0x98] sm:$0xff]
  %v1168 = vld [vmem:[%s1147 + $0xa0] sm:$0xff]
  %v1169 = vld [vmem:[%s1147 + $0xa8] sm:$0xff]
  %v1170 = vld [vmem:[%s1147 + $0xb0] sm:$0xff]
  %v1171 = vld [vmem:[%s1147 + $0xb8] sm:$0xff]
  %1172 = vmatpush.msra.mxu0 0.0
  %1173 = vmatpush.msra.mxu0 0.0
  %1174 = vmatpush.msra.mxu0 0.0
  %1175 = vmatpush.msra.mxu0 0.0
  %1176 = vmatpush.msra.mxu0 %v1170
  %1177 = vmatpush.msra.mxu0 %v1168
  %1178 = vmatpush.msra.mxu0 %v1166
  %1179 = vmatpush.msra.mxu0 %v1164
  %1180 = vmatpush.msra.mxu0 %v1162
  %1181 = vmatpush.msra.mxu0 %v1160
  %1182 = vmatpush.msra.mxu0 %v1158
  %1183 = vmatpush.msra.mxu0 %v1156
  %1184 = vmatpush.msra.mxu0 %v1154
  %1185 = vmatpush.msra.mxu0 %v1152
  %1186 = vmatpush.msra.mxu0 %v1150
  %1187 = vmatpush.msra.mxu0 %v1148
  %1188 = vmatmul.f32.gmra.mxu0 %v1051
  %v1189 = vpop.f32.mrf.mxu0
  %v1190 = vadd.f32 0.0, %v1189
  %1191 = vmatmul.f32.gmra.mxu0 %v1054
  %v1192 = vpop.f32.mrf.mxu0
  %v1193 = vadd.f32 0.0, %v1192
  %1194 = vmatmul.f32.gmra.mxu0 %v1057
  %v1195 = vpop.f32.mrf.mxu0
  %v1196 = vadd.f32 0.0, %v1195
  %1197 = vmatmul.f32.gmra.mxu0 %v1060
  %v1198 = vpop.f32.mrf.mxu0
  %v1199 = vadd.f32 0.0, %v1198
  %1200 = vmatmul.f32.gmra.mxu0 %v1063
  %v1201 = vpop.f32.mrf.mxu0
  %v1202 = vadd.f32 0.0, %v1201
  %1203 = vmatmul.f32.gmra.mxu0 %v1066
  %v1204 = vpop.f32.mrf.mxu0
  %v1205 = vadd.f32 0.0, %v1204
  %1206 = vmatmul.f32.gmra.mxu0 %v1069
  %v1207 = vpop.f32.mrf.mxu0
  %v1208 = vadd.f32 0.0, %v1207
  %1209 = vdwg.mxu0
  %1210 = vmatpush.msra.mxu0 0.0
  %1211 = vmatpush.msra.mxu0 0.0
  %1212 = vmatpush.msra.mxu0 0.0
  %1213 = vmatpush.msra.mxu0 0.0
  %1214 = vmatpush.msra.mxu0 %v1171
  %1215 = vmatpush.msra.mxu0 %v1169
  %1216 = vmatpush.msra.mxu0 %v1167
  %1217 = vmatpush.msra.mxu0 %v1165
  %1218 = vmatpush.msra.mxu0 %v1163
  %1219 = vmatpush.msra.mxu0 %v1161
  %1220 = vmatpush.msra.mxu0 %v1159
  %1221 = vmatpush.msra.mxu0 %v1157
  %1222 = vmatpush.msra.mxu0 %v1155
  %1223 = vmatpush.msra.mxu0 %v1153
  %1224 = vmatpush.msra.mxu0 %v1151
  %1225 = vmatpush.msra.mxu0 %v1149
  %1226 = vmatmul.f32.gmra.mxu0 %v1051
  %v1227 = vpop.f32.mrf.mxu0
  %v1228 = vadd.f32 0.0, %v1227
  %1229 = vmatmul.f32.gmra.mxu0 %v1054
  %v1230 = vpop.f32.mrf.mxu0
  %v1231 = vadd.f32 0.0, %v1230
  %1232 = vmatmul.f32.gmra.mxu0 %v1057
  %v1233 = vpop.f32.mrf.mxu0
  %v1234 = vadd.f32 0.0, %v1233
  %1235 = vmatmul.f32.gmra.mxu0 %v1060
  %v1236 = vpop.f32.mrf.mxu0
  %v1237 = vadd.f32 0.0, %v1236
  %1238 = vmatmul.f32.gmra.mxu0 %v1063
  %v1239 = vpop.f32.mrf.mxu0
  %v1240 = vadd.f32 0.0, %v1239
  %1241 = vmatmul.f32.gmra.mxu0 %v1066
  %v1242 = vpop.f32.mrf.mxu0
  %v1243 = vadd.f32 0.0, %v1242
  %1244 = vmatmul.f32.gmra.mxu0 %v1069
  %v1245 = vpop.f32.mrf.mxu0
  %v1246 = vadd.f32 0.0, %v1245
  %1247 = vdwg.mxu0
  %v1248 = vadd.f32 %v989, %v1089
  %v1249 = vadd.f32 %v990, %v1127
  %v1250 = vadd.f32 %v991, %v1092
  %v1251 = vadd.f32 %v992, %v1130
  %v1252 = vadd.f32 %v993, %v1095
  %v1253 = vadd.f32 %v994, %v1133
  %v1254 = vadd.f32 %v995, %v1098
  %v1255 = vadd.f32 %v996, %v1136
  %v1256 = vadd.f32 %v997, %v1101
  %v1257 = vadd.f32 %v998, %v1139
  %v1258 = vadd.f32 %v999, %v1104
  %v1259 = vadd.f32 %v1000, %v1142
  %v1260 = vadd.f32 %v1001, %v1107
  %v1261 = vadd.f32 %v1002, %v1145
  %v1262 = vadd.f32 %v1003, %v1190
  %v1263 = vadd.f32 %v1004, %v1228
  %v1264 = vadd.f32 %v1005, %v1193
  %v1265 = vadd.f32 %v1006, %v1231
  %v1266 = vadd.f32 %v1007, %v1196
  %v1267 = vadd.f32 %v1008, %v1234
  %v1268 = vadd.f32 %v1009, %v1199
  %v1269 = vadd.f32 %v1010, %v1237
  %v1270 = vadd.f32 %v1011, %v1202
  %v1271 = vadd.f32 %v1012, %v1240
  %v1272 = vadd.f32 %v1013, %v1205
  %v1273 = vadd.f32 %v1014, %v1243
  %v1274 = vadd.f32 %v1015, %v1208
  %v1275 = vadd.f32 %v1016, %v1246
  %v1276 = vmax.f32 %v1248, %v1262
  %v1277 = vmax.f32 %v1249, %v1263
  %v1278 = vmax.f32 %v1250, %v1264
  %v1279 = vmax.f32 %v1251, %v1265
  %v1280 = vmax.f32 %v1252, %v1266
  %v1281 = vmax.f32 %v1253, %v1267
  %v1282 = vmax.f32 %v1254, %v1268
  %v1283 = vmax.f32 %v1255, %v1269
  %v1284 = vmax.f32 %v1256, %v1270
  %v1285 = vmax.f32 %v1257, %v1271
  %v1286 = vmax.f32 %v1258, %v1272
  %v1287 = vmax.f32 %v1259, %v1273
  %v1288 = vmax.f32 %v1260, %v1274
  %v1289 = vmax.f32 %v1261, %v1275
  %1290 = vmatpush.msra.mxu0 0.0
  %1291 = vmatpush.msra.mxu0 0.0
  %1292 = vmatpush.msra.mxu0 0.0
  %1293 = vmatpush.msra.mxu0 0.0
  %1294 = vmatpush.msra.mxu0 %v125
  %1295 = vmatpush.msra.mxu0 %v123
  %1296 = vmatpush.msra.mxu0 %v121
  %1297 = vmatpush.msra.mxu0 %v119
  %1298 = vmatpush.msra.mxu0 %v117
  %1299 = vmatpush.msra.mxu0 %v115
  %1300 = vmatpush.msra.mxu0 %v113
  %1301 = vmatpush.msra.mxu0 %v111
  %1302 = vmatpush.msra.mxu0 %v109
  %1303 = vmatpush.msra.mxu0 %v107
  %1304 = vmatpush.msra.mxu0 %v105
  %1305 = vmatpush.msra.mxu0 %v103
  %1306 = vmatmul.f32.gmra.mxu0 %v533
  %v1307 = vpop.f32.mrf.mxu0
  %v1308 = vadd.f32 0.0, %v1307
  %1309 = vmatmul.f32.gmra.mxu0 %v536
  %v1310 = vpop.f32.mrf.mxu0
  %v1311 = vadd.f32 0.0, %v1310
  %1312 = vmatmul.f32.gmra.mxu0 %v539
  %v1313 = vpop.f32.mrf.mxu0
  %v1314 = vadd.f32 0.0, %v1313
  %1315 = vmatmul.f32.gmra.mxu0 %v542
  %v1316 = vpop.f32.mrf.mxu0
  %v1317 = vadd.f32 0.0, %v1316
  %1318 = vmatmul.f32.gmra.mxu0 %v545
  %v1319 = vpop.f32.mrf.mxu0
  %v1320 = vadd.f32 0.0, %v1319
  %1321 = vmatmul.f32.gmra.mxu0 %v548
  %v1322 = vpop.f32.mrf.mxu0
  %v1323 = vadd.f32 0.0, %v1322
  %1324 = vmatmul.f32.gmra.mxu0 %v551
  %v1325 = vpop.f32.mrf.mxu0
  %v1326 = vadd.f32 0.0, %v1325
  %1327 = vdwg.mxu0
  %1328 = vmatpush.msra.mxu0 0.0
  %1329 = vmatpush.msra.mxu0 0.0
  %1330 = vmatpush.msra.mxu0 0.0
  %1331 = vmatpush.msra.mxu0 0.0
  %1332 = vmatpush.msra.mxu0 %v126
  %1333 = vmatpush.msra.mxu0 %v124
  %1334 = vmatpush.msra.mxu0 %v122
  %1335 = vmatpush.msra.mxu0 %v120
  %1336 = vmatpush.msra.mxu0 %v118
  %1337 = vmatpush.msra.mxu0 %v116
  %1338 = vmatpush.msra.mxu0 %v114
  %1339 = vmatpush.msra.mxu0 %v112
  %1340 = vmatpush.msra.mxu0 %v110
  %1341 = vmatpush.msra.mxu0 %v108
  %1342 = vmatpush.msra.mxu0 %v106
  %1343 = vmatpush.msra.mxu0 %v104
  %1344 = vmatmul.f32.gmra.mxu0 %v533
  %v1345 = vpop.f32.mrf.mxu0
  %v1346 = vadd.f32 0.0, %v1345
  %1347 = vmatmul.f32.gmra.mxu0 %v536
  %v1348 = vpop.f32.mrf.mxu0
  %v1349 = vadd.f32 0.0, %v1348
  %1350 = vmatmul.f32.gmra.mxu0 %v539
  %v1351 = vpop.f32.mrf.mxu0
  %v1352 = vadd.f32 0.0, %v1351
  %1353 = vmatmul.f32.gmra.mxu0 %v542
  %v1354 = vpop.f32.mrf.mxu0
  %v1355 = vadd.f32 0.0, %v1354
  %1356 = vmatmul.f32.gmra.mxu0 %v545
  %v1357 = vpop.f32.mrf.mxu0
  %v1358 = vadd.f32 0.0, %v1357
  %1359 = vmatmul.f32.gmra.mxu0 %v548
  %v1360 = vpop.f32.mrf.mxu0
  %v1361 = vadd.f32 0.0, %v1360
  %1362 = vmatmul.f32.gmra.mxu0 %v551
  %v1363 = vpop.f32.mrf.mxu0
  %v1364 = vadd.f32 0.0, %v1363
  %1365 = vdwg.mxu0
  %1366 = vmatpush.msra.mxu0 0.0
  %1367 = vmatpush.msra.mxu0 0.0
  %1368 = vmatpush.msra.mxu0 0.0
  %1369 = vmatpush.msra.mxu0 0.0
  %1370 = vmatpush.msra.mxu0 %v248
  %1371 = vmatpush.msra.mxu0 %v246
  %1372 = vmatpush.msra.mxu0 %v244
  %1373 = vmatpush.msra.mxu0 %v242
  %1374 = vmatpush.msra.mxu0 %v240
  %1375 = vmatpush.msra.mxu0 %v238
  %1376 = vmatpush.msra.mxu0 %v236
  %1377 = vmatpush.msra.mxu0 %v234
  %1378 = vmatpush.msra.mxu0 %v232
  %1379 = vmatpush.msra.mxu0 %v230
  %1380 = vmatpush.msra.mxu0 %v228
  %1381 = vmatpush.msra.mxu0 %v226
  %1382 = vmatmul.f32.gmra.mxu0 %v533
  %v1383 = vpop.f32.mrf.mxu0
  %v1384 = vadd.f32 0.0, %v1383
  %1385 = vmatmul.f32.gmra.mxu0 %v536
  %v1386 = vpop.f32.mrf.mxu0
  %v1387 = vadd.f32 0.0, %v1386
  %1388 = vmatmul.f32.gmra.mxu0 %v539
  %v1389 = vpop.f32.mrf.mxu0
  %v1390 = vadd.f32 0.0, %v1389
  %1391 = vmatmul.f32.gmra.mxu0 %v542
  %v1392 = vpop.f32.mrf.mxu0
  %v1393 = vadd.f32 0.0, %v1392
  %1394 = vmatmul.f32.gmra.mxu0 %v545
  %v1395 = vpop.f32.mrf.mxu0
  %v1396 = vadd.f32 0.0, %v1395
  %1397 = vmatmul.f32.gmra.mxu0 %v548
  %v1398 = vpop.f32.mrf.mxu0
  %v1399 = vadd.f32 0.0, %v1398
  %1400 = vmatmul.f32.gmra.mxu0 %v551
  %v1401 = vpop.f32.mrf.mxu0
  %v1402 = vadd.f32 0.0, %v1401
  %1403 = vdwg.mxu0
  %1404 = vmatpush.msra.mxu0 0.0
  %1405 = vmatpush.msra.mxu0 0.0
  %1406 = vmatpush.msra.mxu0 0.0
  %1407 = vmatpush.msra.mxu0 0.0
  %1408 = vmatpush.msra.mxu0 %v249
  %1409 = vmatpush.msra.mxu0 %v247
  %1410 = vmatpush.msra.mxu0 %v245
  %1411 = vmatpush.msra.mxu0 %v243
  %1412 = vmatpush.msra.mxu0 %v241
  %1413 = vmatpush.msra.mxu0 %v239
  %1414 = vmatpush.msra.mxu0 %v237
  %1415 = vmatpush.msra.mxu0 %v235
  %1416 = vmatpush.msra.mxu0 %v233
  %1417 = vmatpush.msra.mxu0 %v231
  %1418 = vmatpush.msra.mxu0 %v229
  %1419 = vmatpush.msra.mxu0 %v227
  %1420 = vmatmul.f32.gmra.mxu0 %v533
  %v1421 = vpop.f32.mrf.mxu0
  %v1422 = vadd.f32 0.0, %v1421
  %1423 = vmatmul.f32.gmra.mxu0 %v536
  %v1424 = vpop.f32.mrf.mxu0
  %v1425 = vadd.f32 0.0, %v1424
  %1426 = vmatmul.f32.gmra.mxu0 %v539
  %v1427 = vpop.f32.mrf.mxu0
  %v1428 = vadd.f32 0.0, %v1427
  %1429 = vmatmul.f32.gmra.mxu0 %v542
  %v1430 = vpop.f32.mrf.mxu0
  %v1431 = vadd.f32 0.0, %v1430
  %1432 = vmatmul.f32.gmra.mxu0 %v545
  %v1433 = vpop.f32.mrf.mxu0
  %v1434 = vadd.f32 0.0, %v1433
  %1435 = vmatmul.f32.gmra.mxu0 %v548
  %v1436 = vpop.f32.mrf.mxu0
  %v1437 = vadd.f32 0.0, %v1436
  %1438 = vmatmul.f32.gmra.mxu0 %v551
  %v1439 = vpop.f32.mrf.mxu0
  %v1440 = vadd.f32 0.0, %v1439
  %1441 = vdwg.mxu0
  %1442 = vmatpush.msra.mxu0 0.0
  %1443 = vmatpush.msra.mxu0 0.0
  %1444 = vmatpush.msra.mxu0 0.0
  %1445 = vmatpush.msra.mxu0 0.0
  %1446 = vmatpush.msra.mxu0 %v67
  %1447 = vmatpush.msra.mxu0 %v65
  %1448 = vmatpush.msra.mxu0 %v63
  %1449 = vmatpush.msra.mxu0 %v61
  %1450 = vmatpush.msra.mxu0 %v59
  %1451 = vmatpush.msra.mxu0 %v57
  %1452 = vmatpush.msra.mxu0 %v55
  %1453 = vmatpush.msra.mxu0 %v53
  %1454 = vmatpush.msra.mxu0 %v51
  %1455 = vmatpush.msra.mxu0 %v49
  %1456 = vmatpush.msra.mxu0 %v47
  %1457 = vmatpush.msra.mxu0 %v45
  %1458 = vmatmul.f32.gmra.mxu0 %v129
  %v1459 = vpop.f32.mrf.mxu0
  %v1460 = vadd.f32 %v1308, %v1459
  %1461 = vmatmul.f32.gmra.mxu0 %v132
  %v1462 = vpop.f32.mrf.mxu0
  %v1463 = vadd.f32 %v1311, %v1462
  %1464 = vmatmul.f32.gmra.mxu0 %v135
  %v1465 = vpop.f32.mrf.mxu0
  %v1466 = vadd.f32 %v1314, %v1465
  %1467 = vmatmul.f32.gmra.mxu0 %v138
  %v1468 = vpop.f32.mrf.mxu0
  %v1469 = vadd.f32 %v1317, %v1468
  %1470 = vmatmul.f32.gmra.mxu0 %v141
  %v1471 = vpop.f32.mrf.mxu0
  %v1472 = vadd.f32 %v1320, %v1471
  %1473 = vmatmul.f32.gmra.mxu0 %v144
  %v1474 = vpop.f32.mrf.mxu0
  %v1475 = vadd.f32 %v1323, %v1474
  %1476 = vmatmul.f32.gmra.mxu0 %v147
  %v1477 = vpop.f32.mrf.mxu0
  %v1478 = vadd.f32 %v1326, %v1477
  %1479 = vdwg.mxu0
  %1480 = vmatpush.msra.mxu0 0.0
  %1481 = vmatpush.msra.mxu0 0.0
  %1482 = vmatpush.msra.mxu0 0.0
  %1483 = vmatpush.msra.mxu0 0.0
  %1484 = vmatpush.msra.mxu0 %v68
  %1485 = vmatpush.msra.mxu0 %v66
  %1486 = vmatpush.msra.mxu0 %v64
  %1487 = vmatpush.msra.mxu0 %v62
  %1488 = vmatpush.msra.mxu0 %v60
  %1489 = vmatpush.msra.mxu0 %v58
  %1490 = vmatpush.msra.mxu0 %v56
  %1491 = vmatpush.msra.mxu0 %v54
  %1492 = vmatpush.msra.mxu0 %v52
  %1493 = vmatpush.msra.mxu0 %v50
  %1494 = vmatpush.msra.mxu0 %v48
  %1495 = vmatpush.msra.mxu0 %v46
  %1496 = vmatmul.f32.gmra.mxu0 %v129
  %v1497 = vpop.f32.mrf.mxu0
  %v1498 = vadd.f32 %v1346, %v1497
  %1499 = vmatmul.f32.gmra.mxu0 %v132
  %v1500 = vpop.f32.mrf.mxu0
  %v1501 = vadd.f32 %v1349, %v1500
  %1502 = vmatmul.f32.gmra.mxu0 %v135
  %v1503 = vpop.f32.mrf.mxu0
  %v1504 = vadd.f32 %v1352, %v1503
  %1505 = vmatmul.f32.gmra.mxu0 %v138
  %v1506 = vpop.f32.mrf.mxu0
  %v1507 = vadd.f32 %v1355, %v1506
  %1508 = vmatmul.f32.gmra.mxu0 %v141
  %v1509 = vpop.f32.mrf.mxu0
  %v1510 = vadd.f32 %v1358, %v1509
  %1511 = vmatmul.f32.gmra.mxu0 %v144
  %v1512 = vpop.f32.mrf.mxu0
  %v1513 = vadd.f32 %v1361, %v1512
  %1514 = vmatmul.f32.gmra.mxu0 %v147
  %v1515 = vpop.f32.mrf.mxu0
  %v1516 = vadd.f32 %v1364, %v1515
  %1517 = vdwg.mxu0
  %1518 = vmatpush.msra.mxu0 0.0
  %1519 = vmatpush.msra.mxu0 0.0
  %1520 = vmatpush.msra.mxu0 0.0
  %1521 = vmatpush.msra.mxu0 0.0
  %1522 = vmatpush.msra.mxu0 %v92
  %1523 = vmatpush.msra.mxu0 %v90
  %1524 = vmatpush.msra.mxu0 %v88
  %1525 = vmatpush.msra.mxu0 %v86
  %1526 = vmatpush.msra.mxu0 %v84
  %1527 = vmatpush.msra.mxu0 %v82
  %1528 = vmatpush.msra.mxu0 %v80
  %1529 = vmatpush.msra.mxu0 %v78
  %1530 = vmatpush.msra.mxu0 %v76
  %1531 = vmatpush.msra.mxu0 %v74
  %1532 = vmatpush.msra.mxu0 %v72
  %1533 = vmatpush.msra.mxu0 %v70
  %1534 = vmatmul.f32.gmra.mxu0 %v129
  %v1535 = vpop.f32.mrf.mxu0
  %v1536 = vadd.f32 %v1384, %v1535
  %1537 = vmatmul.f32.gmra.mxu0 %v132
  %v1538 = vpop.f32.mrf.mxu0
  %v1539 = vadd.f32 %v1387, %v1538
  %1540 = vmatmul.f32.gmra.mxu0 %v135
  %v1541 = vpop.f32.mrf.mxu0
  %v1542 = vadd.f32 %v1390, %v1541
  %1543 = vmatmul.f32.gmra.mxu0 %v138
  %v1544 = vpop.f32.mrf.mxu0
  %v1545 = vadd.f32 %v1393, %v1544
  %1546 = vmatmul.f32.gmra.mxu0 %v141
  %v1547 = vpop.f32.mrf.mxu0
  %v1548 = vadd.f32 %v1396, %v1547
  %1549 = vmatmul.f32.gmra.mxu0 %v144
  %v1550 = vpop.f32.mrf.mxu0
  %v1551 = vadd.f32 %v1399, %v1550
  %1552 = vmatmul.f32.gmra.mxu0 %v147
  %v1553 = vpop.f32.mrf.mxu0
  %v1554 = vadd.f32 %v1402, %v1553
  %1555 = vdwg.mxu0
  %1556 = vmatpush.msra.mxu0 0.0
  %1557 = vmatpush.msra.mxu0 0.0
  %1558 = vmatpush.msra.mxu0 0.0
  %1559 = vmatpush.msra.mxu0 0.0
  %1560 = vmatpush.msra.mxu0 %v93
  %1561 = vmatpush.msra.mxu0 %v91
  %1562 = vmatpush.msra.mxu0 %v89
  %1563 = vmatpush.msra.mxu0 %v87
  %1564 = vmatpush.msra.mxu0 %v85
  %1565 = vmatpush.msra.mxu0 %v83
  %1566 = vmatpush.msra.mxu0 %v81
  %1567 = vmatpush.msra.mxu0 %v79
  %1568 = vmatpush.msra.mxu0 %v77
  %1569 = vmatpush.msra.mxu0 %v75
  %1570 = vmatpush.msra.mxu0 %v73
  %1571 = vmatpush.msra.mxu0 %v71
  %1572 = vmatmul.f32.gmra.mxu0 %v129
  %v1573 = vpop.f32.mrf.mxu0
  %v1574 = vadd.f32 %v1422, %v1573
  %1575 = vmatmul.f32.gmra.mxu0 %v132
  %v1576 = vpop.f32.mrf.mxu0
  %v1577 = vadd.f32 %v1425, %v1576
  %1578 = vmatmul.f32.gmra.mxu0 %v135
  %v1579 = vpop.f32.mrf.mxu0
  %v1580 = vadd.f32 %v1428, %v1579
  %1581 = vmatmul.f32.gmra.mxu0 %v138
  %v1582 = vpop.f32.mrf.mxu0
  %v1583 = vadd.f32 %v1431, %v1582
  %1584 = vmatmul.f32.gmra.mxu0 %v141
  %v1585 = vpop.f32.mrf.mxu0
  %v1586 = vadd.f32 %v1434, %v1585
  %1587 = vmatmul.f32.gmra.mxu0 %v144
  %v1588 = vpop.f32.mrf.mxu0
  %v1589 = vadd.f32 %v1437, %v1588
  %1590 = vmatmul.f32.gmra.mxu0 %v147
  %v1591 = vpop.f32.mrf.mxu0
  %v1592 = vadd.f32 %v1440, %v1591
  %1593 = vdwg.mxu0
  %1594 = vmatpush.msra.mxu0 0.0
  %1595 = vmatpush.msra.mxu0 0.0
  %1596 = vmatpush.msra.mxu0 0.0
  %1597 = vmatpush.msra.mxu0 0.0
  %1598 = vmatpush.msra.mxu0 %v530
  %1599 = vmatpush.msra.mxu0 %v528
  %1600 = vmatpush.msra.mxu0 %v526
  %1601 = vmatpush.msra.mxu0 %v524
  %1602 = vmatpush.msra.mxu0 %v522
  %1603 = vmatpush.msra.mxu0 %v520
  %1604 = vmatpush.msra.mxu0 %v518
  %1605 = vmatpush.msra.mxu0 %v516
  %1606 = vmatpush.msra.mxu0 %v514
  %1607 = vmatpush.msra.mxu0 %v512
  %1608 = vmatpush.msra.mxu0 %v510
  %1609 = vmatpush.msra.mxu0 %v508
  %1610 = vmatmul.f32.gmra.mxu0 %v792
  %v1611 = vpop.f32.mrf.mxu0
  %v1612 = vadd.f32 0.0, %v1611
  %1613 = vmatmul.f32.gmra.mxu0 %v795
  %v1614 = vpop.f32.mrf.mxu0
  %v1615 = vadd.f32 0.0, %v1614
  %1616 = vmatmul.f32.gmra.mxu0 %v798
  %v1617 = vpop.f32.mrf.mxu0
  %v1618 = vadd.f32 0.0, %v1617
  %1619 = vmatmul.f32.gmra.mxu0 %v801
  %v1620 = vpop.f32.mrf.mxu0
  %v1621 = vadd.f32 0.0, %v1620
  %1622 = vmatmul.f32.gmra.mxu0 %v804
  %v1623 = vpop.f32.mrf.mxu0
  %v1624 = vadd.f32 0.0, %v1623
  %1625 = vmatmul.f32.gmra.mxu0 %v807
  %v1626 = vpop.f32.mrf.mxu0
  %v1627 = vadd.f32 0.0, %v1626
  %1628 = vmatmul.f32.gmra.mxu0 %v810
  %v1629 = vpop.f32.mrf.mxu0
  %v1630 = vadd.f32 0.0, %v1629
  %1631 = vdwg.mxu0
  %1632 = vmatpush.msra.mxu0 0.0
  %1633 = vmatpush.msra.mxu0 0.0
  %1634 = vmatpush.msra.mxu0 0.0
  %1635 = vmatpush.msra.mxu0 0.0
  %1636 = vmatpush.msra.mxu0 %v531
  %1637 = vmatpush.msra.mxu0 %v529
  %1638 = vmatpush.msra.mxu0 %v527
  %1639 = vmatpush.msra.mxu0 %v525
  %1640 = vmatpush.msra.mxu0 %v523
  %1641 = vmatpush.msra.mxu0 %v521
  %1642 = vmatpush.msra.mxu0 %v519
  %1643 = vmatpush.msra.mxu0 %v517
  %1644 = vmatpush.msra.mxu0 %v515
  %1645 = vmatpush.msra.mxu0 %v513
  %1646 = vmatpush.msra.mxu0 %v511
  %1647 = vmatpush.msra.mxu0 %v509
  %1648 = vmatmul.f32.gmra.mxu0 %v792
  %v1649 = vpop.f32.mrf.mxu0
  %v1650 = vadd.f32 0.0, %v1649
  %1651 = vmatmul.f32.gmra.mxu0 %v795
  %v1652 = vpop.f32.mrf.mxu0
  %v1653 = vadd.f32 0.0, %v1652
  %1654 = vmatmul.f32.gmra.mxu0 %v798
  %v1655 = vpop.f32.mrf.mxu0
  %v1656 = vadd.f32 0.0, %v1655
  %1657 = vmatmul.f32.gmra.mxu0 %v801
  %v1658 = vpop.f32.mrf.mxu0
  %v1659 = vadd.f32 0.0, %v1658
  %1660 = vmatmul.f32.gmra.mxu0 %v804
  %v1661 = vpop.f32.mrf.mxu0
  %v1662 = vadd.f32 0.0, %v1661
  %1663 = vmatmul.f32.gmra.mxu0 %v807
  %v1664 = vpop.f32.mrf.mxu0
  %v1665 = vadd.f32 0.0, %v1664
  %1666 = vmatmul.f32.gmra.mxu0 %v810
  %v1667 = vpop.f32.mrf.mxu0
  %v1668 = vadd.f32 0.0, %v1667
  %1669 = vdwg.mxu0
  %1670 = vmatpush.msra.mxu0 0.0
  %1671 = vmatpush.msra.mxu0 0.0
  %1672 = vmatpush.msra.mxu0 0.0
  %1673 = vmatpush.msra.mxu0 0.0
  %1674 = vmatpush.msra.mxu0 %v652
  %1675 = vmatpush.msra.mxu0 %v650
  %1676 = vmatpush.msra.mxu0 %v648
  %1677 = vmatpush.msra.mxu0 %v646
  %1678 = vmatpush.msra.mxu0 %v644
  %1679 = vmatpush.msra.mxu0 %v642
  %1680 = vmatpush.msra.mxu0 %v640
  %1681 = vmatpush.msra.mxu0 %v638
  %1682 = vmatpush.msra.mxu0 %v636
  %1683 = vmatpush.msra.mxu0 %v634
  %1684 = vmatpush.msra.mxu0 %v632
  %1685 = vmatpush.msra.mxu0 %v630
  %1686 = vmatmul.f32.gmra.mxu0 %v792
  %v1687 = vpop.f32.mrf.mxu0
  %v1688 = vadd.f32 0.0, %v1687
  %1689 = vmatmul.f32.gmra.mxu0 %v795
  %v1690 = vpop.f32.mrf.mxu0
  %v1691 = vadd.f32 0.0, %v1690
  %1692 = vmatmul.f32.gmra.mxu0 %v798
  %v1693 = vpop.f32.mrf.mxu0
  %v1694 = vadd.f32 0.0, %v1693
  %1695 = vmatmul.f32.gmra.mxu0 %v801
  %v1696 = vpop.f32.mrf.mxu0
  %v1697 = vadd.f32 0.0, %v1696
  %1698 = vmatmul.f32.gmra.mxu0 %v804
  %v1699 = vpop.f32.mrf.mxu0
  %v1700 = vadd.f32 0.0, %v1699
  %1701 = vmatmul.f32.gmra.mxu0 %v807
  %v1702 = vpop.f32.mrf.mxu0
  %v1703 = vadd.f32 0.0, %v1702
  %1704 = vmatmul.f32.gmra.mxu0 %v810
  %v1705 = vpop.f32.mrf.mxu0
  %v1706 = vadd.f32 0.0, %v1705
  %1707 = vdwg.mxu0
  %1708 = vmatpush.msra.mxu0 0.0
  %1709 = vmatpush.msra.mxu0 0.0
  %1710 = vmatpush.msra.mxu0 0.0
  %1711 = vmatpush.msra.mxu0 0.0
  %1712 = vmatpush.msra.mxu0 %v653
  %1713 = vmatpush.msra.mxu0 %v651
  %1714 = vmatpush.msra.mxu0 %v649
  %1715 = vmatpush.msra.mxu0 %v647
  %1716 = vmatpush.msra.mxu0 %v645
  %1717 = vmatpush.msra.mxu0 %v643
  %1718 = vmatpush.msra.mxu0 %v641
  %1719 = vmatpush.msra.mxu0 %v639
  %1720 = vmatpush.msra.mxu0 %v637
  %1721 = vmatpush.msra.mxu0 %v635
  %1722 = vmatpush.msra.mxu0 %v633
  %1723 = vmatpush.msra.mxu0 %v631
  %1724 = vmatmul.f32.gmra.mxu0 %v792
  %v1725 = vpop.f32.mrf.mxu0
  %v1726 = vadd.f32 0.0, %v1725
  %1727 = vmatmul.f32.gmra.mxu0 %v795
  %v1728 = vpop.f32.mrf.mxu0
  %v1729 = vadd.f32 0.0, %v1728
  %1730 = vmatmul.f32.gmra.mxu0 %v798
  %v1731 = vpop.f32.mrf.mxu0
  %v1732 = vadd.f32 0.0, %v1731
  %1733 = vmatmul.f32.gmra.mxu0 %v801
  %v1734 = vpop.f32.mrf.mxu0
  %v1735 = vadd.f32 0.0, %v1734
  %1736 = vmatmul.f32.gmra.mxu0 %v804
  %v1737 = vpop.f32.mrf.mxu0
  %v1738 = vadd.f32 0.0, %v1737
  %1739 = vmatmul.f32.gmra.mxu0 %v807
  %v1740 = vpop.f32.mrf.mxu0
  %v1741 = vadd.f32 0.0, %v1740
  %1742 = vmatmul.f32.gmra.mxu0 %v810
  %v1743 = vpop.f32.mrf.mxu0
  %v1744 = vadd.f32 0.0, %v1743
  %1745 = vdwg.mxu0
  %v1746 = vadd.f32 %v1460, %v1612
  %v1747 = vadd.f32 %v1498, %v1650
  %v1748 = vadd.f32 %v1463, %v1615
  %v1749 = vadd.f32 %v1501, %v1653
  %v1750 = vadd.f32 %v1466, %v1618
  %v1751 = vadd.f32 %v1504, %v1656
  %v1752 = vadd.f32 %v1469, %v1621
  %v1753 = vadd.f32 %v1507, %v1659
  %v1754 = vadd.f32 %v1472, %v1624
  %v1755 = vadd.f32 %v1510, %v1662
  %v1756 = vadd.f32 %v1475, %v1627
  %v1757 = vadd.f32 %v1513, %v1665
  %v1758 = vadd.f32 %v1478, %v1630
  %v1759 = vadd.f32 %v1516, %v1668
  %v1760 = vadd.f32 %v1536, %v1688
  %v1761 = vadd.f32 %v1574, %v1726
  %v1762 = vadd.f32 %v1539, %v1691
  %v1763 = vadd.f32 %v1577, %v1729
  %v1764 = vadd.f32 %v1542, %v1694
  %v1765 = vadd.f32 %v1580, %v1732
  %v1766 = vadd.f32 %v1545, %v1697
  %v1767 = vadd.f32 %v1583, %v1735
  %v1768 = vadd.f32 %v1548, %v1700
  %v1769 = vadd.f32 %v1586, %v1738
  %v1770 = vadd.f32 %v1551, %v1703
  %v1771 = vadd.f32 %v1589, %v1741
  %v1772 = vadd.f32 %v1554, %v1706
  %v1773 = vadd.f32 %v1592, %v1744
  %1774 = vmatpush.msra.mxu0 0.0
  %1775 = vmatpush.msra.mxu0 0.0
  %1776 = vmatpush.msra.mxu0 0.0
  %1777 = vmatpush.msra.mxu0 0.0
  %1778 = vmatpush.msra.mxu0 %v789
  %1779 = vmatpush.msra.mxu0 %v787
  %1780 = vmatpush.msra.mxu0 %v785
  %1781 = vmatpush.msra.mxu0 %v783
  %1782 = vmatpush.msra.mxu0 %v781
  %1783 = vmatpush.msra.mxu0 %v779
  %1784 = vmatpush.msra.mxu0 %v777
  %1785 = vmatpush.msra.mxu0 %v775
  %1786 = vmatpush.msra.mxu0 %v773
  %1787 = vmatpush.msra.mxu0 %v771
  %1788 = vmatpush.msra.mxu0 %v769
  %1789 = vmatpush.msra.mxu0 %v767
  %1790 = vmatmul.f32.gmra.mxu0 %v1051
  %v1791 = vpop.f32.mrf.mxu0
  %v1792 = vadd.f32 0.0, %v1791
  %1793 = vmatmul.f32.gmra.mxu0 %v1054
  %v1794 = vpop.f32.mrf.mxu0
  %v1795 = vadd.f32 0.0, %v1794
  %1796 = vmatmul.f32.gmra.mxu0 %v1057
  %v1797 = vpop.f32.mrf.mxu0
  %v1798 = vadd.f32 0.0, %v1797
  %1799 = vmatmul.f32.gmra.mxu0 %v1060
  %v1800 = vpop.f32.mrf.mxu0
  %v1801 = vadd.f32 0.0, %v1800
  %1802 = vmatmul.f32.gmra.mxu0 %v1063
  %v1803 = vpop.f32.mrf.mxu0
  %v1804 = vadd.f32 0.0, %v1803
  %1805 = vmatmul.f32.gmra.mxu0 %v1066
  %v1806 = vpop.f32.mrf.mxu0
  %v1807 = vadd.f32 0.0, %v1806
  %1808 = vmatmul.f32.gmra.mxu0 %v1069
  %v1809 = vpop.f32.mrf.mxu0
  %v1810 = vadd.f32 0.0, %v1809
  %1811 = vdwg.mxu0
  %1812 = vmatpush.msra.mxu0 0.0
  %1813 = vmatpush.msra.mxu0 0.0
  %1814 = vmatpush.msra.mxu0 0.0
  %1815 = vmatpush.msra.mxu0 0.0
  %1816 = vmatpush.msra.mxu0 %v790
  %1817 = vmatpush.msra.mxu0 %v788
  %1818 = vmatpush.msra.mxu0 %v786
  %1819 = vmatpush.msra.mxu0 %v784
  %1820 = vmatpush.msra.mxu0 %v782
  %1821 = vmatpush.msra.mxu0 %v780
  %1822 = vmatpush.msra.mxu0 %v778
  %1823 = vmatpush.msra.mxu0 %v776
  %1824 = vmatpush.msra.mxu0 %v774
  %1825 = vmatpush.msra.mxu0 %v772
  %1826 = vmatpush.msra.mxu0 %v770
  %1827 = vmatpush.msra.mxu0 %v768
  %1828 = vmatmul.f32.gmra.mxu0 %v1051
  %v1829 = vpop.f32.mrf.mxu0
  %v1830 = vadd.f32 0.0, %v1829
  %1831 = vmatmul.f32.gmra.mxu0 %v1054
  %v1832 = vpop.f32.mrf.mxu0
  %v1833 = vadd.f32 0.0, %v1832
  %1834 = vmatmul.f32.gmra.mxu0 %v1057
  %v1835 = vpop.f32.mrf.mxu0
  %v1836 = vadd.f32 0.0, %v1835
  %1837 = vmatmul.f32.gmra.mxu0 %v1060
  %v1838 = vpop.f32.mrf.mxu0
  %v1839 = vadd.f32 0.0, %v1838
  %1840 = vmatmul.f32.gmra.mxu0 %v1063
  %v1841 = vpop.f32.mrf.mxu0
  %v1842 = vadd.f32 0.0, %v1841
  %1843 = vmatmul.f32.gmra.mxu0 %v1066
  %v1844 = vpop.f32.mrf.mxu0
  %v1845 = vadd.f32 0.0, %v1844
  %1846 = vmatmul.f32.gmra.mxu0 %v1069
  %v1847 = vpop.f32.mrf.mxu0
  %v1848 = vadd.f32 0.0, %v1847
  %1849 = vdwg.mxu0
  %1850 = vmatpush.msra.mxu0 0.0
  %1851 = vmatpush.msra.mxu0 0.0
  %1852 = vmatpush.msra.mxu0 0.0
  %1853 = vmatpush.msra.mxu0 0.0
  %1854 = vmatpush.msra.mxu0 %v911
  %1855 = vmatpush.msra.mxu0 %v909
  %1856 = vmatpush.msra.mxu0 %v907
  %1857 = vmatpush.msra.mxu0 %v905
  %1858 = vmatpush.msra.mxu0 %v903
  %1859 = vmatpush.msra.mxu0 %v901
  %1860 = vmatpush.msra.mxu0 %v899
  %1861 = vmatpush.msra.mxu0 %v897
  %1862 = vmatpush.msra.mxu0 %v895
  %1863 = vmatpush.msra.mxu0 %v893
  %1864 = vmatpush.msra.mxu0 %v891
  %1865 = vmatpush.msra.mxu0 %v889
  %1866 = vmatmul.f32.gmra.mxu0 %v1051
  %v1867 = vpop.f32.mrf.mxu0
  %v1868 = vadd.f32 0.0, %v1867
  %1869 = vmatmul.f32.gmra.mxu0 %v1054
  %v1870 = vpop.f32.mrf.mxu0
  %v1871 = vadd.f32 0.0, %v1870
  %1872 = vmatmul.f32.gmra.mxu0 %v1057
  %v1873 = vpop.f32.mrf.mxu0
  %v1874 = vadd.f32 0.0, %v1873
  %1875 = vmatmul.f32.gmra.mxu0 %v1060
  %v1876 = vpop.f32.mrf.mxu0
  %v1877 = vadd.f32 0.0, %v1876
  %1878 = vmatmul.f32.gmra.mxu0 %v1063
  %v1879 = vpop.f32.mrf.mxu0
  %v1880 = vadd.f32 0.0, %v1879
  %1881 = vmatmul.f32.gmra.mxu0 %v1066
  %v1882 = vpop.f32.mrf.mxu0
  %v1883 = vadd.f32 0.0, %v1882
  %1884 = vmatmul.f32.gmra.mxu0 %v1069
  %v1885 = vpop.f32.mrf.mxu0
  %v1886 = vadd.f32 0.0, %v1885
  %1887 = vdwg.mxu0
  %1888 = vmatpush.msra.mxu0 0.0
  %1889 = vmatpush.msra.mxu0 0.0
  %1890 = vmatpush.msra.mxu0 0.0
  %1891 = vmatpush.msra.mxu0 0.0
  %1892 = vmatpush.msra.mxu0 %v912
  %1893 = vmatpush.msra.mxu0 %v910
  %1894 = vmatpush.msra.mxu0 %v908
  %1895 = vmatpush.msra.mxu0 %v906
  %1896 = vmatpush.msra.mxu0 %v904
  %1897 = vmatpush.msra.mxu0 %v902
  %1898 = vmatpush.msra.mxu0 %v900
  %1899 = vmatpush.msra.mxu0 %v898
  %1900 = vmatpush.msra.mxu0 %v896
  %1901 = vmatpush.msra.mxu0 %v894
  %1902 = vmatpush.msra.mxu0 %v892
  %1903 = vmatpush.msra.mxu0 %v890
  %1904 = vmatmul.f32.gmra.mxu0 %v1051
  %v1905 = vpop.f32.mrf.mxu0
  %v1906 = vadd.f32 0.0, %v1905
  %1907 = vmatmul.f32.gmra.mxu0 %v1054
  %v1908 = vpop.f32.mrf.mxu0
  %v1909 = vadd.f32 0.0, %v1908
  %1910 = vmatmul.f32.gmra.mxu0 %v1057
  %v1911 = vpop.f32.mrf.mxu0
  %v1912 = vadd.f32 0.0, %v1911
  %1913 = vmatmul.f32.gmra.mxu0 %v1060
  %v1914 = vpop.f32.mrf.mxu0
  %v1915 = vadd.f32 0.0, %v1914
  %1916 = vmatmul.f32.gmra.mxu0 %v1063
  %v1917 = vpop.f32.mrf.mxu0
  %v1918 = vadd.f32 0.0, %v1917
  %1919 = vmatmul.f32.gmra.mxu0 %v1066
  %v1920 = vpop.f32.mrf.mxu0
  %v1921 = vadd.f32 0.0, %v1920
  %1922 = vmatmul.f32.gmra.mxu0 %v1069
  %v1923 = vpop.f32.mrf.mxu0
  %v1924 = vadd.f32 0.0, %v1923
  %1925 = vdwg.mxu0
  %v1926 = vadd.f32 %v1746, %v1792
  %v1927 = vadd.f32 %v1747, %v1830
  %v1928 = vadd.f32 %v1748, %v1795
  %v1929 = vadd.f32 %v1749, %v1833
  %v1930 = vadd.f32 %v1750, %v1798
  %v1931 = vadd.f32 %v1751, %v1836
  %v1932 = vadd.f32 %v1752, %v1801
  %v1933 = vadd.f32 %v1753, %v1839
  %v1934 = vadd.f32 %v1754, %v1804
  %v1935 = vadd.f32 %v1755, %v1842
  %v1936 = vadd.f32 %v1756, %v1807
  %v1937 = vadd.f32 %v1757, %v1845
  %v1938 = vadd.f32 %v1758, %v1810
  %v1939 = vadd.f32 %v1759, %v1848
  %v1940 = vadd.f32 %v1760, %v1868
  %v1941 = vadd.f32 %v1761, %v1906
  %v1942 = vadd.f32 %v1762, %v1871
  %v1943 = vadd.f32 %v1763, %v1909
  %v1944 = vadd.f32 %v1764, %v1874
  %v1945 = vadd.f32 %v1765, %v1912
  %v1946 = vadd.f32 %v1766, %v1877
  %v1947 = vadd.f32 %v1767, %v1915
  %v1948 = vadd.f32 %v1768, %v1880
  %v1949 = vadd.f32 %v1769, %v1918
  %v1950 = vadd.f32 %v1770, %v1883
  %v1951 = vadd.f32 %v1771, %v1921
  %v1952 = vadd.f32 %v1772, %v1886
  %v1953 = vadd.f32 %v1773, %v1924
  %s1954 = scalar_lea.vmem %s0, 280
  %v1955 = vld [vmem:[%s1954] sm:$0xff]
  %v1956 = vld [vmem:[%s1954 + $0x8] sm:$0xff]
  %v1957 = vld [vmem:[%s1954 + $0x10] sm:$0xff]
  %v1958 = vld [vmem:[%s1954 + $0x18] sm:$0xff]
  %v1959 = vld [vmem:[%s1954 + $0x20] sm:$0xff]
  %v1960 = vld [vmem:[%s1954 + $0x28] sm:$0xff]
  %v1961 = vld [vmem:[%s1954 + $0x30] sm:$0xff]
  %v1963 = vsel %vm127, %v1955, 0
  %v1966 = vsel %vm127, %v1956, 0
  %v1969 = vsel %vm127, %v1957, 0
  %v1972 = vsel %vm127, %v1958, 0
  %v1975 = vsel %vm127, %v1959, 0
  %v1978 = vsel %vm127, %v1960, 0
  %v1981 = vsel %vm127, %v1961, 0
  %1983 = vmatpush.msra.mxu0 0.0
  %1984 = vmatpush.msra.mxu0 0.0
  %1985 = vmatpush.msra.mxu0 0.0
  %1986 = vmatpush.msra.mxu0 0.0
  %1987 = vmatpush.msra.mxu0 %v1048
  %1988 = vmatpush.msra.mxu0 %v1046
  %1989 = vmatpush.msra.mxu0 %v1044
  %1990 = vmatpush.msra.mxu0 %v1042
  %1991 = vmatpush.msra.mxu0 %v1040
  %1992 = vmatpush.msra.mxu0 %v1038
  %1993 = vmatpush.msra.mxu0 %v1036
  %1994 = vmatpush.msra.mxu0 %v1034
  %1995 = vmatpush.msra.mxu0 %v1032
  %1996 = vmatpush.msra.mxu0 %v1030
  %1997 = vmatpush.msra.mxu0 %v1028
  %1998 = vmatpush.msra.mxu0 %v1026
  %1999 = vmatmul.f32.gmra.mxu0 %v1963
  %v2000 = vpop.f32.mrf.mxu0
  %v2001 = vadd.f32 0.0, %v2000
  %2002 = vmatmul.f32.gmra.mxu0 %v1966
  %v2003 = vpop.f32.mrf.mxu0
  %v2004 = vadd.f32 0.0, %v2003
  %2005 = vmatmul.f32.gmra.mxu0 %v1969
  %v2006 = vpop.f32.mrf.mxu0
  %v2007 = vadd.f32 0.0, %v2006
  %2008 = vmatmul.f32.gmra.mxu0 %v1972
  %v2009 = vpop.f32.mrf.mxu0
  %v2010 = vadd.f32 0.0, %v2009
  %2011 = vmatmul.f32.gmra.mxu0 %v1975
  %v2012 = vpop.f32.mrf.mxu0
  %v2013 = vadd.f32 0.0, %v2012
  %2014 = vmatmul.f32.gmra.mxu0 %v1978
  %v2015 = vpop.f32.mrf.mxu0
  %v2016 = vadd.f32 0.0, %v2015
  %2017 = vmatmul.f32.gmra.mxu0 %v1981
  %v2018 = vpop.f32.mrf.mxu0
  %v2019 = vadd.f32 0.0, %v2018
  %2020 = vdwg.mxu0
  %2021 = vmatpush.msra.mxu0 0.0
  %2022 = vmatpush.msra.mxu0 0.0
  %2023 = vmatpush.msra.mxu0 0.0
  %2024 = vmatpush.msra.mxu0 0.0
  %2025 = vmatpush.msra.mxu0 %v1049
  %2026 = vmatpush.msra.mxu0 %v1047
  %2027 = vmatpush.msra.mxu0 %v1045
  %2028 = vmatpush.msra.mxu0 %v1043
  %2029 = vmatpush.msra.mxu0 %v1041
  %2030 = vmatpush.msra.mxu0 %v1039
  %2031 = vmatpush.msra.mxu0 %v1037
  %2032 = vmatpush.msra.mxu0 %v1035
  %2033 = vmatpush.msra.mxu0 %v1033
  %2034 = vmatpush.msra.mxu0 %v1031
  %2035 = vmatpush.msra.mxu0 %v1029
  %2036 = vmatpush.msra.mxu0 %v1027
  %2037 = vmatmul.f32.gmra.mxu0 %v1963
  %v2038 = vpop.f32.mrf.mxu0
  %v2039 = vadd.f32 0.0, %v2038
  %2040 = vmatmul.f32.gmra.mxu0 %v1966
  %v2041 = vpop.f32.mrf.mxu0
  %v2042 = vadd.f32 0.0, %v2041
  %2043 = vmatmul.f32.gmra.mxu0 %v1969
  %v2044 = vpop.f32.mrf.mxu0
  %v2045 = vadd.f32 0.0, %v2044
  %2046 = vmatmul.f32.gmra.mxu0 %v1972
  %v2047 = vpop.f32.mrf.mxu0
  %v2048 = vadd.f32 0.0, %v2047
  %2049 = vmatmul.f32.gmra.mxu0 %v1975
  %v2050 = vpop.f32.mrf.mxu0
  %v2051 = vadd.f32 0.0, %v2050
  %2052 = vmatmul.f32.gmra.mxu0 %v1978
  %v2053 = vpop.f32.mrf.mxu0
  %v2054 = vadd.f32 0.0, %v2053
  %2055 = vmatmul.f32.gmra.mxu0 %v1981
  %v2056 = vpop.f32.mrf.mxu0
  %v2057 = vadd.f32 0.0, %v2056
  %2058 = vdwg.mxu0
  %2059 = vmatpush.msra.mxu0 0.0
  %2060 = vmatpush.msra.mxu0 0.0
  %2061 = vmatpush.msra.mxu0 0.0
  %2062 = vmatpush.msra.mxu0 0.0
  %2063 = vmatpush.msra.mxu0 %v1170
  %2064 = vmatpush.msra.mxu0 %v1168
  %2065 = vmatpush.msra.mxu0 %v1166
  %2066 = vmatpush.msra.mxu0 %v1164
  %2067 = vmatpush.msra.mxu0 %v1162
  %2068 = vmatpush.msra.mxu0 %v1160
  %2069 = vmatpush.msra.mxu0 %v1158
  %2070 = vmatpush.msra.mxu0 %v1156
  %2071 = vmatpush.msra.mxu0 %v1154
  %2072 = vmatpush.msra.mxu0 %v1152
  %2073 = vmatpush.msra.mxu0 %v1150
  %2074 = vmatpush.msra.mxu0 %v1148
  %2075 = vmatmul.f32.gmra.mxu0 %v1963
  %v2076 = vpop.f32.mrf.mxu0
  %v2077 = vadd.f32 0.0, %v2076
  %2078 = vmatmul.f32.gmra.mxu0 %v1966
  %v2079 = vpop.f32.mrf.mxu0
  %v2080 = vadd.f32 0.0, %v2079
  %2081 = vmatmul.f32.gmra.mxu0 %v1969
  %v2082 = vpop.f32.mrf.mxu0
  %v2083 = vadd.f32 0.0, %v2082
  %2084 = vmatmul.f32.gmra.mxu0 %v1972
  %v2085 = vpop.f32.mrf.mxu0
  %v2086 = vadd.f32 0.0, %v2085
  %2087 = vmatmul.f32.gmra.mxu0 %v1975
  %v2088 = vpop.f32.mrf.mxu0
  %v2089 = vadd.f32 0.0, %v2088
  %2090 = vmatmul.f32.gmra.mxu0 %v1978
  %v2091 = vpop.f32.mrf.mxu0
  %v2092 = vadd.f32 0.0, %v2091
  %2093 = vmatmul.f32.gmra.mxu0 %v1981
  %v2094 = vpop.f32.mrf.mxu0
  %v2095 = vadd.f32 0.0, %v2094
  %2096 = vdwg.mxu0
  %2097 = vmatpush.msra.mxu0 0.0
  %2098 = vmatpush.msra.mxu0 0.0
  %2099 = vmatpush.msra.mxu0 0.0
  %2100 = vmatpush.msra.mxu0 0.0
  %2101 = vmatpush.msra.mxu0 %v1171
  %2102 = vmatpush.msra.mxu0 %v1169
  %2103 = vmatpush.msra.mxu0 %v1167
  %2104 = vmatpush.msra.mxu0 %v1165
  %2105 = vmatpush.msra.mxu0 %v1163
  %2106 = vmatpush.msra.mxu0 %v1161
  %2107 = vmatpush.msra.mxu0 %v1159
  %2108 = vmatpush.msra.mxu0 %v1157
  %2109 = vmatpush.msra.mxu0 %v1155
  %2110 = vmatpush.msra.mxu0 %v1153
  %2111 = vmatpush.msra.mxu0 %v1151
  %2112 = vmatpush.msra.mxu0 %v1149
  %2113 = vmatmul.f32.gmra.mxu0 %v1963
  %v2114 = vpop.f32.mrf.mxu0
  %v2115 = vadd.f32 0.0, %v2114
  %2116 = vmatmul.f32.gmra.mxu0 %v1966
  %v2117 = vpop.f32.mrf.mxu0
  %v2118 = vadd.f32 0.0, %v2117
  %2119 = vmatmul.f32.gmra.mxu0 %v1969
  %v2120 = vpop.f32.mrf.mxu0
  %v2121 = vadd.f32 0.0, %v2120
  %2122 = vmatmul.f32.gmra.mxu0 %v1972
  %v2123 = vpop.f32.mrf.mxu0
  %v2124 = vadd.f32 0.0, %v2123
  %2125 = vmatmul.f32.gmra.mxu0 %v1975
  %v2126 = vpop.f32.mrf.mxu0
  %v2127 = vadd.f32 0.0, %v2126
  %2128 = vmatmul.f32.gmra.mxu0 %v1978
  %v2129 = vpop.f32.mrf.mxu0
  %v2130 = vadd.f32 0.0, %v2129
  %2131 = vmatmul.f32.gmra.mxu0 %v1981
  %v2132 = vpop.f32.mrf.mxu0
  %v2133 = vadd.f32 0.0, %v2132
  %2134 = vdwg.mxu0
  %v2135 = vadd.f32 %v1926, %v2001
  %v2136 = vadd.f32 %v1927, %v2039
  %v2137 = vadd.f32 %v1928, %v2004
  %v2138 = vadd.f32 %v1929, %v2042
  %v2139 = vadd.f32 %v1930, %v2007
  %v2140 = vadd.f32 %v1931, %v2045
  %v2141 = vadd.f32 %v1932, %v2010
  %v2142 = vadd.f32 %v1933, %v2048
  %v2143 = vadd.f32 %v1934, %v2013
  %v2144 = vadd.f32 %v1935, %v2051
  %v2145 = vadd.f32 %v1936, %v2016
  %v2146 = vadd.f32 %v1937, %v2054
  %v2147 = vadd.f32 %v1938, %v2019
  %v2148 = vadd.f32 %v1939, %v2057
  %v2149 = vadd.f32 %v1940, %v2077
  %v2150 = vadd.f32 %v1941, %v2115
  %v2151 = vadd.f32 %v1942, %v2080
  %v2152 = vadd.f32 %v1943, %v2118
  %v2153 = vadd.f32 %v1944, %v2083
  %v2154 = vadd.f32 %v1945, %v2121
  %v2155 = vadd.f32 %v1946, %v2086
  %v2156 = vadd.f32 %v1947, %v2124
  %v2157 = vadd.f32 %v1948, %v2089
  %v2158 = vadd.f32 %v1949, %v2127
  %v2159 = vadd.f32 %v1950, %v2092
  %v2160 = vadd.f32 %v1951, %v2130
  %v2161 = vadd.f32 %v1952, %v2095
  %v2162 = vadd.f32 %v1953, %v2133
  %v2163 = vmax.f32 %v2135, %v2149
  %v2164 = vmax.f32 %v2136, %v2150
  %v2165 = vmax.f32 %v2137, %v2151
  %v2166 = vmax.f32 %v2138, %v2152
  %v2167 = vmax.f32 %v2139, %v2153
  %v2168 = vmax.f32 %v2140, %v2154
  %v2169 = vmax.f32 %v2141, %v2155
  %v2170 = vmax.f32 %v2142, %v2156
  %v2171 = vmax.f32 %v2143, %v2157
  %v2172 = vmax.f32 %v2144, %v2158
  %v2173 = vmax.f32 %v2145, %v2159
  %v2174 = vmax.f32 %v2146, %v2160
  %v2175 = vmax.f32 %v2147, %v2161
  %v2176 = vmax.f32 %v2148, %v2162
  %v2177 = vmax.f32 %v1276, %v2163
  %v2178 = vmax.f32 %v1277, %v2164
  %v2179 = vmax.f32 %v1278, %v2165
  %v2180 = vmax.f32 %v1279, %v2166
  %v2181 = vmax.f32 %v1280, %v2167
  %v2182 = vmax.f32 %v1281, %v2168
  %v2183 = vmax.f32 %v1282, %v2169
  %v2184 = vmax.f32 %v1283, %v2170
  %v2185 = vmax.f32 %v1284, %v2171
  %v2186 = vmax.f32 %v1285, %v2172
  %v2187 = vmax.f32 %v1286, %v2173
  %v2188 = vmax.f32 %v1287, %v2174
  %v2189 = vmax.f32 %v1288, %v2175
  %v2190 = vmax.f32 %v1289, %v2176
  %v2191 = vld [vmem:[%s2] sm:$0x3]
  %v2193 = vperm.slane %v2191, 0
  %v2194 = vperm.slane %v2191, 1
  %v2197 = vadd.f32 %v2177, %v2193
  %v2198 = vadd.f32 %v2178, %v2194
  %v2199 = vadd.f32 %v2179, %v2193
  %v2200 = vadd.f32 %v2180, %v2194
  %v2201 = vadd.f32 %v2181, %v2193
  %v2202 = vadd.f32 %v2182, %v2194
  %v2203 = vadd.f32 %v2183, %v2193
  %v2204 = vadd.f32 %v2184, %v2194
  %v2205 = vadd.f32 %v2185, %v2193
  %v2206 = vadd.f32 %v2186, %v2194
  %v2207 = vadd.f32 %v2187, %v2193
  %v2208 = vadd.f32 %v2188, %v2194
  %v2209 = vadd.f32 %v2189, %v2193
  %v2210 = vadd.f32 %v2190, %v2194
  %v2211 = vmax.f32 %v2197, 0.0
  %v2212 = vmax.f32 %v2198, 0.0
  %v2213 = vmax.f32 %v2199, 0.0
  %v2214 = vmax.f32 %v2200, 0.0
  %v2215 = vmax.f32 %v2201, 0.0
  %v2216 = vmax.f32 %v2202, 0.0
  %v2217 = vmax.f32 %v2203, 0.0
  %v2218 = vmax.f32 %v2204, 0.0
  %v2219 = vmax.f32 %v2205, 0.0
  %v2220 = vmax.f32 %v2206, 0.0
  %v2221 = vmax.f32 %v2207, 0.0
  %v2222 = vmax.f32 %v2208, 0.0
  %v2223 = vmax.f32 %v2209, 0.0
  %v2224 = vmax.f32 %v2210, 0.0
  %2225 = vst [vmem:[#allocation2] sm:$0xff] %v2211
  %2226 = vst.msk [vmem:[#allocation2 + $0x8] sm:$0xff] %vm127, %v2212
  %2227 = vst [vmem:[#allocation2 + $0x10] sm:$0xff] %v2213
  %2228 = vst.msk [vmem:[#allocation2 + $0x18] sm:$0xff] %vm127, %v2214
  %2229 = vst [vmem:[#allocation2 + $0x20] sm:$0xff] %v2215
  %2230 = vst.msk [vmem:[#allocation2 + $0x28] sm:$0xff] %vm127, %v2216
  %2231 = vst [vmem:[#allocation2 + $0x30] sm:$0xff] %v2217
  %2232 = vst.msk [vmem:[#allocation2 + $0x38] sm:$0xff] %vm127, %v2218
  %2233 = vst [vmem:[#allocation2 + $0x40] sm:$0xff] %v2219
  %2234 = vst.msk [vmem:[#allocation2 + $0x48] sm:$0xff] %vm127, %v2220
  %2235 = vst [vmem:[#allocation2 + $0x50] sm:$0xff] %v2221
  %2236 = vst.msk [vmem:[#allocation2 + $0x58] sm:$0xff] %vm127, %v2222
  %2237 = vst [vmem:[#allocation2 + $0x60] sm:$0xff] %v2223
  %2238 = vst.msk [vmem:[#allocation2 + $0x68] sm:$0xff] %vm127, %v2224
  %v2239 = vld [vmem:[%s499] sm:$0xff]
  %v2240 = vld [vmem:[%s499 + $0x8] sm:$0xff]
  %v2241 = vld [vmem:[%s499 + $0x10] sm:$0xff]
  %v2242 = vld [vmem:[%s499 + $0x18] sm:$0xff]
  %v2243 = vld [vmem:[%s499 + $0x20] sm:$0xff]
  %v2244 = vld [vmem:[%s499 + $0x28] sm:$0xff]
  %v2245 = vld [vmem:[%s499 + $0x30] sm:$0xff]
  %v2246 = vld [vmem:[%s1] sm:$0xff]
  %v2247 = vld [vmem:[%s1 + $0x8] sm:$0xff]
  %v2248 = vld [vmem:[%s1 + $0x10] sm:$0xff]
  %v2249 = vld [vmem:[%s1 + $0x18] sm:$0xff]
  %v2250 = vld [vmem:[%s1 + $0x20] sm:$0xff]
  %v2251 = vld [vmem:[%s1 + $0x28] sm:$0xff]
  %v2252 = vld [vmem:[%s1 + $0x30] sm:$0xff]
  %v2253 = vld [vmem:[%s1 + $0x38] sm:$0xff]
  %v2254 = vld [vmem:[%s1 + $0x40] sm:$0xff]
  %v2255 = vld [vmem:[%s1 + $0x48] sm:$0xff]
  %v2256 = vld [vmem:[%s1 + $0x50] sm:$0xff]
  %v2257 = vld [vmem:[%s1 + $0x58] sm:$0xff]
  %v2258 = vld [vmem:[%s1 + $0x60] sm:$0xff]
  %v2259 = vld [vmem:[%s1 + $0x68] sm:$0xff]
  %v2260 = vld [vmem:[%s1 + $0x70] sm:$0xff]
  %v2261 = vld [vmem:[%s1 + $0x78] sm:$0xff]
  %v2262 = vld [vmem:[%s1 + $0x80] sm:$0xff]
  %v2263 = vld [vmem:[%s1 + $0x88] sm:$0xff]
  %v2264 = vld [vmem:[%s1 + $0x90] sm:$0xff]
  %v2265 = vld [vmem:[%s1 + $0x98] sm:$0xff]
  %v2266 = vld [vmem:[%s1 + $0xa0] sm:$0xff]
  %v2267 = vld [vmem:[%s1 + $0xa8] sm:$0xff]
  %v2268 = vld [vmem:[%s1 + $0xb0] sm:$0xff]
  %v2269 = vld [vmem:[%s1 + $0xb8] sm:$0xff]
  %v2270 = vld [vmem:[%s69] sm:$0xff]
  %v2271 = vld [vmem:[%s69 + $0x8] sm:$0xff]
  %v2272 = vld [vmem:[%s69 + $0x10] sm:$0xff]
  %v2273 = vld [vmem:[%s69 + $0x18] sm:$0xff]
  %v2274 = vld [vmem:[%s69 + $0x20] sm:$0xff]
  %v2275 = vld [vmem:[%s69 + $0x28] sm:$0xff]
  %v2276 = vld [vmem:[%s69 + $0x30] sm:$0xff]
  %v2277 = vld [vmem:[%s69 + $0x38] sm:$0xff]
  %v2278 = vld [vmem:[%s69 + $0x40] sm:$0xff]
  %v2279 = vld [vmem:[%s69 + $0x48] sm:$0xff]
  %v2280 = vld [vmem:[%s69 + $0x50] sm:$0xff]
  %v2281 = vld [vmem:[%s69 + $0x58] sm:$0xff]
  %v2282 = vld [vmem:[%s69 + $0x60] sm:$0xff]
  %v2283 = vld [vmem:[%s69 + $0x68] sm:$0xff]
  %v2284 = vld [vmem:[%s69 + $0x70] sm:$0xff]
  %v2285 = vld [vmem:[%s69 + $0x78] sm:$0xff]
  %v2286 = vld [vmem:[%s69 + $0x80] sm:$0xff]
  %v2287 = vld [vmem:[%s69 + $0x88] sm:$0xff]
  %v2288 = vld [vmem:[%s69 + $0x90] sm:$0xff]
  %v2289 = vld [vmem:[%s69 + $0x98] sm:$0xff]
  %v2290 = vld [vmem:[%s69 + $0xa0] sm:$0xff]
  %v2291 = vld [vmem:[%s69 + $0xa8] sm:$0xff]
  %v2292 = vld [vmem:[%s69 + $0xb0] sm:$0xff]
  %v2293 = vld [vmem:[%s69 + $0xb8] sm:$0xff]
  %v2294 = vld [vmem:[%s758] sm:$0xff]
  %v2295 = vld [vmem:[%s758 + $0x8] sm:$0xff]
  %v2296 = vld [vmem:[%s758 + $0x10] sm:$0xff]
  %v2297 = vld [vmem:[%s758 + $0x18] sm:$0xff]
  %v2298 = vld [vmem:[%s758 + $0x20] sm:$0xff]
  %v2299 = vld [vmem:[%s758 + $0x28] sm:$0xff]
  %v2300 = vld [vmem:[%s758 + $0x30] sm:$0xff]
  %v2301 = vld [vmem:[%s102] sm:$0xff]
  %v2302 = vld [vmem:[%s102 + $0x8] sm:$0xff]
  %v2303 = vld [vmem:[%s102 + $0x10] sm:$0xff]
  %v2304 = vld [vmem:[%s102 + $0x18] sm:$0xff]
  %v2305 = vld [vmem:[%s102 + $0x20] sm:$0xff]
  %v2306 = vld [vmem:[%s102 + $0x28] sm:$0xff]
  %v2307 = vld [vmem:[%s102 + $0x30] sm:$0xff]
  %v2308 = vld [vmem:[%s102 + $0x38] sm:$0xff]
  %v2309 = vld [vmem:[%s102 + $0x40] sm:$0xff]
  %v2310 = vld [vmem:[%s102 + $0x48] sm:$0xff]
  %v2311 = vld [vmem:[%s102 + $0x50] sm:$0xff]
  %v2312 = vld [vmem:[%s102 + $0x58] sm:$0xff]
  %v2313 = vld [vmem:[%s102 + $0x60] sm:$0xff]
  %v2314 = vld [vmem:[%s102 + $0x68] sm:$0xff]
  %v2315 = vld [vmem:[%s102 + $0x70] sm:$0xff]
  %v2316 = vld [vmem:[%s102 + $0x78] sm:$0xff]
  %v2317 = vld [vmem:[%s102 + $0x80] sm:$0xff]
  %v2318 = vld [vmem:[%s102 + $0x88] sm:$0xff]
  %v2319 = vld [vmem:[%s102 + $0x90] sm:$0xff]
  %v2320 = vld [vmem:[%s102 + $0x98] sm:$0xff]
  %v2321 = vld [vmem:[%s102 + $0xa0] sm:$0xff]
  %v2322 = vld [vmem:[%s102 + $0xa8] sm:$0xff]
  %v2323 = vld [vmem:[%s102 + $0xb0] sm:$0xff]
  %v2324 = vld [vmem:[%s102 + $0xb8] sm:$0xff]
  %v2326 = vsel %vm127, %v2294, 0
  %v2329 = vsel %vm127, %v2295, 0
  %v2332 = vsel %vm127, %v2296, 0
  %v2335 = vsel %vm127, %v2297, 0
  %v2338 = vsel %vm127, %v2298, 0
  %v2341 = vsel %vm127, %v2299, 0
  %v2344 = vsel %vm127, %v2300, 0
  %2346 = vmatpush.msra.mxu0 0.0
  %2347 = vmatpush.msra.mxu0 0.0
  %2348 = vmatpush.msra.mxu0 0.0
  %2349 = vmatpush.msra.mxu0 0.0
  %2350 = vmatpush.msra.mxu0 %v2323
  %2351 = vmatpush.msra.mxu0 %v2321
  %2352 = vmatpush.msra.mxu0 %v2319
  %2353 = vmatpush.msra.mxu0 %v2317
  %2354 = vmatpush.msra.mxu0 %v2315
  %2355 = vmatpush.msra.mxu0 %v2313
  %2356 = vmatpush.msra.mxu0 %v2311
  %2357 = vmatpush.msra.mxu0 %v2309
  %2358 = vmatpush.msra.mxu0 %v2307
  %2359 = vmatpush.msra.mxu0 %v2305
  %2360 = vmatpush.msra.mxu0 %v2303
  %2361 = vmatpush.msra.mxu0 %v2301
  %2362 = vmatmul.f32.gmra.mxu0 %v2326
  %v2363 = vpop.f32.mrf.mxu0
  %v2364 = vadd.f32 0.0, %v2363
  %2365 = vmatmul.f32.gmra.mxu0 %v2329
  %v2366 = vpop.f32.mrf.mxu0
  %v2367 = vadd.f32 0.0, %v2366
  %2368 = vmatmul.f32.gmra.mxu0 %v2332
  %v2369 = vpop.f32.mrf.mxu0
  %v2370 = vadd.f32 0.0, %v2369
  %2371 = vmatmul.f32.gmra.mxu0 %v2335
  %v2372 = vpop.f32.mrf.mxu0
  %v2373 = vadd.f32 0.0, %v2372
  %2374 = vmatmul.f32.gmra.mxu0 %v2338
  %v2375 = vpop.f32.mrf.mxu0
  %v2376 = vadd.f32 0.0, %v2375
  %2377 = vmatmul.f32.gmra.mxu0 %v2341
  %v2378 = vpop.f32.mrf.mxu0
  %v2379 = vadd.f32 0.0, %v2378
  %2380 = vmatmul.f32.gmra.mxu0 %v2344
  %v2381 = vpop.f32.mrf.mxu0
  %v2382 = vadd.f32 0.0, %v2381
  %2383 = vdwg.mxu0
  %2384 = vmatpush.msra.mxu0 0.0
  %2385 = vmatpush.msra.mxu0 0.0
  %2386 = vmatpush.msra.mxu0 0.0
  %2387 = vmatpush.msra.mxu0 0.0
  %2388 = vmatpush.msra.mxu0 %v2324
  %2389 = vmatpush.msra.mxu0 %v2322
  %2390 = vmatpush.msra.mxu0 %v2320
  %2391 = vmatpush.msra.mxu0 %v2318
  %2392 = vmatpush.msra.mxu0 %v2316
  %2393 = vmatpush.msra.mxu0 %v2314
  %2394 = vmatpush.msra.mxu0 %v2312
  %2395 = vmatpush.msra.mxu0 %v2310
  %2396 = vmatpush.msra.mxu0 %v2308
  %2397 = vmatpush.msra.mxu0 %v2306
  %2398 = vmatpush.msra.mxu0 %v2304
  %2399 = vmatpush.msra.mxu0 %v2302
  %2400 = vmatmul.f32.gmra.mxu0 %v2326
  %v2401 = vpop.f32.mrf.mxu0
  %v2402 = vadd.f32 0.0, %v2401
  %2403 = vmatmul.f32.gmra.mxu0 %v2329
  %v2404 = vpop.f32.mrf.mxu0
  %v2405 = vadd.f32 0.0, %v2404
  %2406 = vmatmul.f32.gmra.mxu0 %v2332
  %v2407 = vpop.f32.mrf.mxu0
  %v2408 = vadd.f32 0.0, %v2407
  %2409 = vmatmul.f32.gmra.mxu0 %v2335
  %v2410 = vpop.f32.mrf.mxu0
  %v2411 = vadd.f32 0.0, %v2410
  %2412 = vmatmul.f32.gmra.mxu0 %v2338
  %v2413 = vpop.f32.mrf.mxu0
  %v2414 = vadd.f32 0.0, %v2413
  %2415 = vmatmul.f32.gmra.mxu0 %v2341
  %v2416 = vpop.f32.mrf.mxu0
  %v2417 = vadd.f32 0.0, %v2416
  %2418 = vmatmul.f32.gmra.mxu0 %v2344
  %v2419 = vpop.f32.mrf.mxu0
  %v2420 = vadd.f32 0.0, %v2419
  %2421 = vdwg.mxu0
  %v2422 = vld [vmem:[%s225] sm:$0xff]
  %v2423 = vld [vmem:[%s225 + $0x8] sm:$0xff]
  %v2424 = vld [vmem:[%s225 + $0x10] sm:$0xff]
  %v2425 = vld [vmem:[%s225 + $0x18] sm:$0xff]
  %v2426 = vld [vmem:[%s225 + $0x20] sm:$0xff]
  %v2427 = vld [vmem:[%s225 + $0x28] sm:$0xff]
  %v2428 = vld [vmem:[%s225 + $0x30] sm:$0xff]
  %v2429 = vld [vmem:[%s225 + $0x38] sm:$0xff]
  %v2430 = vld [vmem:[%s225 + $0x40] sm:$0xff]
  %v2431 = vld [vmem:[%s225 + $0x48] sm:$0xff]
  %v2432 = vld [vmem:[%s225 + $0x50] sm:$0xff]
  %v2433 = vld [vmem:[%s225 + $0x58] sm:$0xff]
  %v2434 = vld [vmem:[%s225 + $0x60] sm:$0xff]
  %v2435 = vld [vmem:[%s225 + $0x68] sm:$0xff]
  %v2436 = vld [vmem:[%s225 + $0x70] sm:$0xff]
  %v2437 = vld [vmem:[%s225 + $0x78] sm:$0xff]
  %v2438 = vld [vmem:[%s225 + $0x80] sm:$0xff]
  %v2439 = vld [vmem:[%s225 + $0x88] sm:$0xff]
  %v2440 = vld [vmem:[%s225 + $0x90] sm:$0xff]
  %v2441 = vld [vmem:[%s225 + $0x98] sm:$0xff]
  %v2442 = vld [vmem:[%s225 + $0xa0] sm:$0xff]
  %v2443 = vld [vmem:[%s225 + $0xa8] sm:$0xff]
  %v2444 = vld [vmem:[%s225 + $0xb0] sm:$0xff]
  %v2445 = vld [vmem:[%s225 + $0xb8] sm:$0xff]
  %2446 = vmatpush.msra.mxu0 0.0
  %2447 = vmatpush.msra.mxu0 0.0
  %2448 = vmatpush.msra.mxu0 0.0
  %2449 = vmatpush.msra.mxu0 0.0
  %2450 = vmatpush.msra.mxu0 %v2444
  %2451 = vmatpush.msra.mxu0 %v2442
  %2452 = vmatpush.msra.mxu0 %v2440
  %2453 = vmatpush.msra.mxu0 %v2438
  %2454 = vmatpush.msra.mxu0 %v2436
  %2455 = vmatpush.msra.mxu0 %v2434
  %2456 = vmatpush.msra.mxu0 %v2432
  %2457 = vmatpush.msra.mxu0 %v2430
  %2458 = vmatpush.msra.mxu0 %v2428
  %2459 = vmatpush.msra.mxu0 %v2426
  %2460 = vmatpush.msra.mxu0 %v2424
  %2461 = vmatpush.msra.mxu0 %v2422
  %2462 = vmatmul.f32.gmra.mxu0 %v2326
  %v2463 = vpop.f32.mrf.mxu0
  %v2464 = vadd.f32 0.0, %v2463
  %2465 = vmatmul.f32.gmra.mxu0 %v2329
  %v2466 = vpop.f32.mrf.mxu0
  %v2467 = vadd.f32 0.0, %v2466
  %2468 = vmatmul.f32.gmra.mxu0 %v2332
  %v2469 = vpop.f32.mrf.mxu0
  %v2470 = vadd.f32 0.0, %v2469
  %2471 = vmatmul.f32.gmra.mxu0 %v2335
  %v2472 = vpop.f32.mrf.mxu0
  %v2473 = vadd.f32 0.0, %v2472
  %2474 = vmatmul.f32.gmra.mxu0 %v2338
  %v2475 = vpop.f32.mrf.mxu0
  %v2476 = vadd.f32 0.0, %v2475
  %2477 = vmatmul.f32.gmra.mxu0 %v2341
  %v2478 = vpop.f32.mrf.mxu0
  %v2479 = vadd.f32 0.0, %v2478
  %2480 = vmatmul.f32.gmra.mxu0 %v2344
  %v2481 = vpop.f32.mrf.mxu0
  %v2482 = vadd.f32 0.0, %v2481
  %2483 = vdwg.mxu0
  %2484 = vmatpush.msra.mxu0 0.0
  %2485 = vmatpush.msra.mxu0 0.0
  %2486 = vmatpush.msra.mxu0 0.0
  %2487 = vmatpush.msra.mxu0 0.0
  %2488 = vmatpush.msra.mxu0 %v2445
  %2489 = vmatpush.msra.mxu0 %v2443
  %2490 = vmatpush.msra.mxu0 %v2441
  %2491 = vmatpush.msra.mxu0 %v2439
  %2492 = vmatpush.msra.mxu0 %v2437
  %2493 = vmatpush.msra.mxu0 %v2435
  %2494 = vmatpush.msra.mxu0 %v2433
  %2495 = vmatpush.msra.mxu0 %v2431
  %2496 = vmatpush.msra.mxu0 %v2429
  %2497 = vmatpush.msra.mxu0 %v2427
  %2498 = vmatpush.msra.mxu0 %v2425
  %2499 = vmatpush.msra.mxu0 %v2423
  %2500 = vmatmul.f32.gmra.mxu0 %v2326
  %v2501 = vpop.f32.mrf.mxu0
  %v2502 = vadd.f32 0.0, %v2501
  %2503 = vmatmul.f32.gmra.mxu0 %v2329
  %v2504 = vpop.f32.mrf.mxu0
  %v2505 = vadd.f32 0.0, %v2504
  %2506 = vmatmul.f32.gmra.mxu0 %v2332
  %v2507 = vpop.f32.mrf.mxu0
  %v2508 = vadd.f32 0.0, %v2507
  %2509 = vmatmul.f32.gmra.mxu0 %v2335
  %v2510 = vpop.f32.mrf.mxu0
  %v2511 = vadd.f32 0.0, %v2510
  %2512 = vmatmul.f32.gmra.mxu0 %v2338
  %v2513 = vpop.f32.mrf.mxu0
  %v2514 = vadd.f32 0.0, %v2513
  %2515 = vmatmul.f32.gmra.mxu0 %v2341
  %v2516 = vpop.f32.mrf.mxu0
  %v2517 = vadd.f32 0.0, %v2516
  %2518 = vmatmul.f32.gmra.mxu0 %v2344
  %v2519 = vpop.f32.mrf.mxu0
  %v2520 = vadd.f32 0.0, %v2519
  %2521 = vdwg.mxu0
  %v2523 = vsel %vm127, %v2239, 0
  %v2526 = vsel %vm127, %v2240, 0
  %v2529 = vsel %vm127, %v2241, 0
  %v2532 = vsel %vm127, %v2242, 0
  %v2535 = vsel %vm127, %v2243, 0
  %v2538 = vsel %vm127, %v2244, 0
  %v2541 = vsel %vm127, %v2245, 0
  %2543 = vmatpush.msra.mxu0 0.0
  %2544 = vmatpush.msra.mxu0 0.0
  %2545 = vmatpush.msra.mxu0 0.0
  %2546 = vmatpush.msra.mxu0 0.0
  %2547 = vmatpush.msra.mxu0 %v2268
  %2548 = vmatpush.msra.mxu0 %v2266
  %2549 = vmatpush.msra.mxu0 %v2264
  %2550 = vmatpush.msra.mxu0 %v2262
  %2551 = vmatpush.msra.mxu0 %v2260
  %2552 = vmatpush.msra.mxu0 %v2258
  %2553 = vmatpush.msra.mxu0 %v2256
  %2554 = vmatpush.msra.mxu0 %v2254
  %2555 = vmatpush.msra.mxu0 %v2252
  %2556 = vmatpush.msra.mxu0 %v2250
  %2557 = vmatpush.msra.mxu0 %v2248
  %2558 = vmatpush.msra.mxu0 %v2246
  %2559 = vmatmul.f32.gmra.mxu0 %v2523
  %v2560 = vpop.f32.mrf.mxu0
  %v2561 = vadd.f32 %v2364, %v2560
  %2562 = vmatmul.f32.gmra.mxu0 %v2526
  %v2563 = vpop.f32.mrf.mxu0
  %v2564 = vadd.f32 %v2367, %v2563
  %2565 = vmatmul.f32.gmra.mxu0 %v2529
  %v2566 = vpop.f32.mrf.mxu0
  %v2567 = vadd.f32 %v2370, %v2566
  %2568 = vmatmul.f32.gmra.mxu0 %v2532
  %v2569 = vpop.f32.mrf.mxu0
  %v2570 = vadd.f32 %v2373, %v2569
  %2571 = vmatmul.f32.gmra.mxu0 %v2535
  %v2572 = vpop.f32.mrf.mxu0
  %v2573 = vadd.f32 %v2376, %v2572
  %2574 = vmatmul.f32.gmra.mxu0 %v2538
  %v2575 = vpop.f32.mrf.mxu0
  %v2576 = vadd.f32 %v2379, %v2575
  %2577 = vmatmul.f32.gmra.mxu0 %v2541
  %v2578 = vpop.f32.mrf.mxu0
  %v2579 = vadd.f32 %v2382, %v2578
  %2580 = vdwg.mxu0
  %2581 = vmatpush.msra.mxu0 0.0
  %2582 = vmatpush.msra.mxu0 0.0
  %2583 = vmatpush.msra.mxu0 0.0
  %2584 = vmatpush.msra.mxu0 0.0
  %2585 = vmatpush.msra.mxu0 %v2269
  %2586 = vmatpush.msra.mxu0 %v2267
  %2587 = vmatpush.msra.mxu0 %v2265
  %2588 = vmatpush.msra.mxu0 %v2263
  %2589 = vmatpush.msra.mxu0 %v2261
  %2590 = vmatpush.msra.mxu0 %v2259
  %2591 = vmatpush.msra.mxu0 %v2257
  %2592 = vmatpush.msra.mxu0 %v2255
  %2593 = vmatpush.msra.mxu0 %v2253
  %2594 = vmatpush.msra.mxu0 %v2251
  %2595 = vmatpush.msra.mxu0 %v2249
  %2596 = vmatpush.msra.mxu0 %v2247
  %2597 = vmatmul.f32.gmra.mxu0 %v2523
  %v2598 = vpop.f32.mrf.mxu0
  %v2599 = vadd.f32 %v2402, %v2598
  %2600 = vmatmul.f32.gmra.mxu0 %v2526
  %v2601 = vpop.f32.mrf.mxu0
  %v2602 = vadd.f32 %v2405, %v2601
  %2603 = vmatmul.f32.gmra.mxu0 %v2529
  %v2604 = vpop.f32.mrf.mxu0
  %v2605 = vadd.f32 %v2408, %v2604
  %2606 = vmatmul.f32.gmra.mxu0 %v2532
  %v2607 = vpop.f32.mrf.mxu0
  %v2608 = vadd.f32 %v2411, %v2607
  %2609 = vmatmul.f32.gmra.mxu0 %v2535
  %v2610 = vpop.f32.mrf.mxu0
  %v2611 = vadd.f32 %v2414, %v2610
  %2612 = vmatmul.f32.gmra.mxu0 %v2538
  %v2613 = vpop.f32.mrf.mxu0
  %v2614 = vadd.f32 %v2417, %v2613
  %2615 = vmatmul.f32.gmra.mxu0 %v2541
  %v2616 = vpop.f32.mrf.mxu0
  %v2617 = vadd.f32 %v2420, %v2616
  %2618 = vdwg.mxu0
  %2619 = vmatpush.msra.mxu0 0.0
  %2620 = vmatpush.msra.mxu0 0.0
  %2621 = vmatpush.msra.mxu0 0.0
  %2622 = vmatpush.msra.mxu0 0.0
  %2623 = vmatpush.msra.mxu0 %v2292
  %2624 = vmatpush.msra.mxu0 %v2290
  %2625 = vmatpush.msra.mxu0 %v2288
  %2626 = vmatpush.msra.mxu0 %v2286
  %2627 = vmatpush.msra.mxu0 %v2284
  %2628 = vmatpush.msra.mxu0 %v2282
  %2629 = vmatpush.msra.mxu0 %v2280
  %2630 = vmatpush.msra.mxu0 %v2278
  %2631 = vmatpush.msra.mxu0 %v2276
  %2632 = vmatpush.msra.mxu0 %v2274
  %2633 = vmatpush.msra.mxu0 %v2272
  %2634 = vmatpush.msra.mxu0 %v2270
  %2635 = vmatmul.f32.gmra.mxu0 %v2523
  %v2636 = vpop.f32.mrf.mxu0
  %v2637 = vadd.f32 %v2464, %v2636
  %2638 = vmatmul.f32.gmra.mxu0 %v2526
  %v2639 = vpop.f32.mrf.mxu0
  %v2640 = vadd.f32 %v2467, %v2639
  %2641 = vmatmul.f32.gmra.mxu0 %v2529
  %v2642 = vpop.f32.mrf.mxu0
  %v2643 = vadd.f32 %v2470, %v2642
  %2644 = vmatmul.f32.gmra.mxu0 %v2532
  %v2645 = vpop.f32.mrf.mxu0
  %v2646 = vadd.f32 %v2473, %v2645
  %2647 = vmatmul.f32.gmra.mxu0 %v2535
  %v2648 = vpop.f32.mrf.mxu0
  %v2649 = vadd.f32 %v2476, %v2648
  %2650 = vmatmul.f32.gmra.mxu0 %v2538
  %v2651 = vpop.f32.mrf.mxu0
  %v2652 = vadd.f32 %v2479, %v2651
  %2653 = vmatmul.f32.gmra.mxu0 %v2541
  %v2654 = vpop.f32.mrf.mxu0
  %v2655 = vadd.f32 %v2482, %v2654
  %2656 = vdwg.mxu0
  %2657 = vmatpush.msra.mxu0 0.0
  %2658 = vmatpush.msra.mxu0 0.0
  %2659 = vmatpush.msra.mxu0 0.0
  %2660 = vmatpush.msra.mxu0 0.0
  %2661 = vmatpush.msra.mxu0 %v2293
  %2662 = vmatpush.msra.mxu0 %v2291
  %2663 = vmatpush.msra.mxu0 %v2289
  %2664 = vmatpush.msra.mxu0 %v2287
  %2665 = vmatpush.msra.mxu0 %v2285
  %2666 = vmatpush.msra.mxu0 %v2283
  %2667 = vmatpush.msra.mxu0 %v2281
  %2668 = vmatpush.msra.mxu0 %v2279
  %2669 = vmatpush.msra.mxu0 %v2277
  %2670 = vmatpush.msra.mxu0 %v2275
  %2671 = vmatpush.msra.mxu0 %v2273
  %2672 = vmatpush.msra.mxu0 %v2271
  %2673 = vmatmul.f32.gmra.mxu0 %v2523
  %v2674 = vpop.f32.mrf.mxu0
  %v2675 = vadd.f32 %v2502, %v2674
  %2676 = vmatmul.f32.gmra.mxu0 %v2526
  %v2677 = vpop.f32.mrf.mxu0
  %v2678 = vadd.f32 %v2505, %v2677
  %2679 = vmatmul.f32.gmra.mxu0 %v2529
  %v2680 = vpop.f32.mrf.mxu0
  %v2681 = vadd.f32 %v2508, %v2680
  %2682 = vmatmul.f32.gmra.mxu0 %v2532
  %v2683 = vpop.f32.mrf.mxu0
  %v2684 = vadd.f32 %v2511, %v2683
  %2685 = vmatmul.f32.gmra.mxu0 %v2535
  %v2686 = vpop.f32.mrf.mxu0
  %v2687 = vadd.f32 %v2514, %v2686
  %2688 = vmatmul.f32.gmra.mxu0 %v2538
  %v2689 = vpop.f32.mrf.mxu0
  %v2690 = vadd.f32 %v2517, %v2689
  %2691 = vmatmul.f32.gmra.mxu0 %v2541
  %v2692 = vpop.f32.mrf.mxu0
  %v2693 = vadd.f32 %v2520, %v2692
  %2694 = vdwg.mxu0
  %v2695 = vld [vmem:[%s1017] sm:$0xff]
  %v2696 = vld [vmem:[%s1017 + $0x8] sm:$0xff]
  %v2697 = vld [vmem:[%s1017 + $0x10] sm:$0xff]
  %v2698 = vld [vmem:[%s1017 + $0x18] sm:$0xff]
  %v2699 = vld [vmem:[%s1017 + $0x20] sm:$0xff]
  %v2700 = vld [vmem:[%s1017 + $0x28] sm:$0xff]
  %v2701 = vld [vmem:[%s1017 + $0x30] sm:$0xff]
  %v2702 = vld [vmem:[%s507] sm:$0xff]
  %v2703 = vld [vmem:[%s507 + $0x8] sm:$0xff]
  %v2704 = vld [vmem:[%s507 + $0x10] sm:$0xff]
  %v2705 = vld [vmem:[%s507 + $0x18] sm:$0xff]
  %v2706 = vld [vmem:[%s507 + $0x20] sm:$0xff]
  %v2707 = vld [vmem:[%s507 + $0x28] sm:$0xff]
  %v2708 = vld [vmem:[%s507 + $0x30] sm:$0xff]
  %v2709 = vld [vmem:[%s507 + $0x38] sm:$0xff]
  %v2710 = vld [vmem:[%s507 + $0x40] sm:$0xff]
  %v2711 = vld [vmem:[%s507 + $0x48] sm:$0xff]
  %v2712 = vld [vmem:[%s507 + $0x50] sm:$0xff]
  %v2713 = vld [vmem:[%s507 + $0x58] sm:$0xff]
  %v2714 = vld [vmem:[%s507 + $0x60] sm:$0xff]
  %v2715 = vld [vmem:[%s507 + $0x68] sm:$0xff]
  %v2716 = vld [vmem:[%s507 + $0x70] sm:$0xff]
  %v2717 = vld [vmem:[%s507 + $0x78] sm:$0xff]
  %v2718 = vld [vmem:[%s507 + $0x80] sm:$0xff]
  %v2719 = vld [vmem:[%s507 + $0x88] sm:$0xff]
  %v2720 = vld [vmem:[%s507 + $0x90] sm:$0xff]
  %v2721 = vld [vmem:[%s507 + $0x98] sm:$0xff]
  %v2722 = vld [vmem:[%s507 + $0xa0] sm:$0xff]
  %v2723 = vld [vmem:[%s507 + $0xa8] sm:$0xff]
  %v2724 = vld [vmem:[%s507 + $0xb0] sm:$0xff]
  %v2725 = vld [vmem:[%s507 + $0xb8] sm:$0xff]
  %v2727 = vsel %vm127, %v2695, 0
  %v2730 = vsel %vm127, %v2696, 0
  %v2733 = vsel %vm127, %v2697, 0
  %v2736 = vsel %vm127, %v2698, 0
  %v2739 = vsel %vm127, %v2699, 0
  %v2742 = vsel %vm127, %v2700, 0
  %v2745 = vsel %vm127, %v2701, 0
  %2747 = vmatpush.msra.mxu0 0.0
  %2748 = vmatpush.msra.mxu0 0.0
  %2749 = vmatpush.msra.mxu0 0.0
  %2750 = vmatpush.msra.mxu0 0.0
  %2751 = vmatpush.msra.mxu0 %v2724
  %2752 = vmatpush.msra.mxu0 %v2722
  %2753 = vmatpush.msra.mxu0 %v2720
  %2754 = vmatpush.msra.mxu0 %v2718
  %2755 = vmatpush.msra.mxu0 %v2716
  %2756 = vmatpush.msra.mxu0 %v2714
  %2757 = vmatpush.msra.mxu0 %v2712
  %2758 = vmatpush.msra.mxu0 %v2710
  %2759 = vmatpush.msra.mxu0 %v2708
  %2760 = vmatpush.msra.mxu0 %v2706
  %2761 = vmatpush.msra.mxu0 %v2704
  %2762 = vmatpush.msra.mxu0 %v2702
  %2763 = vmatmul.f32.gmra.mxu0 %v2727
  %v2764 = vpop.f32.mrf.mxu0
  %v2765 = vadd.f32 0.0, %v2764
  %2766 = vmatmul.f32.gmra.mxu0 %v2730
  %v2767 = vpop.f32.mrf.mxu0
  %v2768 = vadd.f32 0.0, %v2767
  %2769 = vmatmul.f32.gmra.mxu0 %v2733
  %v2770 = vpop.f32.mrf.mxu0
  %v2771 = vadd.f32 0.0, %v2770
  %2772 = vmatmul.f32.gmra.mxu0 %v2736
  %v2773 = vpop.f32.mrf.mxu0
  %v2774 = vadd.f32 0.0, %v2773
  %2775 = vmatmul.f32.gmra.mxu0 %v2739
  %v2776 = vpop.f32.mrf.mxu0
  %v2777 = vadd.f32 0.0, %v2776
  %2778 = vmatmul.f32.gmra.mxu0 %v2742
  %v2779 = vpop.f32.mrf.mxu0
  %v2780 = vadd.f32 0.0, %v2779
  %2781 = vmatmul.f32.gmra.mxu0 %v2745
  %v2782 = vpop.f32.mrf.mxu0
  %v2783 = vadd.f32 0.0, %v2782
  %2784 = vdwg.mxu0
  %2785 = vmatpush.msra.mxu0 0.0
  %2786 = vmatpush.msra.mxu0 0.0
  %2787 = vmatpush.msra.mxu0 0.0
  %2788 = vmatpush.msra.mxu0 0.0
  %2789 = vmatpush.msra.mxu0 %v2725
  %2790 = vmatpush.msra.mxu0 %v2723
  %2791 = vmatpush.msra.mxu0 %v2721
  %2792 = vmatpush.msra.mxu0 %v2719
  %2793 = vmatpush.msra.mxu0 %v2717
  %2794 = vmatpush.msra.mxu0 %v2715
  %2795 = vmatpush.msra.mxu0 %v2713
  %2796 = vmatpush.msra.mxu0 %v2711
  %2797 = vmatpush.msra.mxu0 %v2709
  %2798 = vmatpush.msra.mxu0 %v2707
  %2799 = vmatpush.msra.mxu0 %v2705
  %2800 = vmatpush.msra.mxu0 %v2703
  %2801 = vmatmul.f32.gmra.mxu0 %v2727
  %v2802 = vpop.f32.mrf.mxu0
  %v2803 = vadd.f32 0.0, %v2802
  %2804 = vmatmul.f32.gmra.mxu0 %v2730
  %v2805 = vpop.f32.mrf.mxu0
  %v2806 = vadd.f32 0.0, %v2805
  %2807 = vmatmul.f32.gmra.mxu0 %v2733
  %v2808 = vpop.f32.mrf.mxu0
  %v2809 = vadd.f32 0.0, %v2808
  %2810 = vmatmul.f32.gmra.mxu0 %v2736
  %v2811 = vpop.f32.mrf.mxu0
  %v2812 = vadd.f32 0.0, %v2811
  %2813 = vmatmul.f32.gmra.mxu0 %v2739
  %v2814 = vpop.f32.mrf.mxu0
  %v2815 = vadd.f32 0.0, %v2814
  %2816 = vmatmul.f32.gmra.mxu0 %v2742
  %v2817 = vpop.f32.mrf.mxu0
  %v2818 = vadd.f32 0.0, %v2817
  %2819 = vmatmul.f32.gmra.mxu0 %v2745
  %v2820 = vpop.f32.mrf.mxu0
  %v2821 = vadd.f32 0.0, %v2820
  %2822 = vdwg.mxu0
  %v2823 = vld [vmem:[%s629] sm:$0xff]
  %v2824 = vld [vmem:[%s629 + $0x8] sm:$0xff]
  %v2825 = vld [vmem:[%s629 + $0x10] sm:$0xff]
  %v2826 = vld [vmem:[%s629 + $0x18] sm:$0xff]
  %v2827 = vld [vmem:[%s629 + $0x20] sm:$0xff]
  %v2828 = vld [vmem:[%s629 + $0x28] sm:$0xff]
  %v2829 = vld [vmem:[%s629 + $0x30] sm:$0xff]
  %v2830 = vld [vmem:[%s629 + $0x38] sm:$0xff]
  %v2831 = vld [vmem:[%s629 + $0x40] sm:$0xff]
  %v2832 = vld [vmem:[%s629 + $0x48] sm:$0xff]
  %v2833 = vld [vmem:[%s629 + $0x50] sm:$0xff]
  %v2834 = vld [vmem:[%s629 + $0x58] sm:$0xff]
  %v2835 = vld [vmem:[%s629 + $0x60] sm:$0xff]
  %v2836 = vld [vmem:[%s629 + $0x68] sm:$0xff]
  %v2837 = vld [vmem:[%s629 + $0x70] sm:$0xff]
  %v2838 = vld [vmem:[%s629 + $0x78] sm:$0xff]
  %v2839 = vld [vmem:[%s629 + $0x80] sm:$0xff]
  %v2840 = vld [vmem:[%s629 + $0x88] sm:$0xff]
  %v2841 = vld [vmem:[%s629 + $0x90] sm:$0xff]
  %v2842 = vld [vmem:[%s629 + $0x98] sm:$0xff]
  %v2843 = vld [vmem:[%s629 + $0xa0] sm:$0xff]
  %v2844 = vld [vmem:[%s629 + $0xa8] sm:$0xff]
  %v2845 = vld [vmem:[%s629 + $0xb0] sm:$0xff]
  %v2846 = vld [vmem:[%s629 + $0xb8] sm:$0xff]
  %2847 = vmatpush.msra.mxu0 0.0
  %2848 = vmatpush.msra.mxu0 0.0
  %2849 = vmatpush.msra.mxu0 0.0
  %2850 = vmatpush.msra.mxu0 0.0
  %2851 = vmatpush.msra.mxu0 %v2845
  %2852 = vmatpush.msra.mxu0 %v2843
  %2853 = vmatpush.msra.mxu0 %v2841
  %2854 = vmatpush.msra.mxu0 %v2839
  %2855 = vmatpush.msra.mxu0 %v2837
  %2856 = vmatpush.msra.mxu0 %v2835
  %2857 = vmatpush.msra.mxu0 %v2833
  %2858 = vmatpush.msra.mxu0 %v2831
  %2859 = vmatpush.msra.mxu0 %v2829
  %2860 = vmatpush.msra.mxu0 %v2827
  %2861 = vmatpush.msra.mxu0 %v2825
  %2862 = vmatpush.msra.mxu0 %v2823
  %2863 = vmatmul.f32.gmra.mxu0 %v2727
  %v2864 = vpop.f32.mrf.mxu0
  %v2865 = vadd.f32 0.0, %v2864
  %2866 = vmatmul.f32.gmra.mxu0 %v2730
  %v2867 = vpop.f32.mrf.mxu0
  %v2868 = vadd.f32 0.0, %v2867
  %2869 = vmatmul.f32.gmra.mxu0 %v2733
  %v2870 = vpop.f32.mrf.mxu0
  %v2871 = vadd.f32 0.0, %v2870
  %2872 = vmatmul.f32.gmra.mxu0 %v2736
  %v2873 = vpop.f32.mrf.mxu0
  %v2874 = vadd.f32 0.0, %v2873
  %2875 = vmatmul.f32.gmra.mxu0 %v2739
  %v2876 = vpop.f32.mrf.mxu0
  %v2877 = vadd.f32 0.0, %v2876
  %2878 = vmatmul.f32.gmra.mxu0 %v2742
  %v2879 = vpop.f32.mrf.mxu0
  %v2880 = vadd.f32 0.0, %v2879
  %2881 = vmatmul.f32.gmra.mxu0 %v2745
  %v2882 = vpop.f32.mrf.mxu0
  %v2883 = vadd.f32 0.0, %v2882
  %2884 = vdwg.mxu0
  %2885 = vmatpush.msra.mxu0 0.0
  %2886 = vmatpush.msra.mxu0 0.0
  %2887 = vmatpush.msra.mxu0 0.0
  %2888 = vmatpush.msra.mxu0 0.0
  %2889 = vmatpush.msra.mxu0 %v2846
  %2890 = vmatpush.msra.mxu0 %v2844
  %2891 = vmatpush.msra.mxu0 %v2842
  %2892 = vmatpush.msra.mxu0 %v2840
  %2893 = vmatpush.msra.mxu0 %v2838
  %2894 = vmatpush.msra.mxu0 %v2836
  %2895 = vmatpush.msra.mxu0 %v2834
  %2896 = vmatpush.msra.mxu0 %v2832
  %2897 = vmatpush.msra.mxu0 %v2830
  %2898 = vmatpush.msra.mxu0 %v2828
  %2899 = vmatpush.msra.mxu0 %v2826
  %2900 = vmatpush.msra.mxu0 %v2824
  %2901 = vmatmul.f32.gmra.mxu0 %v2727
  %v2902 = vpop.f32.mrf.mxu0
  %v2903 = vadd.f32 0.0, %v2902
  %2904 = vmatmul.f32.gmra.mxu0 %v2730
  %v2905 = vpop.f32.mrf.mxu0
  %v2906 = vadd.f32 0.0, %v2905
  %2907 = vmatmul.f32.gmra.mxu0 %v2733
  %v2908 = vpop.f32.mrf.mxu0
  %v2909 = vadd.f32 0.0, %v2908
  %2910 = vmatmul.f32.gmra.mxu0 %v2736
  %v2911 = vpop.f32.mrf.mxu0
  %v2912 = vadd.f32 0.0, %v2911
  %2913 = vmatmul.f32.gmra.mxu0 %v2739
  %v2914 = vpop.f32.mrf.mxu0
  %v2915 = vadd.f32 0.0, %v2914
  %2916 = vmatmul.f32.gmra.mxu0 %v2742
  %v2917 = vpop.f32.mrf.mxu0
  %v2918 = vadd.f32 0.0, %v2917
  %2919 = vmatmul.f32.gmra.mxu0 %v2745
  %v2920 = vpop.f32.mrf.mxu0
  %v2921 = vadd.f32 0.0, %v2920
  %2922 = vdwg.mxu0
  %v2923 = vadd.f32 %v2561, %v2765
  %v2924 = vadd.f32 %v2599, %v2803
  %v2925 = vadd.f32 %v2564, %v2768
  %v2926 = vadd.f32 %v2602, %v2806
  %v2927 = vadd.f32 %v2567, %v2771
  %v2928 = vadd.f32 %v2605, %v2809
  %v2929 = vadd.f32 %v2570, %v2774
  %v2930 = vadd.f32 %v2608, %v2812
  %v2931 = vadd.f32 %v2573, %v2777
  %v2932 = vadd.f32 %v2611, %v2815
  %v2933 = vadd.f32 %v2576, %v2780
  %v2934 = vadd.f32 %v2614, %v2818
  %v2935 = vadd.f32 %v2579, %v2783
  %v2936 = vadd.f32 %v2617, %v2821
  %v2937 = vadd.f32 %v2637, %v2865
  %v2938 = vadd.f32 %v2675, %v2903
  %v2939 = vadd.f32 %v2640, %v2868
  %v2940 = vadd.f32 %v2678, %v2906
  %v2941 = vadd.f32 %v2643, %v2871
  %v2942 = vadd.f32 %v2681, %v2909
  %v2943 = vadd.f32 %v2646, %v2874
  %v2944 = vadd.f32 %v2684, %v2912
  %v2945 = vadd.f32 %v2649, %v2877
  %v2946 = vadd.f32 %v2687, %v2915
  %v2947 = vadd.f32 %v2652, %v2880
  %v2948 = vadd.f32 %v2690, %v2918
  %v2949 = vadd.f32 %v2655, %v2883
  %v2950 = vadd.f32 %v2693, %v2921
  %v2951 = vld [vmem:[%s1954] sm:$0xff]
  %v2952 = vld [vmem:[%s1954 + $0x8] sm:$0xff]
  %v2953 = vld [vmem:[%s1954 + $0x10] sm:$0xff]
  %v2954 = vld [vmem:[%s1954 + $0x18] sm:$0xff]
  %v2955 = vld [vmem:[%s1954 + $0x20] sm:$0xff]
  %v2956 = vld [vmem:[%s1954 + $0x28] sm:$0xff]
  %v2957 = vld [vmem:[%s1954 + $0x30] sm:$0xff]
  %v2958 = vld [vmem:[%s766] sm:$0xff]
  %v2959 = vld [vmem:[%s766 + $0x8] sm:$0xff]
  %v2960 = vld [vmem:[%s766 + $0x10] sm:$0xff]
  %v2961 = vld [vmem:[%s766 + $0x18] sm:$0xff]
  %v2962 = vld [vmem:[%s766 + $0x20] sm:$0xff]
  %v2963 = vld [vmem:[%s766 + $0x28] sm:$0xff]
  %v2964 = vld [vmem:[%s766 + $0x30] sm:$0xff]
  %v2965 = vld [vmem:[%s766 + $0x38] sm:$0xff]
  %v2966 = vld [vmem:[%s766 + $0x40] sm:$0xff]
  %v2967 = vld [vmem:[%s766 + $0x48] sm:$0xff]
  %v2968 = vld [vmem:[%s766 + $0x50] sm:$0xff]
  %v2969 = vld [vmem:[%s766 + $0x58] sm:$0xff]
  %v2970 = vld [vmem:[%s766 + $0x60] sm:$0xff]
  %v2971 = vld [vmem:[%s766 + $0x68] sm:$0xff]
  %v2972 = vld [vmem:[%s766 + $0x70] sm:$0xff]
  %v2973 = vld [vmem:[%s766 + $0x78] sm:$0xff]
  %v2974 = vld [vmem:[%s766 + $0x80] sm:$0xff]
  %v2975 = vld [vmem:[%s766 + $0x88] sm:$0xff]
  %v2976 = vld [vmem:[%s766 + $0x90] sm:$0xff]
  %v2977 = vld [vmem:[%s766 + $0x98] sm:$0xff]
  %v2978 = vld [vmem:[%s766 + $0xa0] sm:$0xff]
  %v2979 = vld [vmem:[%s766 + $0xa8] sm:$0xff]
  %v2980 = vld [vmem:[%s766 + $0xb0] sm:$0xff]
  %v2981 = vld [vmem:[%s766 + $0xb8] sm:$0xff]
  %v2983 = vsel %vm127, %v2951, 0
  %v2986 = vsel %vm127, %v2952, 0
  %v2989 = vsel %vm127, %v2953, 0
  %v2992 = vsel %vm127, %v2954, 0
  %v2995 = vsel %vm127, %v2955, 0
  %v2998 = vsel %vm127, %v2956, 0
  %v3001 = vsel %vm127, %v2957, 0
  %3003 = vmatpush.msra.mxu0 0.0
  %3004 = vmatpush.msra.mxu0 0.0
  %3005 = vmatpush.msra.mxu0 0.0
  %3006 = vmatpush.msra.mxu0 0.0
  %3007 = vmatpush.msra.mxu0 %v2980
  %3008 = vmatpush.msra.mxu0 %v2978
  %3009 = vmatpush.msra.mxu0 %v2976
  %3010 = vmatpush.msra.mxu0 %v2974
  %3011 = vmatpush.msra.mxu0 %v2972
  %3012 = vmatpush.msra.mxu0 %v2970
  %3013 = vmatpush.msra.mxu0 %v2968
  %3014 = vmatpush.msra.mxu0 %v2966
  %3015 = vmatpush.msra.mxu0 %v2964
  %3016 = vmatpush.msra.mxu0 %v2962
  %3017 = vmatpush.msra.mxu0 %v2960
  %3018 = vmatpush.msra.mxu0 %v2958
  %3019 = vmatmul.f32.gmra.mxu0 %v2983
  %v3020 = vpop.f32.mrf.mxu0
  %v3021 = vadd.f32 0.0, %v3020
  %3022 = vmatmul.f32.gmra.mxu0 %v2986
  %v3023 = vpop.f32.mrf.mxu0
  %v3024 = vadd.f32 0.0, %v3023
  %3025 = vmatmul.f32.gmra.mxu0 %v2989
  %v3026 = vpop.f32.mrf.mxu0
  %v3027 = vadd.f32 0.0, %v3026
  %3028 = vmatmul.f32.gmra.mxu0 %v2992
  %v3029 = vpop.f32.mrf.mxu0
  %v3030 = vadd.f32 0.0, %v3029
  %3031 = vmatmul.f32.gmra.mxu0 %v2995
  %v3032 = vpop.f32.mrf.mxu0
  %v3033 = vadd.f32 0.0, %v3032
  %3034 = vmatmul.f32.gmra.mxu0 %v2998
  %v3035 = vpop.f32.mrf.mxu0
  %v3036 = vadd.f32 0.0, %v3035
  %3037 = vmatmul.f32.gmra.mxu0 %v3001
  %v3038 = vpop.f32.mrf.mxu0
  %v3039 = vadd.f32 0.0, %v3038
  %3040 = vdwg.mxu0
  %3041 = vmatpush.msra.mxu0 0.0
  %3042 = vmatpush.msra.mxu0 0.0
  %3043 = vmatpush.msra.mxu0 0.0
  %3044 = vmatpush.msra.mxu0 0.0
  %3045 = vmatpush.msra.mxu0 %v2981
  %3046 = vmatpush.msra.mxu0 %v2979
  %3047 = vmatpush.msra.mxu0 %v2977
  %3048 = vmatpush.msra.mxu0 %v2975
  %3049 = vmatpush.msra.mxu0 %v2973
  %3050 = vmatpush.msra.mxu0 %v2971
  %3051 = vmatpush.msra.mxu0 %v2969
  %3052 = vmatpush.msra.mxu0 %v2967
  %3053 = vmatpush.msra.mxu0 %v2965
  %3054 = vmatpush.msra.mxu0 %v2963
  %3055 = vmatpush.msra.mxu0 %v2961
  %3056 = vmatpush.msra.mxu0 %v2959
  %3057 = vmatmul.f32.gmra.mxu0 %v2983
  %v3058 = vpop.f32.mrf.mxu0
  %v3059 = vadd.f32 0.0, %v3058
  %3060 = vmatmul.f32.gmra.mxu0 %v2986
  %v3061 = vpop.f32.mrf.mxu0
  %v3062 = vadd.f32 0.0, %v3061
  %3063 = vmatmul.f32.gmra.mxu0 %v2989
  %v3064 = vpop.f32.mrf.mxu0
  %v3065 = vadd.f32 0.0, %v3064
  %3066 = vmatmul.f32.gmra.mxu0 %v2992
  %v3067 = vpop.f32.mrf.mxu0
  %v3068 = vadd.f32 0.0, %v3067
  %3069 = vmatmul.f32.gmra.mxu0 %v2995
  %v3070 = vpop.f32.mrf.mxu0
  %v3071 = vadd.f32 0.0, %v3070
  %3072 = vmatmul.f32.gmra.mxu0 %v2998
  %v3073 = vpop.f32.mrf.mxu0
  %v3074 = vadd.f32 0.0, %v3073
  %3075 = vmatmul.f32.gmra.mxu0 %v3001
  %v3076 = vpop.f32.mrf.mxu0
  %v3077 = vadd.f32 0.0, %v3076
  %3078 = vdwg.mxu0
  %v3079 = vld [vmem:[%s888] sm:$0xff]
  %v3080 = vld [vmem:[%s888 + $0x8] sm:$0xff]
  %v3081 = vld [vmem:[%s888 + $0x10] sm:$0xff]
  %v3082 = vld [vmem:[%s888 + $0x18] sm:$0xff]
  %v3083 = vld [vmem:[%s888 + $0x20] sm:$0xff]
  %v3084 = vld [vmem:[%s888 + $0x28] sm:$0xff]
  %v3085 = vld [vmem:[%s888 + $0x30] sm:$0xff]
  %v3086 = vld [vmem:[%s888 + $0x38] sm:$0xff]
  %v3087 = vld [vmem:[%s888 + $0x40] sm:$0xff]
  %v3088 = vld [vmem:[%s888 + $0x48] sm:$0xff]
  %v3089 = vld [vmem:[%s888 + $0x50] sm:$0xff]
  %v3090 = vld [vmem:[%s888 + $0x58] sm:$0xff]
  %v3091 = vld [vmem:[%s888 + $0x60] sm:$0xff]
  %v3092 = vld [vmem:[%s888 + $0x68] sm:$0xff]
  %v3093 = vld [vmem:[%s888 + $0x70] sm:$0xff]
  %v3094 = vld [vmem:[%s888 + $0x78] sm:$0xff]
  %v3095 = vld [vmem:[%s888 + $0x80] sm:$0xff]
  %v3096 = vld [vmem:[%s888 + $0x88] sm:$0xff]
  %v3097 = vld [vmem:[%s888 + $0x90] sm:$0xff]
  %v3098 = vld [vmem:[%s888 + $0x98] sm:$0xff]
  %v3099 = vld [vmem:[%s888 + $0xa0] sm:$0xff]
  %v3100 = vld [vmem:[%s888 + $0xa8] sm:$0xff]
  %v3101 = vld [vmem:[%s888 + $0xb0] sm:$0xff]
  %v3102 = vld [vmem:[%s888 + $0xb8] sm:$0xff]
  %3103 = vmatpush.msra.mxu0 0.0
  %3104 = vmatpush.msra.mxu0 0.0
  %3105 = vmatpush.msra.mxu0 0.0
  %3106 = vmatpush.msra.mxu0 0.0
  %3107 = vmatpush.msra.mxu0 %v3101
  %3108 = vmatpush.msra.mxu0 %v3099
  %3109 = vmatpush.msra.mxu0 %v3097
  %3110 = vmatpush.msra.mxu0 %v3095
  %3111 = vmatpush.msra.mxu0 %v3093
  %3112 = vmatpush.msra.mxu0 %v3091
  %3113 = vmatpush.msra.mxu0 %v3089
  %3114 = vmatpush.msra.mxu0 %v3087
  %3115 = vmatpush.msra.mxu0 %v3085
  %3116 = vmatpush.msra.mxu0 %v3083
  %3117 = vmatpush.msra.mxu0 %v3081
  %3118 = vmatpush.msra.mxu0 %v3079
  %3119 = vmatmul.f32.gmra.mxu0 %v2983
  %v3120 = vpop.f32.mrf.mxu0
  %v3121 = vadd.f32 0.0, %v3120
  %3122 = vmatmul.f32.gmra.mxu0 %v2986
  %v3123 = vpop.f32.mrf.mxu0
  %v3124 = vadd.f32 0.0, %v3123
  %3125 = vmatmul.f32.gmra.mxu0 %v2989
  %v3126 = vpop.f32.mrf.mxu0
  %v3127 = vadd.f32 0.0, %v3126
  %3128 = vmatmul.f32.gmra.mxu0 %v2992
  %v3129 = vpop.f32.mrf.mxu0
  %v3130 = vadd.f32 0.0, %v3129
  %3131 = vmatmul.f32.gmra.mxu0 %v2995
  %v3132 = vpop.f32.mrf.mxu0
  %v3133 = vadd.f32 0.0, %v3132
  %3134 = vmatmul.f32.gmra.mxu0 %v2998
  %v3135 = vpop.f32.mrf.mxu0
  %v3136 = vadd.f32 0.0, %v3135
  %3137 = vmatmul.f32.gmra.mxu0 %v3001
  %v3138 = vpop.f32.mrf.mxu0
  %v3139 = vadd.f32 0.0, %v3138
  %3140 = vdwg.mxu0
  %3141 = vmatpush.msra.mxu0 0.0
  %3142 = vmatpush.msra.mxu0 0.0
  %3143 = vmatpush.msra.mxu0 0.0
  %3144 = vmatpush.msra.mxu0 0.0
  %3145 = vmatpush.msra.mxu0 %v3102
  %3146 = vmatpush.msra.mxu0 %v3100
  %3147 = vmatpush.msra.mxu0 %v3098
  %3148 = vmatpush.msra.mxu0 %v3096
  %3149 = vmatpush.msra.mxu0 %v3094
  %3150 = vmatpush.msra.mxu0 %v3092
  %3151 = vmatpush.msra.mxu0 %v3090
  %3152 = vmatpush.msra.mxu0 %v3088
  %3153 = vmatpush.msra.mxu0 %v3086
  %3154 = vmatpush.msra.mxu0 %v3084
  %3155 = vmatpush.msra.mxu0 %v3082
  %3156 = vmatpush.msra.mxu0 %v3080
  %3157 = vmatmul.f32.gmra.mxu0 %v2983
  %v3158 = vpop.f32.mrf.mxu0
  %v3159 = vadd.f32 0.0, %v3158
  %3160 = vmatmul.f32.gmra.mxu0 %v2986
  %v3161 = vpop.f32.mrf.mxu0
  %v3162 = vadd.f32 0.0, %v3161
  %3163 = vmatmul.f32.gmra.mxu0 %v2989
  %v3164 = vpop.f32.mrf.mxu0
  %v3165 = vadd.f32 0.0, %v3164
  %3166 = vmatmul.f32.gmra.mxu0 %v2992
  %v3167 = vpop.f32.mrf.mxu0
  %v3168 = vadd.f32 0.0, %v3167
  %3169 = vmatmul.f32.gmra.mxu0 %v2995
  %v3170 = vpop.f32.mrf.mxu0
  %v3171 = vadd.f32 0.0, %v3170
  %3172 = vmatmul.f32.gmra.mxu0 %v2998
  %v3173 = vpop.f32.mrf.mxu0
  %v3174 = vadd.f32 0.0, %v3173
  %3175 = vmatmul.f32.gmra.mxu0 %v3001
  %v3176 = vpop.f32.mrf.mxu0
  %v3177 = vadd.f32 0.0, %v3176
  %3178 = vdwg.mxu0
  %v3179 = vadd.f32 %v2923, %v3021
  %v3180 = vadd.f32 %v2924, %v3059
  %v3181 = vadd.f32 %v2925, %v3024
  %v3182 = vadd.f32 %v2926, %v3062
  %v3183 = vadd.f32 %v2927, %v3027
  %v3184 = vadd.f32 %v2928, %v3065
  %v3185 = vadd.f32 %v2929, %v3030
  %v3186 = vadd.f32 %v2930, %v3068
  %v3187 = vadd.f32 %v2931, %v3033
  %v3188 = vadd.f32 %v2932, %v3071
  %v3189 = vadd.f32 %v2933, %v3036
  %v3190 = vadd.f32 %v2934, %v3074
  %v3191 = vadd.f32 %v2935, %v3039
  %v3192 = vadd.f32 %v2936, %v3077
  %v3193 = vadd.f32 %v2937, %v3121
  %v3194 = vadd.f32 %v2938, %v3159
  %v3195 = vadd.f32 %v2939, %v3124
  %v3196 = vadd.f32 %v2940, %v3162
  %v3197 = vadd.f32 %v2941, %v3127
  %v3198 = vadd.f32 %v2942, %v3165
  %v3199 = vadd.f32 %v2943, %v3130
  %v3200 = vadd.f32 %v2944, %v3168
  %v3201 = vadd.f32 %v2945, %v3133
  %v3202 = vadd.f32 %v2946, %v3171
  %v3203 = vadd.f32 %v2947, %v3136
  %v3204 = vadd.f32 %v2948, %v3174
  %v3205 = vadd.f32 %v2949, %v3139
  %v3206 = vadd.f32 %v2950, %v3177
  %s3207 = scalar_lea.vmem %s0, 336
  %v3208 = vld [vmem:[%s3207] sm:$0xff]
  %v3209 = vld [vmem:[%s3207 + $0x8] sm:$0xff]
  %v3210 = vld [vmem:[%s3207 + $0x10] sm:$0xff]
  %v3211 = vld [vmem:[%s3207 + $0x18] sm:$0xff]
  %v3212 = vld [vmem:[%s3207 + $0x20] sm:$0xff]
  %v3213 = vld [vmem:[%s3207 + $0x28] sm:$0xff]
  %v3214 = vld [vmem:[%s3207 + $0x30] sm:$0xff]
  %v3215 = vld [vmem:[%s1025] sm:$0xff]
  %v3216 = vld [vmem:[%s1025 + $0x8] sm:$0xff]
  %v3217 = vld [vmem:[%s1025 + $0x10] sm:$0xff]
  %v3218 = vld [vmem:[%s1025 + $0x18] sm:$0xff]
  %v3219 = vld [vmem:[%s1025 + $0x20] sm:$0xff]
  %v3220 = vld [vmem:[%s1025 + $0x28] sm:$0xff]
  %v3221 = vld [vmem:[%s1025 + $0x30] sm:$0xff]
  %v3222 = vld [vmem:[%s1025 + $0x38] sm:$0xff]
  %v3223 = vld [vmem:[%s1025 + $0x40] sm:$0xff]
  %v3224 = vld [vmem:[%s1025 + $0x48] sm:$0xff]
  %v3225 = vld [vmem:[%s1025 + $0x50] sm:$0xff]
  %v3226 = vld [vmem:[%s1025 + $0x58] sm:$0xff]
  %v3227 = vld [vmem:[%s1025 + $0x60] sm:$0xff]
  %v3228 = vld [vmem:[%s1025 + $0x68] sm:$0xff]
  %v3229 = vld [vmem:[%s1025 + $0x70] sm:$0xff]
  %v3230 = vld [vmem:[%s1025 + $0x78] sm:$0xff]
  %v3231 = vld [vmem:[%s1025 + $0x80] sm:$0xff]
  %v3232 = vld [vmem:[%s1025 + $0x88] sm:$0xff]
  %v3233 = vld [vmem:[%s1025 + $0x90] sm:$0xff]
  %v3234 = vld [vmem:[%s1025 + $0x98] sm:$0xff]
  %v3235 = vld [vmem:[%s1025 + $0xa0] sm:$0xff]
  %v3236 = vld [vmem:[%s1025 + $0xa8] sm:$0xff]
  %v3237 = vld [vmem:[%s1025 + $0xb0] sm:$0xff]
  %v3238 = vld [vmem:[%s1025 + $0xb8] sm:$0xff]
  %v3240 = vsel %vm127, %v3208, 0
  %v3243 = vsel %vm127, %v3209, 0
  %v3246 = vsel %vm127, %v3210, 0
  %v3249 = vsel %vm127, %v3211, 0
  %v3252 = vsel %vm127, %v3212, 0
  %v3255 = vsel %vm127, %v3213, 0
  %v3258 = vsel %vm127, %v3214, 0
  %3260 = vmatpush.msra.mxu0 0.0
  %3261 = vmatpush.msra.mxu0 0.0
  %3262 = vmatpush.msra.mxu0 0.0
  %3263 = vmatpush.msra.mxu0 0.0
  %3264 = vmatpush.msra.mxu0 %v3237
  %3265 = vmatpush.msra.mxu0 %v3235
  %3266 = vmatpush.msra.mxu0 %v3233
  %3267 = vmatpush.msra.mxu0 %v3231
  %3268 = vmatpush.msra.mxu0 %v3229
  %3269 = vmatpush.msra.mxu0 %v3227
  %3270 = vmatpush.msra.mxu0 %v3225
  %3271 = vmatpush.msra.mxu0 %v3223
  %3272 = vmatpush.msra.mxu0 %v3221
  %3273 = vmatpush.msra.mxu0 %v3219
  %3274 = vmatpush.msra.mxu0 %v3217
  %3275 = vmatpush.msra.mxu0 %v3215
  %3276 = vmatmul.f32.gmra.mxu0 %v3240
  %v3277 = vpop.f32.mrf.mxu0
  %v3278 = vadd.f32 0.0, %v3277
  %3279 = vmatmul.f32.gmra.mxu0 %v3243
  %v3280 = vpop.f32.mrf.mxu0
  %v3281 = vadd.f32 0.0, %v3280
  %3282 = vmatmul.f32.gmra.mxu0 %v3246
  %v3283 = vpop.f32.mrf.mxu0
  %v3284 = vadd.f32 0.0, %v3283
  %3285 = vmatmul.f32.gmra.mxu0 %v3249
  %v3286 = vpop.f32.mrf.mxu0
  %v3287 = vadd.f32 0.0, %v3286
  %3288 = vmatmul.f32.gmra.mxu0 %v3252
  %v3289 = vpop.f32.mrf.mxu0
  %v3290 = vadd.f32 0.0, %v3289
  %3291 = vmatmul.f32.gmra.mxu0 %v3255
  %v3292 = vpop.f32.mrf.mxu0
  %v3293 = vadd.f32 0.0, %v3292
  %3294 = vmatmul.f32.gmra.mxu0 %v3258
  %v3295 = vpop.f32.mrf.mxu0
  %v3296 = vadd.f32 0.0, %v3295
  %3297 = vdwg.mxu0
  %3298 = vmatpush.msra.mxu0 0.0
  %3299 = vmatpush.msra.mxu0 0.0
  %3300 = vmatpush.msra.mxu0 0.0
  %3301 = vmatpush.msra.mxu0 0.0
  %3302 = vmatpush.msra.mxu0 %v3238
  %3303 = vmatpush.msra.mxu0 %v3236
  %3304 = vmatpush.msra.mxu0 %v3234
  %3305 = vmatpush.msra.mxu0 %v3232
  %3306 = vmatpush.msra.mxu0 %v3230
  %3307 = vmatpush.msra.mxu0 %v3228
  %3308 = vmatpush.msra.mxu0 %v3226
  %3309 = vmatpush.msra.mxu0 %v3224
  %3310 = vmatpush.msra.mxu0 %v3222
  %3311 = vmatpush.msra.mxu0 %v3220
  %3312 = vmatpush.msra.mxu0 %v3218
  %3313 = vmatpush.msra.mxu0 %v3216
  %3314 = vmatmul.f32.gmra.mxu0 %v3240
  %v3315 = vpop.f32.mrf.mxu0
  %v3316 = vadd.f32 0.0, %v3315
  %3317 = vmatmul.f32.gmra.mxu0 %v3243
  %v3318 = vpop.f32.mrf.mxu0
  %v3319 = vadd.f32 0.0, %v3318
  %3320 = vmatmul.f32.gmra.mxu0 %v3246
  %v3321 = vpop.f32.mrf.mxu0
  %v3322 = vadd.f32 0.0, %v3321
  %3323 = vmatmul.f32.gmra.mxu0 %v3249
  %v3324 = vpop.f32.mrf.mxu0
  %v3325 = vadd.f32 0.0, %v3324
  %3326 = vmatmul.f32.gmra.mxu0 %v3252
  %v3327 = vpop.f32.mrf.mxu0
  %v3328 = vadd.f32 0.0, %v3327
  %3329 = vmatmul.f32.gmra.mxu0 %v3255
  %v3330 = vpop.f32.mrf.mxu0
  %v3331 = vadd.f32 0.0, %v3330
  %3332 = vmatmul.f32.gmra.mxu0 %v3258
  %v3333 = vpop.f32.mrf.mxu0
  %v3334 = vadd.f32 0.0, %v3333
  %3335 = vdwg.mxu0
  %v3336 = vld [vmem:[%s1147] sm:$0xff]
  %v3337 = vld [vmem:[%s1147 + $0x8] sm:$0xff]
  %v3338 = vld [vmem:[%s1147 + $0x10] sm:$0xff]
  %v3339 = vld [vmem:[%s1147 + $0x18] sm:$0xff]
  %v3340 = vld [vmem:[%s1147 + $0x20] sm:$0xff]
  %v3341 = vld [vmem:[%s1147 + $0x28] sm:$0xff]
  %v3342 = vld [vmem:[%s1147 + $0x30] sm:$0xff]
  %v3343 = vld [vmem:[%s1147 + $0x38] sm:$0xff]
  %v3344 = vld [vmem:[%s1147 + $0x40] sm:$0xff]
  %v3345 = vld [vmem:[%s1147 + $0x48] sm:$0xff]
  %v3346 = vld [vmem:[%s1147 + $0x50] sm:$0xff]
  %v3347 = vld [vmem:[%s1147 + $0x58] sm:$0xff]
  %v3348 = vld [vmem:[%s1147 + $0x60] sm:$0xff]
  %v3349 = vld [vmem:[%s1147 + $0x68] sm:$0xff]
  %v3350 = vld [vmem:[%s1147 + $0x70] sm:$0xff]
  %v3351 = vld [vmem:[%s1147 + $0x78] sm:$0xff]
  %v3352 = vld [vmem:[%s1147 + $0x80] sm:$0xff]
  %v3353 = vld [vmem:[%s1147 + $0x88] sm:$0xff]
  %v3354 = vld [vmem:[%s1147 + $0x90] sm:$0xff]
  %v3355 = vld [vmem:[%s1147 + $0x98] sm:$0xff]
  %v3356 = vld [vmem:[%s1147 + $0xa0] sm:$0xff]
  %v3357 = vld [vmem:[%s1147 + $0xa8] sm:$0xff]
  %v3358 = vld [vmem:[%s1147 + $0xb0] sm:$0xff]
  %v3359 = vld [vmem:[%s1147 + $0xb8] sm:$0xff]
  %3360 = vmatpush.msra.mxu0 0.0
  %3361 = vmatpush.msra.mxu0 0.0
  %3362 = vmatpush.msra.mxu0 0.0
  %3363 = vmatpush.msra.mxu0 0.0
  %3364 = vmatpush.msra.mxu0 %v3358
  %3365 = vmatpush.msra.mxu0 %v3356
  %3366 = vmatpush.msra.mxu0 %v3354
  %3367 = vmatpush.msra.mxu0 %v3352
  %3368 = vmatpush.msra.mxu0 %v3350
  %3369 = vmatpush.msra.mxu0 %v3348
  %3370 = vmatpush.msra.mxu0 %v3346
  %3371 = vmatpush.msra.mxu0 %v3344
  %3372 = vmatpush.msra.mxu0 %v3342
  %3373 = vmatpush.msra.mxu0 %v3340
  %3374 = vmatpush.msra.mxu0 %v3338
  %3375 = vmatpush.msra.mxu0 %v3336
  %3376 = vmatmul.f32.gmra.mxu0 %v3240
  %v3377 = vpop.f32.mrf.mxu0
  %v3378 = vadd.f32 0.0, %v3377
  %3379 = vmatmul.f32.gmra.mxu0 %v3243
  %v3380 = vpop.f32.mrf.mxu0
  %v3381 = vadd.f32 0.0, %v3380
  %3382 = vmatmul.f32.gmra.mxu0 %v3246
  %v3383 = vpop.f32.mrf.mxu0
  %v3384 = vadd.f32 0.0, %v3383
  %3385 = vmatmul.f32.gmra.mxu0 %v3249
  %v3386 = vpop.f32.mrf.mxu0
  %v3387 = vadd.f32 0.0, %v3386
  %3388 = vmatmul.f32.gmra.mxu0 %v3252
  %v3389 = vpop.f32.mrf.mxu0
  %v3390 = vadd.f32 0.0, %v3389
  %3391 = vmatmul.f32.gmra.mxu0 %v3255
  %v3392 = vpop.f32.mrf.mxu0
  %v3393 = vadd.f32 0.0, %v3392
  %3394 = vmatmul.f32.gmra.mxu0 %v3258
  %v3395 = vpop.f32.mrf.mxu0
  %v3396 = vadd.f32 0.0, %v3395
  %3397 = vdwg.mxu0
  %3398 = vmatpush.msra.mxu0 0.0
  %3399 = vmatpush.msra.mxu0 0.0
  %3400 = vmatpush.msra.mxu0 0.0
  %3401 = vmatpush.msra.mxu0 0.0
  %3402 = vmatpush.msra.mxu0 %v3359
  %3403 = vmatpush.msra.mxu0 %v3357
  %3404 = vmatpush.msra.mxu0 %v3355
  %3405 = vmatpush.msra.mxu0 %v3353
  %3406 = vmatpush.msra.mxu0 %v3351
  %3407 = vmatpush.msra.mxu0 %v3349
  %3408 = vmatpush.msra.mxu0 %v3347
  %3409 = vmatpush.msra.mxu0 %v3345
  %3410 = vmatpush.msra.mxu0 %v3343
  %3411 = vmatpush.msra.mxu0 %v3341
  %3412 = vmatpush.msra.mxu0 %v3339
  %3413 = vmatpush.msra.mxu0 %v3337
  %3414 = vmatmul.f32.gmra.mxu0 %v3240
  %v3415 = vpop.f32.mrf.mxu0
  %v3416 = vadd.f32 0.0, %v3415
  %3417 = vmatmul.f32.gmra.mxu0 %v3243
  %v3418 = vpop.f32.mrf.mxu0
  %v3419 = vadd.f32 0.0, %v3418
  %3420 = vmatmul.f32.gmra.mxu0 %v3246
  %v3421 = vpop.f32.mrf.mxu0
  %v3422 = vadd.f32 0.0, %v3421
  %3423 = vmatmul.f32.gmra.mxu0 %v3249
  %v3424 = vpop.f32.mrf.mxu0
  %v3425 = vadd.f32 0.0, %v3424
  %3426 = vmatmul.f32.gmra.mxu0 %v3252
  %v3427 = vpop.f32.mrf.mxu0
  %v3428 = vadd.f32 0.0, %v3427
  %3429 = vmatmul.f32.gmra.mxu0 %v3255
  %v3430 = vpop.f32.mrf.mxu0
  %v3431 = vadd.f32 0.0, %v3430
  %3432 = vmatmul.f32.gmra.mxu0 %v3258
  %v3433 = vpop.f32.mrf.mxu0
  %v3434 = vadd.f32 0.0, %v3433
  %3435 = vdwg.mxu0
  %v3436 = vadd.f32 %v3179, %v3278
  %v3437 = vadd.f32 %v3180, %v3316
  %v3438 = vadd.f32 %v3181, %v3281
  %v3439 = vadd.f32 %v3182, %v3319
  %v3440 = vadd.f32 %v3183, %v3284
  %v3441 = vadd.f32 %v3184, %v3322
  %v3442 = vadd.f32 %v3185, %v3287
  %v3443 = vadd.f32 %v3186, %v3325
  %v3444 = vadd.f32 %v3187, %v3290
  %v3445 = vadd.f32 %v3188, %v3328
  %v3446 = vadd.f32 %v3189, %v3293
  %v3447 = vadd.f32 %v3190, %v3331
  %v3448 = vadd.f32 %v3191, %v3296
  %v3449 = vadd.f32 %v3192, %v3334
  %v3450 = vadd.f32 %v3193, %v3378
  %v3451 = vadd.f32 %v3194, %v3416
  %v3452 = vadd.f32 %v3195, %v3381
  %v3453 = vadd.f32 %v3196, %v3419
  %v3454 = vadd.f32 %v3197, %v3384
  %v3455 = vadd.f32 %v3198, %v3422
  %v3456 = vadd.f32 %v3199, %v3387
  %v3457 = vadd.f32 %v3200, %v3425
  %v3458 = vadd.f32 %v3201, %v3390
  %v3459 = vadd.f32 %v3202, %v3428
  %v3460 = vadd.f32 %v3203, %v3393
  %v3461 = vadd.f32 %v3204, %v3431
  %v3462 = vadd.f32 %v3205, %v3396
  %v3463 = vadd.f32 %v3206, %v3434
  %v3464 = vmax.f32 %v3436, %v3450
  %v3465 = vmax.f32 %v3437, %v3451
  %v3466 = vmax.f32 %v3438, %v3452
  %v3467 = vmax.f32 %v3439, %v3453
  %v3468 = vmax.f32 %v3440, %v3454
  %v3469 = vmax.f32 %v3441, %v3455
  %v3470 = vmax.f32 %v3442, %v3456
  %v3471 = vmax.f32 %v3443, %v3457
  %v3472 = vmax.f32 %v3444, %v3458
  %v3473 = vmax.f32 %v3445, %v3459
  %v3474 = vmax.f32 %v3446, %v3460
  %v3475 = vmax.f32 %v3447, %v3461
  %v3476 = vmax.f32 %v3448, %v3462
  %v3477 = vmax.f32 %v3449, %v3463
  %3478 = vmatpush.msra.mxu0 0.0
  %3479 = vmatpush.msra.mxu0 0.0
  %3480 = vmatpush.msra.mxu0 0.0
  %3481 = vmatpush.msra.mxu0 0.0
  %3482 = vmatpush.msra.mxu0 %v2323
  %3483 = vmatpush.msra.mxu0 %v2321
  %3484 = vmatpush.msra.mxu0 %v2319
  %3485 = vmatpush.msra.mxu0 %v2317
  %3486 = vmatpush.msra.mxu0 %v2315
  %3487 = vmatpush.msra.mxu0 %v2313
  %3488 = vmatpush.msra.mxu0 %v2311
  %3489 = vmatpush.msra.mxu0 %v2309
  %3490 = vmatpush.msra.mxu0 %v2307
  %3491 = vmatpush.msra.mxu0 %v2305
  %3492 = vmatpush.msra.mxu0 %v2303
  %3493 = vmatpush.msra.mxu0 %v2301
  %3494 = vmatmul.f32.gmra.mxu0 %v2727
  %v3495 = vpop.f32.mrf.mxu0
  %v3496 = vadd.f32 0.0, %v3495
  %3497 = vmatmul.f32.gmra.mxu0 %v2730
  %v3498 = vpop.f32.mrf.mxu0
  %v3499 = vadd.f32 0.0, %v3498
  %3500 = vmatmul.f32.gmra.mxu0 %v2733
  %v3501 = vpop.f32.mrf.mxu0
  %v3502 = vadd.f32 0.0, %v3501
  %3503 = vmatmul.f32.gmra.mxu0 %v2736
  %v3504 = vpop.f32.mrf.mxu0
  %v3505 = vadd.f32 0.0, %v3504
  %3506 = vmatmul.f32.gmra.mxu0 %v2739
  %v3507 = vpop.f32.mrf.mxu0
  %v3508 = vadd.f32 0.0, %v3507
  %3509 = vmatmul.f32.gmra.mxu0 %v2742
  %v3510 = vpop.f32.mrf.mxu0
  %v3511 = vadd.f32 0.0, %v3510
  %3512 = vmatmul.f32.gmra.mxu0 %v2745
  %v3513 = vpop.f32.mrf.mxu0
  %v3514 = vadd.f32 0.0, %v3513
  %3515 = vdwg.mxu0
  %3516 = vmatpush.msra.mxu0 0.0
  %3517 = vmatpush.msra.mxu0 0.0
  %3518 = vmatpush.msra.mxu0 0.0
  %3519 = vmatpush.msra.mxu0 0.0
  %3520 = vmatpush.msra.mxu0 %v2324
  %3521 = vmatpush.msra.mxu0 %v2322
  %3522 = vmatpush.msra.mxu0 %v2320
  %3523 = vmatpush.msra.mxu0 %v2318
  %3524 = vmatpush.msra.mxu0 %v2316
  %3525 = vmatpush.msra.mxu0 %v2314
  %3526 = vmatpush.msra.mxu0 %v2312
  %3527 = vmatpush.msra.mxu0 %v2310
  %3528 = vmatpush.msra.mxu0 %v2308
  %3529 = vmatpush.msra.mxu0 %v2306
  %3530 = vmatpush.msra.mxu0 %v2304
  %3531 = vmatpush.msra.mxu0 %v2302
  %3532 = vmatmul.f32.gmra.mxu0 %v2727
  %v3533 = vpop.f32.mrf.mxu0
  %v3534 = vadd.f32 0.0, %v3533
  %3535 = vmatmul.f32.gmra.mxu0 %v2730
  %v3536 = vpop.f32.mrf.mxu0
  %v3537 = vadd.f32 0.0, %v3536
  %3538 = vmatmul.f32.gmra.mxu0 %v2733
  %v3539 = vpop.f32.mrf.mxu0
  %v3540 = vadd.f32 0.0, %v3539
  %3541 = vmatmul.f32.gmra.mxu0 %v2736
  %v3542 = vpop.f32.mrf.mxu0
  %v3543 = vadd.f32 0.0, %v3542
  %3544 = vmatmul.f32.gmra.mxu0 %v2739
  %v3545 = vpop.f32.mrf.mxu0
  %v3546 = vadd.f32 0.0, %v3545
  %3547 = vmatmul.f32.gmra.mxu0 %v2742
  %v3548 = vpop.f32.mrf.mxu0
  %v3549 = vadd.f32 0.0, %v3548
  %3550 = vmatmul.f32.gmra.mxu0 %v2745
  %v3551 = vpop.f32.mrf.mxu0
  %v3552 = vadd.f32 0.0, %v3551
  %3553 = vdwg.mxu0
  %3554 = vmatpush.msra.mxu0 0.0
  %3555 = vmatpush.msra.mxu0 0.0
  %3556 = vmatpush.msra.mxu0 0.0
  %3557 = vmatpush.msra.mxu0 0.0
  %3558 = vmatpush.msra.mxu0 %v2444
  %3559 = vmatpush.msra.mxu0 %v2442
  %3560 = vmatpush.msra.mxu0 %v2440
  %3561 = vmatpush.msra.mxu0 %v2438
  %3562 = vmatpush.msra.mxu0 %v2436
  %3563 = vmatpush.msra.mxu0 %v2434
  %3564 = vmatpush.msra.mxu0 %v2432
  %3565 = vmatpush.msra.mxu0 %v2430
  %3566 = vmatpush.msra.mxu0 %v2428
  %3567 = vmatpush.msra.mxu0 %v2426
  %3568 = vmatpush.msra.mxu0 %v2424
  %3569 = vmatpush.msra.mxu0 %v2422
  %3570 = vmatmul.f32.gmra.mxu0 %v2727
  %v3571 = vpop.f32.mrf.mxu0
  %v3572 = vadd.f32 0.0, %v3571
  %3573 = vmatmul.f32.gmra.mxu0 %v2730
  %v3574 = vpop.f32.mrf.mxu0
  %v3575 = vadd.f32 0.0, %v3574
  %3576 = vmatmul.f32.gmra.mxu0 %v2733
  %v3577 = vpop.f32.mrf.mxu0
  %v3578 = vadd.f32 0.0, %v3577
  %3579 = vmatmul.f32.gmra.mxu0 %v2736
  %v3580 = vpop.f32.mrf.mxu0
  %v3581 = vadd.f32 0.0, %v3580
  %3582 = vmatmul.f32.gmra.mxu0 %v2739
  %v3583 = vpop.f32.mrf.mxu0
  %v3584 = vadd.f32 0.0, %v3583
  %3585 = vmatmul.f32.gmra.mxu0 %v2742
  %v3586 = vpop.f32.mrf.mxu0
  %v3587 = vadd.f32 0.0, %v3586
  %3588 = vmatmul.f32.gmra.mxu0 %v2745
  %v3589 = vpop.f32.mrf.mxu0
  %v3590 = vadd.f32 0.0, %v3589
  %3591 = vdwg.mxu0
  %3592 = vmatpush.msra.mxu0 0.0
  %3593 = vmatpush.msra.mxu0 0.0
  %3594 = vmatpush.msra.mxu0 0.0
  %3595 = vmatpush.msra.mxu0 0.0
  %3596 = vmatpush.msra.mxu0 %v2445
  %3597 = vmatpush.msra.mxu0 %v2443
  %3598 = vmatpush.msra.mxu0 %v2441
  %3599 = vmatpush.msra.mxu0 %v2439
  %3600 = vmatpush.msra.mxu0 %v2437
  %3601 = vmatpush.msra.mxu0 %v2435
  %3602 = vmatpush.msra.mxu0 %v2433
  %3603 = vmatpush.msra.mxu0 %v2431
  %3604 = vmatpush.msra.mxu0 %v2429
  %3605 = vmatpush.msra.mxu0 %v2427
  %3606 = vmatpush.msra.mxu0 %v2425
  %3607 = vmatpush.msra.mxu0 %v2423
  %3608 = vmatmul.f32.gmra.mxu0 %v2727
  %v3609 = vpop.f32.mrf.mxu0
  %v3610 = vadd.f32 0.0, %v3609
  %3611 = vmatmul.f32.gmra.mxu0 %v2730
  %v3612 = vpop.f32.mrf.mxu0
  %v3613 = vadd.f32 0.0, %v3612
  %3614 = vmatmul.f32.gmra.mxu0 %v2733
  %v3615 = vpop.f32.mrf.mxu0
  %v3616 = vadd.f32 0.0, %v3615
  %3617 = vmatmul.f32.gmra.mxu0 %v2736
  %v3618 = vpop.f32.mrf.mxu0
  %v3619 = vadd.f32 0.0, %v3618
  %3620 = vmatmul.f32.gmra.mxu0 %v2739
  %v3621 = vpop.f32.mrf.mxu0
  %v3622 = vadd.f32 0.0, %v3621
  %3623 = vmatmul.f32.gmra.mxu0 %v2742
  %v3624 = vpop.f32.mrf.mxu0
  %v3625 = vadd.f32 0.0, %v3624
  %3626 = vmatmul.f32.gmra.mxu0 %v2745
  %v3627 = vpop.f32.mrf.mxu0
  %v3628 = vadd.f32 0.0, %v3627
  %3629 = vdwg.mxu0
  %3630 = vmatpush.msra.mxu0 0.0
  %3631 = vmatpush.msra.mxu0 0.0
  %3632 = vmatpush.msra.mxu0 0.0
  %3633 = vmatpush.msra.mxu0 0.0
  %3634 = vmatpush.msra.mxu0 %v2268
  %3635 = vmatpush.msra.mxu0 %v2266
  %3636 = vmatpush.msra.mxu0 %v2264
  %3637 = vmatpush.msra.mxu0 %v2262
  %3638 = vmatpush.msra.mxu0 %v2260
  %3639 = vmatpush.msra.mxu0 %v2258
  %3640 = vmatpush.msra.mxu0 %v2256
  %3641 = vmatpush.msra.mxu0 %v2254
  %3642 = vmatpush.msra.mxu0 %v2252
  %3643 = vmatpush.msra.mxu0 %v2250
  %3644 = vmatpush.msra.mxu0 %v2248
  %3645 = vmatpush.msra.mxu0 %v2246
  %3646 = vmatmul.f32.gmra.mxu0 %v2326
  %v3647 = vpop.f32.mrf.mxu0
  %v3648 = vadd.f32 %v3496, %v3647
  %3649 = vmatmul.f32.gmra.mxu0 %v2329
  %v3650 = vpop.f32.mrf.mxu0
  %v3651 = vadd.f32 %v3499, %v3650
  %3652 = vmatmul.f32.gmra.mxu0 %v2332
  %v3653 = vpop.f32.mrf.mxu0
  %v3654 = vadd.f32 %v3502, %v3653
  %3655 = vmatmul.f32.gmra.mxu0 %v2335
  %v3656 = vpop.f32.mrf.mxu0
  %v3657 = vadd.f32 %v3505, %v3656
  %3658 = vmatmul.f32.gmra.mxu0 %v2338
  %v3659 = vpop.f32.mrf.mxu0
  %v3660 = vadd.f32 %v3508, %v3659
  %3661 = vmatmul.f32.gmra.mxu0 %v2341
  %v3662 = vpop.f32.mrf.mxu0
  %v3663 = vadd.f32 %v3511, %v3662
  %3664 = vmatmul.f32.gmra.mxu0 %v2344
  %v3665 = vpop.f32.mrf.mxu0
  %v3666 = vadd.f32 %v3514, %v3665
  %3667 = vdwg.mxu0
  %3668 = vmatpush.msra.mxu0 0.0
  %3669 = vmatpush.msra.mxu0 0.0
  %3670 = vmatpush.msra.mxu0 0.0
  %3671 = vmatpush.msra.mxu0 0.0
  %3672 = vmatpush.msra.mxu0 %v2269
  %3673 = vmatpush.msra.mxu0 %v2267
  %3674 = vmatpush.msra.mxu0 %v2265
  %3675 = vmatpush.msra.mxu0 %v2263
  %3676 = vmatpush.msra.mxu0 %v2261
  %3677 = vmatpush.msra.mxu0 %v2259
  %3678 = vmatpush.msra.mxu0 %v2257
  %3679 = vmatpush.msra.mxu0 %v2255
  %3680 = vmatpush.msra.mxu0 %v2253
  %3681 = vmatpush.msra.mxu0 %v2251
  %3682 = vmatpush.msra.mxu0 %v2249
  %3683 = vmatpush.msra.mxu0 %v2247
  %3684 = vmatmul.f32.gmra.mxu0 %v2326
  %v3685 = vpop.f32.mrf.mxu0
  %v3686 = vadd.f32 %v3534, %v3685
  %3687 = vmatmul.f32.gmra.mxu0 %v2329
  %v3688 = vpop.f32.mrf.mxu0
  %v3689 = vadd.f32 %v3537, %v3688
  %3690 = vmatmul.f32.gmra.mxu0 %v2332
  %v3691 = vpop.f32.mrf.mxu0
  %v3692 = vadd.f32 %v3540, %v3691
  %3693 = vmatmul.f32.gmra.mxu0 %v2335
  %v3694 = vpop.f32.mrf.mxu0
  %v3695 = vadd.f32 %v3543, %v3694
  %3696 = vmatmul.f32.gmra.mxu0 %v2338
  %v3697 = vpop.f32.mrf.mxu0
  %v3698 = vadd.f32 %v3546, %v3697
  %3699 = vmatmul.f32.gmra.mxu0 %v2341
  %v3700 = vpop.f32.mrf.mxu0
  %v3701 = vadd.f32 %v3549, %v3700
  %3702 = vmatmul.f32.gmra.mxu0 %v2344
  %v3703 = vpop.f32.mrf.mxu0
  %v3704 = vadd.f32 %v3552, %v3703
  %3705 = vdwg.mxu0
  %3706 = vmatpush.msra.mxu0 0.0
  %3707 = vmatpush.msra.mxu0 0.0
  %3708 = vmatpush.msra.mxu0 0.0
  %3709 = vmatpush.msra.mxu0 0.0
  %3710 = vmatpush.msra.mxu0 %v2292
  %3711 = vmatpush.msra.mxu0 %v2290
  %3712 = vmatpush.msra.mxu0 %v2288
  %3713 = vmatpush.msra.mxu0 %v2286
  %3714 = vmatpush.msra.mxu0 %v2284
  %3715 = vmatpush.msra.mxu0 %v2282
  %3716 = vmatpush.msra.mxu0 %v2280
  %3717 = vmatpush.msra.mxu0 %v2278
  %3718 = vmatpush.msra.mxu0 %v2276
  %3719 = vmatpush.msra.mxu0 %v2274
  %3720 = vmatpush.msra.mxu0 %v2272
  %3721 = vmatpush.msra.mxu0 %v2270
  %3722 = vmatmul.f32.gmra.mxu0 %v2326
  %v3723 = vpop.f32.mrf.mxu0
  %v3724 = vadd.f32 %v3572, %v3723
  %3725 = vmatmul.f32.gmra.mxu0 %v2329
  %v3726 = vpop.f32.mrf.mxu0
  %v3727 = vadd.f32 %v3575, %v3726
  %3728 = vmatmul.f32.gmra.mxu0 %v2332
  %v3729 = vpop.f32.mrf.mxu0
  %v3730 = vadd.f32 %v3578, %v3729
  %3731 = vmatmul.f32.gmra.mxu0 %v2335
  %v3732 = vpop.f32.mrf.mxu0
  %v3733 = vadd.f32 %v3581, %v3732
  %3734 = vmatmul.f32.gmra.mxu0 %v2338
  %v3735 = vpop.f32.mrf.mxu0
  %v3736 = vadd.f32 %v3584, %v3735
  %3737 = vmatmul.f32.gmra.mxu0 %v2341
  %v3738 = vpop.f32.mrf.mxu0
  %v3739 = vadd.f32 %v3587, %v3738
  %3740 = vmatmul.f32.gmra.mxu0 %v2344
  %v3741 = vpop.f32.mrf.mxu0
  %v3742 = vadd.f32 %v3590, %v3741
  %3743 = vdwg.mxu0
  %3744 = vmatpush.msra.mxu0 0.0
  %3745 = vmatpush.msra.mxu0 0.0
  %3746 = vmatpush.msra.mxu0 0.0
  %3747 = vmatpush.msra.mxu0 0.0
  %3748 = vmatpush.msra.mxu0 %v2293
  %3749 = vmatpush.msra.mxu0 %v2291
  %3750 = vmatpush.msra.mxu0 %v2289
  %3751 = vmatpush.msra.mxu0 %v2287
  %3752 = vmatpush.msra.mxu0 %v2285
  %3753 = vmatpush.msra.mxu0 %v2283
  %3754 = vmatpush.msra.mxu0 %v2281
  %3755 = vmatpush.msra.mxu0 %v2279
  %3756 = vmatpush.msra.mxu0 %v2277
  %3757 = vmatpush.msra.mxu0 %v2275
  %3758 = vmatpush.msra.mxu0 %v2273
  %3759 = vmatpush.msra.mxu0 %v2271
  %3760 = vmatmul.f32.gmra.mxu0 %v2326
  %v3761 = vpop.f32.mrf.mxu0
  %v3762 = vadd.f32 %v3610, %v3761
  %3763 = vmatmul.f32.gmra.mxu0 %v2329
  %v3764 = vpop.f32.mrf.mxu0
  %v3765 = vadd.f32 %v3613, %v3764
  %3766 = vmatmul.f32.gmra.mxu0 %v2332
  %v3767 = vpop.f32.mrf.mxu0
  %v3768 = vadd.f32 %v3616, %v3767
  %3769 = vmatmul.f32.gmra.mxu0 %v2335
  %v3770 = vpop.f32.mrf.mxu0
  %v3771 = vadd.f32 %v3619, %v3770
  %3772 = vmatmul.f32.gmra.mxu0 %v2338
  %v3773 = vpop.f32.mrf.mxu0
  %v3774 = vadd.f32 %v3622, %v3773
  %3775 = vmatmul.f32.gmra.mxu0 %v2341
  %v3776 = vpop.f32.mrf.mxu0
  %v3777 = vadd.f32 %v3625, %v3776
  %3778 = vmatmul.f32.gmra.mxu0 %v2344
  %v3779 = vpop.f32.mrf.mxu0
  %v3780 = vadd.f32 %v3628, %v3779
  %3781 = vdwg.mxu0
  %3782 = vmatpush.msra.mxu0 0.0
  %3783 = vmatpush.msra.mxu0 0.0
  %3784 = vmatpush.msra.mxu0 0.0
  %3785 = vmatpush.msra.mxu0 0.0
  %3786 = vmatpush.msra.mxu0 %v2724
  %3787 = vmatpush.msra.mxu0 %v2722
  %3788 = vmatpush.msra.mxu0 %v2720
  %3789 = vmatpush.msra.mxu0 %v2718
  %3790 = vmatpush.msra.mxu0 %v2716
  %3791 = vmatpush.msra.mxu0 %v2714
  %3792 = vmatpush.msra.mxu0 %v2712
  %3793 = vmatpush.msra.mxu0 %v2710
  %3794 = vmatpush.msra.mxu0 %v2708
  %3795 = vmatpush.msra.mxu0 %v2706
  %3796 = vmatpush.msra.mxu0 %v2704
  %3797 = vmatpush.msra.mxu0 %v2702
  %3798 = vmatmul.f32.gmra.mxu0 %v2983
  %v3799 = vpop.f32.mrf.mxu0
  %v3800 = vadd.f32 0.0, %v3799
  %3801 = vmatmul.f32.gmra.mxu0 %v2986
  %v3802 = vpop.f32.mrf.mxu0
  %v3803 = vadd.f32 0.0, %v3802
  %3804 = vmatmul.f32.gmra.mxu0 %v2989
  %v3805 = vpop.f32.mrf.mxu0
  %v3806 = vadd.f32 0.0, %v3805
  %3807 = vmatmul.f32.gmra.mxu0 %v2992
  %v3808 = vpop.f32.mrf.mxu0
  %v3809 = vadd.f32 0.0, %v3808
  %3810 = vmatmul.f32.gmra.mxu0 %v2995
  %v3811 = vpop.f32.mrf.mxu0
  %v3812 = vadd.f32 0.0, %v3811
  %3813 = vmatmul.f32.gmra.mxu0 %v2998
  %v3814 = vpop.f32.mrf.mxu0
  %v3815 = vadd.f32 0.0, %v3814
  %3816 = vmatmul.f32.gmra.mxu0 %v3001
  %v3817 = vpop.f32.mrf.mxu0
  %v3818 = vadd.f32 0.0, %v3817
  %3819 = vdwg.mxu0
  %3820 = vmatpush.msra.mxu0 0.0
  %3821 = vmatpush.msra.mxu0 0.0
  %3822 = vmatpush.msra.mxu0 0.0
  %3823 = vmatpush.msra.mxu0 0.0
  %3824 = vmatpush.msra.mxu0 %v2725
  %3825 = vmatpush.msra.mxu0 %v2723
  %3826 = vmatpush.msra.mxu0 %v2721
  %3827 = vmatpush.msra.mxu0 %v2719
  %3828 = vmatpush.msra.mxu0 %v2717
  %3829 = vmatpush.msra.mxu0 %v2715
  %3830 = vmatpush.msra.mxu0 %v2713
  %3831 = vmatpush.msra.mxu0 %v2711
  %3832 = vmatpush.msra.mxu0 %v2709
  %3833 = vmatpush.msra.mxu0 %v2707
  %3834 = vmatpush.msra.mxu0 %v2705
  %3835 = vmatpush.msra.mxu0 %v2703
  %3836 = vmatmul.f32.gmra.mxu0 %v2983
  %v3837 = vpop.f32.mrf.mxu0
  %v3838 = vadd.f32 0.0, %v3837
  %3839 = vmatmul.f32.gmra.mxu0 %v2986
  %v3840 = vpop.f32.mrf.mxu0
  %v3841 = vadd.f32 0.0, %v3840
  %3842 = vmatmul.f32.gmra.mxu0 %v2989
  %v3843 = vpop.f32.mrf.mxu0
  %v3844 = vadd.f32 0.0, %v3843
  %3845 = vmatmul.f32.gmra.mxu0 %v2992
  %v3846 = vpop.f32.mrf.mxu0
  %v3847 = vadd.f32 0.0, %v3846
  %3848 = vmatmul.f32.gmra.mxu0 %v2995
  %v3849 = vpop.f32.mrf.mxu0
  %v3850 = vadd.f32 0.0, %v3849
  %3851 = vmatmul.f32.gmra.mxu0 %v2998
  %v3852 = vpop.f32.mrf.mxu0
  %v3853 = vadd.f32 0.0, %v3852
  %3854 = vmatmul.f32.gmra.mxu0 %v3001
  %v3855 = vpop.f32.mrf.mxu0
  %v3856 = vadd.f32 0.0, %v3855
  %3857 = vdwg.mxu0
  %3858 = vmatpush.msra.mxu0 0.0
  %3859 = vmatpush.msra.mxu0 0.0
  %3860 = vmatpush.msra.mxu0 0.0
  %3861 = vmatpush.msra.mxu0 0.0
  %3862 = vmatpush.msra.mxu0 %v2845
  %3863 = vmatpush.msra.mxu0 %v2843
  %3864 = vmatpush.msra.mxu0 %v2841
  %3865 = vmatpush.msra.mxu0 %v2839
  %3866 = vmatpush.msra.mxu0 %v2837
  %3867 = vmatpush.msra.mxu0 %v2835
  %3868 = vmatpush.msra.mxu0 %v2833
  %3869 = vmatpush.msra.mxu0 %v2831
  %3870 = vmatpush.msra.mxu0 %v2829
  %3871 = vmatpush.msra.mxu0 %v2827
  %3872 = vmatpush.msra.mxu0 %v2825
  %3873 = vmatpush.msra.mxu0 %v2823
  %3874 = vmatmul.f32.gmra.mxu0 %v2983
  %v3875 = vpop.f32.mrf.mxu0
  %v3876 = vadd.f32 0.0, %v3875
  %3877 = vmatmul.f32.gmra.mxu0 %v2986
  %v3878 = vpop.f32.mrf.mxu0
  %v3879 = vadd.f32 0.0, %v3878
  %3880 = vmatmul.f32.gmra.mxu0 %v2989
  %v3881 = vpop.f32.mrf.mxu0
  %v3882 = vadd.f32 0.0, %v3881
  %3883 = vmatmul.f32.gmra.mxu0 %v2992
  %v3884 = vpop.f32.mrf.mxu0
  %v3885 = vadd.f32 0.0, %v3884
  %3886 = vmatmul.f32.gmra.mxu0 %v2995
  %v3887 = vpop.f32.mrf.mxu0
  %v3888 = vadd.f32 0.0, %v3887
  %3889 = vmatmul.f32.gmra.mxu0 %v2998
  %v3890 = vpop.f32.mrf.mxu0
  %v3891 = vadd.f32 0.0, %v3890
  %3892 = vmatmul.f32.gmra.mxu0 %v3001
  %v3893 = vpop.f32.mrf.mxu0
  %v3894 = vadd.f32 0.0, %v3893
  %3895 = vdwg.mxu0
  %3896 = vmatpush.msra.mxu0 0.0
  %3897 = vmatpush.msra.mxu0 0.0
  %3898 = vmatpush.msra.mxu0 0.0
  %3899 = vmatpush.msra.mxu0 0.0
  %3900 = vmatpush.msra.mxu0 %v2846
  %3901 = vmatpush.msra.mxu0 %v2844
  %3902 = vmatpush.msra.mxu0 %v2842
  %3903 = vmatpush.msra.mxu0 %v2840
  %3904 = vmatpush.msra.mxu0 %v2838
  %3905 = vmatpush.msra.mxu0 %v2836
  %3906 = vmatpush.msra.mxu0 %v2834
  %3907 = vmatpush.msra.mxu0 %v2832
  %3908 = vmatpush.msra.mxu0 %v2830
  %3909 = vmatpush.msra.mxu0 %v2828
  %3910 = vmatpush.msra.mxu0 %v2826
  %3911 = vmatpush.msra.mxu0 %v2824
  %3912 = vmatmul.f32.gmra.mxu0 %v2983
  %v3913 = vpop.f32.mrf.mxu0
  %v3914 = vadd.f32 0.0, %v3913
  %3915 = vmatmul.f32.gmra.mxu0 %v2986
  %v3916 = vpop.f32.mrf.mxu0
  %v3917 = vadd.f32 0.0, %v3916
  %3918 = vmatmul.f32.gmra.mxu0 %v2989
  %v3919 = vpop.f32.mrf.mxu0
  %v3920 = vadd.f32 0.0, %v3919
  %3921 = vmatmul.f32.gmra.mxu0 %v2992
  %v3922 = vpop.f32.mrf.mxu0
  %v3923 = vadd.f32 0.0, %v3922
  %3924 = vmatmul.f32.gmra.mxu0 %v2995
  %v3925 = vpop.f32.mrf.mxu0
  %v3926 = vadd.f32 0.0, %v3925
  %3927 = vmatmul.f32.gmra.mxu0 %v2998
  %v3928 = vpop.f32.mrf.mxu0
  %v3929 = vadd.f32 0.0, %v3928
  %3930 = vmatmul.f32.gmra.mxu0 %v3001
  %v3931 = vpop.f32.mrf.mxu0
  %v3932 = vadd.f32 0.0, %v3931
  %3933 = vdwg.mxu0
  %v3934 = vadd.f32 %v3648, %v3800
  %v3935 = vadd.f32 %v3686, %v3838
  %v3936 = vadd.f32 %v3651, %v3803
  %v3937 = vadd.f32 %v3689, %v3841
  %v3938 = vadd.f32 %v3654, %v3806
  %v3939 = vadd.f32 %v3692, %v3844
  %v3940 = vadd.f32 %v3657, %v3809
  %v3941 = vadd.f32 %v3695, %v3847
  %v3942 = vadd.f32 %v3660, %v3812
  %v3943 = vadd.f32 %v3698, %v3850
  %v3944 = vadd.f32 %v3663, %v3815
  %v3945 = vadd.f32 %v3701, %v3853
  %v3946 = vadd.f32 %v3666, %v3818
  %v3947 = vadd.f32 %v3704, %v3856
  %v3948 = vadd.f32 %v3724, %v3876
  %v3949 = vadd.f32 %v3762, %v3914
  %v3950 = vadd.f32 %v3727, %v3879
  %v3951 = vadd.f32 %v3765, %v3917
  %v3952 = vadd.f32 %v3730, %v3882
  %v3953 = vadd.f32 %v3768, %v3920
  %v3954 = vadd.f32 %v3733, %v3885
  %v3955 = vadd.f32 %v3771, %v3923
  %v3956 = vadd.f32 %v3736, %v3888
  %v3957 = vadd.f32 %v3774, %v3926
  %v3958 = vadd.f32 %v3739, %v3891
  %v3959 = vadd.f32 %v3777, %v3929
  %v3960 = vadd.f32 %v3742, %v3894
  %v3961 = vadd.f32 %v3780, %v3932
  %3962 = vmatpush.msra.mxu0 0.0
  %3963 = vmatpush.msra.mxu0 0.0
  %3964 = vmatpush.msra.mxu0 0.0
  %3965 = vmatpush.msra.mxu0 0.0
  %3966 = vmatpush.msra.mxu0 %v2980
  %3967 = vmatpush.msra.mxu0 %v2978
  %3968 = vmatpush.msra.mxu0 %v2976
  %3969 = vmatpush.msra.mxu0 %v2974
  %3970 = vmatpush.msra.mxu0 %v2972
  %3971 = vmatpush.msra.mxu0 %v2970
  %3972 = vmatpush.msra.mxu0 %v2968
  %3973 = vmatpush.msra.mxu0 %v2966
  %3974 = vmatpush.msra.mxu0 %v2964
  %3975 = vmatpush.msra.mxu0 %v2962
  %3976 = vmatpush.msra.mxu0 %v2960
  %3977 = vmatpush.msra.mxu0 %v2958
  %3978 = vmatmul.f32.gmra.mxu0 %v3240
  %v3979 = vpop.f32.mrf.mxu0
  %v3980 = vadd.f32 0.0, %v3979
  %3981 = vmatmul.f32.gmra.mxu0 %v3243
  %v3982 = vpop.f32.mrf.mxu0
  %v3983 = vadd.f32 0.0, %v3982
  %3984 = vmatmul.f32.gmra.mxu0 %v3246
  %v3985 = vpop.f32.mrf.mxu0
  %v3986 = vadd.f32 0.0, %v3985
  %3987 = vmatmul.f32.gmra.mxu0 %v3249
  %v3988 = vpop.f32.mrf.mxu0
  %v3989 = vadd.f32 0.0, %v3988
  %3990 = vmatmul.f32.gmra.mxu0 %v3252
  %v3991 = vpop.f32.mrf.mxu0
  %v3992 = vadd.f32 0.0, %v3991
  %3993 = vmatmul.f32.gmra.mxu0 %v3255
  %v3994 = vpop.f32.mrf.mxu0
  %v3995 = vadd.f32 0.0, %v3994
  %3996 = vmatmul.f32.gmra.mxu0 %v3258
  %v3997 = vpop.f32.mrf.mxu0
  %v3998 = vadd.f32 0.0, %v3997
  %3999 = vdwg.mxu0
  %4000 = vmatpush.msra.mxu0 0.0
  %4001 = vmatpush.msra.mxu0 0.0
  %4002 = vmatpush.msra.mxu0 0.0
  %4003 = vmatpush.msra.mxu0 0.0
  %4004 = vmatpush.msra.mxu0 %v2981
  %4005 = vmatpush.msra.mxu0 %v2979
  %4006 = vmatpush.msra.mxu0 %v2977
  %4007 = vmatpush.msra.mxu0 %v2975
  %4008 = vmatpush.msra.mxu0 %v2973
  %4009 = vmatpush.msra.mxu0 %v2971
  %4010 = vmatpush.msra.mxu0 %v2969
  %4011 = vmatpush.msra.mxu0 %v2967
  %4012 = vmatpush.msra.mxu0 %v2965
  %4013 = vmatpush.msra.mxu0 %v2963
  %4014 = vmatpush.msra.mxu0 %v2961
  %4015 = vmatpush.msra.mxu0 %v2959
  %4016 = vmatmul.f32.gmra.mxu0 %v3240
  %v4017 = vpop.f32.mrf.mxu0
  %v4018 = vadd.f32 0.0, %v4017
  %4019 = vmatmul.f32.gmra.mxu0 %v3243
  %v4020 = vpop.f32.mrf.mxu0
  %v4021 = vadd.f32 0.0, %v4020
  %4022 = vmatmul.f32.gmra.mxu0 %v3246
  %v4023 = vpop.f32.mrf.mxu0
  %v4024 = vadd.f32 0.0, %v4023
  %4025 = vmatmul.f32.gmra.mxu0 %v3249
  %v4026 = vpop.f32.mrf.mxu0
  %v4027 = vadd.f32 0.0, %v4026
  %4028 = vmatmul.f32.gmra.mxu0 %v3252
  %v4029 = vpop.f32.mrf.mxu0
  %v4030 = vadd.f32 0.0, %v4029
  %4031 = vmatmul.f32.gmra.mxu0 %v3255
  %v4032 = vpop.f32.mrf.mxu0
  %v4033 = vadd.f32 0.0, %v4032
  %4034 = vmatmul.f32.gmra.mxu0 %v3258
  %v4035 = vpop.f32.mrf.mxu0
  %v4036 = vadd.f32 0.0, %v4035
  %4037 = vdwg.mxu0
  %4038 = vmatpush.msra.mxu0 0.0
  %4039 = vmatpush.msra.mxu0 0.0
  %4040 = vmatpush.msra.mxu0 0.0
  %4041 = vmatpush.msra.mxu0 0.0
  %4042 = vmatpush.msra.mxu0 %v3101
  %4043 = vmatpush.msra.mxu0 %v3099
  %4044 = vmatpush.msra.mxu0 %v3097
  %4045 = vmatpush.msra.mxu0 %v3095
  %4046 = vmatpush.msra.mxu0 %v3093
  %4047 = vmatpush.msra.mxu0 %v3091
  %4048 = vmatpush.msra.mxu0 %v3089
  %4049 = vmatpush.msra.mxu0 %v3087
  %4050 = vmatpush.msra.mxu0 %v3085
  %4051 = vmatpush.msra.mxu0 %v3083
  %4052 = vmatpush.msra.mxu0 %v3081
  %4053 = vmatpush.msra.mxu0 %v3079
  %4054 = vmatmul.f32.gmra.mxu0 %v3240
  %v4055 = vpop.f32.mrf.mxu0
  %v4056 = vadd.f32 0.0, %v4055
  %4057 = vmatmul.f32.gmra.mxu0 %v3243
  %v4058 = vpop.f32.mrf.mxu0
  %v4059 = vadd.f32 0.0, %v4058
  %4060 = vmatmul.f32.gmra.mxu0 %v3246
  %v4061 = vpop.f32.mrf.mxu0
  %v4062 = vadd.f32 0.0, %v4061
  %4063 = vmatmul.f32.gmra.mxu0 %v3249
  %v4064 = vpop.f32.mrf.mxu0
  %v4065 = vadd.f32 0.0, %v4064
  %4066 = vmatmul.f32.gmra.mxu0 %v3252
  %v4067 = vpop.f32.mrf.mxu0
  %v4068 = vadd.f32 0.0, %v4067
  %4069 = vmatmul.f32.gmra.mxu0 %v3255
  %v4070 = vpop.f32.mrf.mxu0
  %v4071 = vadd.f32 0.0, %v4070
  %4072 = vmatmul.f32.gmra.mxu0 %v3258
  %v4073 = vpop.f32.mrf.mxu0
  %v4074 = vadd.f32 0.0, %v4073
  %4075 = vdwg.mxu0
  %4076 = vmatpush.msra.mxu0 0.0
  %4077 = vmatpush.msra.mxu0 0.0
  %4078 = vmatpush.msra.mxu0 0.0
  %4079 = vmatpush.msra.mxu0 0.0
  %4080 = vmatpush.msra.mxu0 %v3102
  %4081 = vmatpush.msra.mxu0 %v3100
  %4082 = vmatpush.msra.mxu0 %v3098
  %4083 = vmatpush.msra.mxu0 %v3096
  %4084 = vmatpush.msra.mxu0 %v3094
  %4085 = vmatpush.msra.mxu0 %v3092
  %4086 = vmatpush.msra.mxu0 %v3090
  %4087 = vmatpush.msra.mxu0 %v3088
  %4088 = vmatpush.msra.mxu0 %v3086
  %4089 = vmatpush.msra.mxu0 %v3084
  %4090 = vmatpush.msra.mxu0 %v3082
  %4091 = vmatpush.msra.mxu0 %v3080
  %4092 = vmatmul.f32.gmra.mxu0 %v3240
  %v4093 = vpop.f32.mrf.mxu0
  %v4094 = vadd.f32 0.0, %v4093
  %4095 = vmatmul.f32.gmra.mxu0 %v3243
  %v4096 = vpop.f32.mrf.mxu0
  %v4097 = vadd.f32 0.0, %v4096
  %4098 = vmatmul.f32.gmra.mxu0 %v3246
  %v4099 = vpop.f32.mrf.mxu0
  %v4100 = vadd.f32 0.0, %v4099
  %4101 = vmatmul.f32.gmra.mxu0 %v3249
  %v4102 = vpop.f32.mrf.mxu0
  %v4103 = vadd.f32 0.0, %v4102
  %4104 = vmatmul.f32.gmra.mxu0 %v3252
  %v4105 = vpop.f32.mrf.mxu0
  %v4106 = vadd.f32 0.0, %v4105
  %4107 = vmatmul.f32.gmra.mxu0 %v3255
  %v4108 = vpop.f32.mrf.mxu0
  %v4109 = vadd.f32 0.0, %v4108
  %4110 = vmatmul.f32.gmra.mxu0 %v3258
  %v4111 = vpop.f32.mrf.mxu0
  %v4112 = vadd.f32 0.0, %v4111
  %4113 = vdwg.mxu0
  %v4114 = vadd.f32 %v3934, %v3980
  %v4115 = vadd.f32 %v3935, %v4018
  %v4116 = vadd.f32 %v3936, %v3983
  %v4117 = vadd.f32 %v3937, %v4021
  %v4118 = vadd.f32 %v3938, %v3986
  %v4119 = vadd.f32 %v3939, %v4024
  %v4120 = vadd.f32 %v3940, %v3989
  %v4121 = vadd.f32 %v3941, %v4027
  %v4122 = vadd.f32 %v3942, %v3992
  %v4123 = vadd.f32 %v3943, %v4030
  %v4124 = vadd.f32 %v3944, %v3995
  %v4125 = vadd.f32 %v3945, %v4033
  %v4126 = vadd.f32 %v3946, %v3998
  %v4127 = vadd.f32 %v3947, %v4036
  %v4128 = vadd.f32 %v3948, %v4056
  %v4129 = vadd.f32 %v3949, %v4094
  %v4130 = vadd.f32 %v3950, %v4059
  %v4131 = vadd.f32 %v3951, %v4097
  %v4132 = vadd.f32 %v3952, %v4062
  %v4133 = vadd.f32 %v3953, %v4100
  %v4134 = vadd.f32 %v3954, %v4065
  %v4135 = vadd.f32 %v3955, %v4103
  %v4136 = vadd.f32 %v3956, %v4068
  %v4137 = vadd.f32 %v3957, %v4106
  %v4138 = vadd.f32 %v3958, %v4071
  %v4139 = vadd.f32 %v3959, %v4109
  %v4140 = vadd.f32 %v3960, %v4074
  %v4141 = vadd.f32 %v3961, %v4112
  %s4142 = scalar_lea.vmem %s0, 392
  %v4143 = vld [vmem:[%s4142] sm:$0xff]
  %v4144 = vld [vmem:[%s4142 + $0x8] sm:$0xff]
  %v4145 = vld [vmem:[%s4142 + $0x10] sm:$0xff]
  %v4146 = vld [vmem:[%s4142 + $0x18] sm:$0xff]
  %v4147 = vld [vmem:[%s4142 + $0x20] sm:$0xff]
  %v4148 = vld [vmem:[%s4142 + $0x28] sm:$0xff]
  %v4149 = vld [vmem:[%s4142 + $0x30] sm:$0xff]
  %v4151 = vsel %vm127, %v4143, 0
  %v4154 = vsel %vm127, %v4144, 0
  %v4157 = vsel %vm127, %v4145, 0
  %v4160 = vsel %vm127, %v4146, 0
  %v4163 = vsel %vm127, %v4147, 0
  %v4166 = vsel %vm127, %v4148, 0
  %v4169 = vsel %vm127, %v4149, 0
  %4171 = vmatpush.msra.mxu0 0.0
  %4172 = vmatpush.msra.mxu0 0.0
  %4173 = vmatpush.msra.mxu0 0.0
  %4174 = vmatpush.msra.mxu0 0.0
  %4175 = vmatpush.msra.mxu0 %v3237
  %4176 = vmatpush.msra.mxu0 %v3235
  %4177 = vmatpush.msra.mxu0 %v3233
  %4178 = vmatpush.msra.mxu0 %v3231
  %4179 = vmatpush.msra.mxu0 %v3229
  %4180 = vmatpush.msra.mxu0 %v3227
  %4181 = vmatpush.msra.mxu0 %v3225
  %4182 = vmatpush.msra.mxu0 %v3223
  %4183 = vmatpush.msra.mxu0 %v3221
  %4184 = vmatpush.msra.mxu0 %v3219
  %4185 = vmatpush.msra.mxu0 %v3217
  %4186 = vmatpush.msra.mxu0 %v3215
  %4187 = vmatmul.f32.gmra.mxu0 %v4151
  %v4188 = vpop.f32.mrf.mxu0
  %v4189 = vadd.f32 0.0, %v4188
  %4190 = vmatmul.f32.gmra.mxu0 %v4154
  %v4191 = vpop.f32.mrf.mxu0
  %v4192 = vadd.f32 0.0, %v4191
  %4193 = vmatmul.f32.gmra.mxu0 %v4157
  %v4194 = vpop.f32.mrf.mxu0
  %v4195 = vadd.f32 0.0, %v4194
  %4196 = vmatmul.f32.gmra.mxu0 %v4160
  %v4197 = vpop.f32.mrf.mxu0
  %v4198 = vadd.f32 0.0, %v4197
  %4199 = vmatmul.f32.gmra.mxu0 %v4163
  %v4200 = vpop.f32.mrf.mxu0
  %v4201 = vadd.f32 0.0, %v4200
  %4202 = vmatmul.f32.gmra.mxu0 %v4166
  %v4203 = vpop.f32.mrf.mxu0
  %v4204 = vadd.f32 0.0, %v4203
  %4205 = vmatmul.f32.gmra.mxu0 %v4169
  %v4206 = vpop.f32.mrf.mxu0
  %v4207 = vadd.f32 0.0, %v4206
  %4208 = vdwg.mxu0
  %4209 = vmatpush.msra.mxu0 0.0
  %4210 = vmatpush.msra.mxu0 0.0
  %4211 = vmatpush.msra.mxu0 0.0
  %4212 = vmatpush.msra.mxu0 0.0
  %4213 = vmatpush.msra.mxu0 %v3238
  %4214 = vmatpush.msra.mxu0 %v3236
  %4215 = vmatpush.msra.mxu0 %v3234
  %4216 = vmatpush.msra.mxu0 %v3232
  %4217 = vmatpush.msra.mxu0 %v3230
  %4218 = vmatpush.msra.mxu0 %v3228
  %4219 = vmatpush.msra.mxu0 %v3226
  %4220 = vmatpush.msra.mxu0 %v3224
  %4221 = vmatpush.msra.mxu0 %v3222
  %4222 = vmatpush.msra.mxu0 %v3220
  %4223 = vmatpush.msra.mxu0 %v3218
  %4224 = vmatpush.msra.mxu0 %v3216
  %4225 = vmatmul.f32.gmra.mxu0 %v4151
  %v4226 = vpop.f32.mrf.mxu0
  %v4227 = vadd.f32 0.0, %v4226
  %4228 = vmatmul.f32.gmra.mxu0 %v4154
  %v4229 = vpop.f32.mrf.mxu0
  %v4230 = vadd.f32 0.0, %v4229
  %4231 = vmatmul.f32.gmra.mxu0 %v4157
  %v4232 = vpop.f32.mrf.mxu0
  %v4233 = vadd.f32 0.0, %v4232
  %4234 = vmatmul.f32.gmra.mxu0 %v4160
  %v4235 = vpop.f32.mrf.mxu0
  %v4236 = vadd.f32 0.0, %v4235
  %4237 = vmatmul.f32.gmra.mxu0 %v4163
  %v4238 = vpop.f32.mrf.mxu0
  %v4239 = vadd.f32 0.0, %v4238
  %4240 = vmatmul.f32.gmra.mxu0 %v4166
  %v4241 = vpop.f32.mrf.mxu0
  %v4242 = vadd.f32 0.0, %v4241
  %4243 = vmatmul.f32.gmra.mxu0 %v4169
  %v4244 = vpop.f32.mrf.mxu0
  %v4245 = vadd.f32 0.0, %v4244
  %4246 = vdwg.mxu0
  %4247 = vmatpush.msra.mxu0 0.0
  %4248 = vmatpush.msra.mxu0 0.0
  %4249 = vmatpush.msra.mxu0 0.0
  %4250 = vmatpush.msra.mxu0 0.0
  %4251 = vmatpush.msra.mxu0 %v3358
  %4252 = vmatpush.msra.mxu0 %v3356
  %4253 = vmatpush.msra.mxu0 %v3354
  %4254 = vmatpush.msra.mxu0 %v3352
  %4255 = vmatpush.msra.mxu0 %v3350
  %4256 = vmatpush.msra.mxu0 %v3348
  %4257 = vmatpush.msra.mxu0 %v3346
  %4258 = vmatpush.msra.mxu0 %v3344
  %4259 = vmatpush.msra.mxu0 %v3342
  %4260 = vmatpush.msra.mxu0 %v3340
  %4261 = vmatpush.msra.mxu0 %v3338
  %4262 = vmatpush.msra.mxu0 %v3336
  %4263 = vmatmul.f32.gmra.mxu0 %v4151
  %v4264 = vpop.f32.mrf.mxu0
  %v4265 = vadd.f32 0.0, %v4264
  %4266 = vmatmul.f32.gmra.mxu0 %v4154
  %v4267 = vpop.f32.mrf.mxu0
  %v4268 = vadd.f32 0.0, %v4267
  %4269 = vmatmul.f32.gmra.mxu0 %v4157
  %v4270 = vpop.f32.mrf.mxu0
  %v4271 = vadd.f32 0.0, %v4270
  %4272 = vmatmul.f32.gmra.mxu0 %v4160
  %v4273 = vpop.f32.mrf.mxu0
  %v4274 = vadd.f32 0.0, %v4273
  %4275 = vmatmul.f32.gmra.mxu0 %v4163
  %v4276 = vpop.f32.mrf.mxu0
  %v4277 = vadd.f32 0.0, %v4276
  %4278 = vmatmul.f32.gmra.mxu0 %v4166
  %v4279 = vpop.f32.mrf.mxu0
  %v4280 = vadd.f32 0.0, %v4279
  %4281 = vmatmul.f32.gmra.mxu0 %v4169
  %v4282 = vpop.f32.mrf.mxu0
  %v4283 = vadd.f32 0.0, %v4282
  %4284 = vdwg.mxu0
  %4285 = vmatpush.msra.mxu0 0.0
  %4286 = vmatpush.msra.mxu0 0.0
  %4287 = vmatpush.msra.mxu0 0.0
  %4288 = vmatpush.msra.mxu0 0.0
  %4289 = vmatpush.msra.mxu0 %v3359
  %4290 = vmatpush.msra.mxu0 %v3357
  %4291 = vmatpush.msra.mxu0 %v3355
  %4292 = vmatpush.msra.mxu0 %v3353
  %4293 = vmatpush.msra.mxu0 %v3351
  %4294 = vmatpush.msra.mxu0 %v3349
  %4295 = vmatpush.msra.mxu0 %v3347
  %4296 = vmatpush.msra.mxu0 %v3345
  %4297 = vmatpush.msra.mxu0 %v3343
  %4298 = vmatpush.msra.mxu0 %v3341
  %4299 = vmatpush.msra.mxu0 %v3339
  %4300 = vmatpush.msra.mxu0 %v3337
  %4301 = vmatmul.f32.gmra.mxu0 %v4151
  %v4302 = vpop.f32.mrf.mxu0
  %v4303 = vadd.f32 0.0, %v4302
  %4304 = vmatmul.f32.gmra.mxu0 %v4154
  %v4305 = vpop.f32.mrf.mxu0
  %v4306 = vadd.f32 0.0, %v4305
  %4307 = vmatmul.f32.gmra.mxu0 %v4157
  %v4308 = vpop.f32.mrf.mxu0
  %v4309 = vadd.f32 0.0, %v4308
  %4310 = vmatmul.f32.gmra.mxu0 %v4160
  %v4311 = vpop.f32.mrf.mxu0
  %v4312 = vadd.f32 0.0, %v4311
  %4313 = vmatmul.f32.gmra.mxu0 %v4163
  %v4314 = vpop.f32.mrf.mxu0
  %v4315 = vadd.f32 0.0, %v4314
  %4316 = vmatmul.f32.gmra.mxu0 %v4166
  %v4317 = vpop.f32.mrf.mxu0
  %v4318 = vadd.f32 0.0, %v4317
  %4319 = vmatmul.f32.gmra.mxu0 %v4169
  %v4320 = vpop.f32.mrf.mxu0
  %v4321 = vadd.f32 0.0, %v4320
  %4322 = vdwg.mxu0
  %v4323 = vadd.f32 %v4114, %v4189
  %v4324 = vadd.f32 %v4115, %v4227
  %v4325 = vadd.f32 %v4116, %v4192
  %v4326 = vadd.f32 %v4117, %v4230
  %v4327 = vadd.f32 %v4118, %v4195
  %v4328 = vadd.f32 %v4119, %v4233
  %v4329 = vadd.f32 %v4120, %v4198
  %v4330 = vadd.f32 %v4121, %v4236
  %v4331 = vadd.f32 %v4122, %v4201
  %v4332 = vadd.f32 %v4123, %v4239
  %v4333 = vadd.f32 %v4124, %v4204
  %v4334 = vadd.f32 %v4125, %v4242
  %v4335 = vadd.f32 %v4126, %v4207
  %v4336 = vadd.f32 %v4127, %v4245
  %v4337 = vadd.f32 %v4128, %v4265
  %v4338 = vadd.f32 %v4129, %v4303
  %v4339 = vadd.f32 %v4130, %v4268
  %v4340 = vadd.f32 %v4131, %v4306
  %v4341 = vadd.f32 %v4132, %v4271
  %v4342 = vadd.f32 %v4133, %v4309
  %v4343 = vadd.f32 %v4134, %v4274
  %v4344 = vadd.f32 %v4135, %v4312
  %v4345 = vadd.f32 %v4136, %v4277
  %v4346 = vadd.f32 %v4137, %v4315
  %v4347 = vadd.f32 %v4138, %v4280
  %v4348 = vadd.f32 %v4139, %v4318
  %v4349 = vadd.f32 %v4140, %v4283
  %v4350 = vadd.f32 %v4141, %v4321
  %v4351 = vmax.f32 %v4323, %v4337
  %v4352 = vmax.f32 %v4324, %v4338
  %v4353 = vmax.f32 %v4325, %v4339
  %v4354 = vmax.f32 %v4326, %v4340
  %v4355 = vmax.f32 %v4327, %v4341
  %v4356 = vmax.f32 %v4328, %v4342
  %v4357 = vmax.f32 %v4329, %v4343
  %v4358 = vmax.f32 %v4330, %v4344
  %v4359 = vmax.f32 %v4331, %v4345
  %v4360 = vmax.f32 %v4332, %v4346
  %v4361 = vmax.f32 %v4333, %v4347
  %v4362 = vmax.f32 %v4334, %v4348
  %v4363 = vmax.f32 %v4335, %v4349
  %v4364 = vmax.f32 %v4336, %v4350
  %v4365 = vmax.f32 %v3464, %v4351
  %v4366 = vmax.f32 %v3465, %v4352
  %v4367 = vmax.f32 %v3466, %v4353
  %v4368 = vmax.f32 %v3467, %v4354
  %v4369 = vmax.f32 %v3468, %v4355
  %v4370 = vmax.f32 %v3469, %v4356
  %v4371 = vmax.f32 %v3470, %v4357
  %v4372 = vmax.f32 %v3471, %v4358
  %v4373 = vmax.f32 %v3472, %v4359
  %v4374 = vmax.f32 %v3473, %v4360
  %v4375 = vmax.f32 %v3474, %v4361
  %v4376 = vmax.f32 %v3475, %v4362
  %v4377 = vmax.f32 %v3476, %v4363
  %v4378 = vmax.f32 %v3477, %v4364
  %v4379 = vld [vmem:[%s2] sm:$0x3]
  %v4381 = vperm.slane %v4379, 0
  %v4382 = vperm.slane %v4379, 1
  %v4385 = vadd.f32 %v4365, %v4381
  %v4386 = vadd.f32 %v4366, %v4382
  %v4387 = vadd.f32 %v4367, %v4381
  %v4388 = vadd.f32 %v4368, %v4382
  %v4389 = vadd.f32 %v4369, %v4381
  %v4390 = vadd.f32 %v4370, %v4382
  %v4391 = vadd.f32 %v4371, %v4381
  %v4392 = vadd.f32 %v4372, %v4382
  %v4393 = vadd.f32 %v4373, %v4381
  %v4394 = vadd.f32 %v4374, %v4382
  %v4395 = vadd.f32 %v4375, %v4381
  %v4396 = vadd.f32 %v4376, %v4382
  %v4397 = vadd.f32 %v4377, %v4381
  %v4398 = vadd.f32 %v4378, %v4382
  %v4399 = vmax.f32 %v4385, 0.0
  %v4400 = vmax.f32 %v4386, 0.0
  %v4401 = vmax.f32 %v4387, 0.0
  %v4402 = vmax.f32 %v4388, 0.0
  %v4403 = vmax.f32 %v4389, 0.0
  %v4404 = vmax.f32 %v4390, 0.0
  %v4405 = vmax.f32 %v4391, 0.0
  %v4406 = vmax.f32 %v4392, 0.0
  %v4407 = vmax.f32 %v4393, 0.0
  %v4408 = vmax.f32 %v4394, 0.0
  %v4409 = vmax.f32 %v4395, 0.0
  %v4410 = vmax.f32 %v4396, 0.0
  %v4411 = vmax.f32 %v4397, 0.0
  %v4412 = vmax.f32 %v4398, 0.0
  %4413 = vst [vmem:[#allocation3] sm:$0xff] %v4399
  %4414 = vst.msk [vmem:[#allocation3 + $0x8] sm:$0xff] %vm127, %v4400
  %4415 = vst [vmem:[#allocation3 + $0x10] sm:$0xff] %v4401
  %4416 = vst.msk [vmem:[#allocation3 + $0x18] sm:$0xff] %vm127, %v4402
  %4417 = vst [vmem:[#allocation3 + $0x20] sm:$0xff] %v4403
  %4418 = vst.msk [vmem:[#allocation3 + $0x28] sm:$0xff] %vm127, %v4404
  %4419 = vst [vmem:[#allocation3 + $0x30] sm:$0xff] %v4405
  %4420 = vst.msk [vmem:[#allocation3 + $0x38] sm:$0xff] %vm127, %v4406
  %4421 = vst [vmem:[#allocation3 + $0x40] sm:$0xff] %v4407
  %4422 = vst.msk [vmem:[#allocation3 + $0x48] sm:$0xff] %vm127, %v4408
  %4423 = vst [vmem:[#allocation3 + $0x50] sm:$0xff] %v4409
  %4424 = vst.msk [vmem:[#allocation3 + $0x58] sm:$0xff] %vm127, %v4410
  %4425 = vst [vmem:[#allocation3 + $0x60] sm:$0xff] %v4411
  %4426 = vst.msk [vmem:[#allocation3 + $0x68] sm:$0xff] %vm127, %v4412
  %v4427 = vld [vmem:[#allocation2] sm:$0xff]
  %v4428 = vld [vmem:[#allocation2 + $0x8] sm:$0xff]
  %v4429 = vld [vmem:[#allocation2 + $0x10] sm:$0xff]
  %v4430 = vld [vmem:[#allocation2 + $0x18] sm:$0xff]
  %v4431 = vld [vmem:[#allocation2 + $0x20] sm:$0xff]
  %v4432 = vld [vmem:[#allocation2 + $0x28] sm:$0xff]
  %v4433 = vld [vmem:[#allocation2 + $0x30] sm:$0xff]
  %v4434 = vld [vmem:[#allocation2 + $0x38] sm:$0xff]
  %v4435 = vld [vmem:[#allocation2 + $0x40] sm:$0xff]
  %v4436 = vld [vmem:[#allocation2 + $0x48] sm:$0xff]
  %v4437 = vld [vmem:[%s3] sm:$0xff]
  %v4438 = vld [vmem:[%s3 + $0x8] sm:$0xff]
  %v4439 = vld [vmem:[%s3 + $0x10] sm:$0xff]
  %v4440 = vld [vmem:[%s3 + $0x18] sm:$0xff]
  %v4441 = vld [vmem:[%s3 + $0x20] sm:$0xff]
  %v4442 = vld [vmem:[%s3 + $0x28] sm:$0xff]
  %v4443 = vld [vmem:[%s3 + $0x30] sm:$0xff]
  %v4444 = vld [vmem:[%s3 + $0x38] sm:$0xff]
  %v4445 = vld [vmem:[%s3 + $0x40] sm:$0xff]
  %v4446 = vld [vmem:[%s3 + $0x48] sm:$0xff]
  %v4447 = vld [vmem:[%s3 + $0x50] sm:$0xff]
  %v4448 = vld [vmem:[%s3 + $0x58] sm:$0xff]
  %v4449 = vld [vmem:[%s3 + $0x60] sm:$0xff]
  %v4450 = vld [vmem:[%s3 + $0x68] sm:$0xff]
  %v4451 = vld [vmem:[%s3 + $0x70] sm:$0xff]
  %v4452 = vld [vmem:[%s3 + $0x78] sm:$0xff]
  %v4453 = vld [vmem:[%s3 + $0x80] sm:$0xff]
  %v4454 = vld [vmem:[%s3 + $0x88] sm:$0xff]
  %v4455 = vld [vmem:[%s3 + $0x90] sm:$0xff]
  %v4456 = vld [vmem:[%s3 + $0x98] sm:$0xff]
  %v4457 = vld [vmem:[%s3 + $0xa0] sm:$0xff]
  %v4458 = vld [vmem:[%s3 + $0xa8] sm:$0xff]
  %v4459 = vld [vmem:[%s3 + $0xb0] sm:$0xff]
  %v4460 = vld [vmem:[%s3 + $0xb8] sm:$0xff]
  %v4461 = vld [vmem:[%s3 + $0xc0] sm:$0xff]
  %v4462 = vld [vmem:[%s3 + $0xc8] sm:$0xff]
  %v4463 = vld [vmem:[%s3 + $0xd0] sm:$0xff]
  %v4464 = vld [vmem:[%s3 + $0xd8] sm:$0xff]
  %v4465 = vld [vmem:[%s3 + $0xe0] sm:$0xff]
  %v4466 = vld [vmem:[%s3 + $0xe8] sm:$0xff]
  %v4467 = vld [vmem:[%s3 + $0xf0] sm:$0xff]
  %v4468 = vld [vmem:[%s3 + $0xf8] sm:$0xff]
  %v4469 = vld [vmem:[%s3 + $0x100] sm:$0xff]
  %v4470 = vld [vmem:[%s3 + $0x108] sm:$0xff]
  %v4471 = vld [vmem:[%s3 + $0x110] sm:$0xff]
  %v4472 = vld [vmem:[%s3 + $0x118] sm:$0xff]
  %v4473 = vld [vmem:[%s3 + $0x120] sm:$0xff]
  %v4474 = vld [vmem:[%s3 + $0x128] sm:$0xff]
  %v4475 = vld [vmem:[%s3 + $0x130] sm:$0xff]
  %v4476 = vld [vmem:[%s3 + $0x138] sm:$0xff]
  %v4477 = vld [vmem:[%s3 + $0x140] sm:$0xff]
  %v4478 = vld [vmem:[%s3 + $0x148] sm:$0xff]
  %v4479 = vld [vmem:[%s3 + $0x150] sm:$0xff]
  %v4480 = vld [vmem:[%s3 + $0x158] sm:$0xff]
  %v4481 = vld [vmem:[%s3 + $0x160] sm:$0xff]
  %v4482 = vld [vmem:[%s3 + $0x168] sm:$0xff]
  %v4483 = vld [vmem:[%s3 + $0x170] sm:$0xff]
  %v4484 = vld [vmem:[%s3 + $0x178] sm:$0xff]
  %v4485 = vld [vmem:[%s3 + $0x180] sm:$0xff]
  %v4486 = vld [vmem:[%s3 + $0x188] sm:$0xff]
  %v4487 = vld [vmem:[%s3 + $0x190] sm:$0xff]
  %v4488 = vld [vmem:[%s3 + $0x198] sm:$0xff]
  %v4489 = vld [vmem:[%s3 + $0x1a0] sm:$0xff]
  %v4490 = vld [vmem:[%s3 + $0x1a8] sm:$0xff]
  %v4491 = vld [vmem:[%s3 + $0x1b0] sm:$0xff]
  %v4492 = vld [vmem:[%s3 + $0x1b8] sm:$0xff]
  %s4493 = scalar_lea.vmem %s3, 2240
  %v4494 = vld [vmem:[%s4493] sm:$0xff]
  %v4495 = vld [vmem:[%s4493 + $0x8] sm:$0xff]
  %v4496 = vld [vmem:[%s4493 + $0x10] sm:$0xff]
  %v4497 = vld [vmem:[%s4493 + $0x18] sm:$0xff]
  %v4498 = vld [vmem:[%s4493 + $0x20] sm:$0xff]
  %v4499 = vld [vmem:[%s4493 + $0x28] sm:$0xff]
  %v4500 = vld [vmem:[%s4493 + $0x30] sm:$0xff]
  %v4501 = vld [vmem:[%s4493 + $0x38] sm:$0xff]
  %v4502 = vld [vmem:[%s4493 + $0x40] sm:$0xff]
  %v4503 = vld [vmem:[%s4493 + $0x48] sm:$0xff]
  %v4504 = vld [vmem:[%s4493 + $0x50] sm:$0xff]
  %v4505 = vld [vmem:[%s4493 + $0x58] sm:$0xff]
  %v4506 = vld [vmem:[%s4493 + $0x60] sm:$0xff]
  %v4507 = vld [vmem:[%s4493 + $0x68] sm:$0xff]
  %v4508 = vld [vmem:[%s4493 + $0x70] sm:$0xff]
  %v4509 = vld [vmem:[%s4493 + $0x78] sm:$0xff]
  %v4510 = vld [vmem:[%s4493 + $0x80] sm:$0xff]
  %v4511 = vld [vmem:[%s4493 + $0x88] sm:$0xff]
  %v4512 = vld [vmem:[%s4493 + $0x90] sm:$0xff]
  %v4513 = vld [vmem:[%s4493 + $0x98] sm:$0xff]
  %v4514 = vld [vmem:[%s4493 + $0xa0] sm:$0xff]
  %v4515 = vld [vmem:[%s4493 + $0xa8] sm:$0xff]
  %v4516 = vld [vmem:[%s4493 + $0xb0] sm:$0xff]
  %v4517 = vld [vmem:[%s4493 + $0xb8] sm:$0xff]
  %v4518 = vld [vmem:[%s4493 + $0xc0] sm:$0xff]
  %v4519 = vld [vmem:[%s4493 + $0xc8] sm:$0xff]
  %v4520 = vld [vmem:[%s4493 + $0xd0] sm:$0xff]
  %v4521 = vld [vmem:[%s4493 + $0xd8] sm:$0xff]
  %v4522 = vld [vmem:[%s4493 + $0xe0] sm:$0xff]
  %v4523 = vld [vmem:[%s4493 + $0xe8] sm:$0xff]
  %v4524 = vld [vmem:[%s4493 + $0xf0] sm:$0xff]
  %v4525 = vld [vmem:[%s4493 + $0xf8] sm:$0xff]
  %v4526 = vld [vmem:[%s4493 + $0x100] sm:$0xff]
  %v4527 = vld [vmem:[%s4493 + $0x108] sm:$0xff]
  %v4528 = vld [vmem:[%s4493 + $0x110] sm:$0xff]
  %v4529 = vld [vmem:[%s4493 + $0x118] sm:$0xff]
  %v4530 = vld [vmem:[%s4493 + $0x120] sm:$0xff]
  %v4531 = vld [vmem:[%s4493 + $0x128] sm:$0xff]
  %v4532 = vld [vmem:[%s4493 + $0x130] sm:$0xff]
  %v4533 = vld [vmem:[%s4493 + $0x138] sm:$0xff]
  %v4534 = vld [vmem:[%s4493 + $0x140] sm:$0xff]
  %v4535 = vld [vmem:[%s4493 + $0x148] sm:$0xff]
  %v4536 = vld [vmem:[%s4493 + $0x150] sm:$0xff]
  %v4537 = vld [vmem:[%s4493 + $0x158] sm:$0xff]
  %v4538 = vld [vmem:[%s4493 + $0x160] sm:$0xff]
  %v4539 = vld [vmem:[%s4493 + $0x168] sm:$0xff]
  %v4540 = vld [vmem:[%s4493 + $0x170] sm:$0xff]
  %v4541 = vld [vmem:[%s4493 + $0x178] sm:$0xff]
  %v4542 = vld [vmem:[%s4493 + $0x180] sm:$0xff]
  %v4543 = vld [vmem:[%s4493 + $0x188] sm:$0xff]
  %v4544 = vld [vmem:[%s4493 + $0x190] sm:$0xff]
  %v4545 = vld [vmem:[%s4493 + $0x198] sm:$0xff]
  %v4546 = vld [vmem:[%s4493 + $0x1a0] sm:$0xff]
  %v4547 = vld [vmem:[%s4493 + $0x1a8] sm:$0xff]
  %v4548 = vld [vmem:[%s4493 + $0x1b0] sm:$0xff]
  %v4549 = vld [vmem:[%s4493 + $0x1b8] sm:$0xff]
  %v4550 = vld [vmem:[#allocation3] sm:$0xff]
  %v4551 = vld [vmem:[#allocation3 + $0x8] sm:$0xff]
  %v4552 = vld [vmem:[#allocation3 + $0x10] sm:$0xff]
  %v4553 = vld [vmem:[#allocation3 + $0x18] sm:$0xff]
  %v4554 = vld [vmem:[#allocation3 + $0x20] sm:$0xff]
  %v4555 = vld [vmem:[#allocation3 + $0x28] sm:$0xff]
  %v4556 = vld [vmem:[#allocation3 + $0x30] sm:$0xff]
  %v4557 = vld [vmem:[#allocation3 + $0x38] sm:$0xff]
  %v4558 = vld [vmem:[#allocation3 + $0x40] sm:$0xff]
  %v4559 = vld [vmem:[#allocation3 + $0x48] sm:$0xff]
  %s4560 = scalar_lea.vmem %s3, 448
  %v4561 = vld [vmem:[%s4560] sm:$0xff]
  %v4562 = vld [vmem:[%s4560 + $0x8] sm:$0xff]
  %v4563 = vld [vmem:[%s4560 + $0x10] sm:$0xff]
  %v4564 = vld [vmem:[%s4560 + $0x18] sm:$0xff]
  %v4565 = vld [vmem:[%s4560 + $0x20] sm:$0xff]
  %v4566 = vld [vmem:[%s4560 + $0x28] sm:$0xff]
  %v4567 = vld [vmem:[%s4560 + $0x30] sm:$0xff]
  %v4568 = vld [vmem:[%s4560 + $0x38] sm:$0xff]
  %v4569 = vld [vmem:[%s4560 + $0x40] sm:$0xff]
  %v4570 = vld [vmem:[%s4560 + $0x48] sm:$0xff]
  %v4571 = vld [vmem:[%s4560 + $0x50] sm:$0xff]
  %v4572 = vld [vmem:[%s4560 + $0x58] sm:$0xff]
  %v4573 = vld [vmem:[%s4560 + $0x60] sm:$0xff]
  %v4574 = vld [vmem:[%s4560 + $0x68] sm:$0xff]
  %v4575 = vld [vmem:[%s4560 + $0x70] sm:$0xff]
  %v4576 = vld [vmem:[%s4560 + $0x78] sm:$0xff]
  %v4577 = vld [vmem:[%s4560 + $0x80] sm:$0xff]
  %v4578 = vld [vmem:[%s4560 + $0x88] sm:$0xff]
  %v4579 = vld [vmem:[%s4560 + $0x90] sm:$0xff]
  %v4580 = vld [vmem:[%s4560 + $0x98] sm:$0xff]
  %v4581 = vld [vmem:[%s4560 + $0xa0] sm:$0xff]
  %v4582 = vld [vmem:[%s4560 + $0xa8] sm:$0xff]
  %v4583 = vld [vmem:[%s4560 + $0xb0] sm:$0xff]
  %v4584 = vld [vmem:[%s4560 + $0xb8] sm:$0xff]
  %v4585 = vld [vmem:[%s4560 + $0xc0] sm:$0xff]
  %v4586 = vld [vmem:[%s4560 + $0xc8] sm:$0xff]
  %v4587 = vld [vmem:[%s4560 + $0xd0] sm:$0xff]
  %v4588 = vld [vmem:[%s4560 + $0xd8] sm:$0xff]
  %v4589 = vld [vmem:[%s4560 + $0xe0] sm:$0xff]
  %v4590 = vld [vmem:[%s4560 + $0xe8] sm:$0xff]
  %v4591 = vld [vmem:[%s4560 + $0xf0] sm:$0xff]
  %v4592 = vld [vmem:[%s4560 + $0xf8] sm:$0xff]
  %v4593 = vld [vmem:[%s4560 + $0x100] sm:$0xff]
  %v4594 = vld [vmem:[%s4560 + $0x108] sm:$0xff]
  %v4595 = vld [vmem:[%s4560 + $0x110] sm:$0xff]
  %v4596 = vld [vmem:[%s4560 + $0x118] sm:$0xff]
  %v4597 = vld [vmem:[%s4560 + $0x120] sm:$0xff]
  %v4598 = vld [vmem:[%s4560 + $0x128] sm:$0xff]
  %v4599 = vld [vmem:[%s4560 + $0x130] sm:$0xff]
  %v4600 = vld [vmem:[%s4560 + $0x138] sm:$0xff]
  %v4601 = vld [vmem:[%s4560 + $0x140] sm:$0xff]
  %v4602 = vld [vmem:[%s4560 + $0x148] sm:$0xff]
  %v4603 = vld [vmem:[%s4560 + $0x150] sm:$0xff]
  %v4604 = vld [vmem:[%s4560 + $0x158] sm:$0xff]
  %v4605 = vld [vmem:[%s4560 + $0x160] sm:$0xff]
  %v4606 = vld [vmem:[%s4560 + $0x168] sm:$0xff]
  %v4607 = vld [vmem:[%s4560 + $0x170] sm:$0xff]
  %v4608 = vld [vmem:[%s4560 + $0x178] sm:$0xff]
  %v4609 = vld [vmem:[%s4560 + $0x180] sm:$0xff]
  %v4610 = vld [vmem:[%s4560 + $0x188] sm:$0xff]
  %v4611 = vld [vmem:[%s4560 + $0x190] sm:$0xff]
  %v4612 = vld [vmem:[%s4560 + $0x198] sm:$0xff]
  %v4613 = vld [vmem:[%s4560 + $0x1a0] sm:$0xff]
  %v4614 = vld [vmem:[%s4560 + $0x1a8] sm:$0xff]
  %v4615 = vld [vmem:[%s4560 + $0x1b0] sm:$0xff]
  %v4616 = vld [vmem:[%s4560 + $0x1b8] sm:$0xff]
  %v4618 = vsel %vm127, %v4551, 0
  %v4621 = vsel %vm127, %v4553, 0
  %v4624 = vsel %vm127, %v4555, 0
  %v4627 = vsel %vm127, %v4557, 0
  %v4630 = vsel %vm127, %v4559, 0
  %4632 = vmatpush.msra.mxu0 %v4591
  %4633 = vmatpush.msra.mxu0 %v4589
  %4634 = vmatpush.msra.mxu0 %v4587
  %4635 = vmatpush.msra.mxu0 %v4585
  %4636 = vmatpush.msra.mxu0 %v4583
  %4637 = vmatpush.msra.mxu0 %v4581
  %4638 = vmatpush.msra.mxu0 %v4579
  %4639 = vmatpush.msra.mxu0 %v4577
  %4640 = vmatpush.msra.mxu0 %v4575
  %4641 = vmatpush.msra.mxu0 %v4573
  %4642 = vmatpush.msra.mxu0 %v4571
  %4643 = vmatpush.msra.mxu0 %v4569
  %4644 = vmatpush.msra.mxu0 %v4567
  %4645 = vmatpush.msra.mxu0 %v4565
  %4646 = vmatpush.msra.mxu0 %v4563
  %4647 = vmatpush.msra.mxu0 %v4561
  %4648 = vmatmul.f32.gmra.mxu0 %v4550
  %v4649 = vpop.f32.mrf.mxu0
  %v4650 = vadd.f32 0.0, %v4649
  %4651 = vmatmul.f32.gmra.mxu0 %v4552
  %v4652 = vpop.f32.mrf.mxu0
  %v4653 = vadd.f32 0.0, %v4652
  %4654 = vmatmul.f32.gmra.mxu0 %v4554
  %v4655 = vpop.f32.mrf.mxu0
  %v4656 = vadd.f32 0.0, %v4655
  %4657 = vmatmul.f32.gmra.mxu0 %v4556
  %v4658 = vpop.f32.mrf.mxu0
  %v4659 = vadd.f32 0.0, %v4658
  %4660 = vmatmul.f32.gmra.mxu0 %v4558
  %v4661 = vpop.f32.mrf.mxu0
  %v4662 = vadd.f32 0.0, %v4661
  %4663 = vdwg.mxu0
  %4664 = vmatpush.msra.mxu0 0.0
  %4665 = vmatpush.msra.mxu0 0.0
  %4666 = vmatpush.msra.mxu0 0.0
  %4667 = vmatpush.msra.mxu0 0.0
  %4668 = vmatpush.msra.mxu0 %v4615
  %4669 = vmatpush.msra.mxu0 %v4613
  %4670 = vmatpush.msra.mxu0 %v4611
  %4671 = vmatpush.msra.mxu0 %v4609
  %4672 = vmatpush.msra.mxu0 %v4607
  %4673 = vmatpush.msra.mxu0 %v4605
  %4674 = vmatpush.msra.mxu0 %v4603
  %4675 = vmatpush.msra.mxu0 %v4601
  %4676 = vmatpush.msra.mxu0 %v4599
  %4677 = vmatpush.msra.mxu0 %v4597
  %4678 = vmatpush.msra.mxu0 %v4595
  %4679 = vmatpush.msra.mxu0 %v4593
  %4680 = vmatmul.f32.gmra.mxu0 %v4618
  %v4681 = vpop.f32.mrf.mxu0
  %v4682 = vadd.f32 %v4650, %v4681
  %4683 = vmatmul.f32.gmra.mxu0 %v4621
  %v4684 = vpop.f32.mrf.mxu0
  %v4685 = vadd.f32 %v4653, %v4684
  %4686 = vmatmul.f32.gmra.mxu0 %v4624
  %v4687 = vpop.f32.mrf.mxu0
  %v4688 = vadd.f32 %v4656, %v4687
  %4689 = vmatmul.f32.gmra.mxu0 %v4627
  %v4690 = vpop.f32.mrf.mxu0
  %v4691 = vadd.f32 %v4659, %v4690
  %4692 = vmatmul.f32.gmra.mxu0 %v4630
  %v4693 = vpop.f32.mrf.mxu0
  %v4694 = vadd.f32 %v4662, %v4693
  %4695 = vdwg.mxu0
  %4696 = vmatpush.msra.mxu0 %v4592
  %4697 = vmatpush.msra.mxu0 %v4590
  %4698 = vmatpush.msra.mxu0 %v4588
  %4699 = vmatpush.msra.mxu0 %v4586
  %4700 = vmatpush.msra.mxu0 %v4584
  %4701 = vmatpush.msra.mxu0 %v4582
  %4702 = vmatpush.msra.mxu0 %v4580
  %4703 = vmatpush.msra.mxu0 %v4578
  %4704 = vmatpush.msra.mxu0 %v4576
  %4705 = vmatpush.msra.mxu0 %v4574
  %4706 = vmatpush.msra.mxu0 %v4572
  %4707 = vmatpush.msra.mxu0 %v4570
  %4708 = vmatpush.msra.mxu0 %v4568
  %4709 = vmatpush.msra.mxu0 %v4566
  %4710 = vmatpush.msra.mxu0 %v4564
  %4711 = vmatpush.msra.mxu0 %v4562
  %4712 = vmatmul.f32.gmra.mxu0 %v4550
  %v4713 = vpop.f32.mrf.mxu0
  %v4714 = vadd.f32 0.0, %v4713
  %4715 = vmatmul.f32.gmra.mxu0 %v4552
  %v4716 = vpop.f32.mrf.mxu0
  %v4717 = vadd.f32 0.0, %v4716
  %4718 = vmatmul.f32.gmra.mxu0 %v4554
  %v4719 = vpop.f32.mrf.mxu0
  %v4720 = vadd.f32 0.0, %v4719
  %4721 = vmatmul.f32.gmra.mxu0 %v4556
  %v4722 = vpop.f32.mrf.mxu0
  %v4723 = vadd.f32 0.0, %v4722
  %4724 = vmatmul.f32.gmra.mxu0 %v4558
  %v4725 = vpop.f32.mrf.mxu0
  %v4726 = vadd.f32 0.0, %v4725
  %4727 = vdwg.mxu0
  %4728 = vmatpush.msra.mxu0 0.0
  %4729 = vmatpush.msra.mxu0 0.0
  %4730 = vmatpush.msra.mxu0 0.0
  %4731 = vmatpush.msra.mxu0 0.0
  %4732 = vmatpush.msra.mxu0 %v4616
  %4733 = vmatpush.msra.mxu0 %v4614
  %4734 = vmatpush.msra.mxu0 %v4612
  %4735 = vmatpush.msra.mxu0 %v4610
  %4736 = vmatpush.msra.mxu0 %v4608
  %4737 = vmatpush.msra.mxu0 %v4606
  %4738 = vmatpush.msra.mxu0 %v4604
  %4739 = vmatpush.msra.mxu0 %v4602
  %4740 = vmatpush.msra.mxu0 %v4600
  %4741 = vmatpush.msra.mxu0 %v4598
  %4742 = vmatpush.msra.mxu0 %v4596
  %4743 = vmatpush.msra.mxu0 %v4594
  %4744 = vmatmul.f32.gmra.mxu0 %v4618
  %v4745 = vpop.f32.mrf.mxu0
  %v4746 = vadd.f32 %v4714, %v4745
  %4747 = vmatmul.f32.gmra.mxu0 %v4621
  %v4748 = vpop.f32.mrf.mxu0
  %v4749 = vadd.f32 %v4717, %v4748
  %4750 = vmatmul.f32.gmra.mxu0 %v4624
  %v4751 = vpop.f32.mrf.mxu0
  %v4752 = vadd.f32 %v4720, %v4751
  %4753 = vmatmul.f32.gmra.mxu0 %v4627
  %v4754 = vpop.f32.mrf.mxu0
  %v4755 = vadd.f32 %v4723, %v4754
  %4756 = vmatmul.f32.gmra.mxu0 %v4630
  %v4757 = vpop.f32.mrf.mxu0
  %v4758 = vadd.f32 %v4726, %v4757
  %4759 = vdwg.mxu0
  %s4760 = scalar_lea.vmem %s3, 2688
  %v4761 = vld [vmem:[%s4760] sm:$0xff]
  %v4762 = vld [vmem:[%s4760 + $0x8] sm:$0xff]
  %v4763 = vld [vmem:[%s4760 + $0x10] sm:$0xff]
  %v4764 = vld [vmem:[%s4760 + $0x18] sm:$0xff]
  %v4765 = vld [vmem:[%s4760 + $0x20] sm:$0xff]
  %v4766 = vld [vmem:[%s4760 + $0x28] sm:$0xff]
  %v4767 = vld [vmem:[%s4760 + $0x30] sm:$0xff]
  %v4768 = vld [vmem:[%s4760 + $0x38] sm:$0xff]
  %v4769 = vld [vmem:[%s4760 + $0x40] sm:$0xff]
  %v4770 = vld [vmem:[%s4760 + $0x48] sm:$0xff]
  %v4771 = vld [vmem:[%s4760 + $0x50] sm:$0xff]
  %v4772 = vld [vmem:[%s4760 + $0x58] sm:$0xff]
  %v4773 = vld [vmem:[%s4760 + $0x60] sm:$0xff]
  %v4774 = vld [vmem:[%s4760 + $0x68] sm:$0xff]
  %v4775 = vld [vmem:[%s4760 + $0x70] sm:$0xff]
  %v4776 = vld [vmem:[%s4760 + $0x78] sm:$0xff]
  %v4777 = vld [vmem:[%s4760 + $0x80] sm:$0xff]
  %v4778 = vld [vmem:[%s4760 + $0x88] sm:$0xff]
  %v4779 = vld [vmem:[%s4760 + $0x90] sm:$0xff]
  %v4780 = vld [vmem:[%s4760 + $0x98] sm:$0xff]
  %v4781 = vld [vmem:[%s4760 + $0xa0] sm:$0xff]
  %v4782 = vld [vmem:[%s4760 + $0xa8] sm:$0xff]
  %v4783 = vld [vmem:[%s4760 + $0xb0] sm:$0xff]
  %v4784 = vld [vmem:[%s4760 + $0xb8] sm:$0xff]
  %v4785 = vld [vmem:[%s4760 + $0xc0] sm:$0xff]
  %v4786 = vld [vmem:[%s4760 + $0xc8] sm:$0xff]
  %v4787 = vld [vmem:[%s4760 + $0xd0] sm:$0xff]
  %v4788 = vld [vmem:[%s4760 + $0xd8] sm:$0xff]
  %v4789 = vld [vmem:[%s4760 + $0xe0] sm:$0xff]
  %v4790 = vld [vmem:[%s4760 + $0xe8] sm:$0xff]
  %v4791 = vld [vmem:[%s4760 + $0xf0] sm:$0xff]
  %v4792 = vld [vmem:[%s4760 + $0xf8] sm:$0xff]
  %v4793 = vld [vmem:[%s4760 + $0x100] sm:$0xff]
  %v4794 = vld [vmem:[%s4760 + $0x108] sm:$0xff]
  %v4795 = vld [vmem:[%s4760 + $0x110] sm:$0xff]
  %v4796 = vld [vmem:[%s4760 + $0x118] sm:$0xff]
  %v4797 = vld [vmem:[%s4760 + $0x120] sm:$0xff]
  %v4798 = vld [vmem:[%s4760 + $0x128] sm:$0xff]
  %v4799 = vld [vmem:[%s4760 + $0x130] sm:$0xff]
  %v4800 = vld [vmem:[%s4760 + $0x138] sm:$0xff]
  %v4801 = vld [vmem:[%s4760 + $0x140] sm:$0xff]
  %v4802 = vld [vmem:[%s4760 + $0x148] sm:$0xff]
  %v4803 = vld [vmem:[%s4760 + $0x150] sm:$0xff]
  %v4804 = vld [vmem:[%s4760 + $0x158] sm:$0xff]
  %v4805 = vld [vmem:[%s4760 + $0x160] sm:$0xff]
  %v4806 = vld [vmem:[%s4760 + $0x168] sm:$0xff]
  %v4807 = vld [vmem:[%s4760 + $0x170] sm:$0xff]
  %v4808 = vld [vmem:[%s4760 + $0x178] sm:$0xff]
  %v4809 = vld [vmem:[%s4760 + $0x180] sm:$0xff]
  %v4810 = vld [vmem:[%s4760 + $0x188] sm:$0xff]
  %v4811 = vld [vmem:[%s4760 + $0x190] sm:$0xff]
  %v4812 = vld [vmem:[%s4760 + $0x198] sm:$0xff]
  %v4813 = vld [vmem:[%s4760 + $0x1a0] sm:$0xff]
  %v4814 = vld [vmem:[%s4760 + $0x1a8] sm:$0xff]
  %v4815 = vld [vmem:[%s4760 + $0x1b0] sm:$0xff]
  %v4816 = vld [vmem:[%s4760 + $0x1b8] sm:$0xff]
  %4817 = vmatpush.msra.mxu0 %v4791
  %4818 = vmatpush.msra.mxu0 %v4789
  %4819 = vmatpush.msra.mxu0 %v4787
  %4820 = vmatpush.msra.mxu0 %v4785
  %4821 = vmatpush.msra.mxu0 %v4783
  %4822 = vmatpush.msra.mxu0 %v4781
  %4823 = vmatpush.msra.mxu0 %v4779
  %4824 = vmatpush.msra.mxu0 %v4777
  %4825 = vmatpush.msra.mxu0 %v4775
  %4826 = vmatpush.msra.mxu0 %v4773
  %4827 = vmatpush.msra.mxu0 %v4771
  %4828 = vmatpush.msra.mxu0 %v4769
  %4829 = vmatpush.msra.mxu0 %v4767
  %4830 = vmatpush.msra.mxu0 %v4765
  %4831 = vmatpush.msra.mxu0 %v4763
  %4832 = vmatpush.msra.mxu0 %v4761
  %4833 = vmatmul.f32.gmra.mxu0 %v4550
  %v4834 = vpop.f32.mrf.mxu0
  %v4835 = vadd.f32 0.0, %v4834
  %4836 = vmatmul.f32.gmra.mxu0 %v4552
  %v4837 = vpop.f32.mrf.mxu0
  %v4838 = vadd.f32 0.0, %v4837
  %4839 = vmatmul.f32.gmra.mxu0 %v4554
  %v4840 = vpop.f32.mrf.mxu0
  %v4841 = vadd.f32 0.0, %v4840
  %4842 = vmatmul.f32.gmra.mxu0 %v4556
  %v4843 = vpop.f32.mrf.mxu0
  %v4844 = vadd.f32 0.0, %v4843
  %4845 = vmatmul.f32.gmra.mxu0 %v4558
  %v4846 = vpop.f32.mrf.mxu0
  %v4847 = vadd.f32 0.0, %v4846
  %4848 = vdwg.mxu0
  %4849 = vmatpush.msra.mxu0 0.0
  %4850 = vmatpush.msra.mxu0 0.0
  %4851 = vmatpush.msra.mxu0 0.0
  %4852 = vmatpush.msra.mxu0 0.0
  %4853 = vmatpush.msra.mxu0 %v4815
  %4854 = vmatpush.msra.mxu0 %v4813
  %4855 = vmatpush.msra.mxu0 %v4811
  %4856 = vmatpush.msra.mxu0 %v4809
  %4857 = vmatpush.msra.mxu0 %v4807
  %4858 = vmatpush.msra.mxu0 %v4805
  %4859 = vmatpush.msra.mxu0 %v4803
  %4860 = vmatpush.msra.mxu0 %v4801
  %4861 = vmatpush.msra.mxu0 %v4799
  %4862 = vmatpush.msra.mxu0 %v4797
  %4863 = vmatpush.msra.mxu0 %v4795
  %4864 = vmatpush.msra.mxu0 %v4793
  %4865 = vmatmul.f32.gmra.mxu0 %v4618
  %v4866 = vpop.f32.mrf.mxu0
  %v4867 = vadd.f32 %v4835, %v4866
  %4868 = vmatmul.f32.gmra.mxu0 %v4621
  %v4869 = vpop.f32.mrf.mxu0
  %v4870 = vadd.f32 %v4838, %v4869
  %4871 = vmatmul.f32.gmra.mxu0 %v4624
  %v4872 = vpop.f32.mrf.mxu0
  %v4873 = vadd.f32 %v4841, %v4872
  %4874 = vmatmul.f32.gmra.mxu0 %v4627
  %v4875 = vpop.f32.mrf.mxu0
  %v4876 = vadd.f32 %v4844, %v4875
  %4877 = vmatmul.f32.gmra.mxu0 %v4630
  %v4878 = vpop.f32.mrf.mxu0
  %v4879 = vadd.f32 %v4847, %v4878
  %4880 = vdwg.mxu0
  %4881 = vmatpush.msra.mxu0 %v4792
  %4882 = vmatpush.msra.mxu0 %v4790
  %4883 = vmatpush.msra.mxu0 %v4788
  %4884 = vmatpush.msra.mxu0 %v4786
  %4885 = vmatpush.msra.mxu0 %v4784
  %4886 = vmatpush.msra.mxu0 %v4782
  %4887 = vmatpush.msra.mxu0 %v4780
  %4888 = vmatpush.msra.mxu0 %v4778
  %4889 = vmatpush.msra.mxu0 %v4776
  %4890 = vmatpush.msra.mxu0 %v4774
  %4891 = vmatpush.msra.mxu0 %v4772
  %4892 = vmatpush.msra.mxu0 %v4770
  %4893 = vmatpush.msra.mxu0 %v4768
  %4894 = vmatpush.msra.mxu0 %v4766
  %4895 = vmatpush.msra.mxu0 %v4764
  %4896 = vmatpush.msra.mxu0 %v4762
  %4897 = vmatmul.f32.gmra.mxu0 %v4550
  %v4898 = vpop.f32.mrf.mxu0
  %v4899 = vadd.f32 0.0, %v4898
  %4900 = vmatmul.f32.gmra.mxu0 %v4552
  %v4901 = vpop.f32.mrf.mxu0
  %v4902 = vadd.f32 0.0, %v4901
  %4903 = vmatmul.f32.gmra.mxu0 %v4554
  %v4904 = vpop.f32.mrf.mxu0
  %v4905 = vadd.f32 0.0, %v4904
  %4906 = vmatmul.f32.gmra.mxu0 %v4556
  %v4907 = vpop.f32.mrf.mxu0
  %v4908 = vadd.f32 0.0, %v4907
  %4909 = vmatmul.f32.gmra.mxu0 %v4558
  %v4910 = vpop.f32.mrf.mxu0
  %v4911 = vadd.f32 0.0, %v4910
  %4912 = vdwg.mxu0
  %4913 = vmatpush.msra.mxu0 0.0
  %4914 = vmatpush.msra.mxu0 0.0
  %4915 = vmatpush.msra.mxu0 0.0
  %4916 = vmatpush.msra.mxu0 0.0
  %4917 = vmatpush.msra.mxu0 %v4816
  %4918 = vmatpush.msra.mxu0 %v4814
  %4919 = vmatpush.msra.mxu0 %v4812
  %4920 = vmatpush.msra.mxu0 %v4810
  %4921 = vmatpush.msra.mxu0 %v4808
  %4922 = vmatpush.msra.mxu0 %v4806
  %4923 = vmatpush.msra.mxu0 %v4804
  %4924 = vmatpush.msra.mxu0 %v4802
  %4925 = vmatpush.msra.mxu0 %v4800
  %4926 = vmatpush.msra.mxu0 %v4798
  %4927 = vmatpush.msra.mxu0 %v4796
  %4928 = vmatpush.msra.mxu0 %v4794
  %4929 = vmatmul.f32.gmra.mxu0 %v4618
  %v4930 = vpop.f32.mrf.mxu0
  %v4931 = vadd.f32 %v4899, %v4930
  %4932 = vmatmul.f32.gmra.mxu0 %v4621
  %v4933 = vpop.f32.mrf.mxu0
  %v4934 = vadd.f32 %v4902, %v4933
  %4935 = vmatmul.f32.gmra.mxu0 %v4624
  %v4936 = vpop.f32.mrf.mxu0
  %v4937 = vadd.f32 %v4905, %v4936
  %4938 = vmatmul.f32.gmra.mxu0 %v4627
  %v4939 = vpop.f32.mrf.mxu0
  %v4940 = vadd.f32 %v4908, %v4939
  %4941 = vmatmul.f32.gmra.mxu0 %v4630
  %v4942 = vpop.f32.mrf.mxu0
  %v4943 = vadd.f32 %v4911, %v4942
  %4944 = vdwg.mxu0
  %v4946 = vsel %vm127, %v4428, 0
  %v4949 = vsel %vm127, %v4430, 0
  %v4952 = vsel %vm127, %v4432, 0
  %v4955 = vsel %vm127, %v4434, 0
  %v4958 = vsel %vm127, %v4436, 0
  %4960 = vmatpush.msra.mxu0 %v4467
  %4961 = vmatpush.msra.mxu0 %v4465
  %4962 = vmatpush.msra.mxu0 %v4463
  %4963 = vmatpush.msra.mxu0 %v4461
  %4964 = vmatpush.msra.mxu0 %v4459
  %4965 = vmatpush.msra.mxu0 %v4457
  %4966 = vmatpush.msra.mxu0 %v4455
  %4967 = vmatpush.msra.mxu0 %v4453
  %4968 = vmatpush.msra.mxu0 %v4451
  %4969 = vmatpush.msra.mxu0 %v4449
  %4970 = vmatpush.msra.mxu0 %v4447
  %4971 = vmatpush.msra.mxu0 %v4445
  %4972 = vmatpush.msra.mxu0 %v4443
  %4973 = vmatpush.msra.mxu0 %v4441
  %4974 = vmatpush.msra.mxu0 %v4439
  %4975 = vmatpush.msra.mxu0 %v4437
  %4976 = vmatmul.f32.gmra.mxu0 %v4427
  %v4977 = vpop.f32.mrf.mxu0
  %v4978 = vadd.f32 %v4682, %v4977
  %4979 = vmatmul.f32.gmra.mxu0 %v4429
  %v4980 = vpop.f32.mrf.mxu0
  %v4981 = vadd.f32 %v4685, %v4980
  %4982 = vmatmul.f32.gmra.mxu0 %v4431
  %v4983 = vpop.f32.mrf.mxu0
  %v4984 = vadd.f32 %v4688, %v4983
  %4985 = vmatmul.f32.gmra.mxu0 %v4433
  %v4986 = vpop.f32.mrf.mxu0
  %v4987 = vadd.f32 %v4691, %v4986
  %4988 = vmatmul.f32.gmra.mxu0 %v4435
  %v4989 = vpop.f32.mrf.mxu0
  %v4990 = vadd.f32 %v4694, %v4989
  %4991 = vdwg.mxu0
  %4992 = vmatpush.msra.mxu0 0.0
  %4993 = vmatpush.msra.mxu0 0.0
  %4994 = vmatpush.msra.mxu0 0.0
  %4995 = vmatpush.msra.mxu0 0.0
  %4996 = vmatpush.msra.mxu0 %v4491
  %4997 = vmatpush.msra.mxu0 %v4489
  %4998 = vmatpush.msra.mxu0 %v4487
  %4999 = vmatpush.msra.mxu0 %v4485
  %5000 = vmatpush.msra.mxu0 %v4483
  %5001 = vmatpush.msra.mxu0 %v4481
  %5002 = vmatpush.msra.mxu0 %v4479
  %5003 = vmatpush.msra.mxu0 %v4477
  %5004 = vmatpush.msra.mxu0 %v4475
  %5005 = vmatpush.msra.mxu0 %v4473
  %5006 = vmatpush.msra.mxu0 %v4471
  %5007 = vmatpush.msra.mxu0 %v4469
  %5008 = vmatmul.f32.gmra.mxu0 %v4946
  %v5009 = vpop.f32.mrf.mxu0
  %v5010 = vadd.f32 %v4978, %v5009
  %5011 = vmatmul.f32.gmra.mxu0 %v4949
  %v5012 = vpop.f32.mrf.mxu0
  %v5013 = vadd.f32 %v4981, %v5012
  %5014 = vmatmul.f32.gmra.mxu0 %v4952
  %v5015 = vpop.f32.mrf.mxu0
  %v5016 = vadd.f32 %v4984, %v5015
  %5017 = vmatmul.f32.gmra.mxu0 %v4955
  %v5018 = vpop.f32.mrf.mxu0
  %v5019 = vadd.f32 %v4987, %v5018
  %5020 = vmatmul.f32.gmra.mxu0 %v4958
  %v5021 = vpop.f32.mrf.mxu0
  %v5022 = vadd.f32 %v4990, %v5021
  %5023 = vdwg.mxu0
  %5024 = vmatpush.msra.mxu0 %v4468
  %5025 = vmatpush.msra.mxu0 %v4466
  %5026 = vmatpush.msra.mxu0 %v4464
  %5027 = vmatpush.msra.mxu0 %v4462
  %5028 = vmatpush.msra.mxu0 %v4460
  %5029 = vmatpush.msra.mxu0 %v4458
  %5030 = vmatpush.msra.mxu0 %v4456
  %5031 = vmatpush.msra.mxu0 %v4454
  %5032 = vmatpush.msra.mxu0 %v4452
  %5033 = vmatpush.msra.mxu0 %v4450
  %5034 = vmatpush.msra.mxu0 %v4448
  %5035 = vmatpush.msra.mxu0 %v4446
  %5036 = vmatpush.msra.mxu0 %v4444
  %5037 = vmatpush.msra.mxu0 %v4442
  %5038 = vmatpush.msra.mxu0 %v4440
  %5039 = vmatpush.msra.mxu0 %v4438
  %5040 = vmatmul.f32.gmra.mxu0 %v4427
  %v5041 = vpop.f32.mrf.mxu0
  %v5042 = vadd.f32 %v4746, %v5041
  %5043 = vmatmul.f32.gmra.mxu0 %v4429
  %v5044 = vpop.f32.mrf.mxu0
  %v5045 = vadd.f32 %v4749, %v5044
  %5046 = vmatmul.f32.gmra.mxu0 %v4431
  %v5047 = vpop.f32.mrf.mxu0
  %v5048 = vadd.f32 %v4752, %v5047
  %5049 = vmatmul.f32.gmra.mxu0 %v4433
  %v5050 = vpop.f32.mrf.mxu0
  %v5051 = vadd.f32 %v4755, %v5050
  %5052 = vmatmul.f32.gmra.mxu0 %v4435
  %v5053 = vpop.f32.mrf.mxu0
  %v5054 = vadd.f32 %v4758, %v5053
  %5055 = vdwg.mxu0
  %5056 = vmatpush.msra.mxu0 0.0
  %5057 = vmatpush.msra.mxu0 0.0
  %5058 = vmatpush.msra.mxu0 0.0
  %5059 = vmatpush.msra.mxu0 0.0
  %5060 = vmatpush.msra.mxu0 %v4492
  %5061 = vmatpush.msra.mxu0 %v4490
  %5062 = vmatpush.msra.mxu0 %v4488
  %5063 = vmatpush.msra.mxu0 %v4486
  %5064 = vmatpush.msra.mxu0 %v4484
  %5065 = vmatpush.msra.mxu0 %v4482
  %5066 = vmatpush.msra.mxu0 %v4480
  %5067 = vmatpush.msra.mxu0 %v4478
  %5068 = vmatpush.msra.mxu0 %v4476
  %5069 = vmatpush.msra.mxu0 %v4474
  %5070 = vmatpush.msra.mxu0 %v4472
  %5071 = vmatpush.msra.mxu0 %v4470
  %5072 = vmatmul.f32.gmra.mxu0 %v4946
  %v5073 = vpop.f32.mrf.mxu0
  %v5074 = vadd.f32 %v5042, %v5073
  %5075 = vmatmul.f32.gmra.mxu0 %v4949
  %v5076 = vpop.f32.mrf.mxu0
  %v5077 = vadd.f32 %v5045, %v5076
  %5078 = vmatmul.f32.gmra.mxu0 %v4952
  %v5079 = vpop.f32.mrf.mxu0
  %v5080 = vadd.f32 %v5048, %v5079
  %5081 = vmatmul.f32.gmra.mxu0 %v4955
  %v5082 = vpop.f32.mrf.mxu0
  %v5083 = vadd.f32 %v5051, %v5082
  %5084 = vmatmul.f32.gmra.mxu0 %v4958
  %v5085 = vpop.f32.mrf.mxu0
  %v5086 = vadd.f32 %v5054, %v5085
  %5087 = vdwg.mxu0
  %5088 = vmatpush.msra.mxu0 %v4524
  %5089 = vmatpush.msra.mxu0 %v4522
  %5090 = vmatpush.msra.mxu0 %v4520
  %5091 = vmatpush.msra.mxu0 %v4518
  %5092 = vmatpush.msra.mxu0 %v4516
  %5093 = vmatpush.msra.mxu0 %v4514
  %5094 = vmatpush.msra.mxu0 %v4512
  %5095 = vmatpush.msra.mxu0 %v4510
  %5096 = vmatpush.msra.mxu0 %v4508
  %5097 = vmatpush.msra.mxu0 %v4506
  %5098 = vmatpush.msra.mxu0 %v4504
  %5099 = vmatpush.msra.mxu0 %v4502
  %5100 = vmatpush.msra.mxu0 %v4500
  %5101 = vmatpush.msra.mxu0 %v4498
  %5102 = vmatpush.msra.mxu0 %v4496
  %5103 = vmatpush.msra.mxu0 %v4494
  %5104 = vmatmul.f32.gmra.mxu0 %v4427
  %v5105 = vpop.f32.mrf.mxu0
  %v5106 = vadd.f32 %v4867, %v5105
  %5107 = vmatmul.f32.gmra.mxu0 %v4429
  %v5108 = vpop.f32.mrf.mxu0
  %v5109 = vadd.f32 %v4870, %v5108
  %5110 = vmatmul.f32.gmra.mxu0 %v4431
  %v5111 = vpop.f32.mrf.mxu0
  %v5112 = vadd.f32 %v4873, %v5111
  %5113 = vmatmul.f32.gmra.mxu0 %v4433
  %v5114 = vpop.f32.mrf.mxu0
  %v5115 = vadd.f32 %v4876, %v5114
  %5116 = vmatmul.f32.gmra.mxu0 %v4435
  %v5117 = vpop.f32.mrf.mxu0
  %v5118 = vadd.f32 %v4879, %v5117
  %5119 = vdwg.mxu0
  %5120 = vmatpush.msra.mxu0 0.0
  %5121 = vmatpush.msra.mxu0 0.0
  %5122 = vmatpush.msra.mxu0 0.0
  %5123 = vmatpush.msra.mxu0 0.0
  %5124 = vmatpush.msra.mxu0 %v4548
  %5125 = vmatpush.msra.mxu0 %v4546
  %5126 = vmatpush.msra.mxu0 %v4544
  %5127 = vmatpush.msra.mxu0 %v4542
  %5128 = vmatpush.msra.mxu0 %v4540
  %5129 = vmatpush.msra.mxu0 %v4538
  %5130 = vmatpush.msra.mxu0 %v4536
  %5131 = vmatpush.msra.mxu0 %v4534
  %5132 = vmatpush.msra.mxu0 %v4532
  %5133 = vmatpush.msra.mxu0 %v4530
  %5134 = vmatpush.msra.mxu0 %v4528
  %5135 = vmatpush.msra.mxu0 %v4526
  %5136 = vmatmul.f32.gmra.mxu0 %v4946
  %v5137 = vpop.f32.mrf.mxu0
  %v5138 = vadd.f32 %v5106, %v5137
  %5139 = vmatmul.f32.gmra.mxu0 %v4949
  %v5140 = vpop.f32.mrf.mxu0
  %v5141 = vadd.f32 %v5109, %v5140
  %5142 = vmatmul.f32.gmra.mxu0 %v4952
  %v5143 = vpop.f32.mrf.mxu0
  %v5144 = vadd.f32 %v5112, %v5143
  %5145 = vmatmul.f32.gmra.mxu0 %v4955
  %v5146 = vpop.f32.mrf.mxu0
  %v5147 = vadd.f32 %v5115, %v5146
  %5148 = vmatmul.f32.gmra.mxu0 %v4958
  %v5149 = vpop.f32.mrf.mxu0
  %v5150 = vadd.f32 %v5118, %v5149
  %5151 = vdwg.mxu0
  %5152 = vmatpush.msra.mxu0 %v4525
  %5153 = vmatpush.msra.mxu0 %v4523
  %5154 = vmatpush.msra.mxu0 %v4521
  %5155 = vmatpush.msra.mxu0 %v4519
  %5156 = vmatpush.msra.mxu0 %v4517
  %5157 = vmatpush.msra.mxu0 %v4515
  %5158 = vmatpush.msra.mxu0 %v4513
  %5159 = vmatpush.msra.mxu0 %v4511
  %5160 = vmatpush.msra.mxu0 %v4509
  %5161 = vmatpush.msra.mxu0 %v4507
  %5162 = vmatpush.msra.mxu0 %v4505
  %5163 = vmatpush.msra.mxu0 %v4503
  %5164 = vmatpush.msra.mxu0 %v4501
  %5165 = vmatpush.msra.mxu0 %v4499
  %5166 = vmatpush.msra.mxu0 %v4497
  %5167 = vmatpush.msra.mxu0 %v4495
  %5168 = vmatmul.f32.gmra.mxu0 %v4427
  %v5169 = vpop.f32.mrf.mxu0
  %v5170 = vadd.f32 %v4931, %v5169
  %5171 = vmatmul.f32.gmra.mxu0 %v4429
  %v5172 = vpop.f32.mrf.mxu0
  %v5173 = vadd.f32 %v4934, %v5172
  %5174 = vmatmul.f32.gmra.mxu0 %v4431
  %v5175 = vpop.f32.mrf.mxu0
  %v5176 = vadd.f32 %v4937, %v5175
  %5177 = vmatmul.f32.gmra.mxu0 %v4433
  %v5178 = vpop.f32.mrf.mxu0
  %v5179 = vadd.f32 %v4940, %v5178
  %5180 = vmatmul.f32.gmra.mxu0 %v4435
  %v5181 = vpop.f32.mrf.mxu0
  %v5182 = vadd.f32 %v4943, %v5181
  %5183 = vdwg.mxu0
  %5184 = vmatpush.msra.mxu0 0.0
  %5185 = vmatpush.msra.mxu0 0.0
  %5186 = vmatpush.msra.mxu0 0.0
  %5187 = vmatpush.msra.mxu0 0.0
  %5188 = vmatpush.msra.mxu0 %v4549
  %5189 = vmatpush.msra.mxu0 %v4547
  %5190 = vmatpush.msra.mxu0 %v4545
  %5191 = vmatpush.msra.mxu0 %v4543
  %5192 = vmatpush.msra.mxu0 %v4541
  %5193 = vmatpush.msra.mxu0 %v4539
  %5194 = vmatpush.msra.mxu0 %v4537
  %5195 = vmatpush.msra.mxu0 %v4535
  %5196 = vmatpush.msra.mxu0 %v4533
  %5197 = vmatpush.msra.mxu0 %v4531
  %5198 = vmatpush.msra.mxu0 %v4529
  %5199 = vmatpush.msra.mxu0 %v4527
  %5200 = vmatmul.f32.gmra.mxu0 %v4946
  %v5201 = vpop.f32.mrf.mxu0
  %v5202 = vadd.f32 %v5170, %v5201
  %5203 = vmatmul.f32.gmra.mxu0 %v4949
  %v5204 = vpop.f32.mrf.mxu0
  %v5205 = vadd.f32 %v5173, %v5204
  %5206 = vmatmul.f32.gmra.mxu0 %v4952
  %v5207 = vpop.f32.mrf.mxu0
  %v5208 = vadd.f32 %v5176, %v5207
  %5209 = vmatmul.f32.gmra.mxu0 %v4955
  %v5210 = vpop.f32.mrf.mxu0
  %v5211 = vadd.f32 %v5179, %v5210
  %5212 = vmatmul.f32.gmra.mxu0 %v4958
  %v5213 = vpop.f32.mrf.mxu0
  %v5214 = vadd.f32 %v5182, %v5213
  %5215 = vdwg.mxu0
  %v5216 = vld [vmem:[#allocation2 + $0x10] sm:$0xff]
  %v5217 = vld [vmem:[#allocation2 + $0x18] sm:$0xff]
  %v5218 = vld [vmem:[#allocation2 + $0x20] sm:$0xff]
  %v5219 = vld [vmem:[#allocation2 + $0x28] sm:$0xff]
  %v5220 = vld [vmem:[#allocation2 + $0x30] sm:$0xff]
  %v5221 = vld [vmem:[#allocation2 + $0x38] sm:$0xff]
  %v5222 = vld [vmem:[#allocation2 + $0x40] sm:$0xff]
  %v5223 = vld [vmem:[#allocation2 + $0x48] sm:$0xff]
  %v5224 = vld [vmem:[#allocation2 + $0x50] sm:$0xff]
  %v5225 = vld [vmem:[#allocation2 + $0x58] sm:$0xff]
  %s5226 = scalar_lea.vmem %s3, 896
  %v5227 = vld [vmem:[%s5226] sm:$0xff]
  %v5228 = vld [vmem:[%s5226 + $0x8] sm:$0xff]
  %v5229 = vld [vmem:[%s5226 + $0x10] sm:$0xff]
  %v5230 = vld [vmem:[%s5226 + $0x18] sm:$0xff]
  %v5231 = vld [vmem:[%s5226 + $0x20] sm:$0xff]
  %v5232 = vld [vmem:[%s5226 + $0x28] sm:$0xff]
  %v5233 = vld [vmem:[%s5226 + $0x30] sm:$0xff]
  %v5234 = vld [vmem:[%s5226 + $0x38] sm:$0xff]
  %v5235 = vld [vmem:[%s5226 + $0x40] sm:$0xff]
  %v5236 = vld [vmem:[%s5226 + $0x48] sm:$0xff]
  %v5237 = vld [vmem:[%s5226 + $0x50] sm:$0xff]
  %v5238 = vld [vmem:[%s5226 + $0x58] sm:$0xff]
  %v5239 = vld [vmem:[%s5226 + $0x60] sm:$0xff]
  %v5240 = vld [vmem:[%s5226 + $0x68] sm:$0xff]
  %v5241 = vld [vmem:[%s5226 + $0x70] sm:$0xff]
  %v5242 = vld [vmem:[%s5226 + $0x78] sm:$0xff]
  %v5243 = vld [vmem:[%s5226 + $0x80] sm:$0xff]
  %v5244 = vld [vmem:[%s5226 + $0x88] sm:$0xff]
  %v5245 = vld [vmem:[%s5226 + $0x90] sm:$0xff]
  %v5246 = vld [vmem:[%s5226 + $0x98] sm:$0xff]
  %v5247 = vld [vmem:[%s5226 + $0xa0] sm:$0xff]
  %v5248 = vld [vmem:[%s5226 + $0xa8] sm:$0xff]
  %v5249 = vld [vmem:[%s5226 + $0xb0] sm:$0xff]
  %v5250 = vld [vmem:[%s5226 + $0xb8] sm:$0xff]
  %v5251 = vld [vmem:[%s5226 + $0xc0] sm:$0xff]
  %v5252 = vld [vmem:[%s5226 + $0xc8] sm:$0xff]
  %v5253 = vld [vmem:[%s5226 + $0xd0] sm:$0xff]
  %v5254 = vld [vmem:[%s5226 + $0xd8] sm:$0xff]
  %v5255 = vld [vmem:[%s5226 + $0xe0] sm:$0xff]
  %v5256 = vld [vmem:[%s5226 + $0xe8] sm:$0xff]
  %v5257 = vld [vmem:[%s5226 + $0xf0] sm:$0xff]
  %v5258 = vld [vmem:[%s5226 + $0xf8] sm:$0xff]
  %v5259 = vld [vmem:[%s5226 + $0x100] sm:$0xff]
  %v5260 = vld [vmem:[%s5226 + $0x108] sm:$0xff]
  %v5261 = vld [vmem:[%s5226 + $0x110] sm:$0xff]
  %v5262 = vld [vmem:[%s5226 + $0x118] sm:$0xff]
  %v5263 = vld [vmem:[%s5226 + $0x120] sm:$0xff]
  %v5264 = vld [vmem:[%s5226 + $0x128] sm:$0xff]
  %v5265 = vld [vmem:[%s5226 + $0x130] sm:$0xff]
  %v5266 = vld [vmem:[%s5226 + $0x138] sm:$0xff]
  %v5267 = vld [vmem:[%s5226 + $0x140] sm:$0xff]
  %v5268 = vld [vmem:[%s5226 + $0x148] sm:$0xff]
  %v5269 = vld [vmem:[%s5226 + $0x150] sm:$0xff]
  %v5270 = vld [vmem:[%s5226 + $0x158] sm:$0xff]
  %v5271 = vld [vmem:[%s5226 + $0x160] sm:$0xff]
  %v5272 = vld [vmem:[%s5226 + $0x168] sm:$0xff]
  %v5273 = vld [vmem:[%s5226 + $0x170] sm:$0xff]
  %v5274 = vld [vmem:[%s5226 + $0x178] sm:$0xff]
  %v5275 = vld [vmem:[%s5226 + $0x180] sm:$0xff]
  %v5276 = vld [vmem:[%s5226 + $0x188] sm:$0xff]
  %v5277 = vld [vmem:[%s5226 + $0x190] sm:$0xff]
  %v5278 = vld [vmem:[%s5226 + $0x198] sm:$0xff]
  %v5279 = vld [vmem:[%s5226 + $0x1a0] sm:$0xff]
  %v5280 = vld [vmem:[%s5226 + $0x1a8] sm:$0xff]
  %v5281 = vld [vmem:[%s5226 + $0x1b0] sm:$0xff]
  %v5282 = vld [vmem:[%s5226 + $0x1b8] sm:$0xff]
  %v5284 = vsel %vm127, %v5217, 0
  %v5287 = vsel %vm127, %v5219, 0
  %v5290 = vsel %vm127, %v5221, 0
  %v5293 = vsel %vm127, %v5223, 0
  %v5296 = vsel %vm127, %v5225, 0
  %5298 = vmatpush.msra.mxu0 %v5257
  %5299 = vmatpush.msra.mxu0 %v5255
  %5300 = vmatpush.msra.mxu0 %v5253
  %5301 = vmatpush.msra.mxu0 %v5251
  %5302 = vmatpush.msra.mxu0 %v5249
  %5303 = vmatpush.msra.mxu0 %v5247
  %5304 = vmatpush.msra.mxu0 %v5245
  %5305 = vmatpush.msra.mxu0 %v5243
  %5306 = vmatpush.msra.mxu0 %v5241
  %5307 = vmatpush.msra.mxu0 %v5239
  %5308 = vmatpush.msra.mxu0 %v5237
  %5309 = vmatpush.msra.mxu0 %v5235
  %5310 = vmatpush.msra.mxu0 %v5233
  %5311 = vmatpush.msra.mxu0 %v5231
  %5312 = vmatpush.msra.mxu0 %v5229
  %5313 = vmatpush.msra.mxu0 %v5227
  %5314 = vmatmul.f32.gmra.mxu0 %v5216
  %v5315 = vpop.f32.mrf.mxu0
  %v5316 = vadd.f32 0.0, %v5315
  %5317 = vmatmul.f32.gmra.mxu0 %v5218
  %v5318 = vpop.f32.mrf.mxu0
  %v5319 = vadd.f32 0.0, %v5318
  %5320 = vmatmul.f32.gmra.mxu0 %v5220
  %v5321 = vpop.f32.mrf.mxu0
  %v5322 = vadd.f32 0.0, %v5321
  %5323 = vmatmul.f32.gmra.mxu0 %v5222
  %v5324 = vpop.f32.mrf.mxu0
  %v5325 = vadd.f32 0.0, %v5324
  %5326 = vmatmul.f32.gmra.mxu0 %v5224
  %v5327 = vpop.f32.mrf.mxu0
  %v5328 = vadd.f32 0.0, %v5327
  %5329 = vdwg.mxu0
  %5330 = vmatpush.msra.mxu0 0.0
  %5331 = vmatpush.msra.mxu0 0.0
  %5332 = vmatpush.msra.mxu0 0.0
  %5333 = vmatpush.msra.mxu0 0.0
  %5334 = vmatpush.msra.mxu0 %v5281
  %5335 = vmatpush.msra.mxu0 %v5279
  %5336 = vmatpush.msra.mxu0 %v5277
  %5337 = vmatpush.msra.mxu0 %v5275
  %5338 = vmatpush.msra.mxu0 %v5273
  %5339 = vmatpush.msra.mxu0 %v5271
  %5340 = vmatpush.msra.mxu0 %v5269
  %5341 = vmatpush.msra.mxu0 %v5267
  %5342 = vmatpush.msra.mxu0 %v5265
  %5343 = vmatpush.msra.mxu0 %v5263
  %5344 = vmatpush.msra.mxu0 %v5261
  %5345 = vmatpush.msra.mxu0 %v5259
  %5346 = vmatmul.f32.gmra.mxu0 %v5284
  %v5347 = vpop.f32.mrf.mxu0
  %v5348 = vadd.f32 %v5316, %v5347
  %5349 = vmatmul.f32.gmra.mxu0 %v5287
  %v5350 = vpop.f32.mrf.mxu0
  %v5351 = vadd.f32 %v5319, %v5350
  %5352 = vmatmul.f32.gmra.mxu0 %v5290
  %v5353 = vpop.f32.mrf.mxu0
  %v5354 = vadd.f32 %v5322, %v5353
  %5355 = vmatmul.f32.gmra.mxu0 %v5293
  %v5356 = vpop.f32.mrf.mxu0
  %v5357 = vadd.f32 %v5325, %v5356
  %5358 = vmatmul.f32.gmra.mxu0 %v5296
  %v5359 = vpop.f32.mrf.mxu0
  %v5360 = vadd.f32 %v5328, %v5359
  %5361 = vdwg.mxu0
  %5362 = vmatpush.msra.mxu0 %v5258
  %5363 = vmatpush.msra.mxu0 %v5256
  %5364 = vmatpush.msra.mxu0 %v5254
  %5365 = vmatpush.msra.mxu0 %v5252
  %5366 = vmatpush.msra.mxu0 %v5250
  %5367 = vmatpush.msra.mxu0 %v5248
  %5368 = vmatpush.msra.mxu0 %v5246
  %5369 = vmatpush.msra.mxu0 %v5244
  %5370 = vmatpush.msra.mxu0 %v5242
  %5371 = vmatpush.msra.mxu0 %v5240
  %5372 = vmatpush.msra.mxu0 %v5238
  %5373 = vmatpush.msra.mxu0 %v5236
  %5374 = vmatpush.msra.mxu0 %v5234
  %5375 = vmatpush.msra.mxu0 %v5232
  %5376 = vmatpush.msra.mxu0 %v5230
  %5377 = vmatpush.msra.mxu0 %v5228
  %5378 = vmatmul.f32.gmra.mxu0 %v5216
  %v5379 = vpop.f32.mrf.mxu0
  %v5380 = vadd.f32 0.0, %v5379
  %5381 = vmatmul.f32.gmra.mxu0 %v5218
  %v5382 = vpop.f32.mrf.mxu0
  %v5383 = vadd.f32 0.0, %v5382
  %5384 = vmatmul.f32.gmra.mxu0 %v5220
  %v5385 = vpop.f32.mrf.mxu0
  %v5386 = vadd.f32 0.0, %v5385
  %5387 = vmatmul.f32.gmra.mxu0 %v5222
  %v5388 = vpop.f32.mrf.mxu0
  %v5389 = vadd.f32 0.0, %v5388
  %5390 = vmatmul.f32.gmra.mxu0 %v5224
  %v5391 = vpop.f32.mrf.mxu0
  %v5392 = vadd.f32 0.0, %v5391
  %5393 = vdwg.mxu0
  %5394 = vmatpush.msra.mxu0 0.0
  %5395 = vmatpush.msra.mxu0 0.0
  %5396 = vmatpush.msra.mxu0 0.0
  %5397 = vmatpush.msra.mxu0 0.0
  %5398 = vmatpush.msra.mxu0 %v5282
  %5399 = vmatpush.msra.mxu0 %v5280
  %5400 = vmatpush.msra.mxu0 %v5278
  %5401 = vmatpush.msra.mxu0 %v5276
  %5402 = vmatpush.msra.mxu0 %v5274
  %5403 = vmatpush.msra.mxu0 %v5272
  %5404 = vmatpush.msra.mxu0 %v5270
  %5405 = vmatpush.msra.mxu0 %v5268
  %5406 = vmatpush.msra.mxu0 %v5266
  %5407 = vmatpush.msra.mxu0 %v5264
  %5408 = vmatpush.msra.mxu0 %v5262
  %5409 = vmatpush.msra.mxu0 %v5260
  %5410 = vmatmul.f32.gmra.mxu0 %v5284
  %v5411 = vpop.f32.mrf.mxu0
  %v5412 = vadd.f32 %v5380, %v5411
  %5413 = vmatmul.f32.gmra.mxu0 %v5287
  %v5414 = vpop.f32.mrf.mxu0
  %v5415 = vadd.f32 %v5383, %v5414
  %5416 = vmatmul.f32.gmra.mxu0 %v5290
  %v5417 = vpop.f32.mrf.mxu0
  %v5418 = vadd.f32 %v5386, %v5417
  %5419 = vmatmul.f32.gmra.mxu0 %v5293
  %v5420 = vpop.f32.mrf.mxu0
  %v5421 = vadd.f32 %v5389, %v5420
  %5422 = vmatmul.f32.gmra.mxu0 %v5296
  %v5423 = vpop.f32.mrf.mxu0
  %v5424 = vadd.f32 %v5392, %v5423
  %5425 = vdwg.mxu0
  %s5426 = scalar_lea.vmem %s3, 3136
  %v5427 = vld [vmem:[%s5426] sm:$0xff]
  %v5428 = vld [vmem:[%s5426 + $0x8] sm:$0xff]
  %v5429 = vld [vmem:[%s5426 + $0x10] sm:$0xff]
  %v5430 = vld [vmem:[%s5426 + $0x18] sm:$0xff]
  %v5431 = vld [vmem:[%s5426 + $0x20] sm:$0xff]
  %v5432 = vld [vmem:[%s5426 + $0x28] sm:$0xff]
  %v5433 = vld [vmem:[%s5426 + $0x30] sm:$0xff]
  %v5434 = vld [vmem:[%s5426 + $0x38] sm:$0xff]
  %v5435 = vld [vmem:[%s5426 + $0x40] sm:$0xff]
  %v5436 = vld [vmem:[%s5426 + $0x48] sm:$0xff]
  %v5437 = vld [vmem:[%s5426 + $0x50] sm:$0xff]
  %v5438 = vld [vmem:[%s5426 + $0x58] sm:$0xff]
  %v5439 = vld [vmem:[%s5426 + $0x60] sm:$0xff]
  %v5440 = vld [vmem:[%s5426 + $0x68] sm:$0xff]
  %v5441 = vld [vmem:[%s5426 + $0x70] sm:$0xff]
  %v5442 = vld [vmem:[%s5426 + $0x78] sm:$0xff]
  %v5443 = vld [vmem:[%s5426 + $0x80] sm:$0xff]
  %v5444 = vld [vmem:[%s5426 + $0x88] sm:$0xff]
  %v5445 = vld [vmem:[%s5426 + $0x90] sm:$0xff]
  %v5446 = vld [vmem:[%s5426 + $0x98] sm:$0xff]
  %v5447 = vld [vmem:[%s5426 + $0xa0] sm:$0xff]
  %v5448 = vld [vmem:[%s5426 + $0xa8] sm:$0xff]
  %v5449 = vld [vmem:[%s5426 + $0xb0] sm:$0xff]
  %v5450 = vld [vmem:[%s5426 + $0xb8] sm:$0xff]
  %v5451 = vld [vmem:[%s5426 + $0xc0] sm:$0xff]
  %v5452 = vld [vmem:[%s5426 + $0xc8] sm:$0xff]
  %v5453 = vld [vmem:[%s5426 + $0xd0] sm:$0xff]
  %v5454 = vld [vmem:[%s5426 + $0xd8] sm:$0xff]
  %v5455 = vld [vmem:[%s5426 + $0xe0] sm:$0xff]
  %v5456 = vld [vmem:[%s5426 + $0xe8] sm:$0xff]
  %v5457 = vld [vmem:[%s5426 + $0xf0] sm:$0xff]
  %v5458 = vld [vmem:[%s5426 + $0xf8] sm:$0xff]
  %v5459 = vld [vmem:[%s5426 + $0x100] sm:$0xff]
  %v5460 = vld [vmem:[%s5426 + $0x108] sm:$0xff]
  %v5461 = vld [vmem:[%s5426 + $0x110] sm:$0xff]
  %v5462 = vld [vmem:[%s5426 + $0x118] sm:$0xff]
  %v5463 = vld [vmem:[%s5426 + $0x120] sm:$0xff]
  %v5464 = vld [vmem:[%s5426 + $0x128] sm:$0xff]
  %v5465 = vld [vmem:[%s5426 + $0x130] sm:$0xff]
  %v5466 = vld [vmem:[%s5426 + $0x138] sm:$0xff]
  %v5467 = vld [vmem:[%s5426 + $0x140] sm:$0xff]
  %v5468 = vld [vmem:[%s5426 + $0x148] sm:$0xff]
  %v5469 = vld [vmem:[%s5426 + $0x150] sm:$0xff]
  %v5470 = vld [vmem:[%s5426 + $0x158] sm:$0xff]
  %v5471 = vld [vmem:[%s5426 + $0x160] sm:$0xff]
  %v5472 = vld [vmem:[%s5426 + $0x168] sm:$0xff]
  %v5473 = vld [vmem:[%s5426 + $0x170] sm:$0xff]
  %v5474 = vld [vmem:[%s5426 + $0x178] sm:$0xff]
  %v5475 = vld [vmem:[%s5426 + $0x180] sm:$0xff]
  %v5476 = vld [vmem:[%s5426 + $0x188] sm:$0xff]
  %v5477 = vld [vmem:[%s5426 + $0x190] sm:$0xff]
  %v5478 = vld [vmem:[%s5426 + $0x198] sm:$0xff]
  %v5479 = vld [vmem:[%s5426 + $0x1a0] sm:$0xff]
  %v5480 = vld [vmem:[%s5426 + $0x1a8] sm:$0xff]
  %v5481 = vld [vmem:[%s5426 + $0x1b0] sm:$0xff]
  %v5482 = vld [vmem:[%s5426 + $0x1b8] sm:$0xff]
  %5483 = vmatpush.msra.mxu0 %v5457
  %5484 = vmatpush.msra.mxu0 %v5455
  %5485 = vmatpush.msra.mxu0 %v5453
  %5486 = vmatpush.msra.mxu0 %v5451
  %5487 = vmatpush.msra.mxu0 %v5449
  %5488 = vmatpush.msra.mxu0 %v5447
  %5489 = vmatpush.msra.mxu0 %v5445
  %5490 = vmatpush.msra.mxu0 %v5443
  %5491 = vmatpush.msra.mxu0 %v5441
  %5492 = vmatpush.msra.mxu0 %v5439
  %5493 = vmatpush.msra.mxu0 %v5437
  %5494 = vmatpush.msra.mxu0 %v5435
  %5495 = vmatpush.msra.mxu0 %v5433
  %5496 = vmatpush.msra.mxu0 %v5431
  %5497 = vmatpush.msra.mxu0 %v5429
  %5498 = vmatpush.msra.mxu0 %v5427
  %5499 = vmatmul.f32.gmra.mxu0 %v5216
  %v5500 = vpop.f32.mrf.mxu0
  %v5501 = vadd.f32 0.0, %v5500
  %5502 = vmatmul.f32.gmra.mxu0 %v5218
  %v5503 = vpop.f32.mrf.mxu0
  %v5504 = vadd.f32 0.0, %v5503
  %5505 = vmatmul.f32.gmra.mxu0 %v5220
  %v5506 = vpop.f32.mrf.mxu0
  %v5507 = vadd.f32 0.0, %v5506
  %5508 = vmatmul.f32.gmra.mxu0 %v5222
  %v5509 = vpop.f32.mrf.mxu0
  %v5510 = vadd.f32 0.0, %v5509
  %5511 = vmatmul.f32.gmra.mxu0 %v5224
  %v5512 = vpop.f32.mrf.mxu0
  %v5513 = vadd.f32 0.0, %v5512
  %5514 = vdwg.mxu0
  %5515 = vmatpush.msra.mxu0 0.0
  %5516 = vmatpush.msra.mxu0 0.0
  %5517 = vmatpush.msra.mxu0 0.0
  %5518 = vmatpush.msra.mxu0 0.0
  %5519 = vmatpush.msra.mxu0 %v5481
  %5520 = vmatpush.msra.mxu0 %v5479
  %5521 = vmatpush.msra.mxu0 %v5477
  %5522 = vmatpush.msra.mxu0 %v5475
  %5523 = vmatpush.msra.mxu0 %v5473
  %5524 = vmatpush.msra.mxu0 %v5471
  %5525 = vmatpush.msra.mxu0 %v5469
  %5526 = vmatpush.msra.mxu0 %v5467
  %5527 = vmatpush.msra.mxu0 %v5465
  %5528 = vmatpush.msra.mxu0 %v5463
  %5529 = vmatpush.msra.mxu0 %v5461
  %5530 = vmatpush.msra.mxu0 %v5459
  %5531 = vmatmul.f32.gmra.mxu0 %v5284
  %v5532 = vpop.f32.mrf.mxu0
  %v5533 = vadd.f32 %v5501, %v5532
  %5534 = vmatmul.f32.gmra.mxu0 %v5287
  %v5535 = vpop.f32.mrf.mxu0
  %v5536 = vadd.f32 %v5504, %v5535
  %5537 = vmatmul.f32.gmra.mxu0 %v5290
  %v5538 = vpop.f32.mrf.mxu0
  %v5539 = vadd.f32 %v5507, %v5538
  %5540 = vmatmul.f32.gmra.mxu0 %v5293
  %v5541 = vpop.f32.mrf.mxu0
  %v5542 = vadd.f32 %v5510, %v5541
  %5543 = vmatmul.f32.gmra.mxu0 %v5296
  %v5544 = vpop.f32.mrf.mxu0
  %v5545 = vadd.f32 %v5513, %v5544
  %5546 = vdwg.mxu0
  %5547 = vmatpush.msra.mxu0 %v5458
  %5548 = vmatpush.msra.mxu0 %v5456
  %5549 = vmatpush.msra.mxu0 %v5454
  %5550 = vmatpush.msra.mxu0 %v5452
  %5551 = vmatpush.msra.mxu0 %v5450
  %5552 = vmatpush.msra.mxu0 %v5448
  %5553 = vmatpush.msra.mxu0 %v5446
  %5554 = vmatpush.msra.mxu0 %v5444
  %5555 = vmatpush.msra.mxu0 %v5442
  %5556 = vmatpush.msra.mxu0 %v5440
  %5557 = vmatpush.msra.mxu0 %v5438
  %5558 = vmatpush.msra.mxu0 %v5436
  %5559 = vmatpush.msra.mxu0 %v5434
  %5560 = vmatpush.msra.mxu0 %v5432
  %5561 = vmatpush.msra.mxu0 %v5430
  %5562 = vmatpush.msra.mxu0 %v5428
  %5563 = vmatmul.f32.gmra.mxu0 %v5216
  %v5564 = vpop.f32.mrf.mxu0
  %v5565 = vadd.f32 0.0, %v5564
  %5566 = vmatmul.f32.gmra.mxu0 %v5218
  %v5567 = vpop.f32.mrf.mxu0
  %v5568 = vadd.f32 0.0, %v5567
  %5569 = vmatmul.f32.gmra.mxu0 %v5220
  %v5570 = vpop.f32.mrf.mxu0
  %v5571 = vadd.f32 0.0, %v5570
  %5572 = vmatmul.f32.gmra.mxu0 %v5222
  %v5573 = vpop.f32.mrf.mxu0
  %v5574 = vadd.f32 0.0, %v5573
  %5575 = vmatmul.f32.gmra.mxu0 %v5224
  %v5576 = vpop.f32.mrf.mxu0
  %v5577 = vadd.f32 0.0, %v5576
  %5578 = vdwg.mxu0
  %5579 = vmatpush.msra.mxu0 0.0
  %5580 = vmatpush.msra.mxu0 0.0
  %5581 = vmatpush.msra.mxu0 0.0
  %5582 = vmatpush.msra.mxu0 0.0
  %5583 = vmatpush.msra.mxu0 %v5482
  %5584 = vmatpush.msra.mxu0 %v5480
  %5585 = vmatpush.msra.mxu0 %v5478
  %5586 = vmatpush.msra.mxu0 %v5476
  %5587 = vmatpush.msra.mxu0 %v5474
  %5588 = vmatpush.msra.mxu0 %v5472
  %5589 = vmatpush.msra.mxu0 %v5470
  %5590 = vmatpush.msra.mxu0 %v5468
  %5591 = vmatpush.msra.mxu0 %v5466
  %5592 = vmatpush.msra.mxu0 %v5464
  %5593 = vmatpush.msra.mxu0 %v5462
  %5594 = vmatpush.msra.mxu0 %v5460
  %5595 = vmatmul.f32.gmra.mxu0 %v5284
  %v5596 = vpop.f32.mrf.mxu0
  %v5597 = vadd.f32 %v5565, %v5596
  %5598 = vmatmul.f32.gmra.mxu0 %v5287
  %v5599 = vpop.f32.mrf.mxu0
  %v5600 = vadd.f32 %v5568, %v5599
  %5601 = vmatmul.f32.gmra.mxu0 %v5290
  %v5602 = vpop.f32.mrf.mxu0
  %v5603 = vadd.f32 %v5571, %v5602
  %5604 = vmatmul.f32.gmra.mxu0 %v5293
  %v5605 = vpop.f32.mrf.mxu0
  %v5606 = vadd.f32 %v5574, %v5605
  %5607 = vmatmul.f32.gmra.mxu0 %v5296
  %v5608 = vpop.f32.mrf.mxu0
  %v5609 = vadd.f32 %v5577, %v5608
  %5610 = vdwg.mxu0
  %v5611 = vadd.f32 %v5010, %v5348
  %v5612 = vadd.f32 %v5074, %v5412
  %v5613 = vadd.f32 %v5013, %v5351
  %v5614 = vadd.f32 %v5077, %v5415
  %v5615 = vadd.f32 %v5016, %v5354
  %v5616 = vadd.f32 %v5080, %v5418
  %v5617 = vadd.f32 %v5019, %v5357
  %v5618 = vadd.f32 %v5083, %v5421
  %v5619 = vadd.f32 %v5022, %v5360
  %v5620 = vadd.f32 %v5086, %v5424
  %v5621 = vadd.f32 %v5138, %v5533
  %v5622 = vadd.f32 %v5202, %v5597
  %v5623 = vadd.f32 %v5141, %v5536
  %v5624 = vadd.f32 %v5205, %v5600
  %v5625 = vadd.f32 %v5144, %v5539
  %v5626 = vadd.f32 %v5208, %v5603
  %v5627 = vadd.f32 %v5147, %v5542
  %v5628 = vadd.f32 %v5211, %v5606
  %v5629 = vadd.f32 %v5150, %v5545
  %v5630 = vadd.f32 %v5214, %v5609
  %v5631 = vld [vmem:[#allocation3 + $0x10] sm:$0xff]
  %v5632 = vld [vmem:[#allocation3 + $0x18] sm:$0xff]
  %v5633 = vld [vmem:[#allocation3 + $0x20] sm:$0xff]
  %v5634 = vld [vmem:[#allocation3 + $0x28] sm:$0xff]
  %v5635 = vld [vmem:[#allocation3 + $0x30] sm:$0xff]
  %v5636 = vld [vmem:[#allocation3 + $0x38] sm:$0xff]
  %v5637 = vld [vmem:[#allocation3 + $0x40] sm:$0xff]
  %v5638 = vld [vmem:[#allocation3 + $0x48] sm:$0xff]
  %v5639 = vld [vmem:[#allocation3 + $0x50] sm:$0xff]
  %v5640 = vld [vmem:[#allocation3 + $0x58] sm:$0xff]
  %s5641 = scalar_lea.vmem %s3, 1344
  %v5642 = vld [vmem:[%s5641] sm:$0xff]
  %v5643 = vld [vmem:[%s5641 + $0x8] sm:$0xff]
  %v5644 = vld [vmem:[%s5641 + $0x10] sm:$0xff]
  %v5645 = vld [vmem:[%s5641 + $0x18] sm:$0xff]
  %v5646 = vld [vmem:[%s5641 + $0x20] sm:$0xff]
  %v5647 = vld [vmem:[%s5641 + $0x28] sm:$0xff]
  %v5648 = vld [vmem:[%s5641 + $0x30] sm:$0xff]
  %v5649 = vld [vmem:[%s5641 + $0x38] sm:$0xff]
  %v5650 = vld [vmem:[%s5641 + $0x40] sm:$0xff]
  %v5651 = vld [vmem:[%s5641 + $0x48] sm:$0xff]
  %v5652 = vld [vmem:[%s5641 + $0x50] sm:$0xff]
  %v5653 = vld [vmem:[%s5641 + $0x58] sm:$0xff]
  %v5654 = vld [vmem:[%s5641 + $0x60] sm:$0xff]
  %v5655 = vld [vmem:[%s5641 + $0x68] sm:$0xff]
  %v5656 = vld [vmem:[%s5641 + $0x70] sm:$0xff]
  %v5657 = vld [vmem:[%s5641 + $0x78] sm:$0xff]
  %v5658 = vld [vmem:[%s5641 + $0x80] sm:$0xff]
  %v5659 = vld [vmem:[%s5641 + $0x88] sm:$0xff]
  %v5660 = vld [vmem:[%s5641 + $0x90] sm:$0xff]
  %v5661 = vld [vmem:[%s5641 + $0x98] sm:$0xff]
  %v5662 = vld [vmem:[%s5641 + $0xa0] sm:$0xff]
  %v5663 = vld [vmem:[%s5641 + $0xa8] sm:$0xff]
  %v5664 = vld [vmem:[%s5641 + $0xb0] sm:$0xff]
  %v5665 = vld [vmem:[%s5641 + $0xb8] sm:$0xff]
  %v5666 = vld [vmem:[%s5641 + $0xc0] sm:$0xff]
  %v5667 = vld [vmem:[%s5641 + $0xc8] sm:$0xff]
  %v5668 = vld [vmem:[%s5641 + $0xd0] sm:$0xff]
  %v5669 = vld [vmem:[%s5641 + $0xd8] sm:$0xff]
  %v5670 = vld [vmem:[%s5641 + $0xe0] sm:$0xff]
  %v5671 = vld [vmem:[%s5641 + $0xe8] sm:$0xff]
  %v5672 = vld [vmem:[%s5641 + $0xf0] sm:$0xff]
  %v5673 = vld [vmem:[%s5641 + $0xf8] sm:$0xff]
  %v5674 = vld [vmem:[%s5641 + $0x100] sm:$0xff]
  %v5675 = vld [vmem:[%s5641 + $0x108] sm:$0xff]
  %v5676 = vld [vmem:[%s5641 + $0x110] sm:$0xff]
  %v5677 = vld [vmem:[%s5641 + $0x118] sm:$0xff]
  %v5678 = vld [vmem:[%s5641 + $0x120] sm:$0xff]
  %v5679 = vld [vmem:[%s5641 + $0x128] sm:$0xff]
  %v5680 = vld [vmem:[%s5641 + $0x130] sm:$0xff]
  %v5681 = vld [vmem:[%s5641 + $0x138] sm:$0xff]
  %v5682 = vld [vmem:[%s5641 + $0x140] sm:$0xff]
  %v5683 = vld [vmem:[%s5641 + $0x148] sm:$0xff]
  %v5684 = vld [vmem:[%s5641 + $0x150] sm:$0xff]
  %v5685 = vld [vmem:[%s5641 + $0x158] sm:$0xff]
  %v5686 = vld [vmem:[%s5641 + $0x160] sm:$0xff]
  %v5687 = vld [vmem:[%s5641 + $0x168] sm:$0xff]
  %v5688 = vld [vmem:[%s5641 + $0x170] sm:$0xff]
  %v5689 = vld [vmem:[%s5641 + $0x178] sm:$0xff]
  %v5690 = vld [vmem:[%s5641 + $0x180] sm:$0xff]
  %v5691 = vld [vmem:[%s5641 + $0x188] sm:$0xff]
  %v5692 = vld [vmem:[%s5641 + $0x190] sm:$0xff]
  %v5693 = vld [vmem:[%s5641 + $0x198] sm:$0xff]
  %v5694 = vld [vmem:[%s5641 + $0x1a0] sm:$0xff]
  %v5695 = vld [vmem:[%s5641 + $0x1a8] sm:$0xff]
  %v5696 = vld [vmem:[%s5641 + $0x1b0] sm:$0xff]
  %v5697 = vld [vmem:[%s5641 + $0x1b8] sm:$0xff]
  %v5699 = vsel %vm127, %v5632, 0
  %v5702 = vsel %vm127, %v5634, 0
  %v5705 = vsel %vm127, %v5636, 0
  %v5708 = vsel %vm127, %v5638, 0
  %v5711 = vsel %vm127, %v5640, 0
  %5713 = vmatpush.msra.mxu0 %v5672
  %5714 = vmatpush.msra.mxu0 %v5670
  %5715 = vmatpush.msra.mxu0 %v5668
  %5716 = vmatpush.msra.mxu0 %v5666
  %5717 = vmatpush.msra.mxu0 %v5664
  %5718 = vmatpush.msra.mxu0 %v5662
  %5719 = vmatpush.msra.mxu0 %v5660
  %5720 = vmatpush.msra.mxu0 %v5658
  %5721 = vmatpush.msra.mxu0 %v5656
  %5722 = vmatpush.msra.mxu0 %v5654
  %5723 = vmatpush.msra.mxu0 %v5652
  %5724 = vmatpush.msra.mxu0 %v5650
  %5725 = vmatpush.msra.mxu0 %v5648
  %5726 = vmatpush.msra.mxu0 %v5646
  %5727 = vmatpush.msra.mxu0 %v5644
  %5728 = vmatpush.msra.mxu0 %v5642
  %5729 = vmatmul.f32.gmra.mxu0 %v5631
  %v5730 = vpop.f32.mrf.mxu0
  %v5731 = vadd.f32 0.0, %v5730
  %5732 = vmatmul.f32.gmra.mxu0 %v5633
  %v5733 = vpop.f32.mrf.mxu0
  %v5734 = vadd.f32 0.0, %v5733
  %5735 = vmatmul.f32.gmra.mxu0 %v5635
  %v5736 = vpop.f32.mrf.mxu0
  %v5737 = vadd.f32 0.0, %v5736
  %5738 = vmatmul.f32.gmra.mxu0 %v5637
  %v5739 = vpop.f32.mrf.mxu0
  %v5740 = vadd.f32 0.0, %v5739
  %5741 = vmatmul.f32.gmra.mxu0 %v5639
  %v5742 = vpop.f32.mrf.mxu0
  %v5743 = vadd.f32 0.0, %v5742
  %5744 = vdwg.mxu0
  %5745 = vmatpush.msra.mxu0 0.0
  %5746 = vmatpush.msra.mxu0 0.0
  %5747 = vmatpush.msra.mxu0 0.0
  %5748 = vmatpush.msra.mxu0 0.0
  %5749 = vmatpush.msra.mxu0 %v5696
  %5750 = vmatpush.msra.mxu0 %v5694
  %5751 = vmatpush.msra.mxu0 %v5692
  %5752 = vmatpush.msra.mxu0 %v5690
  %5753 = vmatpush.msra.mxu0 %v5688
  %5754 = vmatpush.msra.mxu0 %v5686
  %5755 = vmatpush.msra.mxu0 %v5684
  %5756 = vmatpush.msra.mxu0 %v5682
  %5757 = vmatpush.msra.mxu0 %v5680
  %5758 = vmatpush.msra.mxu0 %v5678
  %5759 = vmatpush.msra.mxu0 %v5676
  %5760 = vmatpush.msra.mxu0 %v5674
  %5761 = vmatmul.f32.gmra.mxu0 %v5699
  %v5762 = vpop.f32.mrf.mxu0
  %v5763 = vadd.f32 %v5731, %v5762
  %5764 = vmatmul.f32.gmra.mxu0 %v5702
  %v5765 = vpop.f32.mrf.mxu0
  %v5766 = vadd.f32 %v5734, %v5765
  %5767 = vmatmul.f32.gmra.mxu0 %v5705
  %v5768 = vpop.f32.mrf.mxu0
  %v5769 = vadd.f32 %v5737, %v5768
  %5770 = vmatmul.f32.gmra.mxu0 %v5708
  %v5771 = vpop.f32.mrf.mxu0
  %v5772 = vadd.f32 %v5740, %v5771
  %5773 = vmatmul.f32.gmra.mxu0 %v5711
  %v5774 = vpop.f32.mrf.mxu0
  %v5775 = vadd.f32 %v5743, %v5774
  %5776 = vdwg.mxu0
  %5777 = vmatpush.msra.mxu0 %v5673
  %5778 = vmatpush.msra.mxu0 %v5671
  %5779 = vmatpush.msra.mxu0 %v5669
  %5780 = vmatpush.msra.mxu0 %v5667
  %5781 = vmatpush.msra.mxu0 %v5665
  %5782 = vmatpush.msra.mxu0 %v5663
  %5783 = vmatpush.msra.mxu0 %v5661
  %5784 = vmatpush.msra.mxu0 %v5659
  %5785 = vmatpush.msra.mxu0 %v5657
  %5786 = vmatpush.msra.mxu0 %v5655
  %5787 = vmatpush.msra.mxu0 %v5653
  %5788 = vmatpush.msra.mxu0 %v5651
  %5789 = vmatpush.msra.mxu0 %v5649
  %5790 = vmatpush.msra.mxu0 %v5647
  %5791 = vmatpush.msra.mxu0 %v5645
  %5792 = vmatpush.msra.mxu0 %v5643
  %5793 = vmatmul.f32.gmra.mxu0 %v5631
  %v5794 = vpop.f32.mrf.mxu0
  %v5795 = vadd.f32 0.0, %v5794
  %5796 = vmatmul.f32.gmra.mxu0 %v5633
  %v5797 = vpop.f32.mrf.mxu0
  %v5798 = vadd.f32 0.0, %v5797
  %5799 = vmatmul.f32.gmra.mxu0 %v5635
  %v5800 = vpop.f32.mrf.mxu0
  %v5801 = vadd.f32 0.0, %v5800
  %5802 = vmatmul.f32.gmra.mxu0 %v5637
  %v5803 = vpop.f32.mrf.mxu0
  %v5804 = vadd.f32 0.0, %v5803
  %5805 = vmatmul.f32.gmra.mxu0 %v5639
  %v5806 = vpop.f32.mrf.mxu0
  %v5807 = vadd.f32 0.0, %v5806
  %5808 = vdwg.mxu0
  %5809 = vmatpush.msra.mxu0 0.0
  %5810 = vmatpush.msra.mxu0 0.0
  %5811 = vmatpush.msra.mxu0 0.0
  %5812 = vmatpush.msra.mxu0 0.0
  %5813 = vmatpush.msra.mxu0 %v5697
  %5814 = vmatpush.msra.mxu0 %v5695
  %5815 = vmatpush.msra.mxu0 %v5693
  %5816 = vmatpush.msra.mxu0 %v5691
  %5817 = vmatpush.msra.mxu0 %v5689
  %5818 = vmatpush.msra.mxu0 %v5687
  %5819 = vmatpush.msra.mxu0 %v5685
  %5820 = vmatpush.msra.mxu0 %v5683
  %5821 = vmatpush.msra.mxu0 %v5681
  %5822 = vmatpush.msra.mxu0 %v5679
  %5823 = vmatpush.msra.mxu0 %v5677
  %5824 = vmatpush.msra.mxu0 %v5675
  %5825 = vmatmul.f32.gmra.mxu0 %v5699
  %v5826 = vpop.f32.mrf.mxu0
  %v5827 = vadd.f32 %v5795, %v5826
  %5828 = vmatmul.f32.gmra.mxu0 %v5702
  %v5829 = vpop.f32.mrf.mxu0
  %v5830 = vadd.f32 %v5798, %v5829
  %5831 = vmatmul.f32.gmra.mxu0 %v5705
  %v5832 = vpop.f32.mrf.mxu0
  %v5833 = vadd.f32 %v5801, %v5832
  %5834 = vmatmul.f32.gmra.mxu0 %v5708
  %v5835 = vpop.f32.mrf.mxu0
  %v5836 = vadd.f32 %v5804, %v5835
  %5837 = vmatmul.f32.gmra.mxu0 %v5711
  %v5838 = vpop.f32.mrf.mxu0
  %v5839 = vadd.f32 %v5807, %v5838
  %5840 = vdwg.mxu0
  %s5841 = scalar_lea.vmem %s3, 3584
  %v5842 = vld [vmem:[%s5841] sm:$0xff]
  %v5843 = vld [vmem:[%s5841 + $0x8] sm:$0xff]
  %v5844 = vld [vmem:[%s5841 + $0x10] sm:$0xff]
  %v5845 = vld [vmem:[%s5841 + $0x18] sm:$0xff]
  %v5846 = vld [vmem:[%s5841 + $0x20] sm:$0xff]
  %v5847 = vld [vmem:[%s5841 + $0x28] sm:$0xff]
  %v5848 = vld [vmem:[%s5841 + $0x30] sm:$0xff]
  %v5849 = vld [vmem:[%s5841 + $0x38] sm:$0xff]
  %v5850 = vld [vmem:[%s5841 + $0x40] sm:$0xff]
  %v5851 = vld [vmem:[%s5841 + $0x48] sm:$0xff]
  %v5852 = vld [vmem:[%s5841 + $0x50] sm:$0xff]
  %v5853 = vld [vmem:[%s5841 + $0x58] sm:$0xff]
  %v5854 = vld [vmem:[%s5841 + $0x60] sm:$0xff]
  %v5855 = vld [vmem:[%s5841 + $0x68] sm:$0xff]
  %v5856 = vld [vmem:[%s5841 + $0x70] sm:$0xff]
  %v5857 = vld [vmem:[%s5841 + $0x78] sm:$0xff]
  %v5858 = vld [vmem:[%s5841 + $0x80] sm:$0xff]
  %v5859 = vld [vmem:[%s5841 + $0x88] sm:$0xff]
  %v5860 = vld [vmem:[%s5841 + $0x90] sm:$0xff]
  %v5861 = vld [vmem:[%s5841 + $0x98] sm:$0xff]
  %v5862 = vld [vmem:[%s5841 + $0xa0] sm:$0xff]
  %v5863 = vld [vmem:[%s5841 + $0xa8] sm:$0xff]
  %v5864 = vld [vmem:[%s5841 + $0xb0] sm:$0xff]
  %v5865 = vld [vmem:[%s5841 + $0xb8] sm:$0xff]
  %v5866 = vld [vmem:[%s5841 + $0xc0] sm:$0xff]
  %v5867 = vld [vmem:[%s5841 + $0xc8] sm:$0xff]
  %v5868 = vld [vmem:[%s5841 + $0xd0] sm:$0xff]
  %v5869 = vld [vmem:[%s5841 + $0xd8] sm:$0xff]
  %v5870 = vld [vmem:[%s5841 + $0xe0] sm:$0xff]
  %v5871 = vld [vmem:[%s5841 + $0xe8] sm:$0xff]
  %v5872 = vld [vmem:[%s5841 + $0xf0] sm:$0xff]
  %v5873 = vld [vmem:[%s5841 + $0xf8] sm:$0xff]
  %v5874 = vld [vmem:[%s5841 + $0x100] sm:$0xff]
  %v5875 = vld [vmem:[%s5841 + $0x108] sm:$0xff]
  %v5876 = vld [vmem:[%s5841 + $0x110] sm:$0xff]
  %v5877 = vld [vmem:[%s5841 + $0x118] sm:$0xff]
  %v5878 = vld [vmem:[%s5841 + $0x120] sm:$0xff]
  %v5879 = vld [vmem:[%s5841 + $0x128] sm:$0xff]
  %v5880 = vld [vmem:[%s5841 + $0x130] sm:$0xff]
  %v5881 = vld [vmem:[%s5841 + $0x138] sm:$0xff]
  %v5882 = vld [vmem:[%s5841 + $0x140] sm:$0xff]
  %v5883 = vld [vmem:[%s5841 + $0x148] sm:$0xff]
  %v5884 = vld [vmem:[%s5841 + $0x150] sm:$0xff]
  %v5885 = vld [vmem:[%s5841 + $0x158] sm:$0xff]
  %v5886 = vld [vmem:[%s5841 + $0x160] sm:$0xff]
  %v5887 = vld [vmem:[%s5841 + $0x168] sm:$0xff]
  %v5888 = vld [vmem:[%s5841 + $0x170] sm:$0xff]
  %v5889 = vld [vmem:[%s5841 + $0x178] sm:$0xff]
  %v5890 = vld [vmem:[%s5841 + $0x180] sm:$0xff]
  %v5891 = vld [vmem:[%s5841 + $0x188] sm:$0xff]
  %v5892 = vld [vmem:[%s5841 + $0x190] sm:$0xff]
  %v5893 = vld [vmem:[%s5841 + $0x198] sm:$0xff]
  %v5894 = vld [vmem:[%s5841 + $0x1a0] sm:$0xff]
  %v5895 = vld [vmem:[%s5841 + $0x1a8] sm:$0xff]
  %v5896 = vld [vmem:[%s5841 + $0x1b0] sm:$0xff]
  %v5897 = vld [vmem:[%s5841 + $0x1b8] sm:$0xff]
  %5898 = vmatpush.msra.mxu0 %v5872
  %5899 = vmatpush.msra.mxu0 %v5870
  %5900 = vmatpush.msra.mxu0 %v5868
  %5901 = vmatpush.msra.mxu0 %v5866
  %5902 = vmatpush.msra.mxu0 %v5864
  %5903 = vmatpush.msra.mxu0 %v5862
  %5904 = vmatpush.msra.mxu0 %v5860
  %5905 = vmatpush.msra.mxu0 %v5858
  %5906 = vmatpush.msra.mxu0 %v5856
  %5907 = vmatpush.msra.mxu0 %v5854
  %5908 = vmatpush.msra.mxu0 %v5852
  %5909 = vmatpush.msra.mxu0 %v5850
  %5910 = vmatpush.msra.mxu0 %v5848
  %5911 = vmatpush.msra.mxu0 %v5846
  %5912 = vmatpush.msra.mxu0 %v5844
  %5913 = vmatpush.msra.mxu0 %v5842
  %5914 = vmatmul.f32.gmra.mxu0 %v5631
  %v5915 = vpop.f32.mrf.mxu0
  %v5916 = vadd.f32 0.0, %v5915
  %5917 = vmatmul.f32.gmra.mxu0 %v5633
  %v5918 = vpop.f32.mrf.mxu0
  %v5919 = vadd.f32 0.0, %v5918
  %5920 = vmatmul.f32.gmra.mxu0 %v5635
  %v5921 = vpop.f32.mrf.mxu0
  %v5922 = vadd.f32 0.0, %v5921
  %5923 = vmatmul.f32.gmra.mxu0 %v5637
  %v5924 = vpop.f32.mrf.mxu0
  %v5925 = vadd.f32 0.0, %v5924
  %5926 = vmatmul.f32.gmra.mxu0 %v5639
  %v5927 = vpop.f32.mrf.mxu0
  %v5928 = vadd.f32 0.0, %v5927
  %5929 = vdwg.mxu0
  %5930 = vmatpush.msra.mxu0 0.0
  %5931 = vmatpush.msra.mxu0 0.0
  %5932 = vmatpush.msra.mxu0 0.0
  %5933 = vmatpush.msra.mxu0 0.0
  %5934 = vmatpush.msra.mxu0 %v5896
  %5935 = vmatpush.msra.mxu0 %v5894
  %5936 = vmatpush.msra.mxu0 %v5892
  %5937 = vmatpush.msra.mxu0 %v5890
  %5938 = vmatpush.msra.mxu0 %v5888
  %5939 = vmatpush.msra.mxu0 %v5886
  %5940 = vmatpush.msra.mxu0 %v5884
  %5941 = vmatpush.msra.mxu0 %v5882
  %5942 = vmatpush.msra.mxu0 %v5880
  %5943 = vmatpush.msra.mxu0 %v5878
  %5944 = vmatpush.msra.mxu0 %v5876
  %5945 = vmatpush.msra.mxu0 %v5874
  %5946 = vmatmul.f32.gmra.mxu0 %v5699
  %v5947 = vpop.f32.mrf.mxu0
  %v5948 = vadd.f32 %v5916, %v5947
  %5949 = vmatmul.f32.gmra.mxu0 %v5702
  %v5950 = vpop.f32.mrf.mxu0
  %v5951 = vadd.f32 %v5919, %v5950
  %5952 = vmatmul.f32.gmra.mxu0 %v5705
  %v5953 = vpop.f32.mrf.mxu0
  %v5954 = vadd.f32 %v5922, %v5953
  %5955 = vmatmul.f32.gmra.mxu0 %v5708
  %v5956 = vpop.f32.mrf.mxu0
  %v5957 = vadd.f32 %v5925, %v5956
  %5958 = vmatmul.f32.gmra.mxu0 %v5711
  %v5959 = vpop.f32.mrf.mxu0
  %v5960 = vadd.f32 %v5928, %v5959
  %5961 = vdwg.mxu0
  %5962 = vmatpush.msra.mxu0 %v5873
  %5963 = vmatpush.msra.mxu0 %v5871
  %5964 = vmatpush.msra.mxu0 %v5869
  %5965 = vmatpush.msra.mxu0 %v5867
  %5966 = vmatpush.msra.mxu0 %v5865
  %5967 = vmatpush.msra.mxu0 %v5863
  %5968 = vmatpush.msra.mxu0 %v5861
  %5969 = vmatpush.msra.mxu0 %v5859
  %5970 = vmatpush.msra.mxu0 %v5857
  %5971 = vmatpush.msra.mxu0 %v5855
  %5972 = vmatpush.msra.mxu0 %v5853
  %5973 = vmatpush.msra.mxu0 %v5851
  %5974 = vmatpush.msra.mxu0 %v5849
  %5975 = vmatpush.msra.mxu0 %v5847
  %5976 = vmatpush.msra.mxu0 %v5845
  %5977 = vmatpush.msra.mxu0 %v5843
  %5978 = vmatmul.f32.gmra.mxu0 %v5631
  %v5979 = vpop.f32.mrf.mxu0
  %v5980 = vadd.f32 0.0, %v5979
  %5981 = vmatmul.f32.gmra.mxu0 %v5633
  %v5982 = vpop.f32.mrf.mxu0
  %v5983 = vadd.f32 0.0, %v5982
  %5984 = vmatmul.f32.gmra.mxu0 %v5635
  %v5985 = vpop.f32.mrf.mxu0
  %v5986 = vadd.f32 0.0, %v5985
  %5987 = vmatmul.f32.gmra.mxu0 %v5637
  %v5988 = vpop.f32.mrf.mxu0
  %v5989 = vadd.f32 0.0, %v5988
  %5990 = vmatmul.f32.gmra.mxu0 %v5639
  %v5991 = vpop.f32.mrf.mxu0
  %v5992 = vadd.f32 0.0, %v5991
  %5993 = vdwg.mxu0
  %5994 = vmatpush.msra.mxu0 0.0
  %5995 = vmatpush.msra.mxu0 0.0
  %5996 = vmatpush.msra.mxu0 0.0
  %5997 = vmatpush.msra.mxu0 0.0
  %5998 = vmatpush.msra.mxu0 %v5897
  %5999 = vmatpush.msra.mxu0 %v5895
  %6000 = vmatpush.msra.mxu0 %v5893
  %6001 = vmatpush.msra.mxu0 %v5891
  %6002 = vmatpush.msra.mxu0 %v5889
  %6003 = vmatpush.msra.mxu0 %v5887
  %6004 = vmatpush.msra.mxu0 %v5885
  %6005 = vmatpush.msra.mxu0 %v5883
  %6006 = vmatpush.msra.mxu0 %v5881
  %6007 = vmatpush.msra.mxu0 %v5879
  %6008 = vmatpush.msra.mxu0 %v5877
  %6009 = vmatpush.msra.mxu0 %v5875
  %6010 = vmatmul.f32.gmra.mxu0 %v5699
  %v6011 = vpop.f32.mrf.mxu0
  %v6012 = vadd.f32 %v5980, %v6011
  %6013 = vmatmul.f32.gmra.mxu0 %v5702
  %v6014 = vpop.f32.mrf.mxu0
  %v6015 = vadd.f32 %v5983, %v6014
  %6016 = vmatmul.f32.gmra.mxu0 %v5705
  %v6017 = vpop.f32.mrf.mxu0
  %v6018 = vadd.f32 %v5986, %v6017
  %6019 = vmatmul.f32.gmra.mxu0 %v5708
  %v6020 = vpop.f32.mrf.mxu0
  %v6021 = vadd.f32 %v5989, %v6020
  %6022 = vmatmul.f32.gmra.mxu0 %v5711
  %v6023 = vpop.f32.mrf.mxu0
  %v6024 = vadd.f32 %v5992, %v6023
  %6025 = vdwg.mxu0
  %v6026 = vadd.f32 %v5611, %v5763
  %v6027 = vadd.f32 %v5612, %v5827
  %v6028 = vadd.f32 %v5613, %v5766
  %v6029 = vadd.f32 %v5614, %v5830
  %v6030 = vadd.f32 %v5615, %v5769
  %v6031 = vadd.f32 %v5616, %v5833
  %v6032 = vadd.f32 %v5617, %v5772
  %v6033 = vadd.f32 %v5618, %v5836
  %v6034 = vadd.f32 %v5619, %v5775
  %v6035 = vadd.f32 %v5620, %v5839
  %v6036 = vadd.f32 %v5621, %v5948
  %v6037 = vadd.f32 %v5622, %v6012
  %v6038 = vadd.f32 %v5623, %v5951
  %v6039 = vadd.f32 %v5624, %v6015
  %v6040 = vadd.f32 %v5625, %v5954
  %v6041 = vadd.f32 %v5626, %v6018
  %v6042 = vadd.f32 %v5627, %v5957
  %v6043 = vadd.f32 %v5628, %v6021
  %v6044 = vadd.f32 %v5629, %v5960
  %v6045 = vadd.f32 %v5630, %v6024
  %v6046 = vld [vmem:[#allocation2 + $0x20] sm:$0xff]
  %v6047 = vld [vmem:[#allocation2 + $0x28] sm:$0xff]
  %v6048 = vld [vmem:[#allocation2 + $0x30] sm:$0xff]
  %v6049 = vld [vmem:[#allocation2 + $0x38] sm:$0xff]
  %v6050 = vld [vmem:[#allocation2 + $0x40] sm:$0xff]
  %v6051 = vld [vmem:[#allocation2 + $0x48] sm:$0xff]
  %v6052 = vld [vmem:[#allocation2 + $0x50] sm:$0xff]
  %v6053 = vld [vmem:[#allocation2 + $0x58] sm:$0xff]
  %v6054 = vld [vmem:[#allocation2 + $0x60] sm:$0xff]
  %v6055 = vld [vmem:[#allocation2 + $0x68] sm:$0xff]
  %s6056 = scalar_lea.vmem %s3, 1792
  %v6057 = vld [vmem:[%s6056] sm:$0xff]
  %v6058 = vld [vmem:[%s6056 + $0x8] sm:$0xff]
  %v6059 = vld [vmem:[%s6056 + $0x10] sm:$0xff]
  %v6060 = vld [vmem:[%s6056 + $0x18] sm:$0xff]
  %v6061 = vld [vmem:[%s6056 + $0x20] sm:$0xff]
  %v6062 = vld [vmem:[%s6056 + $0x28] sm:$0xff]
  %v6063 = vld [vmem:[%s6056 + $0x30] sm:$0xff]
  %v6064 = vld [vmem:[%s6056 + $0x38] sm:$0xff]
  %v6065 = vld [vmem:[%s6056 + $0x40] sm:$0xff]
  %v6066 = vld [vmem:[%s6056 + $0x48] sm:$0xff]
  %v6067 = vld [vmem:[%s6056 + $0x50] sm:$0xff]
  %v6068 = vld [vmem:[%s6056 + $0x58] sm:$0xff]
  %v6069 = vld [vmem:[%s6056 + $0x60] sm:$0xff]
  %v6070 = vld [vmem:[%s6056 + $0x68] sm:$0xff]
  %v6071 = vld [vmem:[%s6056 + $0x70] sm:$0xff]
  %v6072 = vld [vmem:[%s6056 + $0x78] sm:$0xff]
  %v6073 = vld [vmem:[%s6056 + $0x80] sm:$0xff]
  %v6074 = vld [vmem:[%s6056 + $0x88] sm:$0xff]
  %v6075 = vld [vmem:[%s6056 + $0x90] sm:$0xff]
  %v6076 = vld [vmem:[%s6056 + $0x98] sm:$0xff]
  %v6077 = vld [vmem:[%s6056 + $0xa0] sm:$0xff]
  %v6078 = vld [vmem:[%s6056 + $0xa8] sm:$0xff]
  %v6079 = vld [vmem:[%s6056 + $0xb0] sm:$0xff]
  %v6080 = vld [vmem:[%s6056 + $0xb8] sm:$0xff]
  %v6081 = vld [vmem:[%s6056 + $0xc0] sm:$0xff]
  %v6082 = vld [vmem:[%s6056 + $0xc8] sm:$0xff]
  %v6083 = vld [vmem:[%s6056 + $0xd0] sm:$0xff]
  %v6084 = vld [vmem:[%s6056 + $0xd8] sm:$0xff]
  %v6085 = vld [vmem:[%s6056 + $0xe0] sm:$0xff]
  %v6086 = vld [vmem:[%s6056 + $0xe8] sm:$0xff]
  %v6087 = vld [vmem:[%s6056 + $0xf0] sm:$0xff]
  %v6088 = vld [vmem:[%s6056 + $0xf8] sm:$0xff]
  %v6089 = vld [vmem:[%s6056 + $0x100] sm:$0xff]
  %v6090 = vld [vmem:[%s6056 + $0x108] sm:$0xff]
  %v6091 = vld [vmem:[%s6056 + $0x110] sm:$0xff]
  %v6092 = vld [vmem:[%s6056 + $0x118] sm:$0xff]
  %v6093 = vld [vmem:[%s6056 + $0x120] sm:$0xff]
  %v6094 = vld [vmem:[%s6056 + $0x128] sm:$0xff]
  %v6095 = vld [vmem:[%s6056 + $0x130] sm:$0xff]
  %v6096 = vld [vmem:[%s6056 + $0x138] sm:$0xff]
  %v6097 = vld [vmem:[%s6056 + $0x140] sm:$0xff]
  %v6098 = vld [vmem:[%s6056 + $0x148] sm:$0xff]
  %v6099 = vld [vmem:[%s6056 + $0x150] sm:$0xff]
  %v6100 = vld [vmem:[%s6056 + $0x158] sm:$0xff]
  %v6101 = vld [vmem:[%s6056 + $0x160] sm:$0xff]
  %v6102 = vld [vmem:[%s6056 + $0x168] sm:$0xff]
  %v6103 = vld [vmem:[%s6056 + $0x170] sm:$0xff]
  %v6104 = vld [vmem:[%s6056 + $0x178] sm:$0xff]
  %v6105 = vld [vmem:[%s6056 + $0x180] sm:$0xff]
  %v6106 = vld [vmem:[%s6056 + $0x188] sm:$0xff]
  %v6107 = vld [vmem:[%s6056 + $0x190] sm:$0xff]
  %v6108 = vld [vmem:[%s6056 + $0x198] sm:$0xff]
  %v6109 = vld [vmem:[%s6056 + $0x1a0] sm:$0xff]
  %v6110 = vld [vmem:[%s6056 + $0x1a8] sm:$0xff]
  %v6111 = vld [vmem:[%s6056 + $0x1b0] sm:$0xff]
  %v6112 = vld [vmem:[%s6056 + $0x1b8] sm:$0xff]
  %v6114 = vsel %vm127, %v6047, 0
  %v6117 = vsel %vm127, %v6049, 0
  %v6120 = vsel %vm127, %v6051, 0
  %v6123 = vsel %vm127, %v6053, 0
  %v6126 = vsel %vm127, %v6055, 0
  %6128 = vmatpush.msra.mxu0 %v6087
  %6129 = vmatpush.msra.mxu0 %v6085
  %6130 = vmatpush.msra.mxu0 %v6083
  %6131 = vmatpush.msra.mxu0 %v6081
  %6132 = vmatpush.msra.mxu0 %v6079
  %6133 = vmatpush.msra.mxu0 %v6077
  %6134 = vmatpush.msra.mxu0 %v6075
  %6135 = vmatpush.msra.mxu0 %v6073
  %6136 = vmatpush.msra.mxu0 %v6071
  %6137 = vmatpush.msra.mxu0 %v6069
  %6138 = vmatpush.msra.mxu0 %v6067
  %6139 = vmatpush.msra.mxu0 %v6065
  %6140 = vmatpush.msra.mxu0 %v6063
  %6141 = vmatpush.msra.mxu0 %v6061
  %6142 = vmatpush.msra.mxu0 %v6059
  %6143 = vmatpush.msra.mxu0 %v6057
  %6144 = vmatmul.f32.gmra.mxu0 %v6046
  %v6145 = vpop.f32.mrf.mxu0
  %v6146 = vadd.f32 0.0, %v6145
  %6147 = vmatmul.f32.gmra.mxu0 %v6048
  %v6148 = vpop.f32.mrf.mxu0
  %v6149 = vadd.f32 0.0, %v6148
  %6150 = vmatmul.f32.gmra.mxu0 %v6050
  %v6151 = vpop.f32.mrf.mxu0
  %v6152 = vadd.f32 0.0, %v6151
  %6153 = vmatmul.f32.gmra.mxu0 %v6052
  %v6154 = vpop.f32.mrf.mxu0
  %v6155 = vadd.f32 0.0, %v6154
  %6156 = vmatmul.f32.gmra.mxu0 %v6054
  %v6157 = vpop.f32.mrf.mxu0
  %v6158 = vadd.f32 0.0, %v6157
  %6159 = vdwg.mxu0
  %6160 = vmatpush.msra.mxu0 0.0
  %6161 = vmatpush.msra.mxu0 0.0
  %6162 = vmatpush.msra.mxu0 0.0
  %6163 = vmatpush.msra.mxu0 0.0
  %6164 = vmatpush.msra.mxu0 %v6111
  %6165 = vmatpush.msra.mxu0 %v6109
  %6166 = vmatpush.msra.mxu0 %v6107
  %6167 = vmatpush.msra.mxu0 %v6105
  %6168 = vmatpush.msra.mxu0 %v6103
  %6169 = vmatpush.msra.mxu0 %v6101
  %6170 = vmatpush.msra.mxu0 %v6099
  %6171 = vmatpush.msra.mxu0 %v6097
  %6172 = vmatpush.msra.mxu0 %v6095
  %6173 = vmatpush.msra.mxu0 %v6093
  %6174 = vmatpush.msra.mxu0 %v6091
  %6175 = vmatpush.msra.mxu0 %v6089
  %6176 = vmatmul.f32.gmra.mxu0 %v6114
  %v6177 = vpop.f32.mrf.mxu0
  %v6178 = vadd.f32 %v6146, %v6177
  %6179 = vmatmul.f32.gmra.mxu0 %v6117
  %v6180 = vpop.f32.mrf.mxu0
  %v6181 = vadd.f32 %v6149, %v6180
  %6182 = vmatmul.f32.gmra.mxu0 %v6120
  %v6183 = vpop.f32.mrf.mxu0
  %v6184 = vadd.f32 %v6152, %v6183
  %6185 = vmatmul.f32.gmra.mxu0 %v6123
  %v6186 = vpop.f32.mrf.mxu0
  %v6187 = vadd.f32 %v6155, %v6186
  %6188 = vmatmul.f32.gmra.mxu0 %v6126
  %v6189 = vpop.f32.mrf.mxu0
  %v6190 = vadd.f32 %v6158, %v6189
  %6191 = vdwg.mxu0
  %6192 = vmatpush.msra.mxu0 %v6088
  %6193 = vmatpush.msra.mxu0 %v6086
  %6194 = vmatpush.msra.mxu0 %v6084
  %6195 = vmatpush.msra.mxu0 %v6082
  %6196 = vmatpush.msra.mxu0 %v6080
  %6197 = vmatpush.msra.mxu0 %v6078
  %6198 = vmatpush.msra.mxu0 %v6076
  %6199 = vmatpush.msra.mxu0 %v6074
  %6200 = vmatpush.msra.mxu0 %v6072
  %6201 = vmatpush.msra.mxu0 %v6070
  %6202 = vmatpush.msra.mxu0 %v6068
  %6203 = vmatpush.msra.mxu0 %v6066
  %6204 = vmatpush.msra.mxu0 %v6064
  %6205 = vmatpush.msra.mxu0 %v6062
  %6206 = vmatpush.msra.mxu0 %v6060
  %6207 = vmatpush.msra.mxu0 %v6058
  %6208 = vmatmul.f32.gmra.mxu0 %v6046
  %v6209 = vpop.f32.mrf.mxu0
  %v6210 = vadd.f32 0.0, %v6209
  %6211 = vmatmul.f32.gmra.mxu0 %v6048
  %v6212 = vpop.f32.mrf.mxu0
  %v6213 = vadd.f32 0.0, %v6212
  %6214 = vmatmul.f32.gmra.mxu0 %v6050
  %v6215 = vpop.f32.mrf.mxu0
  %v6216 = vadd.f32 0.0, %v6215
  %6217 = vmatmul.f32.gmra.mxu0 %v6052
  %v6218 = vpop.f32.mrf.mxu0
  %v6219 = vadd.f32 0.0, %v6218
  %6220 = vmatmul.f32.gmra.mxu0 %v6054
  %v6221 = vpop.f32.mrf.mxu0
  %v6222 = vadd.f32 0.0, %v6221
  %6223 = vdwg.mxu0
  %6224 = vmatpush.msra.mxu0 0.0
  %6225 = vmatpush.msra.mxu0 0.0
  %6226 = vmatpush.msra.mxu0 0.0
  %6227 = vmatpush.msra.mxu0 0.0
  %6228 = vmatpush.msra.mxu0 %v6112
  %6229 = vmatpush.msra.mxu0 %v6110
  %6230 = vmatpush.msra.mxu0 %v6108
  %6231 = vmatpush.msra.mxu0 %v6106
  %6232 = vmatpush.msra.mxu0 %v6104
  %6233 = vmatpush.msra.mxu0 %v6102
  %6234 = vmatpush.msra.mxu0 %v6100
  %6235 = vmatpush.msra.mxu0 %v6098
  %6236 = vmatpush.msra.mxu0 %v6096
  %6237 = vmatpush.msra.mxu0 %v6094
  %6238 = vmatpush.msra.mxu0 %v6092
  %6239 = vmatpush.msra.mxu0 %v6090
  %6240 = vmatmul.f32.gmra.mxu0 %v6114
  %v6241 = vpop.f32.mrf.mxu0
  %v6242 = vadd.f32 %v6210, %v6241
  %6243 = vmatmul.f32.gmra.mxu0 %v6117
  %v6244 = vpop.f32.mrf.mxu0
  %v6245 = vadd.f32 %v6213, %v6244
  %6246 = vmatmul.f32.gmra.mxu0 %v6120
  %v6247 = vpop.f32.mrf.mxu0
  %v6248 = vadd.f32 %v6216, %v6247
  %6249 = vmatmul.f32.gmra.mxu0 %v6123
  %v6250 = vpop.f32.mrf.mxu0
  %v6251 = vadd.f32 %v6219, %v6250
  %6252 = vmatmul.f32.gmra.mxu0 %v6126
  %v6253 = vpop.f32.mrf.mxu0
  %v6254 = vadd.f32 %v6222, %v6253
  %6255 = vdwg.mxu0
  %s6256 = scalar_lea.vmem %s3, 4032
  %v6257 = vld [vmem:[%s6256] sm:$0xff]
  %v6258 = vld [vmem:[%s6256 + $0x8] sm:$0xff]
  %v6259 = vld [vmem:[%s6256 + $0x10] sm:$0xff]
  %v6260 = vld [vmem:[%s6256 + $0x18] sm:$0xff]
  %v6261 = vld [vmem:[%s6256 + $0x20] sm:$0xff]
  %v6262 = vld [vmem:[%s6256 + $0x28] sm:$0xff]
  %v6263 = vld [vmem:[%s6256 + $0x30] sm:$0xff]
  %v6264 = vld [vmem:[%s6256 + $0x38] sm:$0xff]
  %v6265 = vld [vmem:[%s6256 + $0x40] sm:$0xff]
  %v6266 = vld [vmem:[%s6256 + $0x48] sm:$0xff]
  %v6267 = vld [vmem:[%s6256 + $0x50] sm:$0xff]
  %v6268 = vld [vmem:[%s6256 + $0x58] sm:$0xff]
  %v6269 = vld [vmem:[%s6256 + $0x60] sm:$0xff]
  %v6270 = vld [vmem:[%s6256 + $0x68] sm:$0xff]
  %v6271 = vld [vmem:[%s6256 + $0x70] sm:$0xff]
  %v6272 = vld [vmem:[%s6256 + $0x78] sm:$0xff]
  %v6273 = vld [vmem:[%s6256 + $0x80] sm:$0xff]
  %v6274 = vld [vmem:[%s6256 + $0x88] sm:$0xff]
  %v6275 = vld [vmem:[%s6256 + $0x90] sm:$0xff]
  %v6276 = vld [vmem:[%s6256 + $0x98] sm:$0xff]
  %v6277 = vld [vmem:[%s6256 + $0xa0] sm:$0xff]
  %v6278 = vld [vmem:[%s6256 + $0xa8] sm:$0xff]
  %v6279 = vld [vmem:[%s6256 + $0xb0] sm:$0xff]
  %v6280 = vld [vmem:[%s6256 + $0xb8] sm:$0xff]
  %v6281 = vld [vmem:[%s6256 + $0xc0] sm:$0xff]
  %v6282 = vld [vmem:[%s6256 + $0xc8] sm:$0xff]
  %v6283 = vld [vmem:[%s6256 + $0xd0] sm:$0xff]
  %v6284 = vld [vmem:[%s6256 + $0xd8] sm:$0xff]
  %v6285 = vld [vmem:[%s6256 + $0xe0] sm:$0xff]
  %v6286 = vld [vmem:[%s6256 + $0xe8] sm:$0xff]
  %v6287 = vld [vmem:[%s6256 + $0xf0] sm:$0xff]
  %v6288 = vld [vmem:[%s6256 + $0xf8] sm:$0xff]
  %v6289 = vld [vmem:[%s6256 + $0x100] sm:$0xff]
  %v6290 = vld [vmem:[%s6256 + $0x108] sm:$0xff]
  %v6291 = vld [vmem:[%s6256 + $0x110] sm:$0xff]
  %v6292 = vld [vmem:[%s6256 + $0x118] sm:$0xff]
  %v6293 = vld [vmem:[%s6256 + $0x120] sm:$0xff]
  %v6294 = vld [vmem:[%s6256 + $0x128] sm:$0xff]
  %v6295 = vld [vmem:[%s6256 + $0x130] sm:$0xff]
  %v6296 = vld [vmem:[%s6256 + $0x138] sm:$0xff]
  %v6297 = vld [vmem:[%s6256 + $0x140] sm:$0xff]
  %v6298 = vld [vmem:[%s6256 + $0x148] sm:$0xff]
  %v6299 = vld [vmem:[%s6256 + $0x150] sm:$0xff]
  %v6300 = vld [vmem:[%s6256 + $0x158] sm:$0xff]
  %v6301 = vld [vmem:[%s6256 + $0x160] sm:$0xff]
  %v6302 = vld [vmem:[%s6256 + $0x168] sm:$0xff]
  %v6303 = vld [vmem:[%s6256 + $0x170] sm:$0xff]
  %v6304 = vld [vmem:[%s6256 + $0x178] sm:$0xff]
  %v6305 = vld [vmem:[%s6256 + $0x180] sm:$0xff]
  %v6306 = vld [vmem:[%s6256 + $0x188] sm:$0xff]
  %v6307 = vld [vmem:[%s6256 + $0x190] sm:$0xff]
  %v6308 = vld [vmem:[%s6256 + $0x198] sm:$0xff]
  %v6309 = vld [vmem:[%s6256 + $0x1a0] sm:$0xff]
  %v6310 = vld [vmem:[%s6256 + $0x1a8] sm:$0xff]
  %v6311 = vld [vmem:[%s6256 + $0x1b0] sm:$0xff]
  %v6312 = vld [vmem:[%s6256 + $0x1b8] sm:$0xff]
  %6313 = vmatpush.msra.mxu0 %v6287
  %6314 = vmatpush.msra.mxu0 %v6285
  %6315 = vmatpush.msra.mxu0 %v6283
  %6316 = vmatpush.msra.mxu0 %v6281
  %6317 = vmatpush.msra.mxu0 %v6279
  %6318 = vmatpush.msra.mxu0 %v6277
  %6319 = vmatpush.msra.mxu0 %v6275
  %6320 = vmatpush.msra.mxu0 %v6273
  %6321 = vmatpush.msra.mxu0 %v6271
  %6322 = vmatpush.msra.mxu0 %v6269
  %6323 = vmatpush.msra.mxu0 %v6267
  %6324 = vmatpush.msra.mxu0 %v6265
  %6325 = vmatpush.msra.mxu0 %v6263
  %6326 = vmatpush.msra.mxu0 %v6261
  %6327 = vmatpush.msra.mxu0 %v6259
  %6328 = vmatpush.msra.mxu0 %v6257
  %6329 = vmatmul.f32.gmra.mxu0 %v6046
  %v6330 = vpop.f32.mrf.mxu0
  %v6331 = vadd.f32 0.0, %v6330
  %6332 = vmatmul.f32.gmra.mxu0 %v6048
  %v6333 = vpop.f32.mrf.mxu0
  %v6334 = vadd.f32 0.0, %v6333
  %6335 = vmatmul.f32.gmra.mxu0 %v6050
  %v6336 = vpop.f32.mrf.mxu0
  %v6337 = vadd.f32 0.0, %v6336
  %6338 = vmatmul.f32.gmra.mxu0 %v6052
  %v6339 = vpop.f32.mrf.mxu0
  %v6340 = vadd.f32 0.0, %v6339
  %6341 = vmatmul.f32.gmra.mxu0 %v6054
  %v6342 = vpop.f32.mrf.mxu0
  %v6343 = vadd.f32 0.0, %v6342
  %6344 = vdwg.mxu0
  %6345 = vmatpush.msra.mxu0 0.0
  %6346 = vmatpush.msra.mxu0 0.0
  %6347 = vmatpush.msra.mxu0 0.0
  %6348 = vmatpush.msra.mxu0 0.0
  %6349 = vmatpush.msra.mxu0 %v6311
  %6350 = vmatpush.msra.mxu0 %v6309
  %6351 = vmatpush.msra.mxu0 %v6307
  %6352 = vmatpush.msra.mxu0 %v6305
  %6353 = vmatpush.msra.mxu0 %v6303
  %6354 = vmatpush.msra.mxu0 %v6301
  %6355 = vmatpush.msra.mxu0 %v6299
  %6356 = vmatpush.msra.mxu0 %v6297
  %6357 = vmatpush.msra.mxu0 %v6295
  %6358 = vmatpush.msra.mxu0 %v6293
  %6359 = vmatpush.msra.mxu0 %v6291
  %6360 = vmatpush.msra.mxu0 %v6289
  %6361 = vmatmul.f32.gmra.mxu0 %v6114
  %v6362 = vpop.f32.mrf.mxu0
  %v6363 = vadd.f32 %v6331, %v6362
  %6364 = vmatmul.f32.gmra.mxu0 %v6117
  %v6365 = vpop.f32.mrf.mxu0
  %v6366 = vadd.f32 %v6334, %v6365
  %6367 = vmatmul.f32.gmra.mxu0 %v6120
  %v6368 = vpop.f32.mrf.mxu0
  %v6369 = vadd.f32 %v6337, %v6368
  %6370 = vmatmul.f32.gmra.mxu0 %v6123
  %v6371 = vpop.f32.mrf.mxu0
  %v6372 = vadd.f32 %v6340, %v6371
  %6373 = vmatmul.f32.gmra.mxu0 %v6126
  %v6374 = vpop.f32.mrf.mxu0
  %v6375 = vadd.f32 %v6343, %v6374
  %6376 = vdwg.mxu0
  %6377 = vmatpush.msra.mxu0 %v6288
  %6378 = vmatpush.msra.mxu0 %v6286
  %6379 = vmatpush.msra.mxu0 %v6284
  %6380 = vmatpush.msra.mxu0 %v6282
  %6381 = vmatpush.msra.mxu0 %v6280
  %6382 = vmatpush.msra.mxu0 %v6278
  %6383 = vmatpush.msra.mxu0 %v6276
  %6384 = vmatpush.msra.mxu0 %v6274
  %6385 = vmatpush.msra.mxu0 %v6272
  %6386 = vmatpush.msra.mxu0 %v6270
  %6387 = vmatpush.msra.mxu0 %v6268
  %6388 = vmatpush.msra.mxu0 %v6266
  %6389 = vmatpush.msra.mxu0 %v6264
  %6390 = vmatpush.msra.mxu0 %v6262
  %6391 = vmatpush.msra.mxu0 %v6260
  %6392 = vmatpush.msra.mxu0 %v6258
  %6393 = vmatmul.f32.gmra.mxu0 %v6046
  %v6394 = vpop.f32.mrf.mxu0
  %v6395 = vadd.f32 0.0, %v6394
  %6396 = vmatmul.f32.gmra.mxu0 %v6048
  %v6397 = vpop.f32.mrf.mxu0
  %v6398 = vadd.f32 0.0, %v6397
  %6399 = vmatmul.f32.gmra.mxu0 %v6050
  %v6400 = vpop.f32.mrf.mxu0
  %v6401 = vadd.f32 0.0, %v6400
  %6402 = vmatmul.f32.gmra.mxu0 %v6052
  %v6403 = vpop.f32.mrf.mxu0
  %v6404 = vadd.f32 0.0, %v6403
  %6405 = vmatmul.f32.gmra.mxu0 %v6054
  %v6406 = vpop.f32.mrf.mxu0
  %v6407 = vadd.f32 0.0, %v6406
  %6408 = vdwg.mxu0
  %6409 = vmatpush.msra.mxu0 0.0
  %6410 = vmatpush.msra.mxu0 0.0
  %6411 = vmatpush.msra.mxu0 0.0
  %6412 = vmatpush.msra.mxu0 0.0
  %6413 = vmatpush.msra.mxu0 %v6312
  %6414 = vmatpush.msra.mxu0 %v6310
  %6415 = vmatpush.msra.mxu0 %v6308
  %6416 = vmatpush.msra.mxu0 %v6306
  %6417 = vmatpush.msra.mxu0 %v6304
  %6418 = vmatpush.msra.mxu0 %v6302
  %6419 = vmatpush.msra.mxu0 %v6300
  %6420 = vmatpush.msra.mxu0 %v6298
  %6421 = vmatpush.msra.mxu0 %v6296
  %6422 = vmatpush.msra.mxu0 %v6294
  %6423 = vmatpush.msra.mxu0 %v6292
  %6424 = vmatpush.msra.mxu0 %v6290
  %6425 = vmatmul.f32.gmra.mxu0 %v6114
  %v6426 = vpop.f32.mrf.mxu0
  %v6427 = vadd.f32 %v6395, %v6426
  %6428 = vmatmul.f32.gmra.mxu0 %v6117
  %v6429 = vpop.f32.mrf.mxu0
  %v6430 = vadd.f32 %v6398, %v6429
  %6431 = vmatmul.f32.gmra.mxu0 %v6120
  %v6432 = vpop.f32.mrf.mxu0
  %v6433 = vadd.f32 %v6401, %v6432
  %6434 = vmatmul.f32.gmra.mxu0 %v6123
  %v6435 = vpop.f32.mrf.mxu0
  %v6436 = vadd.f32 %v6404, %v6435
  %6437 = vmatmul.f32.gmra.mxu0 %v6126
  %v6438 = vpop.f32.mrf.mxu0
  %v6439 = vadd.f32 %v6407, %v6438
  %6440 = vdwg.mxu0
  %v6441 = vadd.f32 %v6026, %v6178
  %v6442 = vadd.f32 %v6027, %v6242
  %v6443 = vadd.f32 %v6028, %v6181
  %v6444 = vadd.f32 %v6029, %v6245
  %v6445 = vadd.f32 %v6030, %v6184
  %v6446 = vadd.f32 %v6031, %v6248
  %v6447 = vadd.f32 %v6032, %v6187
  %v6448 = vadd.f32 %v6033, %v6251
  %v6449 = vadd.f32 %v6034, %v6190
  %v6450 = vadd.f32 %v6035, %v6254
  %v6451 = vadd.f32 %v6036, %v6363
  %v6452 = vadd.f32 %v6037, %v6427
  %v6453 = vadd.f32 %v6038, %v6366
  %v6454 = vadd.f32 %v6039, %v6430
  %v6455 = vadd.f32 %v6040, %v6369
  %v6456 = vadd.f32 %v6041, %v6433
  %v6457 = vadd.f32 %v6042, %v6372
  %v6458 = vadd.f32 %v6043, %v6436
  %v6459 = vadd.f32 %v6044, %v6375
  %v6460 = vadd.f32 %v6045, %v6439
  %v6461 = vmax.f32 %v6441, %v6451
  %v6462 = vmax.f32 %v6442, %v6452
  %v6463 = vmax.f32 %v6443, %v6453
  %v6464 = vmax.f32 %v6444, %v6454
  %v6465 = vmax.f32 %v6445, %v6455
  %v6466 = vmax.f32 %v6446, %v6456
  %v6467 = vmax.f32 %v6447, %v6457
  %v6468 = vmax.f32 %v6448, %v6458
  %v6469 = vmax.f32 %v6449, %v6459
  %v6470 = vmax.f32 %v6450, %v6460
  %6471 = vmatpush.msra.mxu0 %v4591
  %6472 = vmatpush.msra.mxu0 %v4589
  %6473 = vmatpush.msra.mxu0 %v4587
  %6474 = vmatpush.msra.mxu0 %v4585
  %6475 = vmatpush.msra.mxu0 %v4583
  %6476 = vmatpush.msra.mxu0 %v4581
  %6477 = vmatpush.msra.mxu0 %v4579
  %6478 = vmatpush.msra.mxu0 %v4577
  %6479 = vmatpush.msra.mxu0 %v4575
  %6480 = vmatpush.msra.mxu0 %v4573
  %6481 = vmatpush.msra.mxu0 %v4571
  %6482 = vmatpush.msra.mxu0 %v4569
  %6483 = vmatpush.msra.mxu0 %v4567
  %6484 = vmatpush.msra.mxu0 %v4565
  %6485 = vmatpush.msra.mxu0 %v4563
  %6486 = vmatpush.msra.mxu0 %v4561
  %6487 = vmatmul.f32.gmra.mxu0 %v5216
  %v6488 = vpop.f32.mrf.mxu0
  %v6489 = vadd.f32 0.0, %v6488
  %6490 = vmatmul.f32.gmra.mxu0 %v5218
  %v6491 = vpop.f32.mrf.mxu0
  %v6492 = vadd.f32 0.0, %v6491
  %6493 = vmatmul.f32.gmra.mxu0 %v5220
  %v6494 = vpop.f32.mrf.mxu0
  %v6495 = vadd.f32 0.0, %v6494
  %6496 = vmatmul.f32.gmra.mxu0 %v5222
  %v6497 = vpop.f32.mrf.mxu0
  %v6498 = vadd.f32 0.0, %v6497
  %6499 = vmatmul.f32.gmra.mxu0 %v5224
  %v6500 = vpop.f32.mrf.mxu0
  %v6501 = vadd.f32 0.0, %v6500
  %6502 = vdwg.mxu0
  %6503 = vmatpush.msra.mxu0 0.0
  %6504 = vmatpush.msra.mxu0 0.0
  %6505 = vmatpush.msra.mxu0 0.0
  %6506 = vmatpush.msra.mxu0 0.0
  %6507 = vmatpush.msra.mxu0 %v4615
  %6508 = vmatpush.msra.mxu0 %v4613
  %6509 = vmatpush.msra.mxu0 %v4611
  %6510 = vmatpush.msra.mxu0 %v4609
  %6511 = vmatpush.msra.mxu0 %v4607
  %6512 = vmatpush.msra.mxu0 %v4605
  %6513 = vmatpush.msra.mxu0 %v4603
  %6514 = vmatpush.msra.mxu0 %v4601
  %6515 = vmatpush.msra.mxu0 %v4599
  %6516 = vmatpush.msra.mxu0 %v4597
  %6517 = vmatpush.msra.mxu0 %v4595
  %6518 = vmatpush.msra.mxu0 %v4593
  %6519 = vmatmul.f32.gmra.mxu0 %v5284
  %v6520 = vpop.f32.mrf.mxu0
  %v6521 = vadd.f32 %v6489, %v6520
  %6522 = vmatmul.f32.gmra.mxu0 %v5287
  %v6523 = vpop.f32.mrf.mxu0
  %v6524 = vadd.f32 %v6492, %v6523
  %6525 = vmatmul.f32.gmra.mxu0 %v5290
  %v6526 = vpop.f32.mrf.mxu0
  %v6527 = vadd.f32 %v6495, %v6526
  %6528 = vmatmul.f32.gmra.mxu0 %v5293
  %v6529 = vpop.f32.mrf.mxu0
  %v6530 = vadd.f32 %v6498, %v6529
  %6531 = vmatmul.f32.gmra.mxu0 %v5296
  %v6532 = vpop.f32.mrf.mxu0
  %v6533 = vadd.f32 %v6501, %v6532
  %6534 = vdwg.mxu0
  %6535 = vmatpush.msra.mxu0 %v4592
  %6536 = vmatpush.msra.mxu0 %v4590
  %6537 = vmatpush.msra.mxu0 %v4588
  %6538 = vmatpush.msra.mxu0 %v4586
  %6539 = vmatpush.msra.mxu0 %v4584
  %6540 = vmatpush.msra.mxu0 %v4582
  %6541 = vmatpush.msra.mxu0 %v4580
  %6542 = vmatpush.msra.mxu0 %v4578
  %6543 = vmatpush.msra.mxu0 %v4576
  %6544 = vmatpush.msra.mxu0 %v4574
  %6545 = vmatpush.msra.mxu0 %v4572
  %6546 = vmatpush.msra.mxu0 %v4570
  %6547 = vmatpush.msra.mxu0 %v4568
  %6548 = vmatpush.msra.mxu0 %v4566
  %6549 = vmatpush.msra.mxu0 %v4564
  %6550 = vmatpush.msra.mxu0 %v4562
  %6551 = vmatmul.f32.gmra.mxu0 %v5216
  %v6552 = vpop.f32.mrf.mxu0
  %v6553 = vadd.f32 0.0, %v6552
  %6554 = vmatmul.f32.gmra.mxu0 %v5218
  %v6555 = vpop.f32.mrf.mxu0
  %v6556 = vadd.f32 0.0, %v6555
  %6557 = vmatmul.f32.gmra.mxu0 %v5220
  %v6558 = vpop.f32.mrf.mxu0
  %v6559 = vadd.f32 0.0, %v6558
  %6560 = vmatmul.f32.gmra.mxu0 %v5222
  %v6561 = vpop.f32.mrf.mxu0
  %v6562 = vadd.f32 0.0, %v6561
  %6563 = vmatmul.f32.gmra.mxu0 %v5224
  %v6564 = vpop.f32.mrf.mxu0
  %v6565 = vadd.f32 0.0, %v6564
  %6566 = vdwg.mxu0
  %6567 = vmatpush.msra.mxu0 0.0
  %6568 = vmatpush.msra.mxu0 0.0
  %6569 = vmatpush.msra.mxu0 0.0
  %6570 = vmatpush.msra.mxu0 0.0
  %6571 = vmatpush.msra.mxu0 %v4616
  %6572 = vmatpush.msra.mxu0 %v4614
  %6573 = vmatpush.msra.mxu0 %v4612
  %6574 = vmatpush.msra.mxu0 %v4610
  %6575 = vmatpush.msra.mxu0 %v4608
  %6576 = vmatpush.msra.mxu0 %v4606
  %6577 = vmatpush.msra.mxu0 %v4604
  %6578 = vmatpush.msra.mxu0 %v4602
  %6579 = vmatpush.msra.mxu0 %v4600
  %6580 = vmatpush.msra.mxu0 %v4598
  %6581 = vmatpush.msra.mxu0 %v4596
  %6582 = vmatpush.msra.mxu0 %v4594
  %6583 = vmatmul.f32.gmra.mxu0 %v5284
  %v6584 = vpop.f32.mrf.mxu0
  %v6585 = vadd.f32 %v6553, %v6584
  %6586 = vmatmul.f32.gmra.mxu0 %v5287
  %v6587 = vpop.f32.mrf.mxu0
  %v6588 = vadd.f32 %v6556, %v6587
  %6589 = vmatmul.f32.gmra.mxu0 %v5290
  %v6590 = vpop.f32.mrf.mxu0
  %v6591 = vadd.f32 %v6559, %v6590
  %6592 = vmatmul.f32.gmra.mxu0 %v5293
  %v6593 = vpop.f32.mrf.mxu0
  %v6594 = vadd.f32 %v6562, %v6593
  %6595 = vmatmul.f32.gmra.mxu0 %v5296
  %v6596 = vpop.f32.mrf.mxu0
  %v6597 = vadd.f32 %v6565, %v6596
  %6598 = vdwg.mxu0
  %6599 = vmatpush.msra.mxu0 %v4791
  %6600 = vmatpush.msra.mxu0 %v4789
  %6601 = vmatpush.msra.mxu0 %v4787
  %6602 = vmatpush.msra.mxu0 %v4785
  %6603 = vmatpush.msra.mxu0 %v4783
  %6604 = vmatpush.msra.mxu0 %v4781
  %6605 = vmatpush.msra.mxu0 %v4779
  %6606 = vmatpush.msra.mxu0 %v4777
  %6607 = vmatpush.msra.mxu0 %v4775
  %6608 = vmatpush.msra.mxu0 %v4773
  %6609 = vmatpush.msra.mxu0 %v4771
  %6610 = vmatpush.msra.mxu0 %v4769
  %6611 = vmatpush.msra.mxu0 %v4767
  %6612 = vmatpush.msra.mxu0 %v4765
  %6613 = vmatpush.msra.mxu0 %v4763
  %6614 = vmatpush.msra.mxu0 %v4761
  %6615 = vmatmul.f32.gmra.mxu0 %v5216
  %v6616 = vpop.f32.mrf.mxu0
  %v6617 = vadd.f32 0.0, %v6616
  %6618 = vmatmul.f32.gmra.mxu0 %v5218
  %v6619 = vpop.f32.mrf.mxu0
  %v6620 = vadd.f32 0.0, %v6619
  %6621 = vmatmul.f32.gmra.mxu0 %v5220
  %v6622 = vpop.f32.mrf.mxu0
  %v6623 = vadd.f32 0.0, %v6622
  %6624 = vmatmul.f32.gmra.mxu0 %v5222
  %v6625 = vpop.f32.mrf.mxu0
  %v6626 = vadd.f32 0.0, %v6625
  %6627 = vmatmul.f32.gmra.mxu0 %v5224
  %v6628 = vpop.f32.mrf.mxu0
  %v6629 = vadd.f32 0.0, %v6628
  %6630 = vdwg.mxu0
  %6631 = vmatpush.msra.mxu0 0.0
  %6632 = vmatpush.msra.mxu0 0.0
  %6633 = vmatpush.msra.mxu0 0.0
  %6634 = vmatpush.msra.mxu0 0.0
  %6635 = vmatpush.msra.mxu0 %v4815
  %6636 = vmatpush.msra.mxu0 %v4813
  %6637 = vmatpush.msra.mxu0 %v4811
  %6638 = vmatpush.msra.mxu0 %v4809
  %6639 = vmatpush.msra.mxu0 %v4807
  %6640 = vmatpush.msra.mxu0 %v4805
  %6641 = vmatpush.msra.mxu0 %v4803
  %6642 = vmatpush.msra.mxu0 %v4801
  %6643 = vmatpush.msra.mxu0 %v4799
  %6644 = vmatpush.msra.mxu0 %v4797
  %6645 = vmatpush.msra.mxu0 %v4795
  %6646 = vmatpush.msra.mxu0 %v4793
  %6647 = vmatmul.f32.gmra.mxu0 %v5284
  %v6648 = vpop.f32.mrf.mxu0
  %v6649 = vadd.f32 %v6617, %v6648
  %6650 = vmatmul.f32.gmra.mxu0 %v5287
  %v6651 = vpop.f32.mrf.mxu0
  %v6652 = vadd.f32 %v6620, %v6651
  %6653 = vmatmul.f32.gmra.mxu0 %v5290
  %v6654 = vpop.f32.mrf.mxu0
  %v6655 = vadd.f32 %v6623, %v6654
  %6656 = vmatmul.f32.gmra.mxu0 %v5293
  %v6657 = vpop.f32.mrf.mxu0
  %v6658 = vadd.f32 %v6626, %v6657
  %6659 = vmatmul.f32.gmra.mxu0 %v5296
  %v6660 = vpop.f32.mrf.mxu0
  %v6661 = vadd.f32 %v6629, %v6660
  %6662 = vdwg.mxu0
  %6663 = vmatpush.msra.mxu0 %v4792
  %6664 = vmatpush.msra.mxu0 %v4790
  %6665 = vmatpush.msra.mxu0 %v4788
  %6666 = vmatpush.msra.mxu0 %v4786
  %6667 = vmatpush.msra.mxu0 %v4784
  %6668 = vmatpush.msra.mxu0 %v4782
  %6669 = vmatpush.msra.mxu0 %v4780
  %6670 = vmatpush.msra.mxu0 %v4778
  %6671 = vmatpush.msra.mxu0 %v4776
  %6672 = vmatpush.msra.mxu0 %v4774
  %6673 = vmatpush.msra.mxu0 %v4772
  %6674 = vmatpush.msra.mxu0 %v4770
  %6675 = vmatpush.msra.mxu0 %v4768
  %6676 = vmatpush.msra.mxu0 %v4766
  %6677 = vmatpush.msra.mxu0 %v4764
  %6678 = vmatpush.msra.mxu0 %v4762
  %6679 = vmatmul.f32.gmra.mxu0 %v5216
  %v6680 = vpop.f32.mrf.mxu0
  %v6681 = vadd.f32 0.0, %v6680
  %6682 = vmatmul.f32.gmra.mxu0 %v5218
  %v6683 = vpop.f32.mrf.mxu0
  %v6684 = vadd.f32 0.0, %v6683
  %6685 = vmatmul.f32.gmra.mxu0 %v5220
  %v6686 = vpop.f32.mrf.mxu0
  %v6687 = vadd.f32 0.0, %v6686
  %6688 = vmatmul.f32.gmra.mxu0 %v5222
  %v6689 = vpop.f32.mrf.mxu0
  %v6690 = vadd.f32 0.0, %v6689
  %6691 = vmatmul.f32.gmra.mxu0 %v5224
  %v6692 = vpop.f32.mrf.mxu0
  %v6693 = vadd.f32 0.0, %v6692
  %6694 = vdwg.mxu0
  %6695 = vmatpush.msra.mxu0 0.0
  %6696 = vmatpush.msra.mxu0 0.0
  %6697 = vmatpush.msra.mxu0 0.0
  %6698 = vmatpush.msra.mxu0 0.0
  %6699 = vmatpush.msra.mxu0 %v4816
  %6700 = vmatpush.msra.mxu0 %v4814
  %6701 = vmatpush.msra.mxu0 %v4812
  %6702 = vmatpush.msra.mxu0 %v4810
  %6703 = vmatpush.msra.mxu0 %v4808
  %6704 = vmatpush.msra.mxu0 %v4806
  %6705 = vmatpush.msra.mxu0 %v4804
  %6706 = vmatpush.msra.mxu0 %v4802
  %6707 = vmatpush.msra.mxu0 %v4800
  %6708 = vmatpush.msra.mxu0 %v4798
  %6709 = vmatpush.msra.mxu0 %v4796
  %6710 = vmatpush.msra.mxu0 %v4794
  %6711 = vmatmul.f32.gmra.mxu0 %v5284
  %v6712 = vpop.f32.mrf.mxu0
  %v6713 = vadd.f32 %v6681, %v6712
  %6714 = vmatmul.f32.gmra.mxu0 %v5287
  %v6715 = vpop.f32.mrf.mxu0
  %v6716 = vadd.f32 %v6684, %v6715
  %6717 = vmatmul.f32.gmra.mxu0 %v5290
  %v6718 = vpop.f32.mrf.mxu0
  %v6719 = vadd.f32 %v6687, %v6718
  %6720 = vmatmul.f32.gmra.mxu0 %v5293
  %v6721 = vpop.f32.mrf.mxu0
  %v6722 = vadd.f32 %v6690, %v6721
  %6723 = vmatmul.f32.gmra.mxu0 %v5296
  %v6724 = vpop.f32.mrf.mxu0
  %v6725 = vadd.f32 %v6693, %v6724
  %6726 = vdwg.mxu0
  %6727 = vmatpush.msra.mxu0 %v4467
  %6728 = vmatpush.msra.mxu0 %v4465
  %6729 = vmatpush.msra.mxu0 %v4463
  %6730 = vmatpush.msra.mxu0 %v4461
  %6731 = vmatpush.msra.mxu0 %v4459
  %6732 = vmatpush.msra.mxu0 %v4457
  %6733 = vmatpush.msra.mxu0 %v4455
  %6734 = vmatpush.msra.mxu0 %v4453
  %6735 = vmatpush.msra.mxu0 %v4451
  %6736 = vmatpush.msra.mxu0 %v4449
  %6737 = vmatpush.msra.mxu0 %v4447
  %6738 = vmatpush.msra.mxu0 %v4445
  %6739 = vmatpush.msra.mxu0 %v4443
  %6740 = vmatpush.msra.mxu0 %v4441
  %6741 = vmatpush.msra.mxu0 %v4439
  %6742 = vmatpush.msra.mxu0 %v4437
  %6743 = vmatmul.f32.gmra.mxu0 %v4550
  %v6744 = vpop.f32.mrf.mxu0
  %v6745 = vadd.f32 %v6521, %v6744
  %6746 = vmatmul.f32.gmra.mxu0 %v4552
  %v6747 = vpop.f32.mrf.mxu0
  %v6748 = vadd.f32 %v6524, %v6747
  %6749 = vmatmul.f32.gmra.mxu0 %v4554
  %v6750 = vpop.f32.mrf.mxu0
  %v6751 = vadd.f32 %v6527, %v6750
  %6752 = vmatmul.f32.gmra.mxu0 %v4556
  %v6753 = vpop.f32.mrf.mxu0
  %v6754 = vadd.f32 %v6530, %v6753
  %6755 = vmatmul.f32.gmra.mxu0 %v4558
  %v6756 = vpop.f32.mrf.mxu0
  %v6757 = vadd.f32 %v6533, %v6756
  %6758 = vdwg.mxu0
  %6759 = vmatpush.msra.mxu0 0.0
  %6760 = vmatpush.msra.mxu0 0.0
  %6761 = vmatpush.msra.mxu0 0.0
  %6762 = vmatpush.msra.mxu0 0.0
  %6763 = vmatpush.msra.mxu0 %v4491
  %6764 = vmatpush.msra.mxu0 %v4489
  %6765 = vmatpush.msra.mxu0 %v4487
  %6766 = vmatpush.msra.mxu0 %v4485
  %6767 = vmatpush.msra.mxu0 %v4483
  %6768 = vmatpush.msra.mxu0 %v4481
  %6769 = vmatpush.msra.mxu0 %v4479
  %6770 = vmatpush.msra.mxu0 %v4477
  %6771 = vmatpush.msra.mxu0 %v4475
  %6772 = vmatpush.msra.mxu0 %v4473
  %6773 = vmatpush.msra.mxu0 %v4471
  %6774 = vmatpush.msra.mxu0 %v4469
  %6775 = vmatmul.f32.gmra.mxu0 %v4618
  %v6776 = vpop.f32.mrf.mxu0
  %v6777 = vadd.f32 %v6745, %v6776
  %6778 = vmatmul.f32.gmra.mxu0 %v4621
  %v6779 = vpop.f32.mrf.mxu0
  %v6780 = vadd.f32 %v6748, %v6779
  %6781 = vmatmul.f32.gmra.mxu0 %v4624
  %v6782 = vpop.f32.mrf.mxu0
  %v6783 = vadd.f32 %v6751, %v6782
  %6784 = vmatmul.f32.gmra.mxu0 %v4627
  %v6785 = vpop.f32.mrf.mxu0
  %v6786 = vadd.f32 %v6754, %v6785
  %6787 = vmatmul.f32.gmra.mxu0 %v4630
  %v6788 = vpop.f32.mrf.mxu0
  %v6789 = vadd.f32 %v6757, %v6788
  %6790 = vdwg.mxu0
  %6791 = vmatpush.msra.mxu0 %v4468
  %6792 = vmatpush.msra.mxu0 %v4466
  %6793 = vmatpush.msra.mxu0 %v4464
  %6794 = vmatpush.msra.mxu0 %v4462
  %6795 = vmatpush.msra.mxu0 %v4460
  %6796 = vmatpush.msra.mxu0 %v4458
  %6797 = vmatpush.msra.mxu0 %v4456
  %6798 = vmatpush.msra.mxu0 %v4454
  %6799 = vmatpush.msra.mxu0 %v4452
  %6800 = vmatpush.msra.mxu0 %v4450
  %6801 = vmatpush.msra.mxu0 %v4448
  %6802 = vmatpush.msra.mxu0 %v4446
  %6803 = vmatpush.msra.mxu0 %v4444
  %6804 = vmatpush.msra.mxu0 %v4442
  %6805 = vmatpush.msra.mxu0 %v4440
  %6806 = vmatpush.msra.mxu0 %v4438
  %6807 = vmatmul.f32.gmra.mxu0 %v4550
  %v6808 = vpop.f32.mrf.mxu0
  %v6809 = vadd.f32 %v6585, %v6808
  %6810 = vmatmul.f32.gmra.mxu0 %v4552
  %v6811 = vpop.f32.mrf.mxu0
  %v6812 = vadd.f32 %v6588, %v6811
  %6813 = vmatmul.f32.gmra.mxu0 %v4554
  %v6814 = vpop.f32.mrf.mxu0
  %v6815 = vadd.f32 %v6591, %v6814
  %6816 = vmatmul.f32.gmra.mxu0 %v4556
  %v6817 = vpop.f32.mrf.mxu0
  %v6818 = vadd.f32 %v6594, %v6817
  %6819 = vmatmul.f32.gmra.mxu0 %v4558
  %v6820 = vpop.f32.mrf.mxu0
  %v6821 = vadd.f32 %v6597, %v6820
  %6822 = vdwg.mxu0
  %6823 = vmatpush.msra.mxu0 0.0
  %6824 = vmatpush.msra.mxu0 0.0
  %6825 = vmatpush.msra.mxu0 0.0
  %6826 = vmatpush.msra.mxu0 0.0
  %6827 = vmatpush.msra.mxu0 %v4492
  %6828 = vmatpush.msra.mxu0 %v4490
  %6829 = vmatpush.msra.mxu0 %v4488
  %6830 = vmatpush.msra.mxu0 %v4486
  %6831 = vmatpush.msra.mxu0 %v4484
  %6832 = vmatpush.msra.mxu0 %v4482
  %6833 = vmatpush.msra.mxu0 %v4480
  %6834 = vmatpush.msra.mxu0 %v4478
  %6835 = vmatpush.msra.mxu0 %v4476
  %6836 = vmatpush.msra.mxu0 %v4474
  %6837 = vmatpush.msra.mxu0 %v4472
  %6838 = vmatpush.msra.mxu0 %v4470
  %6839 = vmatmul.f32.gmra.mxu0 %v4618
  %v6840 = vpop.f32.mrf.mxu0
  %v6841 = vadd.f32 %v6809, %v6840
  %6842 = vmatmul.f32.gmra.mxu0 %v4621
  %v6843 = vpop.f32.mrf.mxu0
  %v6844 = vadd.f32 %v6812, %v6843
  %6845 = vmatmul.f32.gmra.mxu0 %v4624
  %v6846 = vpop.f32.mrf.mxu0
  %v6847 = vadd.f32 %v6815, %v6846
  %6848 = vmatmul.f32.gmra.mxu0 %v4627
  %v6849 = vpop.f32.mrf.mxu0
  %v6850 = vadd.f32 %v6818, %v6849
  %6851 = vmatmul.f32.gmra.mxu0 %v4630
  %v6852 = vpop.f32.mrf.mxu0
  %v6853 = vadd.f32 %v6821, %v6852
  %6854 = vdwg.mxu0
  %6855 = vmatpush.msra.mxu0 %v4524
  %6856 = vmatpush.msra.mxu0 %v4522
  %6857 = vmatpush.msra.mxu0 %v4520
  %6858 = vmatpush.msra.mxu0 %v4518
  %6859 = vmatpush.msra.mxu0 %v4516
  %6860 = vmatpush.msra.mxu0 %v4514
  %6861 = vmatpush.msra.mxu0 %v4512
  %6862 = vmatpush.msra.mxu0 %v4510
  %6863 = vmatpush.msra.mxu0 %v4508
  %6864 = vmatpush.msra.mxu0 %v4506
  %6865 = vmatpush.msra.mxu0 %v4504
  %6866 = vmatpush.msra.mxu0 %v4502
  %6867 = vmatpush.msra.mxu0 %v4500
  %6868 = vmatpush.msra.mxu0 %v4498
  %6869 = vmatpush.msra.mxu0 %v4496
  %6870 = vmatpush.msra.mxu0 %v4494
  %6871 = vmatmul.f32.gmra.mxu0 %v4550
  %v6872 = vpop.f32.mrf.mxu0
  %v6873 = vadd.f32 %v6649, %v6872
  %6874 = vmatmul.f32.gmra.mxu0 %v4552
  %v6875 = vpop.f32.mrf.mxu0
  %v6876 = vadd.f32 %v6652, %v6875
  %6877 = vmatmul.f32.gmra.mxu0 %v4554
  %v6878 = vpop.f32.mrf.mxu0
  %v6879 = vadd.f32 %v6655, %v6878
  %6880 = vmatmul.f32.gmra.mxu0 %v4556
  %v6881 = vpop.f32.mrf.mxu0
  %v6882 = vadd.f32 %v6658, %v6881
  %6883 = vmatmul.f32.gmra.mxu0 %v4558
  %v6884 = vpop.f32.mrf.mxu0
  %v6885 = vadd.f32 %v6661, %v6884
  %6886 = vdwg.mxu0
  %6887 = vmatpush.msra.mxu0 0.0
  %6888 = vmatpush.msra.mxu0 0.0
  %6889 = vmatpush.msra.mxu0 0.0
  %6890 = vmatpush.msra.mxu0 0.0
  %6891 = vmatpush.msra.mxu0 %v4548
  %6892 = vmatpush.msra.mxu0 %v4546
  %6893 = vmatpush.msra.mxu0 %v4544
  %6894 = vmatpush.msra.mxu0 %v4542
  %6895 = vmatpush.msra.mxu0 %v4540
  %6896 = vmatpush.msra.mxu0 %v4538
  %6897 = vmatpush.msra.mxu0 %v4536
  %6898 = vmatpush.msra.mxu0 %v4534
  %6899 = vmatpush.msra.mxu0 %v4532
  %6900 = vmatpush.msra.mxu0 %v4530
  %6901 = vmatpush.msra.mxu0 %v4528
  %6902 = vmatpush.msra.mxu0 %v4526
  %6903 = vmatmul.f32.gmra.mxu0 %v4618
  %v6904 = vpop.f32.mrf.mxu0
  %v6905 = vadd.f32 %v6873, %v6904
  %6906 = vmatmul.f32.gmra.mxu0 %v4621
  %v6907 = vpop.f32.mrf.mxu0
  %v6908 = vadd.f32 %v6876, %v6907
  %6909 = vmatmul.f32.gmra.mxu0 %v4624
  %v6910 = vpop.f32.mrf.mxu0
  %v6911 = vadd.f32 %v6879, %v6910
  %6912 = vmatmul.f32.gmra.mxu0 %v4627
  %v6913 = vpop.f32.mrf.mxu0
  %v6914 = vadd.f32 %v6882, %v6913
  %6915 = vmatmul.f32.gmra.mxu0 %v4630
  %v6916 = vpop.f32.mrf.mxu0
  %v6917 = vadd.f32 %v6885, %v6916
  %6918 = vdwg.mxu0
  %6919 = vmatpush.msra.mxu0 %v4525
  %6920 = vmatpush.msra.mxu0 %v4523
  %6921 = vmatpush.msra.mxu0 %v4521
  %6922 = vmatpush.msra.mxu0 %v4519
  %6923 = vmatpush.msra.mxu0 %v4517
  %6924 = vmatpush.msra.mxu0 %v4515
  %6925 = vmatpush.msra.mxu0 %v4513
  %6926 = vmatpush.msra.mxu0 %v4511
  %6927 = vmatpush.msra.mxu0 %v4509
  %6928 = vmatpush.msra.mxu0 %v4507
  %6929 = vmatpush.msra.mxu0 %v4505
  %6930 = vmatpush.msra.mxu0 %v4503
  %6931 = vmatpush.msra.mxu0 %v4501
  %6932 = vmatpush.msra.mxu0 %v4499
  %6933 = vmatpush.msra.mxu0 %v4497
  %6934 = vmatpush.msra.mxu0 %v4495
  %6935 = vmatmul.f32.gmra.mxu0 %v4550
  %v6936 = vpop.f32.mrf.mxu0
  %v6937 = vadd.f32 %v6713, %v6936
  %6938 = vmatmul.f32.gmra.mxu0 %v4552
  %v6939 = vpop.f32.mrf.mxu0
  %v6940 = vadd.f32 %v6716, %v6939
  %6941 = vmatmul.f32.gmra.mxu0 %v4554
  %v6942 = vpop.f32.mrf.mxu0
  %v6943 = vadd.f32 %v6719, %v6942
  %6944 = vmatmul.f32.gmra.mxu0 %v4556
  %v6945 = vpop.f32.mrf.mxu0
  %v6946 = vadd.f32 %v6722, %v6945
  %6947 = vmatmul.f32.gmra.mxu0 %v4558
  %v6948 = vpop.f32.mrf.mxu0
  %v6949 = vadd.f32 %v6725, %v6948
  %6950 = vdwg.mxu0
  %6951 = vmatpush.msra.mxu0 0.0
  %6952 = vmatpush.msra.mxu0 0.0
  %6953 = vmatpush.msra.mxu0 0.0
  %6954 = vmatpush.msra.mxu0 0.0
  %6955 = vmatpush.msra.mxu0 %v4549
  %6956 = vmatpush.msra.mxu0 %v4547
  %6957 = vmatpush.msra.mxu0 %v4545
  %6958 = vmatpush.msra.mxu0 %v4543
  %6959 = vmatpush.msra.mxu0 %v4541
  %6960 = vmatpush.msra.mxu0 %v4539
  %6961 = vmatpush.msra.mxu0 %v4537
  %6962 = vmatpush.msra.mxu0 %v4535
  %6963 = vmatpush.msra.mxu0 %v4533
  %6964 = vmatpush.msra.mxu0 %v4531
  %6965 = vmatpush.msra.mxu0 %v4529
  %6966 = vmatpush.msra.mxu0 %v4527
  %6967 = vmatmul.f32.gmra.mxu0 %v4618
  %v6968 = vpop.f32.mrf.mxu0
  %v6969 = vadd.f32 %v6937, %v6968
  %6970 = vmatmul.f32.gmra.mxu0 %v4621
  %v6971 = vpop.f32.mrf.mxu0
  %v6972 = vadd.f32 %v6940, %v6971
  %6973 = vmatmul.f32.gmra.mxu0 %v4624
  %v6974 = vpop.f32.mrf.mxu0
  %v6975 = vadd.f32 %v6943, %v6974
  %6976 = vmatmul.f32.gmra.mxu0 %v4627
  %v6977 = vpop.f32.mrf.mxu0
  %v6978 = vadd.f32 %v6946, %v6977
  %6979 = vmatmul.f32.gmra.mxu0 %v4630
  %v6980 = vpop.f32.mrf.mxu0
  %v6981 = vadd.f32 %v6949, %v6980
  %6982 = vdwg.mxu0
  %6983 = vmatpush.msra.mxu0 %v5257
  %6984 = vmatpush.msra.mxu0 %v5255
  %6985 = vmatpush.msra.mxu0 %v5253
  %6986 = vmatpush.msra.mxu0 %v5251
  %6987 = vmatpush.msra.mxu0 %v5249
  %6988 = vmatpush.msra.mxu0 %v5247
  %6989 = vmatpush.msra.mxu0 %v5245
  %6990 = vmatpush.msra.mxu0 %v5243
  %6991 = vmatpush.msra.mxu0 %v5241
  %6992 = vmatpush.msra.mxu0 %v5239
  %6993 = vmatpush.msra.mxu0 %v5237
  %6994 = vmatpush.msra.mxu0 %v5235
  %6995 = vmatpush.msra.mxu0 %v5233
  %6996 = vmatpush.msra.mxu0 %v5231
  %6997 = vmatpush.msra.mxu0 %v5229
  %6998 = vmatpush.msra.mxu0 %v5227
  %6999 = vmatmul.f32.gmra.mxu0 %v5631
  %v7000 = vpop.f32.mrf.mxu0
  %v7001 = vadd.f32 0.0, %v7000
  %7002 = vmatmul.f32.gmra.mxu0 %v5633
  %v7003 = vpop.f32.mrf.mxu0
  %v7004 = vadd.f32 0.0, %v7003
  %7005 = vmatmul.f32.gmra.mxu0 %v5635
  %v7006 = vpop.f32.mrf.mxu0
  %v7007 = vadd.f32 0.0, %v7006
  %7008 = vmatmul.f32.gmra.mxu0 %v5637
  %v7009 = vpop.f32.mrf.mxu0
  %v7010 = vadd.f32 0.0, %v7009
  %7011 = vmatmul.f32.gmra.mxu0 %v5639
  %v7012 = vpop.f32.mrf.mxu0
  %v7013 = vadd.f32 0.0, %v7012
  %7014 = vdwg.mxu0
  %7015 = vmatpush.msra.mxu0 0.0
  %7016 = vmatpush.msra.mxu0 0.0
  %7017 = vmatpush.msra.mxu0 0.0
  %7018 = vmatpush.msra.mxu0 0.0
  %7019 = vmatpush.msra.mxu0 %v5281
  %7020 = vmatpush.msra.mxu0 %v5279
  %7021 = vmatpush.msra.mxu0 %v5277
  %7022 = vmatpush.msra.mxu0 %v5275
  %7023 = vmatpush.msra.mxu0 %v5273
  %7024 = vmatpush.msra.mxu0 %v5271
  %7025 = vmatpush.msra.mxu0 %v5269
  %7026 = vmatpush.msra.mxu0 %v5267
  %7027 = vmatpush.msra.mxu0 %v5265
  %7028 = vmatpush.msra.mxu0 %v5263
  %7029 = vmatpush.msra.mxu0 %v5261
  %7030 = vmatpush.msra.mxu0 %v5259
  %7031 = vmatmul.f32.gmra.mxu0 %v5699
  %v7032 = vpop.f32.mrf.mxu0
  %v7033 = vadd.f32 %v7001, %v7032
  %7034 = vmatmul.f32.gmra.mxu0 %v5702
  %v7035 = vpop.f32.mrf.mxu0
  %v7036 = vadd.f32 %v7004, %v7035
  %7037 = vmatmul.f32.gmra.mxu0 %v5705
  %v7038 = vpop.f32.mrf.mxu0
  %v7039 = vadd.f32 %v7007, %v7038
  %7040 = vmatmul.f32.gmra.mxu0 %v5708
  %v7041 = vpop.f32.mrf.mxu0
  %v7042 = vadd.f32 %v7010, %v7041
  %7043 = vmatmul.f32.gmra.mxu0 %v5711
  %v7044 = vpop.f32.mrf.mxu0
  %v7045 = vadd.f32 %v7013, %v7044
  %7046 = vdwg.mxu0
  %7047 = vmatpush.msra.mxu0 %v5258
  %7048 = vmatpush.msra.mxu0 %v5256
  %7049 = vmatpush.msra.mxu0 %v5254
  %7050 = vmatpush.msra.mxu0 %v5252
  %7051 = vmatpush.msra.mxu0 %v5250
  %7052 = vmatpush.msra.mxu0 %v5248
  %7053 = vmatpush.msra.mxu0 %v5246
  %7054 = vmatpush.msra.mxu0 %v5244
  %7055 = vmatpush.msra.mxu0 %v5242
  %7056 = vmatpush.msra.mxu0 %v5240
  %7057 = vmatpush.msra.mxu0 %v5238
  %7058 = vmatpush.msra.mxu0 %v5236
  %7059 = vmatpush.msra.mxu0 %v5234
  %7060 = vmatpush.msra.mxu0 %v5232
  %7061 = vmatpush.msra.mxu0 %v5230
  %7062 = vmatpush.msra.mxu0 %v5228
  %7063 = vmatmul.f32.gmra.mxu0 %v5631
  %v7064 = vpop.f32.mrf.mxu0
  %v7065 = vadd.f32 0.0, %v7064
  %7066 = vmatmul.f32.gmra.mxu0 %v5633
  %v7067 = vpop.f32.mrf.mxu0
  %v7068 = vadd.f32 0.0, %v7067
  %7069 = vmatmul.f32.gmra.mxu0 %v5635
  %v7070 = vpop.f32.mrf.mxu0
  %v7071 = vadd.f32 0.0, %v7070
  %7072 = vmatmul.f32.gmra.mxu0 %v5637
  %v7073 = vpop.f32.mrf.mxu0
  %v7074 = vadd.f32 0.0, %v7073
  %7075 = vmatmul.f32.gmra.mxu0 %v5639
  %v7076 = vpop.f32.mrf.mxu0
  %v7077 = vadd.f32 0.0, %v7076
  %7078 = vdwg.mxu0
  %7079 = vmatpush.msra.mxu0 0.0
  %7080 = vmatpush.msra.mxu0 0.0
  %7081 = vmatpush.msra.mxu0 0.0
  %7082 = vmatpush.msra.mxu0 0.0
  %7083 = vmatpush.msra.mxu0 %v5282
  %7084 = vmatpush.msra.mxu0 %v5280
  %7085 = vmatpush.msra.mxu0 %v5278
  %7086 = vmatpush.msra.mxu0 %v5276
  %7087 = vmatpush.msra.mxu0 %v5274
  %7088 = vmatpush.msra.mxu0 %v5272
  %7089 = vmatpush.msra.mxu0 %v5270
  %7090 = vmatpush.msra.mxu0 %v5268
  %7091 = vmatpush.msra.mxu0 %v5266
  %7092 = vmatpush.msra.mxu0 %v5264
  %7093 = vmatpush.msra.mxu0 %v5262
  %7094 = vmatpush.msra.mxu0 %v5260
  %7095 = vmatmul.f32.gmra.mxu0 %v5699
  %v7096 = vpop.f32.mrf.mxu0
  %v7097 = vadd.f32 %v7065, %v7096
  %7098 = vmatmul.f32.gmra.mxu0 %v5702
  %v7099 = vpop.f32.mrf.mxu0
  %v7100 = vadd.f32 %v7068, %v7099
  %7101 = vmatmul.f32.gmra.mxu0 %v5705
  %v7102 = vpop.f32.mrf.mxu0
  %v7103 = vadd.f32 %v7071, %v7102
  %7104 = vmatmul.f32.gmra.mxu0 %v5708
  %v7105 = vpop.f32.mrf.mxu0
  %v7106 = vadd.f32 %v7074, %v7105
  %7107 = vmatmul.f32.gmra.mxu0 %v5711
  %v7108 = vpop.f32.mrf.mxu0
  %v7109 = vadd.f32 %v7077, %v7108
  %7110 = vdwg.mxu0
  %7111 = vmatpush.msra.mxu0 %v5457
  %7112 = vmatpush.msra.mxu0 %v5455
  %7113 = vmatpush.msra.mxu0 %v5453
  %7114 = vmatpush.msra.mxu0 %v5451
  %7115 = vmatpush.msra.mxu0 %v5449
  %7116 = vmatpush.msra.mxu0 %v5447
  %7117 = vmatpush.msra.mxu0 %v5445
  %7118 = vmatpush.msra.mxu0 %v5443
  %7119 = vmatpush.msra.mxu0 %v5441
  %7120 = vmatpush.msra.mxu0 %v5439
  %7121 = vmatpush.msra.mxu0 %v5437
  %7122 = vmatpush.msra.mxu0 %v5435
  %7123 = vmatpush.msra.mxu0 %v5433
  %7124 = vmatpush.msra.mxu0 %v5431
  %7125 = vmatpush.msra.mxu0 %v5429
  %7126 = vmatpush.msra.mxu0 %v5427
  %7127 = vmatmul.f32.gmra.mxu0 %v5631
  %v7128 = vpop.f32.mrf.mxu0
  %v7129 = vadd.f32 0.0, %v7128
  %7130 = vmatmul.f32.gmra.mxu0 %v5633
  %v7131 = vpop.f32.mrf.mxu0
  %v7132 = vadd.f32 0.0, %v7131
  %7133 = vmatmul.f32.gmra.mxu0 %v5635
  %v7134 = vpop.f32.mrf.mxu0
  %v7135 = vadd.f32 0.0, %v7134
  %7136 = vmatmul.f32.gmra.mxu0 %v5637
  %v7137 = vpop.f32.mrf.mxu0
  %v7138 = vadd.f32 0.0, %v7137
  %7139 = vmatmul.f32.gmra.mxu0 %v5639
  %v7140 = vpop.f32.mrf.mxu0
  %v7141 = vadd.f32 0.0, %v7140
  %7142 = vdwg.mxu0
  %7143 = vmatpush.msra.mxu0 0.0
  %7144 = vmatpush.msra.mxu0 0.0
  %7145 = vmatpush.msra.mxu0 0.0
  %7146 = vmatpush.msra.mxu0 0.0
  %7147 = vmatpush.msra.mxu0 %v5481
  %7148 = vmatpush.msra.mxu0 %v5479
  %7149 = vmatpush.msra.mxu0 %v5477
  %7150 = vmatpush.msra.mxu0 %v5475
  %7151 = vmatpush.msra.mxu0 %v5473
  %7152 = vmatpush.msra.mxu0 %v5471
  %7153 = vmatpush.msra.mxu0 %v5469
  %7154 = vmatpush.msra.mxu0 %v5467
  %7155 = vmatpush.msra.mxu0 %v5465
  %7156 = vmatpush.msra.mxu0 %v5463
  %7157 = vmatpush.msra.mxu0 %v5461
  %7158 = vmatpush.msra.mxu0 %v5459
  %7159 = vmatmul.f32.gmra.mxu0 %v5699
  %v7160 = vpop.f32.mrf.mxu0
  %v7161 = vadd.f32 %v7129, %v7160
  %7162 = vmatmul.f32.gmra.mxu0 %v5702
  %v7163 = vpop.f32.mrf.mxu0
  %v7164 = vadd.f32 %v7132, %v7163
  %7165 = vmatmul.f32.gmra.mxu0 %v5705
  %v7166 = vpop.f32.mrf.mxu0
  %v7167 = vadd.f32 %v7135, %v7166
  %7168 = vmatmul.f32.gmra.mxu0 %v5708
  %v7169 = vpop.f32.mrf.mxu0
  %v7170 = vadd.f32 %v7138, %v7169
  %7171 = vmatmul.f32.gmra.mxu0 %v5711
  %v7172 = vpop.f32.mrf.mxu0
  %v7173 = vadd.f32 %v7141, %v7172
  %7174 = vdwg.mxu0
  %7175 = vmatpush.msra.mxu0 %v5458
  %7176 = vmatpush.msra.mxu0 %v5456
  %7177 = vmatpush.msra.mxu0 %v5454
  %7178 = vmatpush.msra.mxu0 %v5452
  %7179 = vmatpush.msra.mxu0 %v5450
  %7180 = vmatpush.msra.mxu0 %v5448
  %7181 = vmatpush.msra.mxu0 %v5446
  %7182 = vmatpush.msra.mxu0 %v5444
  %7183 = vmatpush.msra.mxu0 %v5442
  %7184 = vmatpush.msra.mxu0 %v5440
  %7185 = vmatpush.msra.mxu0 %v5438
  %7186 = vmatpush.msra.mxu0 %v5436
  %7187 = vmatpush.msra.mxu0 %v5434
  %7188 = vmatpush.msra.mxu0 %v5432
  %7189 = vmatpush.msra.mxu0 %v5430
  %7190 = vmatpush.msra.mxu0 %v5428
  %7191 = vmatmul.f32.gmra.mxu0 %v5631
  %v7192 = vpop.f32.mrf.mxu0
  %v7193 = vadd.f32 0.0, %v7192
  %7194 = vmatmul.f32.gmra.mxu0 %v5633
  %v7195 = vpop.f32.mrf.mxu0
  %v7196 = vadd.f32 0.0, %v7195
  %7197 = vmatmul.f32.gmra.mxu0 %v5635
  %v7198 = vpop.f32.mrf.mxu0
  %v7199 = vadd.f32 0.0, %v7198
  %7200 = vmatmul.f32.gmra.mxu0 %v5637
  %v7201 = vpop.f32.mrf.mxu0
  %v7202 = vadd.f32 0.0, %v7201
  %7203 = vmatmul.f32.gmra.mxu0 %v5639
  %v7204 = vpop.f32.mrf.mxu0
  %v7205 = vadd.f32 0.0, %v7204
  %7206 = vdwg.mxu0
  %7207 = vmatpush.msra.mxu0 0.0
  %7208 = vmatpush.msra.mxu0 0.0
  %7209 = vmatpush.msra.mxu0 0.0
  %7210 = vmatpush.msra.mxu0 0.0
  %7211 = vmatpush.msra.mxu0 %v5482
  %7212 = vmatpush.msra.mxu0 %v5480
  %7213 = vmatpush.msra.mxu0 %v5478
  %7214 = vmatpush.msra.mxu0 %v5476
  %7215 = vmatpush.msra.mxu0 %v5474
  %7216 = vmatpush.msra.mxu0 %v5472
  %7217 = vmatpush.msra.mxu0 %v5470
  %7218 = vmatpush.msra.mxu0 %v5468
  %7219 = vmatpush.msra.mxu0 %v5466
  %7220 = vmatpush.msra.mxu0 %v5464
  %7221 = vmatpush.msra.mxu0 %v5462
  %7222 = vmatpush.msra.mxu0 %v5460
  %7223 = vmatmul.f32.gmra.mxu0 %v5699
  %v7224 = vpop.f32.mrf.mxu0
  %v7225 = vadd.f32 %v7193, %v7224
  %7226 = vmatmul.f32.gmra.mxu0 %v5702
  %v7227 = vpop.f32.mrf.mxu0
  %v7228 = vadd.f32 %v7196, %v7227
  %7229 = vmatmul.f32.gmra.mxu0 %v5705
  %v7230 = vpop.f32.mrf.mxu0
  %v7231 = vadd.f32 %v7199, %v7230
  %7232 = vmatmul.f32.gmra.mxu0 %v5708
  %v7233 = vpop.f32.mrf.mxu0
  %v7234 = vadd.f32 %v7202, %v7233
  %7235 = vmatmul.f32.gmra.mxu0 %v5711
  %v7236 = vpop.f32.mrf.mxu0
  %v7237 = vadd.f32 %v7205, %v7236
  %7238 = vdwg.mxu0
  %v7239 = vadd.f32 %v6777, %v7033
  %v7240 = vadd.f32 %v6841, %v7097
  %v7241 = vadd.f32 %v6780, %v7036
  %v7242 = vadd.f32 %v6844, %v7100
  %v7243 = vadd.f32 %v6783, %v7039
  %v7244 = vadd.f32 %v6847, %v7103
  %v7245 = vadd.f32 %v6786, %v7042
  %v7246 = vadd.f32 %v6850, %v7106
  %v7247 = vadd.f32 %v6789, %v7045
  %v7248 = vadd.f32 %v6853, %v7109
  %v7249 = vadd.f32 %v6905, %v7161
  %v7250 = vadd.f32 %v6969, %v7225
  %v7251 = vadd.f32 %v6908, %v7164
  %v7252 = vadd.f32 %v6972, %v7228
  %v7253 = vadd.f32 %v6911, %v7167
  %v7254 = vadd.f32 %v6975, %v7231
  %v7255 = vadd.f32 %v6914, %v7170
  %v7256 = vadd.f32 %v6978, %v7234
  %v7257 = vadd.f32 %v6917, %v7173
  %v7258 = vadd.f32 %v6981, %v7237
  %7259 = vmatpush.msra.mxu0 %v5672
  %7260 = vmatpush.msra.mxu0 %v5670
  %7261 = vmatpush.msra.mxu0 %v5668
  %7262 = vmatpush.msra.mxu0 %v5666
  %7263 = vmatpush.msra.mxu0 %v5664
  %7264 = vmatpush.msra.mxu0 %v5662
  %7265 = vmatpush.msra.mxu0 %v5660
  %7266 = vmatpush.msra.mxu0 %v5658
  %7267 = vmatpush.msra.mxu0 %v5656
  %7268 = vmatpush.msra.mxu0 %v5654
  %7269 = vmatpush.msra.mxu0 %v5652
  %7270 = vmatpush.msra.mxu0 %v5650
  %7271 = vmatpush.msra.mxu0 %v5648
  %7272 = vmatpush.msra.mxu0 %v5646
  %7273 = vmatpush.msra.mxu0 %v5644
  %7274 = vmatpush.msra.mxu0 %v5642
  %7275 = vmatmul.f32.gmra.mxu0 %v6046
  %v7276 = vpop.f32.mrf.mxu0
  %v7277 = vadd.f32 0.0, %v7276
  %7278 = vmatmul.f32.gmra.mxu0 %v6048
  %v7279 = vpop.f32.mrf.mxu0
  %v7280 = vadd.f32 0.0, %v7279
  %7281 = vmatmul.f32.gmra.mxu0 %v6050
  %v7282 = vpop.f32.mrf.mxu0
  %v7283 = vadd.f32 0.0, %v7282
  %7284 = vmatmul.f32.gmra.mxu0 %v6052
  %v7285 = vpop.f32.mrf.mxu0
  %v7286 = vadd.f32 0.0, %v7285
  %7287 = vmatmul.f32.gmra.mxu0 %v6054
  %v7288 = vpop.f32.mrf.mxu0
  %v7289 = vadd.f32 0.0, %v7288
  %7290 = vdwg.mxu0
  %7291 = vmatpush.msra.mxu0 0.0
  %7292 = vmatpush.msra.mxu0 0.0
  %7293 = vmatpush.msra.mxu0 0.0
  %7294 = vmatpush.msra.mxu0 0.0
  %7295 = vmatpush.msra.mxu0 %v5696
  %7296 = vmatpush.msra.mxu0 %v5694
  %7297 = vmatpush.msra.mxu0 %v5692
  %7298 = vmatpush.msra.mxu0 %v5690
  %7299 = vmatpush.msra.mxu0 %v5688
  %7300 = vmatpush.msra.mxu0 %v5686
  %7301 = vmatpush.msra.mxu0 %v5684
  %7302 = vmatpush.msra.mxu0 %v5682
  %7303 = vmatpush.msra.mxu0 %v5680
  %7304 = vmatpush.msra.mxu0 %v5678
  %7305 = vmatpush.msra.mxu0 %v5676
  %7306 = vmatpush.msra.mxu0 %v5674
  %7307 = vmatmul.f32.gmra.mxu0 %v6114
  %v7308 = vpop.f32.mrf.mxu0
  %v7309 = vadd.f32 %v7277, %v7308
  %7310 = vmatmul.f32.gmra.mxu0 %v6117
  %v7311 = vpop.f32.mrf.mxu0
  %v7312 = vadd.f32 %v7280, %v7311
  %7313 = vmatmul.f32.gmra.mxu0 %v6120
  %v7314 = vpop.f32.mrf.mxu0
  %v7315 = vadd.f32 %v7283, %v7314
  %7316 = vmatmul.f32.gmra.mxu0 %v6123
  %v7317 = vpop.f32.mrf.mxu0
  %v7318 = vadd.f32 %v7286, %v7317
  %7319 = vmatmul.f32.gmra.mxu0 %v6126
  %v7320 = vpop.f32.mrf.mxu0
  %v7321 = vadd.f32 %v7289, %v7320
  %7322 = vdwg.mxu0
  %7323 = vmatpush.msra.mxu0 %v5673
  %7324 = vmatpush.msra.mxu0 %v5671
  %7325 = vmatpush.msra.mxu0 %v5669
  %7326 = vmatpush.msra.mxu0 %v5667
  %7327 = vmatpush.msra.mxu0 %v5665
  %7328 = vmatpush.msra.mxu0 %v5663
  %7329 = vmatpush.msra.mxu0 %v5661
  %7330 = vmatpush.msra.mxu0 %v5659
  %7331 = vmatpush.msra.mxu0 %v5657
  %7332 = vmatpush.msra.mxu0 %v5655
  %7333 = vmatpush.msra.mxu0 %v5653
  %7334 = vmatpush.msra.mxu0 %v5651
  %7335 = vmatpush.msra.mxu0 %v5649
  %7336 = vmatpush.msra.mxu0 %v5647
  %7337 = vmatpush.msra.mxu0 %v5645
  %7338 = vmatpush.msra.mxu0 %v5643
  %7339 = vmatmul.f32.gmra.mxu0 %v6046
  %v7340 = vpop.f32.mrf.mxu0
  %v7341 = vadd.f32 0.0, %v7340
  %7342 = vmatmul.f32.gmra.mxu0 %v6048
  %v7343 = vpop.f32.mrf.mxu0
  %v7344 = vadd.f32 0.0, %v7343
  %7345 = vmatmul.f32.gmra.mxu0 %v6050
  %v7346 = vpop.f32.mrf.mxu0
  %v7347 = vadd.f32 0.0, %v7346
  %7348 = vmatmul.f32.gmra.mxu0 %v6052
  %v7349 = vpop.f32.mrf.mxu0
  %v7350 = vadd.f32 0.0, %v7349
  %7351 = vmatmul.f32.gmra.mxu0 %v6054
  %v7352 = vpop.f32.mrf.mxu0
  %v7353 = vadd.f32 0.0, %v7352
  %7354 = vdwg.mxu0
  %7355 = vmatpush.msra.mxu0 0.0
  %7356 = vmatpush.msra.mxu0 0.0
  %7357 = vmatpush.msra.mxu0 0.0
  %7358 = vmatpush.msra.mxu0 0.0
  %7359 = vmatpush.msra.mxu0 %v5697
  %7360 = vmatpush.msra.mxu0 %v5695
  %7361 = vmatpush.msra.mxu0 %v5693
  %7362 = vmatpush.msra.mxu0 %v5691
  %7363 = vmatpush.msra.mxu0 %v5689
  %7364 = vmatpush.msra.mxu0 %v5687
  %7365 = vmatpush.msra.mxu0 %v5685
  %7366 = vmatpush.msra.mxu0 %v5683
  %7367 = vmatpush.msra.mxu0 %v5681
  %7368 = vmatpush.msra.mxu0 %v5679
  %7369 = vmatpush.msra.mxu0 %v5677
  %7370 = vmatpush.msra.mxu0 %v5675
  %7371 = vmatmul.f32.gmra.mxu0 %v6114
  %v7372 = vpop.f32.mrf.mxu0
  %v7373 = vadd.f32 %v7341, %v7372
  %7374 = vmatmul.f32.gmra.mxu0 %v6117
  %v7375 = vpop.f32.mrf.mxu0
  %v7376 = vadd.f32 %v7344, %v7375
  %7377 = vmatmul.f32.gmra.mxu0 %v6120
  %v7378 = vpop.f32.mrf.mxu0
  %v7379 = vadd.f32 %v7347, %v7378
  %7380 = vmatmul.f32.gmra.mxu0 %v6123
  %v7381 = vpop.f32.mrf.mxu0
  %v7382 = vadd.f32 %v7350, %v7381
  %7383 = vmatmul.f32.gmra.mxu0 %v6126
  %v7384 = vpop.f32.mrf.mxu0
  %v7385 = vadd.f32 %v7353, %v7384
  %7386 = vdwg.mxu0
  %7387 = vmatpush.msra.mxu0 %v5872
  %7388 = vmatpush.msra.mxu0 %v5870
  %7389 = vmatpush.msra.mxu0 %v5868
  %7390 = vmatpush.msra.mxu0 %v5866
  %7391 = vmatpush.msra.mxu0 %v5864
  %7392 = vmatpush.msra.mxu0 %v5862
  %7393 = vmatpush.msra.mxu0 %v5860
  %7394 = vmatpush.msra.mxu0 %v5858
  %7395 = vmatpush.msra.mxu0 %v5856
  %7396 = vmatpush.msra.mxu0 %v5854
  %7397 = vmatpush.msra.mxu0 %v5852
  %7398 = vmatpush.msra.mxu0 %v5850
  %7399 = vmatpush.msra.mxu0 %v5848
  %7400 = vmatpush.msra.mxu0 %v5846
  %7401 = vmatpush.msra.mxu0 %v5844
  %7402 = vmatpush.msra.mxu0 %v5842
  %7403 = vmatmul.f32.gmra.mxu0 %v6046
  %v7404 = vpop.f32.mrf.mxu0
  %v7405 = vadd.f32 0.0, %v7404
  %7406 = vmatmul.f32.gmra.mxu0 %v6048
  %v7407 = vpop.f32.mrf.mxu0
  %v7408 = vadd.f32 0.0, %v7407
  %7409 = vmatmul.f32.gmra.mxu0 %v6050
  %v7410 = vpop.f32.mrf.mxu0
  %v7411 = vadd.f32 0.0, %v7410
  %7412 = vmatmul.f32.gmra.mxu0 %v6052
  %v7413 = vpop.f32.mrf.mxu0
  %v7414 = vadd.f32 0.0, %v7413
  %7415 = vmatmul.f32.gmra.mxu0 %v6054
  %v7416 = vpop.f32.mrf.mxu0
  %v7417 = vadd.f32 0.0, %v7416
  %7418 = vdwg.mxu0
  %7419 = vmatpush.msra.mxu0 0.0
  %7420 = vmatpush.msra.mxu0 0.0
  %7421 = vmatpush.msra.mxu0 0.0
  %7422 = vmatpush.msra.mxu0 0.0
  %7423 = vmatpush.msra.mxu0 %v5896
  %7424 = vmatpush.msra.mxu0 %v5894
  %7425 = vmatpush.msra.mxu0 %v5892
  %7426 = vmatpush.msra.mxu0 %v5890
  %7427 = vmatpush.msra.mxu0 %v5888
  %7428 = vmatpush.msra.mxu0 %v5886
  %7429 = vmatpush.msra.mxu0 %v5884
  %7430 = vmatpush.msra.mxu0 %v5882
  %7431 = vmatpush.msra.mxu0 %v5880
  %7432 = vmatpush.msra.mxu0 %v5878
  %7433 = vmatpush.msra.mxu0 %v5876
  %7434 = vmatpush.msra.mxu0 %v5874
  %7435 = vmatmul.f32.gmra.mxu0 %v6114
  %v7436 = vpop.f32.mrf.mxu0
  %v7437 = vadd.f32 %v7405, %v7436
  %7438 = vmatmul.f32.gmra.mxu0 %v6117
  %v7439 = vpop.f32.mrf.mxu0
  %v7440 = vadd.f32 %v7408, %v7439
  %7441 = vmatmul.f32.gmra.mxu0 %v6120
  %v7442 = vpop.f32.mrf.mxu0
  %v7443 = vadd.f32 %v7411, %v7442
  %7444 = vmatmul.f32.gmra.mxu0 %v6123
  %v7445 = vpop.f32.mrf.mxu0
  %v7446 = vadd.f32 %v7414, %v7445
  %7447 = vmatmul.f32.gmra.mxu0 %v6126
  %v7448 = vpop.f32.mrf.mxu0
  %v7449 = vadd.f32 %v7417, %v7448
  %7450 = vdwg.mxu0
  %7451 = vmatpush.msra.mxu0 %v5873
  %7452 = vmatpush.msra.mxu0 %v5871
  %7453 = vmatpush.msra.mxu0 %v5869
  %7454 = vmatpush.msra.mxu0 %v5867
  %7455 = vmatpush.msra.mxu0 %v5865
  %7456 = vmatpush.msra.mxu0 %v5863
  %7457 = vmatpush.msra.mxu0 %v5861
  %7458 = vmatpush.msra.mxu0 %v5859
  %7459 = vmatpush.msra.mxu0 %v5857
  %7460 = vmatpush.msra.mxu0 %v5855
  %7461 = vmatpush.msra.mxu0 %v5853
  %7462 = vmatpush.msra.mxu0 %v5851
  %7463 = vmatpush.msra.mxu0 %v5849
  %7464 = vmatpush.msra.mxu0 %v5847
  %7465 = vmatpush.msra.mxu0 %v5845
  %7466 = vmatpush.msra.mxu0 %v5843
  %7467 = vmatmul.f32.gmra.mxu0 %v6046
  %v7468 = vpop.f32.mrf.mxu0
  %v7469 = vadd.f32 0.0, %v7468
  %7470 = vmatmul.f32.gmra.mxu0 %v6048
  %v7471 = vpop.f32.mrf.mxu0
  %v7472 = vadd.f32 0.0, %v7471
  %7473 = vmatmul.f32.gmra.mxu0 %v6050
  %v7474 = vpop.f32.mrf.mxu0
  %v7475 = vadd.f32 0.0, %v7474
  %7476 = vmatmul.f32.gmra.mxu0 %v6052
  %v7477 = vpop.f32.mrf.mxu0
  %v7478 = vadd.f32 0.0, %v7477
  %7479 = vmatmul.f32.gmra.mxu0 %v6054
  %v7480 = vpop.f32.mrf.mxu0
  %v7481 = vadd.f32 0.0, %v7480
  %7482 = vdwg.mxu0
  %7483 = vmatpush.msra.mxu0 0.0
  %7484 = vmatpush.msra.mxu0 0.0
  %7485 = vmatpush.msra.mxu0 0.0
  %7486 = vmatpush.msra.mxu0 0.0
  %7487 = vmatpush.msra.mxu0 %v5897
  %7488 = vmatpush.msra.mxu0 %v5895
  %7489 = vmatpush.msra.mxu0 %v5893
  %7490 = vmatpush.msra.mxu0 %v5891
  %7491 = vmatpush.msra.mxu0 %v5889
  %7492 = vmatpush.msra.mxu0 %v5887
  %7493 = vmatpush.msra.mxu0 %v5885
  %7494 = vmatpush.msra.mxu0 %v5883
  %7495 = vmatpush.msra.mxu0 %v5881
  %7496 = vmatpush.msra.mxu0 %v5879
  %7497 = vmatpush.msra.mxu0 %v5877
  %7498 = vmatpush.msra.mxu0 %v5875
  %7499 = vmatmul.f32.gmra.mxu0 %v6114
  %v7500 = vpop.f32.mrf.mxu0
  %v7501 = vadd.f32 %v7469, %v7500
  %7502 = vmatmul.f32.gmra.mxu0 %v6117
  %v7503 = vpop.f32.mrf.mxu0
  %v7504 = vadd.f32 %v7472, %v7503
  %7505 = vmatmul.f32.gmra.mxu0 %v6120
  %v7506 = vpop.f32.mrf.mxu0
  %v7507 = vadd.f32 %v7475, %v7506
  %7508 = vmatmul.f32.gmra.mxu0 %v6123
  %v7509 = vpop.f32.mrf.mxu0
  %v7510 = vadd.f32 %v7478, %v7509
  %7511 = vmatmul.f32.gmra.mxu0 %v6126
  %v7512 = vpop.f32.mrf.mxu0
  %v7513 = vadd.f32 %v7481, %v7512
  %7514 = vdwg.mxu0
  %v7515 = vadd.f32 %v7239, %v7309
  %v7516 = vadd.f32 %v7240, %v7373
  %v7517 = vadd.f32 %v7241, %v7312
  %v7518 = vadd.f32 %v7242, %v7376
  %v7519 = vadd.f32 %v7243, %v7315
  %v7520 = vadd.f32 %v7244, %v7379
  %v7521 = vadd.f32 %v7245, %v7318
  %v7522 = vadd.f32 %v7246, %v7382
  %v7523 = vadd.f32 %v7247, %v7321
  %v7524 = vadd.f32 %v7248, %v7385
  %v7525 = vadd.f32 %v7249, %v7437
  %v7526 = vadd.f32 %v7250, %v7501
  %v7527 = vadd.f32 %v7251, %v7440
  %v7528 = vadd.f32 %v7252, %v7504
  %v7529 = vadd.f32 %v7253, %v7443
  %v7530 = vadd.f32 %v7254, %v7507
  %v7531 = vadd.f32 %v7255, %v7446
  %v7532 = vadd.f32 %v7256, %v7510
  %v7533 = vadd.f32 %v7257, %v7449
  %v7534 = vadd.f32 %v7258, %v7513
  %v7535 = vld [vmem:[#allocation3 + $0x20] sm:$0xff]
  %v7536 = vld [vmem:[#allocation3 + $0x28] sm:$0xff]
  %v7537 = vld [vmem:[#allocation3 + $0x30] sm:$0xff]
  %v7538 = vld [vmem:[#allocation3 + $0x38] sm:$0xff]
  %v7539 = vld [vmem:[#allocation3 + $0x40] sm:$0xff]
  %v7540 = vld [vmem:[#allocation3 + $0x48] sm:$0xff]
  %v7541 = vld [vmem:[#allocation3 + $0x50] sm:$0xff]
  %v7542 = vld [vmem:[#allocation3 + $0x58] sm:$0xff]
  %v7543 = vld [vmem:[#allocation3 + $0x60] sm:$0xff]
  %v7544 = vld [vmem:[#allocation3 + $0x68] sm:$0xff]
  %v7546 = vsel %vm127, %v7536, 0
  %v7549 = vsel %vm127, %v7538, 0
  %v7552 = vsel %vm127, %v7540, 0
  %v7555 = vsel %vm127, %v7542, 0
  %v7558 = vsel %vm127, %v7544, 0
  %7560 = vmatpush.msra.mxu0 %v6087
  %7561 = vmatpush.msra.mxu0 %v6085
  %7562 = vmatpush.msra.mxu0 %v6083
  %7563 = vmatpush.msra.mxu0 %v6081
  %7564 = vmatpush.msra.mxu0 %v6079
  %7565 = vmatpush.msra.mxu0 %v6077
  %7566 = vmatpush.msra.mxu0 %v6075
  %7567 = vmatpush.msra.mxu0 %v6073
  %7568 = vmatpush.msra.mxu0 %v6071
  %7569 = vmatpush.msra.mxu0 %v6069
  %7570 = vmatpush.msra.mxu0 %v6067
  %7571 = vmatpush.msra.mxu0 %v6065
  %7572 = vmatpush.msra.mxu0 %v6063
  %7573 = vmatpush.msra.mxu0 %v6061
  %7574 = vmatpush.msra.mxu0 %v6059
  %7575 = vmatpush.msra.mxu0 %v6057
  %7576 = vmatmul.f32.gmra.mxu0 %v7535
  %v7577 = vpop.f32.mrf.mxu0
  %v7578 = vadd.f32 0.0, %v7577
  %7579 = vmatmul.f32.gmra.mxu0 %v7537
  %v7580 = vpop.f32.mrf.mxu0
  %v7581 = vadd.f32 0.0, %v7580
  %7582 = vmatmul.f32.gmra.mxu0 %v7539
  %v7583 = vpop.f32.mrf.mxu0
  %v7584 = vadd.f32 0.0, %v7583
  %7585 = vmatmul.f32.gmra.mxu0 %v7541
  %v7586 = vpop.f32.mrf.mxu0
  %v7587 = vadd.f32 0.0, %v7586
  %7588 = vmatmul.f32.gmra.mxu0 %v7543
  %v7589 = vpop.f32.mrf.mxu0
  %v7590 = vadd.f32 0.0, %v7589
  %7591 = vdwg.mxu0
  %7592 = vmatpush.msra.mxu0 0.0
  %7593 = vmatpush.msra.mxu0 0.0
  %7594 = vmatpush.msra.mxu0 0.0
  %7595 = vmatpush.msra.mxu0 0.0
  %7596 = vmatpush.msra.mxu0 %v6111
  %7597 = vmatpush.msra.mxu0 %v6109
  %7598 = vmatpush.msra.mxu0 %v6107
  %7599 = vmatpush.msra.mxu0 %v6105
  %7600 = vmatpush.msra.mxu0 %v6103
  %7601 = vmatpush.msra.mxu0 %v6101
  %7602 = vmatpush.msra.mxu0 %v6099
  %7603 = vmatpush.msra.mxu0 %v6097
  %7604 = vmatpush.msra.mxu0 %v6095
  %7605 = vmatpush.msra.mxu0 %v6093
  %7606 = vmatpush.msra.mxu0 %v6091
  %7607 = vmatpush.msra.mxu0 %v6089
  %7608 = vmatmul.f32.gmra.mxu0 %v7546
  %v7609 = vpop.f32.mrf.mxu0
  %v7610 = vadd.f32 %v7578, %v7609
  %7611 = vmatmul.f32.gmra.mxu0 %v7549
  %v7612 = vpop.f32.mrf.mxu0
  %v7613 = vadd.f32 %v7581, %v7612
  %7614 = vmatmul.f32.gmra.mxu0 %v7552
  %v7615 = vpop.f32.mrf.mxu0
  %v7616 = vadd.f32 %v7584, %v7615
  %7617 = vmatmul.f32.gmra.mxu0 %v7555
  %v7618 = vpop.f32.mrf.mxu0
  %v7619 = vadd.f32 %v7587, %v7618
  %7620 = vmatmul.f32.gmra.mxu0 %v7558
  %v7621 = vpop.f32.mrf.mxu0
  %v7622 = vadd.f32 %v7590, %v7621
  %7623 = vdwg.mxu0
  %7624 = vmatpush.msra.mxu0 %v6088
  %7625 = vmatpush.msra.mxu0 %v6086
  %7626 = vmatpush.msra.mxu0 %v6084
  %7627 = vmatpush.msra.mxu0 %v6082
  %7628 = vmatpush.msra.mxu0 %v6080
  %7629 = vmatpush.msra.mxu0 %v6078
  %7630 = vmatpush.msra.mxu0 %v6076
  %7631 = vmatpush.msra.mxu0 %v6074
  %7632 = vmatpush.msra.mxu0 %v6072
  %7633 = vmatpush.msra.mxu0 %v6070
  %7634 = vmatpush.msra.mxu0 %v6068
  %7635 = vmatpush.msra.mxu0 %v6066
  %7636 = vmatpush.msra.mxu0 %v6064
  %7637 = vmatpush.msra.mxu0 %v6062
  %7638 = vmatpush.msra.mxu0 %v6060
  %7639 = vmatpush.msra.mxu0 %v6058
  %7640 = vmatmul.f32.gmra.mxu0 %v7535
  %v7641 = vpop.f32.mrf.mxu0
  %v7642 = vadd.f32 0.0, %v7641
  %7643 = vmatmul.f32.gmra.mxu0 %v7537
  %v7644 = vpop.f32.mrf.mxu0
  %v7645 = vadd.f32 0.0, %v7644
  %7646 = vmatmul.f32.gmra.mxu0 %v7539
  %v7647 = vpop.f32.mrf.mxu0
  %v7648 = vadd.f32 0.0, %v7647
  %7649 = vmatmul.f32.gmra.mxu0 %v7541
  %v7650 = vpop.f32.mrf.mxu0
  %v7651 = vadd.f32 0.0, %v7650
  %7652 = vmatmul.f32.gmra.mxu0 %v7543
  %v7653 = vpop.f32.mrf.mxu0
  %v7654 = vadd.f32 0.0, %v7653
  %7655 = vdwg.mxu0
  %7656 = vmatpush.msra.mxu0 0.0
  %7657 = vmatpush.msra.mxu0 0.0
  %7658 = vmatpush.msra.mxu0 0.0
  %7659 = vmatpush.msra.mxu0 0.0
  %7660 = vmatpush.msra.mxu0 %v6112
  %7661 = vmatpush.msra.mxu0 %v6110
  %7662 = vmatpush.msra.mxu0 %v6108
  %7663 = vmatpush.msra.mxu0 %v6106
  %7664 = vmatpush.msra.mxu0 %v6104
  %7665 = vmatpush.msra.mxu0 %v6102
  %7666 = vmatpush.msra.mxu0 %v6100
  %7667 = vmatpush.msra.mxu0 %v6098
  %7668 = vmatpush.msra.mxu0 %v6096
  %7669 = vmatpush.msra.mxu0 %v6094
  %7670 = vmatpush.msra.mxu0 %v6092
  %7671 = vmatpush.msra.mxu0 %v6090
  %7672 = vmatmul.f32.gmra.mxu0 %v7546
  %v7673 = vpop.f32.mrf.mxu0
  %v7674 = vadd.f32 %v7642, %v7673
  %7675 = vmatmul.f32.gmra.mxu0 %v7549
  %v7676 = vpop.f32.mrf.mxu0
  %v7677 = vadd.f32 %v7645, %v7676
  %7678 = vmatmul.f32.gmra.mxu0 %v7552
  %v7679 = vpop.f32.mrf.mxu0
  %v7680 = vadd.f32 %v7648, %v7679
  %7681 = vmatmul.f32.gmra.mxu0 %v7555
  %v7682 = vpop.f32.mrf.mxu0
  %v7683 = vadd.f32 %v7651, %v7682
  %7684 = vmatmul.f32.gmra.mxu0 %v7558
  %v7685 = vpop.f32.mrf.mxu0
  %v7686 = vadd.f32 %v7654, %v7685
  %7687 = vdwg.mxu0
  %7688 = vmatpush.msra.mxu0 %v6287
  %7689 = vmatpush.msra.mxu0 %v6285
  %7690 = vmatpush.msra.mxu0 %v6283
  %7691 = vmatpush.msra.mxu0 %v6281
  %7692 = vmatpush.msra.mxu0 %v6279
  %7693 = vmatpush.msra.mxu0 %v6277
  %7694 = vmatpush.msra.mxu0 %v6275
  %7695 = vmatpush.msra.mxu0 %v6273
  %7696 = vmatpush.msra.mxu0 %v6271
  %7697 = vmatpush.msra.mxu0 %v6269
  %7698 = vmatpush.msra.mxu0 %v6267
  %7699 = vmatpush.msra.mxu0 %v6265
  %7700 = vmatpush.msra.mxu0 %v6263
  %7701 = vmatpush.msra.mxu0 %v6261
  %7702 = vmatpush.msra.mxu0 %v6259
  %7703 = vmatpush.msra.mxu0 %v6257
  %7704 = vmatmul.f32.gmra.mxu0 %v7535
  %v7705 = vpop.f32.mrf.mxu0
  %v7706 = vadd.f32 0.0, %v7705
  %7707 = vmatmul.f32.gmra.mxu0 %v7537
  %v7708 = vpop.f32.mrf.mxu0
  %v7709 = vadd.f32 0.0, %v7708
  %7710 = vmatmul.f32.gmra.mxu0 %v7539
  %v7711 = vpop.f32.mrf.mxu0
  %v7712 = vadd.f32 0.0, %v7711
  %7713 = vmatmul.f32.gmra.mxu0 %v7541
  %v7714 = vpop.f32.mrf.mxu0
  %v7715 = vadd.f32 0.0, %v7714
  %7716 = vmatmul.f32.gmra.mxu0 %v7543
  %v7717 = vpop.f32.mrf.mxu0
  %v7718 = vadd.f32 0.0, %v7717
  %7719 = vdwg.mxu0
  %7720 = vmatpush.msra.mxu0 0.0
  %7721 = vmatpush.msra.mxu0 0.0
  %7722 = vmatpush.msra.mxu0 0.0
  %7723 = vmatpush.msra.mxu0 0.0
  %7724 = vmatpush.msra.mxu0 %v6311
  %7725 = vmatpush.msra.mxu0 %v6309
  %7726 = vmatpush.msra.mxu0 %v6307
  %7727 = vmatpush.msra.mxu0 %v6305
  %7728 = vmatpush.msra.mxu0 %v6303
  %7729 = vmatpush.msra.mxu0 %v6301
  %7730 = vmatpush.msra.mxu0 %v6299
  %7731 = vmatpush.msra.mxu0 %v6297
  %7732 = vmatpush.msra.mxu0 %v6295
  %7733 = vmatpush.msra.mxu0 %v6293
  %7734 = vmatpush.msra.mxu0 %v6291
  %7735 = vmatpush.msra.mxu0 %v6289
  %7736 = vmatmul.f32.gmra.mxu0 %v7546
  %v7737 = vpop.f32.mrf.mxu0
  %v7738 = vadd.f32 %v7706, %v7737
  %7739 = vmatmul.f32.gmra.mxu0 %v7549
  %v7740 = vpop.f32.mrf.mxu0
  %v7741 = vadd.f32 %v7709, %v7740
  %7742 = vmatmul.f32.gmra.mxu0 %v7552
  %v7743 = vpop.f32.mrf.mxu0
  %v7744 = vadd.f32 %v7712, %v7743
  %7745 = vmatmul.f32.gmra.mxu0 %v7555
  %v7746 = vpop.f32.mrf.mxu0
  %v7747 = vadd.f32 %v7715, %v7746
  %7748 = vmatmul.f32.gmra.mxu0 %v7558
  %v7749 = vpop.f32.mrf.mxu0
  %v7750 = vadd.f32 %v7718, %v7749
  %7751 = vdwg.mxu0
  %7752 = vmatpush.msra.mxu0 %v6288
  %7753 = vmatpush.msra.mxu0 %v6286
  %7754 = vmatpush.msra.mxu0 %v6284
  %7755 = vmatpush.msra.mxu0 %v6282
  %7756 = vmatpush.msra.mxu0 %v6280
  %7757 = vmatpush.msra.mxu0 %v6278
  %7758 = vmatpush.msra.mxu0 %v6276
  %7759 = vmatpush.msra.mxu0 %v6274
  %7760 = vmatpush.msra.mxu0 %v6272
  %7761 = vmatpush.msra.mxu0 %v6270
  %7762 = vmatpush.msra.mxu0 %v6268
  %7763 = vmatpush.msra.mxu0 %v6266
  %7764 = vmatpush.msra.mxu0 %v6264
  %7765 = vmatpush.msra.mxu0 %v6262
  %7766 = vmatpush.msra.mxu0 %v6260
  %7767 = vmatpush.msra.mxu0 %v6258
  %7768 = vmatmul.f32.gmra.mxu0 %v7535
  %v7769 = vpop.f32.mrf.mxu0
  %v7770 = vadd.f32 0.0, %v7769
  %7771 = vmatmul.f32.gmra.mxu0 %v7537
  %v7772 = vpop.f32.mrf.mxu0
  %v7773 = vadd.f32 0.0, %v7772
  %7774 = vmatmul.f32.gmra.mxu0 %v7539
  %v7775 = vpop.f32.mrf.mxu0
  %v7776 = vadd.f32 0.0, %v7775
  %7777 = vmatmul.f32.gmra.mxu0 %v7541
  %v7778 = vpop.f32.mrf.mxu0
  %v7779 = vadd.f32 0.0, %v7778
  %7780 = vmatmul.f32.gmra.mxu0 %v7543
  %v7781 = vpop.f32.mrf.mxu0
  %v7782 = vadd.f32 0.0, %v7781
  %7783 = vdwg.mxu0
  %7784 = vmatpush.msra.mxu0 0.0
  %7785 = vmatpush.msra.mxu0 0.0
  %7786 = vmatpush.msra.mxu0 0.0
  %7787 = vmatpush.msra.mxu0 0.0
  %7788 = vmatpush.msra.mxu0 %v6312
  %7789 = vmatpush.msra.mxu0 %v6310
  %7790 = vmatpush.msra.mxu0 %v6308
  %7791 = vmatpush.msra.mxu0 %v6306
  %7792 = vmatpush.msra.mxu0 %v6304
  %7793 = vmatpush.msra.mxu0 %v6302
  %7794 = vmatpush.msra.mxu0 %v6300
  %7795 = vmatpush.msra.mxu0 %v6298
  %7796 = vmatpush.msra.mxu0 %v6296
  %7797 = vmatpush.msra.mxu0 %v6294
  %7798 = vmatpush.msra.mxu0 %v6292
  %7799 = vmatpush.msra.mxu0 %v6290
  %7800 = vmatmul.f32.gmra.mxu0 %v7546
  %v7801 = vpop.f32.mrf.mxu0
  %v7802 = vadd.f32 %v7770, %v7801
  %7803 = vmatmul.f32.gmra.mxu0 %v7549
  %v7804 = vpop.f32.mrf.mxu0
  %v7805 = vadd.f32 %v7773, %v7804
  %7806 = vmatmul.f32.gmra.mxu0 %v7552
  %v7807 = vpop.f32.mrf.mxu0
  %v7808 = vadd.f32 %v7776, %v7807
  %7809 = vmatmul.f32.gmra.mxu0 %v7555
  %v7810 = vpop.f32.mrf.mxu0
  %v7811 = vadd.f32 %v7779, %v7810
  %7812 = vmatmul.f32.gmra.mxu0 %v7558
  %v7813 = vpop.f32.mrf.mxu0
  %v7814 = vadd.f32 %v7782, %v7813
  %7815 = vdwg.mxu0
  %v7816 = vadd.f32 %v7515, %v7610
  %v7817 = vadd.f32 %v7516, %v7674
  %v7818 = vadd.f32 %v7517, %v7613
  %v7819 = vadd.f32 %v7518, %v7677
  %v7820 = vadd.f32 %v7519, %v7616
  %v7821 = vadd.f32 %v7520, %v7680
  %v7822 = vadd.f32 %v7521, %v7619
  %v7823 = vadd.f32 %v7522, %v7683
  %v7824 = vadd.f32 %v7523, %v7622
  %v7825 = vadd.f32 %v7524, %v7686
  %v7826 = vadd.f32 %v7525, %v7738
  %v7827 = vadd.f32 %v7526, %v7802
  %v7828 = vadd.f32 %v7527, %v7741
  %v7829 = vadd.f32 %v7528, %v7805
  %v7830 = vadd.f32 %v7529, %v7744
  %v7831 = vadd.f32 %v7530, %v7808
  %v7832 = vadd.f32 %v7531, %v7747
  %v7833 = vadd.f32 %v7532, %v7811
  %v7834 = vadd.f32 %v7533, %v7750
  %v7835 = vadd.f32 %v7534, %v7814
  %v7836 = vmax.f32 %v7816, %v7826
  %v7837 = vmax.f32 %v7817, %v7827
  %v7838 = vmax.f32 %v7818, %v7828
  %v7839 = vmax.f32 %v7819, %v7829
  %v7840 = vmax.f32 %v7820, %v7830
  %v7841 = vmax.f32 %v7821, %v7831
  %v7842 = vmax.f32 %v7822, %v7832
  %v7843 = vmax.f32 %v7823, %v7833
  %v7844 = vmax.f32 %v7824, %v7834
  %v7845 = vmax.f32 %v7825, %v7835
  %v7846 = vmax.f32 %v6461, %v7836
  %v7847 = vmax.f32 %v6462, %v7837
  %v7848 = vmax.f32 %v6463, %v7838
  %v7849 = vmax.f32 %v6464, %v7839
  %v7850 = vmax.f32 %v6465, %v7840
  %v7851 = vmax.f32 %v6466, %v7841
  %v7852 = vmax.f32 %v6467, %v7842
  %v7853 = vmax.f32 %v6468, %v7843
  %v7854 = vmax.f32 %v6469, %v7844
  %v7855 = vmax.f32 %v6470, %v7845
  %v7856 = vld [vmem:[%s4] sm:$0x3]
  %v7858 = vperm.slane %v7856, 0
  %v7859 = vperm.slane %v7856, 1
  %v7862 = vadd.f32 %v7846, %v7858
  %v7863 = vadd.f32 %v7847, %v7859
  %v7864 = vadd.f32 %v7848, %v7858
  %v7865 = vadd.f32 %v7849, %v7859
  %v7866 = vadd.f32 %v7850, %v7858
  %v7867 = vadd.f32 %v7851, %v7859
  %v7868 = vadd.f32 %v7852, %v7858
  %v7869 = vadd.f32 %v7853, %v7859
  %v7870 = vadd.f32 %v7854, %v7858
  %v7871 = vadd.f32 %v7855, %v7859
  %v7872 = vmax.f32 %v7862, 0.0
  %v7873 = vmax.f32 %v7863, 0.0
  %v7874 = vmax.f32 %v7864, 0.0
  %v7875 = vmax.f32 %v7865, 0.0
  %v7876 = vmax.f32 %v7866, 0.0
  %v7877 = vmax.f32 %v7867, 0.0
  %v7878 = vmax.f32 %v7868, 0.0
  %v7879 = vmax.f32 %v7869, 0.0
  %v7880 = vmax.f32 %v7870, 0.0
  %v7881 = vmax.f32 %v7871, 0.0
  %v7882 = vld [vmem:[%s5] sm:$0xff]
  %v7883 = vld [vmem:[%s5 + $0x8] sm:$0xff]
  %v7884 = vld [vmem:[%s5 + $0x10] sm:$0xff]
  %v7885 = vld [vmem:[%s5 + $0x18] sm:$0xff]
  %v7886 = vld [vmem:[%s5 + $0x20] sm:$0xff]
  %v7887 = vld [vmem:[%s5 + $0x28] sm:$0xff]
  %v7888 = vld [vmem:[%s5 + $0x30] sm:$0xff]
  %v7889 = vld [vmem:[%s5 + $0x38] sm:$0xff]
  %v7890 = vld [vmem:[%s5 + $0x40] sm:$0xff]
  %v7891 = vld [vmem:[%s5 + $0x48] sm:$0xff]
  %v7892 = vld [vmem:[%s5 + $0x50] sm:$0xff]
  %v7893 = vld [vmem:[%s5 + $0x58] sm:$0xff]
  %v7894 = vld [vmem:[%s5 + $0x60] sm:$0xff]
  %v7895 = vld [vmem:[%s5 + $0x68] sm:$0xff]
  %v7896 = vld [vmem:[%s5 + $0x70] sm:$0xff]
  %v7897 = vld [vmem:[%s5 + $0x78] sm:$0xff]
  %v7898 = vld [vmem:[%s5 + $0x80] sm:$0xff]
  %v7899 = vld [vmem:[%s5 + $0x88] sm:$0xff]
  %v7900 = vld [vmem:[%s5 + $0x90] sm:$0xff]
  %v7901 = vld [vmem:[%s5 + $0x98] sm:$0xff]
  %s7902 = scalar_lea.vmem %s5, 160
  %v7903 = vld [vmem:[%s7902] sm:$0xff]
  %v7904 = vld [vmem:[%s7902 + $0x8] sm:$0xff]
  %v7905 = vld [vmem:[%s7902 + $0x10] sm:$0xff]
  %v7906 = vld [vmem:[%s7902 + $0x18] sm:$0xff]
  %v7907 = vld [vmem:[%s7902 + $0x20] sm:$0xff]
  %v7908 = vld [vmem:[%s7902 + $0x28] sm:$0xff]
  %v7909 = vld [vmem:[%s7902 + $0x30] sm:$0xff]
  %v7910 = vld [vmem:[%s7902 + $0x38] sm:$0xff]
  %v7911 = vld [vmem:[%s7902 + $0x40] sm:$0xff]
  %v7912 = vld [vmem:[%s7902 + $0x48] sm:$0xff]
  %v7913 = vld [vmem:[%s7902 + $0x50] sm:$0xff]
  %v7914 = vld [vmem:[%s7902 + $0x58] sm:$0xff]
  %v7915 = vld [vmem:[%s7902 + $0x60] sm:$0xff]
  %v7916 = vld [vmem:[%s7902 + $0x68] sm:$0xff]
  %v7917 = vld [vmem:[%s7902 + $0x70] sm:$0xff]
  %v7918 = vld [vmem:[%s7902 + $0x78] sm:$0xff]
  %v7919 = vld [vmem:[%s7902 + $0x80] sm:$0xff]
  %v7920 = vld [vmem:[%s7902 + $0x88] sm:$0xff]
  %v7921 = vld [vmem:[%s7902 + $0x90] sm:$0xff]
  %v7922 = vld [vmem:[%s7902 + $0x98] sm:$0xff]
  %vm7923 = vcmask 261120
  %v7925 = vsel %vm7923, %v7875, 0
  %7927 = vmatpush.msra.mxu0 %v7918
  %7928 = vmatpush.msra.mxu0 %v7917
  %7929 = vmatpush.msra.mxu0 %v7916
  %7930 = vmatpush.msra.mxu0 %v7915
  %7931 = vmatpush.msra.mxu0 %v7914
  %7932 = vmatpush.msra.mxu0 %v7913
  %7933 = vmatpush.msra.mxu0 %v7912
  %7934 = vmatpush.msra.mxu0 %v7911
  %7935 = vmatpush.msra.mxu0 %v7910
  %7936 = vmatpush.msra.mxu0 %v7909
  %7937 = vmatpush.msra.mxu0 %v7908
  %7938 = vmatpush.msra.mxu0 %v7907
  %7939 = vmatpush.msra.mxu0 %v7906
  %7940 = vmatpush.msra.mxu0 %v7905
  %7941 = vmatpush.msra.mxu0 %v7904
  %7942 = vmatpush.msra.mxu0 %v7903
  %7943 = vmatmul.f32.gmra.mxu0 %v7874
  %v7944 = vpop.f32.mrf.mxu0
  %v7945 = vadd.f32 0.0, %v7944
  %7946 = vdwg.mxu0
  %7947 = vmatpush.msra.mxu0 0.0
  %7948 = vmatpush.msra.mxu0 0.0
  %7949 = vmatpush.msra.mxu0 0.0
  %7950 = vmatpush.msra.mxu0 0.0
  %7951 = vmatpush.msra.mxu0 0.0
  %7952 = vmatpush.msra.mxu0 0.0
  %7953 = vmatpush.msra.mxu0 0.0
  %7954 = vmatpush.msra.mxu0 0.0
  %7955 = vmatpush.msra.mxu0 0.0
  %7956 = vmatpush.msra.mxu0 0.0
  %7957 = vmatpush.msra.mxu0 0.0
  %7958 = vmatpush.msra.mxu0 0.0
  %7959 = vmatpush.msra.mxu0 %v7922
  %7960 = vmatpush.msra.mxu0 %v7921
  %7961 = vmatpush.msra.mxu0 %v7920
  %7962 = vmatpush.msra.mxu0 %v7919
  %7963 = vmatmul.f32.gmra.mxu0 %v7925
  %v7964 = vpop.f32.mrf.mxu0
  %v7965 = vadd.f32 %v7945, %v7964
  %7966 = vdwg.mxu0
  %v7968 = vsel %vm7923, %v7873, 0
  %7970 = vmatpush.msra.mxu0 %v7897
  %7971 = vmatpush.msra.mxu0 %v7896
  %7972 = vmatpush.msra.mxu0 %v7895
  %7973 = vmatpush.msra.mxu0 %v7894
  %7974 = vmatpush.msra.mxu0 %v7893
  %7975 = vmatpush.msra.mxu0 %v7892
  %7976 = vmatpush.msra.mxu0 %v7891
  %7977 = vmatpush.msra.mxu0 %v7890
  %7978 = vmatpush.msra.mxu0 %v7889
  %7979 = vmatpush.msra.mxu0 %v7888
  %7980 = vmatpush.msra.mxu0 %v7887
  %7981 = vmatpush.msra.mxu0 %v7886
  %7982 = vmatpush.msra.mxu0 %v7885
  %7983 = vmatpush.msra.mxu0 %v7884
  %7984 = vmatpush.msra.mxu0 %v7883
  %7985 = vmatpush.msra.mxu0 %v7882
  %7986 = vmatmul.f32.gmra.mxu0 %v7872
  %v7987 = vpop.f32.mrf.mxu0
  %v7988 = vadd.f32 %v7965, %v7987
  %7989 = vdwg.mxu0
  %7990 = vmatpush.msra.mxu0 0.0
  %7991 = vmatpush.msra.mxu0 0.0
  %7992 = vmatpush.msra.mxu0 0.0
  %7993 = vmatpush.msra.mxu0 0.0
  %7994 = vmatpush.msra.mxu0 0.0
  %7995 = vmatpush.msra.mxu0 0.0
  %7996 = vmatpush.msra.mxu0 0.0
  %7997 = vmatpush.msra.mxu0 0.0
  %7998 = vmatpush.msra.mxu0 0.0
  %7999 = vmatpush.msra.mxu0 0.0
  %8000 = vmatpush.msra.mxu0 0.0
  %8001 = vmatpush.msra.mxu0 0.0
  %8002 = vmatpush.msra.mxu0 %v7901
  %8003 = vmatpush.msra.mxu0 %v7900
  %8004 = vmatpush.msra.mxu0 %v7899
  %8005 = vmatpush.msra.mxu0 %v7898
  %8006 = vmatmul.f32.gmra.mxu0 %v7968
  %v8007 = vpop.f32.mrf.mxu0
  %v8008 = vadd.f32 %v7988, %v8007
  %8009 = vdwg.mxu0
  %s8010 = scalar_lea.vmem %s5, 320
  %v8011 = vld [vmem:[%s8010] sm:$0xff]
  %v8012 = vld [vmem:[%s8010 + $0x8] sm:$0xff]
  %v8013 = vld [vmem:[%s8010 + $0x10] sm:$0xff]
  %v8014 = vld [vmem:[%s8010 + $0x18] sm:$0xff]
  %v8015 = vld [vmem:[%s8010 + $0x20] sm:$0xff]
  %v8016 = vld [vmem:[%s8010 + $0x28] sm:$0xff]
  %v8017 = vld [vmem:[%s8010 + $0x30] sm:$0xff]
  %v8018 = vld [vmem:[%s8010 + $0x38] sm:$0xff]
  %v8019 = vld [vmem:[%s8010 + $0x40] sm:$0xff]
  %v8020 = vld [vmem:[%s8010 + $0x48] sm:$0xff]
  %v8021 = vld [vmem:[%s8010 + $0x50] sm:$0xff]
  %v8022 = vld [vmem:[%s8010 + $0x58] sm:$0xff]
  %v8023 = vld [vmem:[%s8010 + $0x60] sm:$0xff]
  %v8024 = vld [vmem:[%s8010 + $0x68] sm:$0xff]
  %v8025 = vld [vmem:[%s8010 + $0x70] sm:$0xff]
  %v8026 = vld [vmem:[%s8010 + $0x78] sm:$0xff]
  %v8027 = vld [vmem:[%s8010 + $0x80] sm:$0xff]
  %v8028 = vld [vmem:[%s8010 + $0x88] sm:$0xff]
  %v8029 = vld [vmem:[%s8010 + $0x90] sm:$0xff]
  %v8030 = vld [vmem:[%s8010 + $0x98] sm:$0xff]
  %v8032 = vsel %vm7923, %v7877, 0
  %8034 = vmatpush.msra.mxu0 %v8026
  %8035 = vmatpush.msra.mxu0 %v8025
  %8036 = vmatpush.msra.mxu0 %v8024
  %8037 = vmatpush.msra.mxu0 %v8023
  %8038 = vmatpush.msra.mxu0 %v8022
  %8039 = vmatpush.msra.mxu0 %v8021
  %8040 = vmatpush.msra.mxu0 %v8020
  %8041 = vmatpush.msra.mxu0 %v8019
  %8042 = vmatpush.msra.mxu0 %v8018
  %8043 = vmatpush.msra.mxu0 %v8017
  %8044 = vmatpush.msra.mxu0 %v8016
  %8045 = vmatpush.msra.mxu0 %v8015
  %8046 = vmatpush.msra.mxu0 %v8014
  %8047 = vmatpush.msra.mxu0 %v8013
  %8048 = vmatpush.msra.mxu0 %v8012
  %8049 = vmatpush.msra.mxu0 %v8011
  %8050 = vmatmul.f32.gmra.mxu0 %v7876
  %v8051 = vpop.f32.mrf.mxu0
  %v8052 = vadd.f32 0.0, %v8051
  %8053 = vdwg.mxu0
  %8054 = vmatpush.msra.mxu0 0.0
  %8055 = vmatpush.msra.mxu0 0.0
  %8056 = vmatpush.msra.mxu0 0.0
  %8057 = vmatpush.msra.mxu0 0.0
  %8058 = vmatpush.msra.mxu0 0.0
  %8059 = vmatpush.msra.mxu0 0.0
  %8060 = vmatpush.msra.mxu0 0.0
  %8061 = vmatpush.msra.mxu0 0.0
  %8062 = vmatpush.msra.mxu0 0.0
  %8063 = vmatpush.msra.mxu0 0.0
  %8064 = vmatpush.msra.mxu0 0.0
  %8065 = vmatpush.msra.mxu0 0.0
  %8066 = vmatpush.msra.mxu0 %v8030
  %8067 = vmatpush.msra.mxu0 %v8029
  %8068 = vmatpush.msra.mxu0 %v8028
  %8069 = vmatpush.msra.mxu0 %v8027
  %8070 = vmatmul.f32.gmra.mxu0 %v8032
  %v8071 = vpop.f32.mrf.mxu0
  %v8072 = vadd.f32 %v8052, %v8071
  %8073 = vdwg.mxu0
  %v8074 = vadd.f32 %v8008, %v8072
  %s8075 = scalar_lea.vmem %s5, 480
  %v8076 = vld [vmem:[%s8075] sm:$0xff]
  %v8077 = vld [vmem:[%s8075 + $0x8] sm:$0xff]
  %v8078 = vld [vmem:[%s8075 + $0x10] sm:$0xff]
  %v8079 = vld [vmem:[%s8075 + $0x18] sm:$0xff]
  %v8080 = vld [vmem:[%s8075 + $0x20] sm:$0xff]
  %v8081 = vld [vmem:[%s8075 + $0x28] sm:$0xff]
  %v8082 = vld [vmem:[%s8075 + $0x30] sm:$0xff]
  %v8083 = vld [vmem:[%s8075 + $0x38] sm:$0xff]
  %v8084 = vld [vmem:[%s8075 + $0x40] sm:$0xff]
  %v8085 = vld [vmem:[%s8075 + $0x48] sm:$0xff]
  %v8086 = vld [vmem:[%s8075 + $0x50] sm:$0xff]
  %v8087 = vld [vmem:[%s8075 + $0x58] sm:$0xff]
  %v8088 = vld [vmem:[%s8075 + $0x60] sm:$0xff]
  %v8089 = vld [vmem:[%s8075 + $0x68] sm:$0xff]
  %v8090 = vld [vmem:[%s8075 + $0x70] sm:$0xff]
  %v8091 = vld [vmem:[%s8075 + $0x78] sm:$0xff]
  %v8092 = vld [vmem:[%s8075 + $0x80] sm:$0xff]
  %v8093 = vld [vmem:[%s8075 + $0x88] sm:$0xff]
  %v8094 = vld [vmem:[%s8075 + $0x90] sm:$0xff]
  %v8095 = vld [vmem:[%s8075 + $0x98] sm:$0xff]
  %v8097 = vsel %vm7923, %v7879, 0
  %8099 = vmatpush.msra.mxu0 %v8091
  %8100 = vmatpush.msra.mxu0 %v8090
  %8101 = vmatpush.msra.mxu0 %v8089
  %8102 = vmatpush.msra.mxu0 %v8088
  %8103 = vmatpush.msra.mxu0 %v8087
  %8104 = vmatpush.msra.mxu0 %v8086
  %8105 = vmatpush.msra.mxu0 %v8085
  %8106 = vmatpush.msra.mxu0 %v8084
  %8107 = vmatpush.msra.mxu0 %v8083
  %8108 = vmatpush.msra.mxu0 %v8082
  %8109 = vmatpush.msra.mxu0 %v8081
  %8110 = vmatpush.msra.mxu0 %v8080
  %8111 = vmatpush.msra.mxu0 %v8079
  %8112 = vmatpush.msra.mxu0 %v8078
  %8113 = vmatpush.msra.mxu0 %v8077
  %8114 = vmatpush.msra.mxu0 %v8076
  %8115 = vmatmul.f32.gmra.mxu0 %v7878
  %v8116 = vpop.f32.mrf.mxu0
  %v8117 = vadd.f32 0.0, %v8116
  %8118 = vdwg.mxu0
  %8119 = vmatpush.msra.mxu0 0.0
  %8120 = vmatpush.msra.mxu0 0.0
  %8121 = vmatpush.msra.mxu0 0.0
  %8122 = vmatpush.msra.mxu0 0.0
  %8123 = vmatpush.msra.mxu0 0.0
  %8124 = vmatpush.msra.mxu0 0.0
  %8125 = vmatpush.msra.mxu0 0.0
  %8126 = vmatpush.msra.mxu0 0.0
  %8127 = vmatpush.msra.mxu0 0.0
  %8128 = vmatpush.msra.mxu0 0.0
  %8129 = vmatpush.msra.mxu0 0.0
  %8130 = vmatpush.msra.mxu0 0.0
  %8131 = vmatpush.msra.mxu0 %v8095
  %8132 = vmatpush.msra.mxu0 %v8094
  %8133 = vmatpush.msra.mxu0 %v8093
  %8134 = vmatpush.msra.mxu0 %v8092
  %8135 = vmatmul.f32.gmra.mxu0 %v8097
  %v8136 = vpop.f32.mrf.mxu0
  %v8137 = vadd.f32 %v8117, %v8136
  %8138 = vdwg.mxu0
  %v8139 = vadd.f32 %v8074, %v8137
  %s8140 = scalar_lea.vmem %s5, 640
  %v8141 = vld [vmem:[%s8140] sm:$0xff]
  %v8142 = vld [vmem:[%s8140 + $0x8] sm:$0xff]
  %v8143 = vld [vmem:[%s8140 + $0x10] sm:$0xff]
  %v8144 = vld [vmem:[%s8140 + $0x18] sm:$0xff]
  %v8145 = vld [vmem:[%s8140 + $0x20] sm:$0xff]
  %v8146 = vld [vmem:[%s8140 + $0x28] sm:$0xff]
  %v8147 = vld [vmem:[%s8140 + $0x30] sm:$0xff]
  %v8148 = vld [vmem:[%s8140 + $0x38] sm:$0xff]
  %v8149 = vld [vmem:[%s8140 + $0x40] sm:$0xff]
  %v8150 = vld [vmem:[%s8140 + $0x48] sm:$0xff]
  %v8151 = vld [vmem:[%s8140 + $0x50] sm:$0xff]
  %v8152 = vld [vmem:[%s8140 + $0x58] sm:$0xff]
  %v8153 = vld [vmem:[%s8140 + $0x60] sm:$0xff]
  %v8154 = vld [vmem:[%s8140 + $0x68] sm:$0xff]
  %v8155 = vld [vmem:[%s8140 + $0x70] sm:$0xff]
  %v8156 = vld [vmem:[%s8140 + $0x78] sm:$0xff]
  %v8157 = vld [vmem:[%s8140 + $0x80] sm:$0xff]
  %v8158 = vld [vmem:[%s8140 + $0x88] sm:$0xff]
  %v8159 = vld [vmem:[%s8140 + $0x90] sm:$0xff]
  %v8160 = vld [vmem:[%s8140 + $0x98] sm:$0xff]
  %v8162 = vsel %vm7923, %v7881, 0
  %8164 = vmatpush.msra.mxu0 %v8156
  %8165 = vmatpush.msra.mxu0 %v8155
  %8166 = vmatpush.msra.mxu0 %v8154
  %8167 = vmatpush.msra.mxu0 %v8153
  %8168 = vmatpush.msra.mxu0 %v8152
  %8169 = vmatpush.msra.mxu0 %v8151
  %8170 = vmatpush.msra.mxu0 %v8150
  %8171 = vmatpush.msra.mxu0 %v8149
  %8172 = vmatpush.msra.mxu0 %v8148
  %8173 = vmatpush.msra.mxu0 %v8147
  %8174 = vmatpush.msra.mxu0 %v8146
  %8175 = vmatpush.msra.mxu0 %v8145
  %8176 = vmatpush.msra.mxu0 %v8144
  %8177 = vmatpush.msra.mxu0 %v8143
  %8178 = vmatpush.msra.mxu0 %v8142
  %8179 = vmatpush.msra.mxu0 %v8141
  %8180 = vmatmul.f32.gmra.mxu0 %v7880
  %v8181 = vpop.f32.mrf.mxu0
  %v8182 = vadd.f32 0.0, %v8181
  %8183 = vdwg.mxu0
  %8184 = vmatpush.msra.mxu0 0.0
  %8185 = vmatpush.msra.mxu0 0.0
  %8186 = vmatpush.msra.mxu0 0.0
  %8187 = vmatpush.msra.mxu0 0.0
  %8188 = vmatpush.msra.mxu0 0.0
  %8189 = vmatpush.msra.mxu0 0.0
  %8190 = vmatpush.msra.mxu0 0.0
  %8191 = vmatpush.msra.mxu0 0.0
  %8192 = vmatpush.msra.mxu0 0.0
  %8193 = vmatpush.msra.mxu0 0.0
  %8194 = vmatpush.msra.mxu0 0.0
  %8195 = vmatpush.msra.mxu0 0.0
  %8196 = vmatpush.msra.mxu0 %v8160
  %8197 = vmatpush.msra.mxu0 %v8159
  %8198 = vmatpush.msra.mxu0 %v8158
  %8199 = vmatpush.msra.mxu0 %v8157
  %8200 = vmatmul.f32.gmra.mxu0 %v8162
  %v8201 = vpop.f32.mrf.mxu0
  %v8202 = vadd.f32 %v8182, %v8201
  %8203 = vdwg.mxu0
  %v8204 = vadd.f32 %v8139, %v8202
  %v8205 = vld [vmem:[%s6] sm:$0x1]
  %v8207 = vperm.slane %v8205, 0
  %v8209 = vadd.f32 %v8204, %v8207
  %v8210 = vmax.f32 %v8209, 0.0
  %v8211 = vld [vmem:[%s7] sm:$0xff]
  %v8212 = vld [vmem:[%s7 + $0x8] sm:$0xff]
  %v8213 = vld [vmem:[%s7 + $0x10] sm:$0xff]
  %v8214 = vld [vmem:[%s7 + $0x18] sm:$0xff]
  %v8215 = vld [vmem:[%s7 + $0x20] sm:$0xff]
  %v8216 = vld [vmem:[%s7 + $0x28] sm:$0xff]
  %v8217 = vld [vmem:[%s7 + $0x30] sm:$0xff]
  %v8218 = vld [vmem:[%s7 + $0x38] sm:$0xff]
  %v8219 = vld [vmem:[%s7 + $0x40] sm:$0xff]
  %v8220 = vld [vmem:[%s7 + $0x48] sm:$0xff]
  %v8221 = vld [vmem:[%s7 + $0x50] sm:$0xff]
  %v8222 = vld [vmem:[%s7 + $0x58] sm:$0xff]
  %v8223 = vld [vmem:[%s7 + $0x60] sm:$0xff]
  %v8224 = vld [vmem:[%s7 + $0x68] sm:$0xff]
  %v8225 = vld [vmem:[%s7 + $0x70] sm:$0xff]
  %v8226 = vld [vmem:[%s8] sm:$0x1]
  %v8228 = vperm.slane %v8226, 0
  %vm8230 = vcmask 982016
  %v8232 = vsel %vm8230, %v8210, 0
  %8234 = vmatpush.msra.mxu0 0.0
  %8235 = vmatpush.msra.mxu0 %v8225
  %8236 = vmatpush.msra.mxu0 %v8224
  %8237 = vmatpush.msra.mxu0 %v8223
  %8238 = vmatpush.msra.mxu0 %v8222
  %8239 = vmatpush.msra.mxu0 %v8221
  %8240 = vmatpush.msra.mxu0 %v8220
  %8241 = vmatpush.msra.mxu0 %v8219
  %8242 = vmatpush.msra.mxu0 %v8218
  %8243 = vmatpush.msra.mxu0 %v8217
  %8244 = vmatpush.msra.mxu0 %v8216
  %8245 = vmatpush.msra.mxu0 %v8215
  %8246 = vmatpush.msra.mxu0 %v8214
  %8247 = vmatpush.msra.mxu0 %v8213
  %8248 = vmatpush.msra.mxu0 %v8212
  %8249 = vmatpush.msra.mxu0 %v8211
  %8250 = vmatmul.f32.gmra.mxu0 %v8232
  %v8251 = vpop.f32.mrf.mxu0
  %v8252 = vadd.f32 %v8228, %v8251
  %8253 = vdwg.mxu0
  %v8254 = vmax.f32 %v8252, 0.0
  %v8255 = vld [vmem:[%s9] sm:$0xff]
  %v8256 = vld [vmem:[%s9 + $0x8] sm:$0xff]
  %v8257 = vld [vmem:[%s9 + $0x10] sm:$0xff]
  %v8258 = vld [vmem:[%s9 + $0x18] sm:$0xff]
  %v8259 = vld [vmem:[%s9 + $0x20] sm:$0xff]
  %v8260 = vld [vmem:[%s9 + $0x28] sm:$0xff]
  %v8261 = vld [vmem:[%s9 + $0x30] sm:$0xff]
  %v8262 = vld [vmem:[%s9 + $0x38] sm:$0xff]
  %v8263 = vld [vmem:[%s9 + $0x40] sm:$0xff]
  %v8264 = vld [vmem:[%s9 + $0x48] sm:$0xff]
  %v8265 = vld [vmem:[%s9 + $0x50] sm:$0xf]
  %v8266 = vld [vmem:[%s10] sm:$0x1]
  %v8268 = vperm.slane %v8266, 0
  %vm8270 = vcmask 687104
  %v8272 = vsel %vm8270, %v8254, 0
  %vm8274 = vcmask 1043456
  %v8276 = vsel %vm8274, %v8265, 0
  %8278 = vmatpush.msra.mxu0 0.0
  %8279 = vmatpush.msra.mxu0 0.0
  %8280 = vmatpush.msra.mxu0 0.0
  %8281 = vmatpush.msra.mxu0 0.0
  %8282 = vmatpush.msra.mxu0 0.0
  %8283 = vmatpush.msra.mxu0 %v8276
  %8284 = vmatpush.msra.mxu0 %v8264
  %8285 = vmatpush.msra.mxu0 %v8263
  %8286 = vmatpush.msra.mxu0 %v8262
  %8287 = vmatpush.msra.mxu0 %v8261
  %8288 = vmatpush.msra.mxu0 %v8260
  %8289 = vmatpush.msra.mxu0 %v8259
  %8290 = vmatpush.msra.mxu0 %v8258
  %8291 = vmatpush.msra.mxu0 %v8257
  %8292 = vmatpush.msra.mxu0 %v8256
  %8293 = vmatpush.msra.mxu0 %v8255
  %8294 = vmatmul.f32.gmra.mxu0 %v8272
  %v8295 = vpop.f32.mrf.mxu0
  %v8296 = vadd.f32 %v8268, %v8295
  %8297 = vdwg.mxu0
  %vm8298 = vcmask 80896
  %8299 = vst.msk [vmem:[%s11] sm:$0xff] %vm8298, %v8296
  // Predicated region
  $region46: #{lenet_forward.1} parent=0 // pred_check
    _
  $region47: #{lenet_forward.1} parent=0 // pred_check_branch
    %8301 = sbr.rel (0) target = $region49
  $region48: #{lenet_forward.1} parent=0 // pred_region
    _
  $region49: #{lenet_forward.1} parent=0 // pred_fallthru
    _
  // Predicated region
  $region50: #{lenet_forward.1} parent=0 // pred_check
    _
  $region51: #{lenet_forward.1} parent=0 // pred_check_branch
    %8303 = sbr.rel (0) target = $region53
  $region52: #{lenet_forward.1} parent=0 // pred_region
    _
  $region53: #{lenet_forward.1} parent=0 // pred_fallthru
    _

</llo_original>
